<compile_context>
chip_gen: v6e
topology: v6e:2x2x1
jax: 0.10.0
libtpu: 0.0.40
codegen_flags: <defaults>
</compile_context>

<pallas_src>
import numpy as np
import jax
import jax.numpy as jnp
from jax.experimental import pallas as pl
from jax.experimental.pallas import tpu as pltpu

PRIMITIVES = ['none', 'max_pool_3x3', 'avg_pool_3x3', 'skip_connect',
              'sep_conv_3x3', 'sep_conv_5x5', 'dil_conv_3x3', 'dil_conv_5x5']
BN_EPS = 1e-5
F32 = jnp.float32
BF16 = jnp.bfloat16
NEG_PAD = -1e30        # max-pool padding value (representable in bf16)

_VMEM = pl.BlockSpec(memory_space=pltpu.MemorySpace.VMEM)


# ----------------------------------------------------------------------------
# Pallas kernels
# ----------------------------------------------------------------------------
def _matmul_bias_kernel(a_ref, w_ref, b_ref, o_ref):
    # bf16 operands on the MXU, f32 accumulate; BN scale pre-folded into w,
    # BN shift is the bias row.
    o_ref[...] = jnp.dot(a_ref[...], w_ref[...],
                         preferred_element_type=F32) + b_ref[...]


def _pool_cls_kernel(x_ref, w_ref, b_ref, o_ref):
    # fused global average pool + linear classifier
    pooled = jnp.mean(x_ref[...], axis=1)
    o_ref[...] = jnp.dot(pooled.astype(BF16), w_ref[...],
                         preferred_element_type=F32) + b_ref[...]


def _sep_stage1_kernel(p_ref, w_ref, b_ref, h_ref):
    # First halves of sep_conv_3x3 / sep_conv_5x5 for one edge: a single
    # block-diagonal MXU matmul over the concatenated [M, 34C] patches, fused
    # bias + ReLU, one lane-dense [M, 2C] store.
    h = jnp.dot(p_ref[0], w_ref[0], preferred_element_type=F32) + b_ref[0]
    h_ref[0] = jnp.maximum(h, 0.0).astype(h_ref.dtype)


def make_edge_stage2_kernel(c):
    """Fused MixedOp tail for one edge; gridded over the edges of one node with
    an accumulator output (the node sum stays resident in VMEM)."""
    def kernel(lhs_ref, pmax_ref, w_ref, ms_ref, b_ref, o_ref):
        e = pl.program_id(0)

        @pl.when(e == 0)
        def _():
            o_ref[...] = jnp.zeros_like(o_ref)

        # One MXU matmul covers sep3/sep5 second halves, both dil convs, skip /
        # FactorizedReduce and avg-pool (weights pre-scaled by softmax(alpha)
        # and eval-BN scale; 'none' contributes exactly zero and is dropped).
        y = jnp.dot(lhs_ref[0], w_ref[0], preferred_element_type=F32)
        # max_pool_3x3 on the VPU: padded taps were pre-filled with -1e30.
        pm = pmax_ref[0].astype(F32)
        mx = pm[:, 0:c]
        for t in range(1, 9):
            mx = jnp.maximum(mx, pm[:, t * c:(t + 1) * c])
        o_ref[...] += y + mx * ms_ref[0] + b_ref[0]
    return kernel


# ----------------------------------------------------------------------------
# Kernel wrappers
# ----------------------------------------------------------------------------
def matmul_bias(a, w, b):
    m, n = a.shape[0], w.shape[1]
    return pl.pallas_call(
        _matmul_bias_kernel,
        out_shape=jax.ShapeDtypeStruct((m, n), F32),
        in_specs=[_VMEM] * 3,
        out_specs=_VMEM,
    )(a.astype(BF16), w.astype(BF16), b.reshape(1, -1).astype(F32))


def pool_classifier(xflat, w, b):
    n, ncls = xflat.shape[0], w.shape[1]
    return pl.pallas_call(
        _pool_cls_kernel,
        out_shape=jax.ShapeDtypeStruct((n, ncls), F32),
        in_specs=[_VMEM] * 3,
        out_specs=_VMEM,
    )(xflat.astype(F32), w.astype(BF16), b.reshape(1, ncls).astype(F32))


def run_sep_stage1(p35s, w1s, b1s, m, c):
    e = p35s.shape[0]
    return pl.pallas_call(
        _sep_stage1_kernel,
        out_shape=jax.ShapeDtypeStruct((e, m, 2 * c), BF16),
        grid=(e,),
        in_specs=[
            pl.BlockSpec((1, m, 34 * c), lambda i: (i, 0, 0)),
            pl.BlockSpec((1, 34 * c, 2 * c), lambda i: (i, 0, 0)),
            pl.BlockSpec((1, 1, 2 * c), lambda i: (i, 0, 0)),
        ],
        out_specs=pl.BlockSpec((1, m, 2 * c), lambda i: (i, 0, 0)),
        compiler_params=pltpu.CompilerParams(
            dimension_semantics=("parallel",)),    # v7x: split edges across TCs
    )(p35s, w1s, b1s)


def run_edge_stage2(lhs, pmax, w2, mscale, bias, m, c):
    e, _, k = lhs.shape
    return pl.pallas_call(
        make_edge_stage2_kernel(c),
        out_shape=jax.ShapeDtypeStruct((m, c), F32),
        grid=(e,),
        in_specs=[
            pl.BlockSpec((1, m, k), lambda i: (i, 0, 0)),
            pl.BlockSpec((1, m, 9 * c), lambda i: (i, 0, 0)),
            pl.BlockSpec((1, k, c), lambda i: (i, 0, 0)),
            pl.BlockSpec((1, 1, c), lambda i: (i, 0, 0)),
            pl.BlockSpec((1, 1, c), lambda i: (i, 0, 0)),
        ],
        # same out block for every edge -> VMEM-resident accumulator
        out_specs=pl.BlockSpec((m, c), lambda i: (0, 0)),
        compiler_params=pltpu.CompilerParams(
            dimension_semantics=("arbitrary",)),
    )(lhs, pmax, w2, mscale, bias)


# ----------------------------------------------------------------------------
# Glue: lane-dense im2col and per-state patch bundles
# ----------------------------------------------------------------------------
def extract_patches_ld(x, k, stride, pad, dilation=1, pad_value=0.0):
    """x: [..., H, W, C] -> (patches [..., OH*OW, k*k*C], (OH, OW)).
    Columns are tap-major (t*C + ci), matching the folded conv weights."""
    *lead, h, w, c = x.shape
    xp = jnp.pad(x, [(0, 0)] * len(lead) + [(pad, pad), (pad, pad), (0, 0)],
                 constant_values=pad_value)
    eff = dilation * (k - 1) + 1
    oh = (h + 2 * pad - eff) // stride + 1
    ow = (w + 2 * pad - eff) // stride + 1
    cols = []
    for kh in range(k):
        for kw in range(k):
            sl = xp[..., kh * dilation: kh * dilation + (oh - 1) * stride + 1: stride,
                       kw * dilation: kw * dilation + (ow - 1) * stride + 1: stride, :]
            cols.append(sl.reshape(*lead, oh * ow, c))
    return jnp.concatenate(cols, axis=-1), (oh, ow)


def _pool_inv_cnt(n, h, w, stride):
    """1/valid_count per output row for 3x3 avg pool, pad=1,
    count_include_pad=False (trace-time numpy constant)."""
    oh = (h + 2 - 3) // stride + 1
    ow = (w + 2 - 3) // stride + 1
    cnt = np.zeros((oh * ow, 1), np.float32)
    for i in range(oh):
        for j in range(ow):
            v = 0
            for kh in range(3):
                for kw in range(3):
                    ih, iw = i * stride - 1 + kh, j * stride - 1 + kw
                    if 0 <= ih < h and 0 <= iw < w:
                        v += 1
            cnt[i * ow + j, 0] = v
    return np.tile(1.0 / cnt, (n, 1))


def make_state_bundle(x, stride):
    """Everything derived from one input state; shared by all edges reading it."""
    n, h, w, c = x.shape
    xr = jnp.maximum(x, 0.0)                       # ReLU once, before any im2col
    p3, (oh, ow) = extract_patches_ld(xr, 3, stride, 1)
    p5, _ = extract_patches_ld(xr, 5, stride, 2)
    r3, _ = extract_patches_ld(xr, 3, stride, 2, dilation=2)
    r5, _ = extract_patches_ld(xr, 5, stride, 4, dilation=2)
    pmax, _ = extract_patches_ld(x, 3, stride, 1, pad_value=NEG_PAD)
    pavg, _ = extract_patches_ld(x, 3, stride, 1)
    m = n * oh * ow
    inv_cnt = jnp.asarray(_pool_inv_cnt(n, h, w, stride))            # [m, 1]
    pavg = pavg.reshape(m, 9 * c) * inv_cnt                          # fold 1/cnt
    if stride == 1:
        xflat = x.reshape(m, c)                                      # identity skip
        skip = jnp.concatenate([xflat, jnp.zeros_like(xflat)], axis=-1)
    else:                                                            # FactorizedReduce
        xe = xr[:, ::2, ::2, :].reshape(m, c)
        xo = xr[:, 1::2, 1::2, :].reshape(m, c)
        skip = jnp.concatenate([xe, xo], axis=-1)
    return {
        'shape': (n, oh, ow, c), 'm': m,
        'p35': jnp.concatenate([p3.reshape(m, 9 * c),
                                p5.reshape(m, 25 * c)], axis=-1).astype(BF16),
        'rest': jnp.concatenate([r3.reshape(m, 9 * c), r5.reshape(m, 25 * c),
                                 skip, pavg], axis=-1).astype(BF16),
        'pmax': pmax.reshape(m, 9 * c).astype(BF16),
    }


# ----------------------------------------------------------------------------
# Parameters (depthwise weights pre-folded into dense MXU weights at init)
# ----------------------------------------------------------------------------
class KeyGen:
    def __init__(self, seed):
        self._key = jax.random.PRNGKey(seed)

    def __call__(self):
        self._key, sub = jax.random.split(self._key)
        return sub


def _winit(kg, shape, scale=0.1):
    return (scale * jax.random.normal(kg(), shape)).astype(F32)


def _bn(c):
    # eval-mode BN: running_mean=0, running_var=1, identity affine
    return (jnp.full((c,), 1.0 / np.sqrt(1.0 + BN_EPS), F32),
            jnp.zeros((c,), F32))


def _fold_dw_pw(dw, pw, scale):
    """Depthwise [k2, C] folded with pointwise [C, Cout] and BN scale -> [k2*C, Cout]."""
    k2, c = dw.shape
    w = dw[:, :, None] * pw[None, :, :]
    return (w * scale[None, None, :]).reshape(k2 * c, -1)


def init_relu_conv_bn(kg, cin, cout):
    s, b = _bn(cout)
    return {'W': _winit(kg, (cin, cout)) * s[None, :], 'b': b}


def init_fact_reduce(kg, cin, cout):
    s, b = _bn(cout)
    w1 = _winit(kg, (cin, cout // 2))
    w2 = _winit(kg, (cin, cout // 2))
    wcat = jnp.zeros((2 * cin, cout), F32)
    wcat = wcat.at[:cin, :cout // 2].set(w1)
    wcat = wcat.at[cin:, cout // 2:].set(w2)
    return {'W': wcat * s[None, :], 'b': b}


def init_mixed_op(kg, c, stride):
    p = {}
    # sep convs: first halves as one block-diag [34C, 2C] weight, second halves kept
    # separate (they are scaled by softmax(alpha) at call time and stacked).
    w1 = jnp.zeros((34 * c, 2 * c), F32)
    for k, name, off in ((3, 'sep3', 0), (5, 'sep5', 9 * c)):
        dw1, pw1 = _winit(kg, (k * k, c)), _winit(kg, (c, c))
        s1, b1 = _bn(c)
        dw2, pw2 = _winit(kg, (k * k, c)), _winit(kg, (c, c))
        s2, b2 = _bn(c)
        blk = _fold_dw_pw(dw1, pw1, s1)
        col = 0 if name == 'sep3' else c
        w1 = w1.at[off:off + k * k * c, col:col + c].set(blk)
        p[name + '_b1'] = b1
        p[name + '_W2'] = _fold_dw_pw(dw2, pw2, s2)
        p[name + '_b2'] = b2
    p['sep_W1'] = w1.astype(BF16)
    p['sep_b1'] = jnp.concatenate([p['sep3_b1'], p['sep5_b1']]).reshape(1, 2 * c)
    for k, name in ((3, 'dil3'), (5, 'dil5')):
        dw, pw = _winit(kg, (k * k, c)), _winit(kg, (c, c))
        s, b = _bn(c)
        p[name + '_W'] = _fold_dw_pw(dw, pw, s)
        p[name + '_b'] = b
    if stride == 1:       # identity skip expressed as a [2C, C] block for uniform stacking
        p['skip_W'] = jnp.concatenate([jnp.eye(c, dtype=F32),
                                       jnp.zeros((c, c), F32)], axis=0)
        p['skip_b'] = jnp.zeros((c,), F32)
    else:                 # FactorizedReduce
        fr = init_fact_reduce(kg, c, c)
        p['skip_W'], p['skip_b'] = fr['W'], fr['b']
    s_pool, b_pool = _bn(c)
    p['avg_W'] = jnp.tile(jnp.eye(c, dtype=F32), (9, 1)) * s_pool[None, :]
    p['avg_b'] = b_pool
    p['pool_s'] = s_pool
    p['pool_b'] = b_pool
    return p


def edge_stage2_weights(p, wrow, c):
    """Per-edge stage-2 weight stack: softmax(alpha) and eval-BN folded into the
    columns so the whole conv/skip/avg part of the MixedOp is one MXU matmul."""
    w_all = jnp.concatenate([
        p['sep3_W2'] * wrow[4],
        p['sep5_W2'] * wrow[5],
        p['dil3_W'] * wrow[6],
        p['dil5_W'] * wrow[7],
        p['skip_W'] * wrow[3],
        p['avg_W'] * wrow[2],
    ], axis=0).astype(BF16)                                      # [79C, C]
    bias = (wrow[4] * p['sep3_b2'] + wrow[5] * p['sep5_b2'] +
            wrow[6] * p['dil3_b'] + wrow[7] * p['dil5_b'] +
            wrow[3] * p['skip_b'] + wrow[2] * p['avg_b'] +
            wrow[1] * p['pool_b']).reshape(1, c)
    mscale = (wrow[1] * p['pool_s']).reshape(1, c)
    return w_all, bias, mscale


# ----------------------------------------------------------------------------
# DARTS cell / network
# ----------------------------------------------------------------------------
def relu_conv_bn_1x1(p, x):
    n, h, w, c = x.shape
    y = matmul_bias(jnp.maximum(x, 0.0).reshape(n * h * w, c), p['W'], p['b'])
    return y.reshape(n, h, w, -1)


def fact_reduce_pre(p, x):
    n, h, w, c = x.shape
    xr = jnp.maximum(x, 0.0)
    xe = xr[:, ::2, ::2, :]
    xo = xr[:, 1::2, 1::2, :]
    oh, ow = xe.shape[1], xe.shape[2]
    y = matmul_bias(jnp.concatenate([xe.reshape(-1, c), xo.reshape(-1, c)], -1),
                    p['W'], p['b'])
    return y.reshape(n, oh, ow, -1)


def preprocess(cell, s0, s1):
    if cell['reduction_prev']:
        return fact_reduce_pre(cell['pre0'], s0), relu_conv_bn_1x1(cell['pre1'], s1)
    # Both preprocess ops are 1x1 ReLUConvBN on same-spatial inputs -> fused
    # into a single block-diagonal matmul (one pallas_call instead of two).
    c = cell['c']
    n, h, w, _ = s0.shape
    m = n * h * w
    lhs = jnp.concatenate([jnp.maximum(s0, 0.0).reshape(m, -1),
                           jnp.maximum(s1, 0.0).reshape(m, -1)], axis=-1)
    out = matmul_bias(lhs, cell['pre_W'], cell['pre_b'])
    return out[:, :c].reshape(n, h, w, c), out[:, c:].reshape(n, h, w, c)


def init_cell(kg, steps, multiplier, c_pp, c_p, c, reduction, reduction_prev):
    cell = {'reduction': reduction, 'reduction_prev': reduction_prev,
            'steps': steps, 'multiplier': multiplier, 'c': c}
    if reduction_prev:
        cell['pre0'] = init_fact_reduce(kg, c_pp, c)
        cell['pre1'] = init_relu_conv_bn(kg, c_p, c)
    else:
        p0 = init_relu_conv_bn(kg, c_pp, c)
        p1 = init_relu_conv_bn(kg, c_p, c)
        wd = jnp.zeros((c_pp + c_p, 2 * c), F32)
        wd = wd.at[:c_pp, :c].set(p0['W'])
        wd = wd.at[c_pp:, c:].set(p1['W'])
        cell['pre_W'] = wd
        cell['pre_b'] = jnp.concatenate([p0['b'], p1['b']])
    ops = []
    for i in range(steps):
        for j in range(2 + i):
            stride = 2 if reduction and j < 2 else 1
            ops.append({'stride': stride, 'p': init_mixed_op(kg, c, stride)})
    cell['ops'] = ops
    return cell


def cell_forward(cell, s0, s1, weights):
    c = cell['c']
    s0, s1 = preprocess(cell, s0, s1)
    states = [s0, s1]
    bundles = {}                  # per-state bundles, shared across all steps
    offset = 0
    for _ in range(cell['steps']):
        num_in = len(states)
        p35s, w1s, b1s = [], [], []
        lhs_rest, pmaxs, w2s, b2s, mss = [], [], [], [], []
        out_shape = None
        for j in range(num_in):
            edge = cell['ops'][offset + j]
            if j not in bundles:
                bundles[j] = make_state_bundle(states[j], edge['stride'])
            bd = bundles[j]
            p = edge['p']
            wrow = weights[offset + j]
            p35s.append(bd['p35'])
            w1s.append(p['sep_W1'])
            b1s.append(p['sep_b1'])
            w_all, bias, mscale = edge_stage2_weights(p, wrow, c)
            w2s.append(w_all)
            b2s.append(bias)
            mss.append(mscale)
            lhs_rest.append(bd['rest'])
            pmaxs.append(bd['pmax'])
            out_shape = bd['shape']
        n, oh, ow, _ = out_shape
        m = n * oh * ow
        # Stage 1: sep-conv first halves, gridded over the edges of this node.
        h = run_sep_stage1(jnp.stack(p35s), jnp.stack(w1s), jnp.stack(b1s), m, c)
        # Re-im2col of h3 / h5 (XLA glue; see TODO in header).
        h_img = h.reshape(num_in, n, oh, ow, 2 * c)
        q3, _ = extract_patches_ld(h_img[..., :c], 3, 1, 1)
        q5, _ = extract_patches_ld(h_img[..., c:], 5, 1, 2)
        lhs = jnp.concatenate([q3.reshape(num_in, m, 9 * c),
                               q5.reshape(num_in, m, 25 * c),
                               jnp.stack(lhs_rest)], axis=-1)      # [E, M, 79C]
        # Stage 2: full MixedOp tail, accumulated over edges inside the kernel.
        s_new = run_edge_stage2(lhs, jnp.stack(pmaxs), jnp.stack(w2s),
                                jnp.stack(mss), jnp.stack(b2s), m, c)
        states.append(s_new.reshape(n, oh, ow, c))
        offset += num_in
    return jnp.concatenate(states[-cell['multiplier']:], axis=-1)


def init_network(kg, c=4, num_classes=10, layers=1, steps=4, multiplier=4,
                 stem_multiplier=3):
    net = {'steps': steps, 'multiplier': multiplier}
    c_curr = stem_multiplier * c
    s, b = _bn(c_curr)
    net['stem'] = {'W': _winit(kg, (3 * 3 * 3, c_curr)) * s[None, :], 'b': b}
    c_pp, c_p, c_curr = c_curr, c_curr, c
    cells, reduction_prev = [], False
    for i in range(layers):
        if i in (layers // 3, 2 * layers // 3):
            c_curr *= 2
            reduction = True
        else:
            reduction = False
        cells.append(init_cell(kg, steps, multiplier, c_pp, c_p, c_curr,
                               reduction, reduction_prev))
        reduction_prev = reduction
        c_pp, c_p = c_p, multiplier * c_curr
    net['cells'] = cells
    k = sum(1 for i in range(steps) for _ in range(2 + i))         # 14 edges
    num_ops = len(PRIMITIVES)
    net['alphas_normal'] = (0.001 * jax.random.normal(kg(), (k, num_ops))).astype(F32)
    net['alphas_reduce'] = (0.001 * jax.random.normal(kg(), (k, num_ops))).astype(F32)
    net['classifier_w'] = _winit(kg, (c_p, num_classes))
    net['classifier_b'] = jnp.zeros((num_classes,), F32)
    return net


def network_forward(net, x_nchw):
    x = jnp.transpose(x_nchw.astype(F32), (0, 2, 3, 1))            # NCHW -> NHWC
    # Stem: 3x3 conv (pad 1) + BN, via lane-dense im2col + fused Pallas matmul.
    p, (oh, ow) = extract_patches_ld(x, 3, 1, 1)
    n = x.shape[0]
    s = matmul_bias(p.reshape(n * oh * ow, -1), net['stem']['W'], net['stem']['b'])
    s0 = s1 = s.reshape(n, oh, ow, -1)
    # softmax(alphas) hoisted out of the cell loop; (14,8) softmax in plain jnp.
    arch_w = {}
    for cell in net['cells']:
        key = 'reduce' if cell['reduction'] else 'normal'
        if key not in arch_w:
            arch_w[key] = jax.nn.softmax(net['alphas_' + key], axis=-1)
        s0, s1 = s1, cell_forward(cell, s0, s1, arch_w[key])
    n2, h2, w2, c2 = s1.shape
    # Fused global average pool + classifier.
    return pool_classifier(s1.reshape(n2, h2 * w2, c2),
                           net['classifier_w'], net['classifier_b'])


# ----------------------------------------------------------------------------
# Architect wrapper
# ----------------------------------------------------------------------------
class Architect:
    """Pallas port of the pFedRLNAS Architect. forward(feature) = supernet forward."""

    def __init__(self, client_nums=2, seed=0, learning_rate=0.003, weight_decay=0.3):
        kg = KeyGen(seed)
        self.net = init_network(kg)
        self._steps = 4
        k = self.net['alphas_normal'].shape[0]
        num_ops = len(PRIMITIVES)
        # Per-client architecture parameters (API fidelity; not used by forward).
        self.alphas_normal = [(0.001 * jax.random.normal(kg(), (k, num_ops))).astype(F32)
                              for _ in range(client_nums)]
        self.alphas_reduce = [(0.001 * jax.random.normal(kg(), (k, num_ops))).astype(F32)
                              for _ in range(client_nums)]
        self._arch_parameters = [[self.alphas_normal[i], self.alphas_reduce[i]]
                                 for i in range(client_nums)]
        self._forward = jax.jit(lambda x: network_forward(self.net, x))

    def arch_parameters(self):
        return self._arch_parameters

    def forward(self, feature):
        return self._forward(feature)

    __call__ = forward


if __name__ == "__main__":
    key = jax.random.PRNGKey(0)
    # batch=2, CIFAR-like NCHW input at small spatial size
    feature = jax.random.normal(key, (2, 3, 8, 8), dtype=jnp.float32)
    arch = Architect(client_nums=2, seed=0)
    logits = arch(feature)
    logits = jax.block_until_ready(logits)
    assert logits.shape == (2, 10), logits.shape
    assert bool(jnp.all(jnp.isfinite(logits)))
    print("KERNEL_OK")
</pallas_src>

<mosaic_0001>
module attributes {stable_mosaic.version = 11 : i64} {
  func.func @_matmul_bias_kernel(%arg0: memref<128x27xbf16, #tpu.memory_space<vmem>>, %arg1: memref<27x12xbf16, #tpu.memory_space<vmem>>, %arg2: memref<1x12xf32, #tpu.memory_space<vmem>>, %arg3: memref<128x12xf32, #tpu.memory_space<vmem>>) attributes {dimension_semantics = [], scalar_prefetch = 0 : i64, scratch_operands = 0 : i64, tpu.core_type = #tpu.core_type<tc>} {
    %c0 = arith.constant 0 : index
    %c0_0 = arith.constant 0 : index
    %0 = vector.load %arg0[%c0, %c0_0] : memref<128x27xbf16, #tpu.memory_space<vmem>>, vector<128x27xbf16>
    %c0_1 = arith.constant 0 : index
    %c0_2 = arith.constant 0 : index
    %1 = vector.load %arg1[%c0_1, %c0_2] : memref<27x12xbf16, #tpu.memory_space<vmem>>, vector<27x12xbf16>
    %cst = arith.constant dense<0.000000e+00> : vector<128x12xf32>
    %2 = tpu.matmul %0, %1, %cst {dimension_numbers = #tpu.dot_dimension_numbers<[1], [0], [0], [1], [0, 0, 1, 1], [], []>} : vector<128x27xbf16>, vector<27x12xbf16>, vector<128x12xf32> -> vector<128x12xf32>
    %c0_3 = arith.constant 0 : index
    %c0_4 = arith.constant 0 : index
    %3 = vector.load %arg2[%c0_3, %c0_4] : memref<1x12xf32, #tpu.memory_space<vmem>>, vector<1x12xf32>
    %4 = vector.broadcast %3 : vector<1x12xf32> to vector<128x12xf32>
    %5 = arith.addf %2, %4 : vector<128x12xf32>
    %c0_5 = arith.constant 0 : index
    %c0_6 = arith.constant 0 : index
    %6 = vector.load %arg3[%c0_5, %c0_6] : memref<128x12xf32, #tpu.memory_space<vmem>>, vector<128x12xf32>
    tpu.vector_store %arg3[%c0_5, %c0_6], %5 {strides = array<i32>} : memref<128x12xf32, #tpu.memory_space<vmem>>, vector<128x12xf32>,
    return
  }
}

module attributes {stable_mosaic.version = 11 : i64} {
  func.func @_matmul_bias_kernel(%arg0: memref<128x24xbf16, #tpu.memory_space<vmem>>, %arg1: memref<24x16xbf16, #tpu.memory_space<vmem>>, %arg2: memref<1x16xf32, #tpu.memory_space<vmem>>, %arg3: memref<128x16xf32, #tpu.memory_space<vmem>>) attributes {dimension_semantics = [], scalar_prefetch = 0 : i64, scratch_operands = 0 : i64, tpu.core_type = #tpu.core_type<tc>} {
    %c0 = arith.constant 0 : index
    %c0_0 = arith.constant 0 : index
    %0 = vector.load %arg0[%c0, %c0_0] : memref<128x24xbf16, #tpu.memory_space<vmem>>, vector<128x24xbf16>
    %c0_1 = arith.constant 0 : index
    %c0_2 = arith.constant 0 : index
    %1 = vector.load %arg1[%c0_1, %c0_2] : memref<24x16xbf16, #tpu.memory_space<vmem>>, vector<24x16xbf16>
    %cst = arith.constant dense<0.000000e+00> : vector<128x16xf32>
    %2 = tpu.matmul %0, %1, %cst {dimension_numbers = #tpu.dot_dimension_numbers<[1], [0], [0], [1], [0, 0, 1, 1], [], []>} : vector<128x24xbf16>, vector<24x16xbf16>, vector<128x16xf32> -> vector<128x16xf32>
    %c0_3 = arith.constant 0 : index
    %c0_4 = arith.constant 0 : index
    %3 = vector.load %arg2[%c0_3, %c0_4] : memref<1x16xf32, #tpu.memory_space<vmem>>, vector<1x16xf32>
    %4 = vector.broadcast %3 : vector<1x16xf32> to vector<128x16xf32>
    %5 = arith.addf %2, %4 : vector<128x16xf32>
    %c0_5 = arith.constant 0 : index
    %c0_6 = arith.constant 0 : index
    %6 = vector.load %arg3[%c0_5, %c0_6] : memref<128x16xf32, #tpu.memory_space<vmem>>, vector<128x16xf32>
    tpu.vector_store %arg3[%c0_5, %c0_6], %5 {strides = array<i32>} : memref<128x16xf32, #tpu.memory_space<vmem>>, vector<128x16xf32>,
    return
  }
}

module attributes {stable_mosaic.version = 11 : i64} {
  func.func @_sep_stage1_kernel(%arg0: i32, %arg1: memref<1x32x272xbf16, #tpu.memory_space<vmem>>, %arg2: memref<1x272x16xbf16, #tpu.memory_space<vmem>>, %arg3: memref<1x1x16xf32, #tpu.memory_space<vmem>>, %arg4: memref<1x32x16xbf16, #tpu.memory_space<vmem>>) attributes {dimension_semantics = [#tpu.dimension_semantics<parallel>], iteration_bounds = array<i64: 2>, scalar_prefetch = 0 : i64, scratch_operands = 0 : i64, tpu.core_type = #tpu.core_type<tc>, window_params = [{transform_indices = @transform_0, window_bounds = array<i64: 1, 32, 272>}, {transform_indices = @transform_1, window_bounds = array<i64: 1, 272, 16>}, {transform_indices = @transform_2, window_bounds = array<i64: 1, 1, 16>}, {transform_indices = @transform_3, window_bounds = array<i64: 1, 32, 16>}]} {
    %c0 = arith.constant 0 : index
    %c0_0 = arith.constant 0 : index
    %c0_1 = arith.constant 0 : index
    %0 = vector.load %arg1[%c0, %c0_0, %c0_1] : memref<1x32x272xbf16, #tpu.memory_space<vmem>>, vector<1x32x272xbf16>
    %1 = vector.shape_cast %0 : vector<1x32x272xbf16> to vector<32x272xbf16>
    %c0_2 = arith.constant 0 : index
    %c0_3 = arith.constant 0 : index
    %c0_4 = arith.constant 0 : index
    %2 = vector.load %arg2[%c0_2, %c0_3, %c0_4] : memref<1x272x16xbf16, #tpu.memory_space<vmem>>, vector<1x272x16xbf16>
    %3 = vector.shape_cast %2 : vector<1x272x16xbf16> to vector<272x16xbf16>
    %cst = arith.constant dense<0.000000e+00> : vector<32x16xf32>
    %4 = tpu.matmul %1, %3, %cst {dimension_numbers = #tpu.dot_dimension_numbers<[1], [0], [0], [1], [0, 0, 1, 1], [], []>} : vector<32x272xbf16>, vector<272x16xbf16>, vector<32x16xf32> -> vector<32x16xf32>
    %c0_5 = arith.constant 0 : index
    %c0_6 = arith.constant 0 : index
    %c0_7 = arith.constant 0 : index
    %5 = vector.load %arg3[%c0_5, %c0_6, %c0_7] : memref<1x1x16xf32, #tpu.memory_space<vmem>>, vector<1x1x16xf32>
    %6 = vector.shape_cast %5 : vector<1x1x16xf32> to vector<1x16xf32>
    %7 = vector.broadcast %6 : vector<1x16xf32> to vector<32x16xf32>
    %8 = arith.addf %4, %7 : vector<32x16xf32>
    %cst_8 = arith.constant 0.000000e+00 : f32
    %9 = vector.broadcast %cst_8 : f32 to vector<32x16xf32>
    %10 = arith.maximumf %8, %9 : vector<32x16xf32>
    %11 = arith.truncf %10 : vector<32x16xf32> to vector<32x16xbf16>
    %c0_9 = arith.constant 0 : index
    %c0_10 = arith.constant 0 : index
    %c0_11 = arith.constant 0 : index
    %12 = vector.load %arg4[%c0_9, %c0_10, %c0_11] : memref<1x32x16xbf16, #tpu.memory_space<vmem>>, vector<1x32x16xbf16>
    %13 = vector.shape_cast %12 : vector<1x32x16xbf16> to vector<32x16xbf16>
    %14 = vector.shape_cast %11 : vector<32x16xbf16> to vector<1x32x16xbf16>
    tpu.vector_store %arg4[%c0_9, %c0_10, %c0_11], %14 {strides = array<i32>} : memref<1x32x16xbf16, #tpu.memory_space<vmem>>, vector<1x32x16xbf16>,
    return
  }
  func.func @transform_0(%arg0: i32) -> (i32, i32, i32) {
    %c0_i32 = arith.constant 0 : i32
    %c0_i32_0 = arith.constant 0 : i32
    %c0_i32_1 = arith.constant 0 : i32
    return %arg0, %c0_i32, %c0_i32_0 : i32, i32, i32
  }
  func.func @transform_1(%arg0: i32) -> (i32, i32, i32) {
    %c0_i32 = arith.constant 0 : i32
    %c0_i32_0 = arith.constant 0 : i32
    %c0_i32_1 = arith.constant 0 : i32
    return %arg0, %c0_i32, %c0_i32_0 : i32, i32, i32
  }
  func.func @transform_2(%arg0: i32) -> (i32, i32, i32) {
    %c0_i32 = arith.constant 0 : i32
    %c0_i32_0 = arith.constant 0 : i32
    %c0_i32_1 = arith.constant 0 : i32
    return %arg0, %c0_i32, %c0_i32_0 : i32, i32, i32
  }
  func.func @transform_3(%arg0: i32) -> (i32, i32, i32) {
    %c0_i32 = arith.constant 0 : i32
    %c0_i32_0 = arith.constant 0 : i32
    %c0_i32_1 = arith.constant 0 : i32
    return %arg0, %c0_i32, %c0_i32_0 : i32, i32, i32
  }
}

module attributes {stable_mosaic.version = 11 : i64} {
  func.func @kernel(%arg0: i32, %arg1: memref<1x32x632xbf16, #tpu.memory_space<vmem>>, %arg2: memref<1x32x72xbf16, #tpu.memory_space<vmem>>, %arg3: memref<1x632x8xbf16, #tpu.memory_space<vmem>>, %arg4: memref<1x1x8xf32, #tpu.memory_space<vmem>>, %arg5: memref<1x1x8xf32, #tpu.memory_space<vmem>>, %arg6: memref<32x8xf32, #tpu.memory_space<vmem>>) attributes {dimension_semantics = [#tpu.dimension_semantics<arbitrary>], iteration_bounds = array<i64: 2>, scalar_prefetch = 0 : i64, scratch_operands = 0 : i64, tpu.core_type = #tpu.core_type<tc>, window_params = [{transform_indices = @transform_0, window_bounds = array<i64: 1, 32, 632>}, {transform_indices = @transform_1, window_bounds = array<i64: 1, 32, 72>}, {transform_indices = @transform_2, window_bounds = array<i64: 1, 632, 8>}, {transform_indices = @transform_3, window_bounds = array<i64: 1, 1, 8>}, {transform_indices = @transform_4, window_bounds = array<i64: 1, 1, 8>}, {pipeline_mode = #tpu.pipeline_mode<synchronous>, transform_indices = @transform_5, window_bounds = array<i64: 32, 8>}]} {
    %c0_i32 = arith.constant 0 : i32
    %0 = arith.cmpi eq, %arg0, %c0_i32 : i32
    %1 = arith.extui %0 : i1 to i32
    %c0_i32_0 = arith.constant 0 : i32
    %2 = arith.cmpi ne, %1, %c0_i32_0 : i32
    scf.if %2 {
      %cst_19 = arith.constant 0.000000e+00 : f32
      %40 = vector.broadcast %cst_19 : f32 to vector<32x8xf32>
      %c0_20 = arith.constant 0 : index
      %c0_21 = arith.constant 0 : index
      %41 = vector.load %arg6[%c0_20, %c0_21] : memref<32x8xf32, #tpu.memory_space<vmem>>, vector<32x8xf32>
      tpu.vector_store %arg6[%c0_20, %c0_21], %40 {strides = array<i32>} : memref<32x8xf32, #tpu.memory_space<vmem>>, vector<32x8xf32>,
    } else {
    }
    %c0 = arith.constant 0 : index
    %c0_1 = arith.constant 0 : index
    %c0_2 = arith.constant 0 : index
    %3 = vector.load %arg1[%c0, %c0_1, %c0_2] : memref<1x32x632xbf16, #tpu.memory_space<vmem>>, vector<1x32x632xbf16>
    %4 = vector.shape_cast %3 : vector<1x32x632xbf16> to vector<32x632xbf16>
    %c0_3 = arith.constant 0 : index
    %c0_4 = arith.constant 0 : index
    %c0_5 = arith.constant 0 : index
    %5 = vector.load %arg3[%c0_3, %c0_4, %c0_5] : memref<1x632x8xbf16, #tpu.memory_space<vmem>>, vector<1x632x8xbf16>
    %6 = vector.shape_cast %5 : vector<1x632x8xbf16> to vector<632x8xbf16>
    %cst = arith.constant dense<0.000000e+00> : vector<32x8xf32>
    %7 = tpu.matmul %4, %6, %cst {dimension_numbers = #tpu.dot_dimension_numbers<[1], [0], [0], [1], [0, 0, 1, 1], [], []>} : vector<32x632xbf16>, vector<632x8xbf16>, vector<32x8xf32> -> vector<32x8xf32>
    %c0_6 = arith.constant 0 : index
    %c0_7 = arith.constant 0 : index
    %c0_8 = arith.constant 0 : index
    %8 = vector.load %arg2[%c0_6, %c0_7, %c0_8] : memref<1x32x72xbf16, #tpu.memory_space<vmem>>, vector<1x32x72xbf16>
    %9 = vector.shape_cast %8 : vector<1x32x72xbf16> to vector<32x72xbf16>
    %10 = arith.extf %9 : vector<32x72xbf16> to vector<32x72xf32>
    %11 = vector.extract_strided_slice %10 {offsets = [0, 0], sizes = [32, 8], strides = [1, 1]} : vector<32x72xf32> to vector<32x8xf32>
    %12 = vector.extract_strided_slice %10 {offsets = [0, 8], sizes = [32, 8], strides = [1, 1]} : vector<32x72xf32> to vector<32x8xf32>
    %13 = arith.maximumf %11, %12 : vector<32x8xf32>
    %14 = vector.extract_strided_slice %10 {offsets = [0, 16], sizes = [32, 8], strides = [1, 1]} : vector<32x72xf32> to vector<32x8xf32>
    %15 = arith.maximumf %13, %14 : vector<32x8xf32>
    %16 = vector.extract_strided_slice %10 {offsets = [0, 24], sizes = [32, 8], strides = [1, 1]} : vector<32x72xf32> to vector<32x8xf32>
    %17 = arith.maximumf %15, %16 : vector<32x8xf32>
    %18 = vector.extract_strided_slice %10 {offsets = [0, 32], sizes = [32, 8], strides = [1, 1]} : vector<32x72xf32> to vector<32x8xf32>
    %19 = arith.maximumf %17, %18 : vector<32x8xf32>
    %20 = vector.extract_strided_slice %10 {offsets = [0, 40], sizes = [32, 8], strides = [1, 1]} : vector<32x72xf32> to vector<32x8xf32>
    %21 = arith.maximumf %19, %20 : vector<32x8xf32>
    %22 = vector.extract_strided_slice %10 {offsets = [0, 48], sizes = [32, 8], strides = [1, 1]} : vector<32x72xf32> to vector<32x8xf32>
    %23 = arith.maximumf %21, %22 : vector<32x8xf32>
    %24 = vector.extract_strided_slice %10 {offsets = [0, 56], sizes = [32, 8], strides = [1, 1]} : vector<32x72xf32> to vector<32x8xf32>
    %25 = arith.maximumf %23, %24 : vector<32x8xf32>
    %26 = vector.extract_strided_slice %10 {offsets = [0, 64], sizes = [32, 8], strides = [1, 1]} : vector<32x72xf32> to vector<32x8xf32>
    %27 = arith.maximumf %25, %26 : vector<32x8xf32>
    %c0_9 = arith.constant 0 : index
    %c0_10 = arith.constant 0 : index
    %28 = vector.load %arg6[%c0_9, %c0_10] : memref<32x8xf32, #tpu.memory_space<vmem>>, vector<32x8xf32>
    %c0_11 = arith.constant 0 : index
    %c0_12 = arith.constant 0 : index
    %c0_13 = arith.constant 0 : index
    %29 = vector.load %arg4[%c0_11, %c0_12, %c0_13] : memref<1x1x8xf32, #tpu.memory_space<vmem>>, vector<1x1x8xf32>
    %30 = vector.shape_cast %29 : vector<1x1x8xf32> to vector<1x8xf32>
    %31 = vector.broadcast %30 : vector<1x8xf32> to vector<32x8xf32>
    %32 = arith.mulf %27, %31 : vector<32x8xf32>
    %33 = arith.addf %7, %32 : vector<32x8xf32>
    %c0_14 = arith.constant 0 : index
    %c0_15 = arith.constant 0 : index
    %c0_16 = arith.constant 0 : index
    %34 = vector.load %arg5[%c0_14, %c0_15, %c0_16] : memref<1x1x8xf32, #tpu.memory_space<vmem>>, vector<1x1x8xf32>
    %35 = vector.shape_cast %34 : vector<1x1x8xf32> to vector<1x8xf32>
    %36 = vector.broadcast %35 : vector<1x8xf32> to vector<32x8xf32>
    %37 = arith.addf %33, %36 : vector<32x8xf32>
    %38 = arith.addf %28, %37 : vector<32x8xf32>
    %c0_17 = arith.constant 0 : index
    %c0_18 = arith.constant 0 : index
    %39 = vector.load %arg6[%c0_17, %c0_18] : memref<32x8xf32, #tpu.memory_space<vmem>>, vector<32x8xf32>
    tpu.vector_store %arg6[%c0_17, %c0_18], %38 {strides = array<i32>} : memref<32x8xf32, #tpu.memory_space<vmem>>, vector<32x8xf32>,
    return
  }
  func.func @transform_0(%arg0: i32) -> (i32, i32, i32) {
    %c0_i32 = arith.constant 0 : i32
    %c0_i32_0 = arith.constant 0 : i32
    %c0_i32_1 = arith.constant 0 : i32
    return %arg0, %c0_i32, %c0_i32_0 : i32, i32, i32
  }
  func.func @transform_1(%arg0: i32) -> (i32, i32, i32) {
    %c0_i32 = arith.constant 0 : i32
    %c0_i32_0 = arith.constant 0 : i32
    %c0_i32_1 = arith.constant 0 : i32
    return %arg0, %c0_i32, %c0_i32_0 : i32, i32, i32
  }
  func.func @transform_2(%arg0: i32) -> (i32, i32, i32) {
    %c0_i32 = arith.constant 0 : i32
    %c0_i32_0 = arith.constant 0 : i32
    %c0_i32_1 = arith.constant 0 : i32
    return %arg0, %c0_i32, %c0_i32_0 : i32, i32, i32
  }
  func.func @transform_3(%arg0: i32) -> (i32, i32, i32) {
    %c0_i32 = arith.constant 0 : i32
    %c0_i32_0 = arith.constant 0 : i32
    %c0_i32_1 = arith.constant 0 : i32
    return %arg0, %c0_i32, %c0_i32_0 : i32, i32, i32
  }
  func.func @transform_4(%arg0: i32) -> (i32, i32, i32) {
    %c0_i32 = arith.constant 0 : i32
    %c0_i32_0 = arith.constant 0 : i32
    %c0_i32_1 = arith.constant 0 : i32
    return %arg0, %c0_i32, %c0_i32_0 : i32, i32, i32
  }
  func.func @transform_5(%arg0: i32) -> (i32, i32) {
    %c0_i32 = arith.constant 0 : i32
    %c0_i32_0 = arith.constant 0 : i32
    %c0_i32_1 = arith.constant 0 : i32
    return %c0_i32, %c0_i32_0 : i32, i32
  }
}

module attributes {stable_mosaic.version = 11 : i64} {
  func.func @_sep_stage1_kernel(%arg0: i32, %arg1: memref<1x32x272xbf16, #tpu.memory_space<vmem>>, %arg2: memref<1x272x16xbf16, #tpu.memory_space<vmem>>, %arg3: memref<1x1x16xf32, #tpu.memory_space<vmem>>, %arg4: memref<1x32x16xbf16, #tpu.memory_space<vmem>>) attributes {dimension_semantics = [#tpu.dimension_semantics<parallel>], iteration_bounds = array<i64: 3>, scalar_prefetch = 0 : i64, scratch_operands = 0 : i64, tpu.core_type = #tpu.core_type<tc>, window_params = [{transform_indices = @transform_0, window_bounds = array<i64: 1, 32, 272>}, {transform_indices = @transform_1, window_bounds = array<i64: 1, 272, 16>}, {transform_indices = @transform_2, window_bounds = array<i64: 1, 1, 16>}, {transform_indices = @transform_3, window_bounds = array<i64: 1, 32, 16>}]} {
    %c0 = arith.constant 0 : index
    %c0_0 = arith.constant 0 : index
    %c0_1 = arith.constant 0 : index
    %0 = vector.load %arg1[%c0, %c0_0, %c0_1] : memref<1x32x272xbf16, #tpu.memory_space<vmem>>, vector<1x32x272xbf16>
    %1 = vector.shape_cast %0 : vector<1x32x272xbf16> to vector<32x272xbf16>
    %c0_2 = arith.constant 0 : index
    %c0_3 = arith.constant 0 : index
    %c0_4 = arith.constant 0 : index
    %2 = vector.load %arg2[%c0_2, %c0_3, %c0_4] : memref<1x272x16xbf16, #tpu.memory_space<vmem>>, vector<1x272x16xbf16>
    %3 = vector.shape_cast %2 : vector<1x272x16xbf16> to vector<272x16xbf16>
    %cst = arith.constant dense<0.000000e+00> : vector<32x16xf32>
    %4 = tpu.matmul %1, %3, %cst {dimension_numbers = #tpu.dot_dimension_numbers<[1], [0], [0], [1], [0, 0, 1, 1], [], []>} : vector<32x272xbf16>, vector<272x16xbf16>, vector<32x16xf32> -> vector<32x16xf32>
    %c0_5 = arith.constant 0 : index
    %c0_6 = arith.constant 0 : index
    %c0_7 = arith.constant 0 : index
    %5 = vector.load %arg3[%c0_5, %c0_6, %c0_7] : memref<1x1x16xf32, #tpu.memory_space<vmem>>, vector<1x1x16xf32>
    %6 = vector.shape_cast %5 : vector<1x1x16xf32> to vector<1x16xf32>
    %7 = vector.broadcast %6 : vector<1x16xf32> to vector<32x16xf32>
    %8 = arith.addf %4, %7 : vector<32x16xf32>
    %cst_8 = arith.constant 0.000000e+00 : f32
    %9 = vector.broadcast %cst_8 : f32 to vector<32x16xf32>
    %10 = arith.maximumf %8, %9 : vector<32x16xf32>
    %11 = arith.truncf %10 : vector<32x16xf32> to vector<32x16xbf16>
    %c0_9 = arith.constant 0 : index
    %c0_10 = arith.constant 0 : index
    %c0_11 = arith.constant 0 : index
    %12 = vector.load %arg4[%c0_9, %c0_10, %c0_11] : memref<1x32x16xbf16, #tpu.memory_space<vmem>>, vector<1x32x16xbf16>
    %13 = vector.shape_cast %12 : vector<1x32x16xbf16> to vector<32x16xbf16>
    %14 = vector.shape_cast %11 : vector<32x16xbf16> to vector<1x32x16xbf16>
    tpu.vector_store %arg4[%c0_9, %c0_10, %c0_11], %14 {strides = array<i32>} : memref<1x32x16xbf16, #tpu.memory_space<vmem>>, vector<1x32x16xbf16>,
    return
  }
  func.func @transform_0(%arg0: i32) -> (i32, i32, i32) {
    %c0_i32 = arith.constant 0 : i32
    %c0_i32_0 = arith.constant 0 : i32
    %c0_i32_1 = arith.constant 0 : i32
    return %arg0, %c0_i32, %c0_i32_0 : i32, i32, i32
  }
  func.func @transform_1(%arg0: i32) -> (i32, i32, i32) {
    %c0_i32 = arith.constant 0 : i32
    %c0_i32_0 = arith.constant 0 : i32
    %c0_i32_1 = arith.constant 0 : i32
    return %arg0, %c0_i32, %c0_i32_0 : i32, i32, i32
  }
  func.func @transform_2(%arg0: i32) -> (i32, i32, i32) {
    %c0_i32 = arith.constant 0 : i32
    %c0_i32_0 = arith.constant 0 : i32
    %c0_i32_1 = arith.constant 0 : i32
    return %arg0, %c0_i32, %c0_i32_0 : i32, i32, i32
  }
  func.func @transform_3(%arg0: i32) -> (i32, i32, i32) {
    %c0_i32 = arith.constant 0 : i32
    %c0_i32_0 = arith.constant 0 : i32
    %c0_i32_1 = arith.constant 0 : i32
    return %arg0, %c0_i32, %c0_i32_0 : i32, i32, i32
  }
}

module attributes {stable_mosaic.version = 11 : i64} {
  func.func @kernel(%arg0: i32, %arg1: memref<1x32x632xbf16, #tpu.memory_space<vmem>>, %arg2: memref<1x32x72xbf16, #tpu.memory_space<vmem>>, %arg3: memref<1x632x8xbf16, #tpu.memory_space<vmem>>, %arg4: memref<1x1x8xf32, #tpu.memory_space<vmem>>, %arg5: memref<1x1x8xf32, #tpu.memory_space<vmem>>, %arg6: memref<32x8xf32, #tpu.memory_space<vmem>>) attributes {dimension_semantics = [#tpu.dimension_semantics<arbitrary>], iteration_bounds = array<i64: 3>, scalar_prefetch = 0 : i64, scratch_operands = 0 : i64, tpu.core_type = #tpu.core_type<tc>, window_params = [{transform_indices = @transform_0, window_bounds = array<i64: 1, 32, 632>}, {transform_indices = @transform_1, window_bounds = array<i64: 1, 32, 72>}, {transform_indices = @transform_2, window_bounds = array<i64: 1, 632, 8>}, {transform_indices = @transform_3, window_bounds = array<i64: 1, 1, 8>}, {transform_indices = @transform_4, window_bounds = array<i64: 1, 1, 8>}, {pipeline_mode = #tpu.pipeline_mode<synchronous>, transform_indices = @transform_5, window_bounds = array<i64: 32, 8>}]} {
    %c0_i32 = arith.constant 0 : i32
    %0 = arith.cmpi eq, %arg0, %c0_i32 : i32
    %1 = arith.extui %0 : i1 to i32
    %c0_i32_0 = arith.constant 0 : i32
    %2 = arith.cmpi ne, %1, %c0_i32_0 : i32
    scf.if %2 {
      %cst_19 = arith.constant 0.000000e+00 : f32
      %40 = vector.broadcast %cst_19 : f32 to vector<32x8xf32>
      %c0_20 = arith.constant 0 : index
      %c0_21 = arith.constant 0 : index
      %41 = vector.load %arg6[%c0_20, %c0_21] : memref<32x8xf32, #tpu.memory_space<vmem>>, vector<32x8xf32>
      tpu.vector_store %arg6[%c0_20, %c0_21], %40 {strides = array<i32>} : memref<32x8xf32, #tpu.memory_space<vmem>>, vector<32x8xf32>,
    } else {
    }
    %c0 = arith.constant 0 : index
    %c0_1 = arith.constant 0 : index
    %c0_2 = arith.constant 0 : index
    %3 = vector.load %arg1[%c0, %c0_1, %c0_2] : memref<1x32x632xbf16, #tpu.memory_space<vmem>>, vector<1x32x632xbf16>
    %4 = vector.shape_cast %3 : vector<1x32x632xbf16> to vector<32x632xbf16>
    %c0_3 = arith.constant 0 : index
    %c0_4 = arith.constant 0 : index
    %c0_5 = arith.constant 0 : index
    %5 = vector.load %arg3[%c0_3, %c0_4, %c0_5] : memref<1x632x8xbf16, #tpu.memory_space<vmem>>, vector<1x632x8xbf16>
    %6 = vector.shape_cast %5 : vector<1x632x8xbf16> to vector<632x8xbf16>
    %cst = arith.constant dense<0.000000e+00> : vector<32x8xf32>
    %7 = tpu.matmul %4, %6, %cst {dimension_numbers = #tpu.dot_dimension_numbers<[1], [0], [0], [1], [0, 0, 1, 1], [], []>} : vector<32x632xbf16>, vector<632x8xbf16>, vector<32x8xf32> -> vector<32x8xf32>
    %c0_6 = arith.constant 0 : index
    %c0_7 = arith.constant 0 : index
    %c0_8 = arith.constant 0 : index
    %8 = vector.load %arg2[%c0_6, %c0_7, %c0_8] : memref<1x32x72xbf16, #tpu.memory_space<vmem>>, vector<1x32x72xbf16>
    %9 = vector.shape_cast %8 : vector<1x32x72xbf16> to vector<32x72xbf16>
    %10 = arith.extf %9 : vector<32x72xbf16> to vector<32x72xf32>
    %11 = vector.extract_strided_slice %10 {offsets = [0, 0], sizes = [32, 8], strides = [1, 1]} : vector<32x72xf32> to vector<32x8xf32>
    %12 = vector.extract_strided_slice %10 {offsets = [0, 8], sizes = [32, 8], strides = [1, 1]} : vector<32x72xf32> to vector<32x8xf32>
    %13 = arith.maximumf %11, %12 : vector<32x8xf32>
    %14 = vector.extract_strided_slice %10 {offsets = [0, 16], sizes = [32, 8], strides = [1, 1]} : vector<32x72xf32> to vector<32x8xf32>
    %15 = arith.maximumf %13, %14 : vector<32x8xf32>
    %16 = vector.extract_strided_slice %10 {offsets = [0, 24], sizes = [32, 8], strides = [1, 1]} : vector<32x72xf32> to vector<32x8xf32>
    %17 = arith.maximumf %15, %16 : vector<32x8xf32>
    %18 = vector.extract_strided_slice %10 {offsets = [0, 32], sizes = [32, 8], strides = [1, 1]} : vector<32x72xf32> to vector<32x8xf32>
    %19 = arith.maximumf %17, %18 : vector<32x8xf32>
    %20 = vector.extract_strided_slice %10 {offsets = [0, 40], sizes = [32, 8], strides = [1, 1]} : vector<32x72xf32> to vector<32x8xf32>
    %21 = arith.maximumf %19, %20 : vector<32x8xf32>
    %22 = vector.extract_strided_slice %10 {offsets = [0, 48], sizes = [32, 8], strides = [1, 1]} : vector<32x72xf32> to vector<32x8xf32>
    %23 = arith.maximumf %21, %22 : vector<32x8xf32>
    %24 = vector.extract_strided_slice %10 {offsets = [0, 56], sizes = [32, 8], strides = [1, 1]} : vector<32x72xf32> to vector<32x8xf32>
    %25 = arith.maximumf %23, %24 : vector<32x8xf32>
    %26 = vector.extract_strided_slice %10 {offsets = [0, 64], sizes = [32, 8], strides = [1, 1]} : vector<32x72xf32> to vector<32x8xf32>
    %27 = arith.maximumf %25, %26 : vector<32x8xf32>
    %c0_9 = arith.constant 0 : index
    %c0_10 = arith.constant 0 : index
    %28 = vector.load %arg6[%c0_9, %c0_10] : memref<32x8xf32, #tpu.memory_space<vmem>>, vector<32x8xf32>
    %c0_11 = arith.constant 0 : index
    %c0_12 = arith.constant 0 : index
    %c0_13 = arith.constant 0 : index
    %29 = vector.load %arg4[%c0_11, %c0_12, %c0_13] : memref<1x1x8xf32, #tpu.memory_space<vmem>>, vector<1x1x8xf32>
    %30 = vector.shape_cast %29 : vector<1x1x8xf32> to vector<1x8xf32>
    %31 = vector.broadcast %30 : vector<1x8xf32> to vector<32x8xf32>
    %32 = arith.mulf %27, %31 : vector<32x8xf32>
    %33 = arith.addf %7, %32 : vector<32x8xf32>
    %c0_14 = arith.constant 0 : index
    %c0_15 = arith.constant 0 : index
    %c0_16 = arith.constant 0 : index
    %34 = vector.load %arg5[%c0_14, %c0_15, %c0_16] : memref<1x1x8xf32, #tpu.memory_space<vmem>>, vector<1x1x8xf32>
    %35 = vector.shape_cast %34 : vector<1x1x8xf32> to vector<1x8xf32>
    %36 = vector.broadcast %35 : vector<1x8xf32> to vector<32x8xf32>
    %37 = arith.addf %33, %36 : vector<32x8xf32>
    %38 = arith.addf %28, %37 : vector<32x8xf32>
    %c0_17 = arith.constant 0 : index
    %c0_18 = arith.constant 0 : index
    %39 = vector.load %arg6[%c0_17, %c0_18] : memref<32x8xf32, #tpu.memory_space<vmem>>, vector<32x8xf32>
    tpu.vector_store %arg6[%c0_17, %c0_18], %38 {strides = array<i32>} : memref<32x8xf32, #tpu.memory_space<vmem>>, vector<32x8xf32>,
    return
  }
  func.func @transform_0(%arg0: i32) -> (i32, i32, i32) {
    %c0_i32 = arith.constant 0 : i32
    %c0_i32_0 = arith.constant 0 : i32
    %c0_i32_1 = arith.constant 0 : i32
    return %arg0, %c0_i32, %c0_i32_0 : i32, i32, i32
  }
  func.func @transform_1(%arg0: i32) -> (i32, i32, i32) {
    %c0_i32 = arith.constant 0 : i32
    %c0_i32_0 = arith.constant 0 : i32
    %c0_i32_1 = arith.constant 0 : i32
    return %arg0, %c0_i32, %c0_i32_0 : i32, i32, i32
  }
  func.func @transform_2(%arg0: i32) -> (i32, i32, i32) {
    %c0_i32 = arith.constant 0 : i32
    %c0_i32_0 = arith.constant 0 : i32
    %c0_i32_1 = arith.constant 0 : i32
    return %arg0, %c0_i32, %c0_i32_0 : i32, i32, i32
  }
  func.func @transform_3(%arg0: i32) -> (i32, i32, i32) {
    %c0_i32 = arith.constant 0 : i32
    %c0_i32_0 = arith.constant 0 : i32
    %c0_i32_1 = arith.constant 0 : i32
    return %arg0, %c0_i32, %c0_i32_0 : i32, i32, i32
  }
  func.func @transform_4(%arg0: i32) -> (i32, i32, i32) {
    %c0_i32 = arith.constant 0 : i32
    %c0_i32_0 = arith.constant 0 : i32
    %c0_i32_1 = arith.constant 0 : i32
    return %arg0, %c0_i32, %c0_i32_0 : i32, i32, i32
  }
  func.func @transform_5(%arg0: i32) -> (i32, i32) {
    %c0_i32 = arith.constant 0 : i32
    %c0_i32_0 = arith.constant 0 : i32
    %c0_i32_1 = arith.constant 0 : i32
    return %c0_i32, %c0_i32_0 : i32, i32
  }
}

module attributes {stable_mosaic.version = 11 : i64} {
  func.func @_sep_stage1_kernel(%arg0: i32, %arg1: memref<1x32x272xbf16, #tpu.memory_space<vmem>>, %arg2: memref<1x272x16xbf16, #tpu.memory_space<vmem>>, %arg3: memref<1x1x16xf32, #tpu.memory_space<vmem>>, %arg4: memref<1x32x16xbf16, #tpu.memory_space<vmem>>) attributes {dimension_semantics = [#tpu.dimension_semantics<parallel>], iteration_bounds = array<i64: 4>, scalar_prefetch = 0 : i64, scratch_operands = 0 : i64, tpu.core_type = #tpu.core_type<tc>, window_params = [{transform_indices = @transform_0, window_bounds = array<i64: 1, 32, 272>}, {transform_indices = @transform_1, window_bounds = array<i64: 1, 272, 16>}, {transform_indices = @transform_2, window_bounds = array<i64: 1, 1, 16>}, {transform_indices = @transform_3, window_bounds = array<i64: 1, 32, 16>}]} {
    %c0 = arith.constant 0 : index
    %c0_0 = arith.constant 0 : index
    %c0_1 = arith.constant 0 : index
    %0 = vector.load %arg1[%c0, %c0_0, %c0_1] : memref<1x32x272xbf16, #tpu.memory_space<vmem>>, vector<1x32x272xbf16>
    %1 = vector.shape_cast %0 : vector<1x32x272xbf16> to vector<32x272xbf16>
    %c0_2 = arith.constant 0 : index
    %c0_3 = arith.constant 0 : index
    %c0_4 = arith.constant 0 : index
    %2 = vector.load %arg2[%c0_2, %c0_3, %c0_4] : memref<1x272x16xbf16, #tpu.memory_space<vmem>>, vector<1x272x16xbf16>
    %3 = vector.shape_cast %2 : vector<1x272x16xbf16> to vector<272x16xbf16>
    %cst = arith.constant dense<0.000000e+00> : vector<32x16xf32>
    %4 = tpu.matmul %1, %3, %cst {dimension_numbers = #tpu.dot_dimension_numbers<[1], [0], [0], [1], [0, 0, 1, 1], [], []>} : vector<32x272xbf16>, vector<272x16xbf16>, vector<32x16xf32> -> vector<32x16xf32>
    %c0_5 = arith.constant 0 : index
    %c0_6 = arith.constant 0 : index
    %c0_7 = arith.constant 0 : index
    %5 = vector.load %arg3[%c0_5, %c0_6, %c0_7] : memref<1x1x16xf32, #tpu.memory_space<vmem>>, vector<1x1x16xf32>
    %6 = vector.shape_cast %5 : vector<1x1x16xf32> to vector<1x16xf32>
    %7 = vector.broadcast %6 : vector<1x16xf32> to vector<32x16xf32>
    %8 = arith.addf %4, %7 : vector<32x16xf32>
    %cst_8 = arith.constant 0.000000e+00 : f32
    %9 = vector.broadcast %cst_8 : f32 to vector<32x16xf32>
    %10 = arith.maximumf %8, %9 : vector<32x16xf32>
    %11 = arith.truncf %10 : vector<32x16xf32> to vector<32x16xbf16>
    %c0_9 = arith.constant 0 : index
    %c0_10 = arith.constant 0 : index
    %c0_11 = arith.constant 0 : index
    %12 = vector.load %arg4[%c0_9, %c0_10, %c0_11] : memref<1x32x16xbf16, #tpu.memory_space<vmem>>, vector<1x32x16xbf16>
    %13 = vector.shape_cast %12 : vector<1x32x16xbf16> to vector<32x16xbf16>
    %14 = vector.shape_cast %11 : vector<32x16xbf16> to vector<1x32x16xbf16>
    tpu.vector_store %arg4[%c0_9, %c0_10, %c0_11], %14 {strides = array<i32>} : memref<1x32x16xbf16, #tpu.memory_space<vmem>>, vector<1x32x16xbf16>,
    return
  }
  func.func @transform_0(%arg0: i32) -> (i32, i32, i32) {
    %c0_i32 = arith.constant 0 : i32
    %c0_i32_0 = arith.constant 0 : i32
    %c0_i32_1 = arith.constant 0 : i32
    return %arg0, %c0_i32, %c0_i32_0 : i32, i32, i32
  }
  func.func @transform_1(%arg0: i32) -> (i32, i32, i32) {
    %c0_i32 = arith.constant 0 : i32
    %c0_i32_0 = arith.constant 0 : i32
    %c0_i32_1 = arith.constant 0 : i32
    return %arg0, %c0_i32, %c0_i32_0 : i32, i32, i32
  }
  func.func @transform_2(%arg0: i32) -> (i32, i32, i32) {
    %c0_i32 = arith.constant 0 : i32
    %c0_i32_0 = arith.constant 0 : i32
    %c0_i32_1 = arith.constant 0 : i32
    return %arg0, %c0_i32, %c0_i32_0 : i32, i32, i32
  }
  func.func @transform_3(%arg0: i32) -> (i32, i32, i32) {
    %c0_i32 = arith.constant 0 : i32
    %c0_i32_0 = arith.constant 0 : i32
    %c0_i32_1 = arith.constant 0 : i32
    return %arg0, %c0_i32, %c0_i32_0 : i32, i32, i32
  }
}

module attributes {stable_mosaic.version = 11 : i64} {
  func.func @kernel(%arg0: i32, %arg1: memref<1x32x632xbf16, #tpu.memory_space<vmem>>, %arg2: memref<1x32x72xbf16, #tpu.memory_space<vmem>>, %arg3: memref<1x632x8xbf16, #tpu.memory_space<vmem>>, %arg4: memref<1x1x8xf32, #tpu.memory_space<vmem>>, %arg5: memref<1x1x8xf32, #tpu.memory_space<vmem>>, %arg6: memref<32x8xf32, #tpu.memory_space<vmem>>) attributes {dimension_semantics = [#tpu.dimension_semantics<arbitrary>], iteration_bounds = array<i64: 4>, scalar_prefetch = 0 : i64, scratch_operands = 0 : i64, tpu.core_type = #tpu.core_type<tc>, window_params = [{transform_indices = @transform_0, window_bounds = array<i64: 1, 32, 632>}, {transform_indices = @transform_1, window_bounds = array<i64: 1, 32, 72>}, {transform_indices = @transform_2, window_bounds = array<i64: 1, 632, 8>}, {transform_indices = @transform_3, window_bounds = array<i64: 1, 1, 8>}, {transform_indices = @transform_4, window_bounds = array<i64: 1, 1, 8>}, {pipeline_mode = #tpu.pipeline_mode<synchronous>, transform_indices = @transform_5, window_bounds = array<i64: 32, 8>}]} {
    %c0_i32 = arith.constant 0 : i32
    %0 = arith.cmpi eq, %arg0, %c0_i32 : i32
    %1 = arith.extui %0 : i1 to i32
    %c0_i32_0 = arith.constant 0 : i32
    %2 = arith.cmpi ne, %1, %c0_i32_0 : i32
    scf.if %2 {
      %cst_19 = arith.constant 0.000000e+00 : f32
      %40 = vector.broadcast %cst_19 : f32 to vector<32x8xf32>
      %c0_20 = arith.constant 0 : index
      %c0_21 = arith.constant 0 : index
      %41 = vector.load %arg6[%c0_20, %c0_21] : memref<32x8xf32, #tpu.memory_space<vmem>>, vector<32x8xf32>
      tpu.vector_store %arg6[%c0_20, %c0_21], %40 {strides = array<i32>} : memref<32x8xf32, #tpu.memory_space<vmem>>, vector<32x8xf32>,
    } else {
    }
    %c0 = arith.constant 0 : index
    %c0_1 = arith.constant 0 : index
    %c0_2 = arith.constant 0 : index
    %3 = vector.load %arg1[%c0, %c0_1, %c0_2] : memref<1x32x632xbf16, #tpu.memory_space<vmem>>, vector<1x32x632xbf16>
    %4 = vector.shape_cast %3 : vector<1x32x632xbf16> to vector<32x632xbf16>
    %c0_3 = arith.constant 0 : index
    %c0_4 = arith.constant 0 : index
    %c0_5 = arith.constant 0 : index
    %5 = vector.load %arg3[%c0_3, %c0_4, %c0_5] : memref<1x632x8xbf16, #tpu.memory_space<vmem>>, vector<1x632x8xbf16>
    %6 = vector.shape_cast %5 : vector<1x632x8xbf16> to vector<632x8xbf16>
    %cst = arith.constant dense<0.000000e+00> : vector<32x8xf32>
    %7 = tpu.matmul %4, %6, %cst {dimension_numbers = #tpu.dot_dimension_numbers<[1], [0], [0], [1], [0, 0, 1, 1], [], []>} : vector<32x632xbf16>, vector<632x8xbf16>, vector<32x8xf32> -> vector<32x8xf32>
    %c0_6 = arith.constant 0 : index
    %c0_7 = arith.constant 0 : index
    %c0_8 = arith.constant 0 : index
    %8 = vector.load %arg2[%c0_6, %c0_7, %c0_8] : memref<1x32x72xbf16, #tpu.memory_space<vmem>>, vector<1x32x72xbf16>
    %9 = vector.shape_cast %8 : vector<1x32x72xbf16> to vector<32x72xbf16>
    %10 = arith.extf %9 : vector<32x72xbf16> to vector<32x72xf32>
    %11 = vector.extract_strided_slice %10 {offsets = [0, 0], sizes = [32, 8], strides = [1, 1]} : vector<32x72xf32> to vector<32x8xf32>
    %12 = vector.extract_strided_slice %10 {offsets = [0, 8], sizes = [32, 8], strides = [1, 1]} : vector<32x72xf32> to vector<32x8xf32>
    %13 = arith.maximumf %11, %12 : vector<32x8xf32>
    %14 = vector.extract_strided_slice %10 {offsets = [0, 16], sizes = [32, 8], strides = [1, 1]} : vector<32x72xf32> to vector<32x8xf32>
    %15 = arith.maximumf %13, %14 : vector<32x8xf32>
    %16 = vector.extract_strided_slice %10 {offsets = [0, 24], sizes = [32, 8], strides = [1, 1]} : vector<32x72xf32> to vector<32x8xf32>
    %17 = arith.maximumf %15, %16 : vector<32x8xf32>
    %18 = vector.extract_strided_slice %10 {offsets = [0, 32], sizes = [32, 8], strides = [1, 1]} : vector<32x72xf32> to vector<32x8xf32>
    %19 = arith.maximumf %17, %18 : vector<32x8xf32>
    %20 = vector.extract_strided_slice %10 {offsets = [0, 40], sizes = [32, 8], strides = [1, 1]} : vector<32x72xf32> to vector<32x8xf32>
    %21 = arith.maximumf %19, %20 : vector<32x8xf32>
    %22 = vector.extract_strided_slice %10 {offsets = [0, 48], sizes = [32, 8], strides = [1, 1]} : vector<32x72xf32> to vector<32x8xf32>
    %23 = arith.maximumf %21, %22 : vector<32x8xf32>
    %24 = vector.extract_strided_slice %10 {offsets = [0, 56], sizes = [32, 8], strides = [1, 1]} : vector<32x72xf32> to vector<32x8xf32>
    %25 = arith.maximumf %23, %24 : vector<32x8xf32>
    %26 = vector.extract_strided_slice %10 {offsets = [0, 64], sizes = [32, 8], strides = [1, 1]} : vector<32x72xf32> to vector<32x8xf32>
    %27 = arith.maximumf %25, %26 : vector<32x8xf32>
    %c0_9 = arith.constant 0 : index
    %c0_10 = arith.constant 0 : index
    %28 = vector.load %arg6[%c0_9, %c0_10] : memref<32x8xf32, #tpu.memory_space<vmem>>, vector<32x8xf32>
    %c0_11 = arith.constant 0 : index
    %c0_12 = arith.constant 0 : index
    %c0_13 = arith.constant 0 : index
    %29 = vector.load %arg4[%c0_11, %c0_12, %c0_13] : memref<1x1x8xf32, #tpu.memory_space<vmem>>, vector<1x1x8xf32>
    %30 = vector.shape_cast %29 : vector<1x1x8xf32> to vector<1x8xf32>
    %31 = vector.broadcast %30 : vector<1x8xf32> to vector<32x8xf32>
    %32 = arith.mulf %27, %31 : vector<32x8xf32>
    %33 = arith.addf %7, %32 : vector<32x8xf32>
    %c0_14 = arith.constant 0 : index
    %c0_15 = arith.constant 0 : index
    %c0_16 = arith.constant 0 : index
    %34 = vector.load %arg5[%c0_14, %c0_15, %c0_16] : memref<1x1x8xf32, #tpu.memory_space<vmem>>, vector<1x1x8xf32>
    %35 = vector.shape_cast %34 : vector<1x1x8xf32> to vector<1x8xf32>
    %36 = vector.broadcast %35 : vector<1x8xf32> to vector<32x8xf32>
    %37 = arith.addf %33, %36 : vector<32x8xf32>
    %38 = arith.addf %28, %37 : vector<32x8xf32>
    %c0_17 = arith.constant 0 : index
    %c0_18 = arith.constant 0 : index
    %39 = vector.load %arg6[%c0_17, %c0_18] : memref<32x8xf32, #tpu.memory_space<vmem>>, vector<32x8xf32>
    tpu.vector_store %arg6[%c0_17, %c0_18], %38 {strides = array<i32>} : memref<32x8xf32, #tpu.memory_space<vmem>>, vector<32x8xf32>,
    return
  }
  func.func @transform_0(%arg0: i32) -> (i32, i32, i32) {
    %c0_i32 = arith.constant 0 : i32
    %c0_i32_0 = arith.constant 0 : i32
    %c0_i32_1 = arith.constant 0 : i32
    return %arg0, %c0_i32, %c0_i32_0 : i32, i32, i32
  }
  func.func @transform_1(%arg0: i32) -> (i32, i32, i32) {
    %c0_i32 = arith.constant 0 : i32
    %c0_i32_0 = arith.constant 0 : i32
    %c0_i32_1 = arith.constant 0 : i32
    return %arg0, %c0_i32, %c0_i32_0 : i32, i32, i32
  }
  func.func @transform_2(%arg0: i32) -> (i32, i32, i32) {
    %c0_i32 = arith.constant 0 : i32
    %c0_i32_0 = arith.constant 0 : i32
    %c0_i32_1 = arith.constant 0 : i32
    return %arg0, %c0_i32, %c0_i32_0 : i32, i32, i32
  }
  func.func @transform_3(%arg0: i32) -> (i32, i32, i32) {
    %c0_i32 = arith.constant 0 : i32
    %c0_i32_0 = arith.constant 0 : i32
    %c0_i32_1 = arith.constant 0 : i32
    return %arg0, %c0_i32, %c0_i32_0 : i32, i32, i32
  }
  func.func @transform_4(%arg0: i32) -> (i32, i32, i32) {
    %c0_i32 = arith.constant 0 : i32
    %c0_i32_0 = arith.constant 0 : i32
    %c0_i32_1 = arith.constant 0 : i32
    return %arg0, %c0_i32, %c0_i32_0 : i32, i32, i32
  }
  func.func @transform_5(%arg0: i32) -> (i32, i32) {
    %c0_i32 = arith.constant 0 : i32
    %c0_i32_0 = arith.constant 0 : i32
    %c0_i32_1 = arith.constant 0 : i32
    return %c0_i32, %c0_i32_0 : i32, i32
  }
}

module attributes {stable_mosaic.version = 11 : i64} {
  func.func @_sep_stage1_kernel(%arg0: i32, %arg1: memref<1x32x272xbf16, #tpu.memory_space<vmem>>, %arg2: memref<1x272x16xbf16, #tpu.memory_space<vmem>>, %arg3: memref<1x1x16xf32, #tpu.memory_space<vmem>>, %arg4: memref<1x32x16xbf16, #tpu.memory_space<vmem>>) attributes {dimension_semantics = [#tpu.dimension_semantics<parallel>], iteration_bounds = array<i64: 5>, scalar_prefetch = 0 : i64, scratch_operands = 0 : i64, tpu.core_type = #tpu.core_type<tc>, window_params = [{transform_indices = @transform_0, window_bounds = array<i64: 1, 32, 272>}, {transform_indices = @transform_1, window_bounds = array<i64: 1, 272, 16>}, {transform_indices = @transform_2, window_bounds = array<i64: 1, 1, 16>}, {transform_indices = @transform_3, window_bounds = array<i64: 1, 32, 16>}]} {
    %c0 = arith.constant 0 : index
    %c0_0 = arith.constant 0 : index
    %c0_1 = arith.constant 0 : index
    %0 = vector.load %arg1[%c0, %c0_0, %c0_1] : memref<1x32x272xbf16, #tpu.memory_space<vmem>>, vector<1x32x272xbf16>
    %1 = vector.shape_cast %0 : vector<1x32x272xbf16> to vector<32x272xbf16>
    %c0_2 = arith.constant 0 : index
    %c0_3 = arith.constant 0 : index
    %c0_4 = arith.constant 0 : index
    %2 = vector.load %arg2[%c0_2, %c0_3, %c0_4] : memref<1x272x16xbf16, #tpu.memory_space<vmem>>, vector<1x272x16xbf16>
    %3 = vector.shape_cast %2 : vector<1x272x16xbf16> to vector<272x16xbf16>
    %cst = arith.constant dense<0.000000e+00> : vector<32x16xf32>
    %4 = tpu.matmul %1, %3, %cst {dimension_numbers = #tpu.dot_dimension_numbers<[1], [0], [0], [1], [0, 0, 1, 1], [], []>} : vector<32x272xbf16>, vector<272x16xbf16>, vector<32x16xf32> -> vector<32x16xf32>
    %c0_5 = arith.constant 0 : index
    %c0_6 = arith.constant 0 : index
    %c0_7 = arith.constant 0 : index
    %5 = vector.load %arg3[%c0_5, %c0_6, %c0_7] : memref<1x1x16xf32, #tpu.memory_space<vmem>>, vector<1x1x16xf32>
    %6 = vector.shape_cast %5 : vector<1x1x16xf32> to vector<1x16xf32>
    %7 = vector.broadcast %6 : vector<1x16xf32> to vector<32x16xf32>
    %8 = arith.addf %4, %7 : vector<32x16xf32>
    %cst_8 = arith.constant 0.000000e+00 : f32
    %9 = vector.broadcast %cst_8 : f32 to vector<32x16xf32>
    %10 = arith.maximumf %8, %9 : vector<32x16xf32>
    %11 = arith.truncf %10 : vector<32x16xf32> to vector<32x16xbf16>
    %c0_9 = arith.constant 0 : index
    %c0_10 = arith.constant 0 : index
    %c0_11 = arith.constant 0 : index
    %12 = vector.load %arg4[%c0_9, %c0_10, %c0_11] : memref<1x32x16xbf16, #tpu.memory_space<vmem>>, vector<1x32x16xbf16>
    %13 = vector.shape_cast %12 : vector<1x32x16xbf16> to vector<32x16xbf16>
    %14 = vector.shape_cast %11 : vector<32x16xbf16> to vector<1x32x16xbf16>
    tpu.vector_store %arg4[%c0_9, %c0_10, %c0_11], %14 {strides = array<i32>} : memref<1x32x16xbf16, #tpu.memory_space<vmem>>, vector<1x32x16xbf16>,
    return
  }
  func.func @transform_0(%arg0: i32) -> (i32, i32, i32) {
    %c0_i32 = arith.constant 0 : i32
    %c0_i32_0 = arith.constant 0 : i32
    %c0_i32_1 = arith.constant 0 : i32
    return %arg0, %c0_i32, %c0_i32_0 : i32, i32, i32
  }
  func.func @transform_1(%arg0: i32) -> (i32, i32, i32) {
    %c0_i32 = arith.constant 0 : i32
    %c0_i32_0 = arith.constant 0 : i32
    %c0_i32_1 = arith.constant 0 : i32
    return %arg0, %c0_i32, %c0_i32_0 : i32, i32, i32
  }
  func.func @transform_2(%arg0: i32) -> (i32, i32, i32) {
    %c0_i32 = arith.constant 0 : i32
    %c0_i32_0 = arith.constant 0 : i32
    %c0_i32_1 = arith.constant 0 : i32
    return %arg0, %c0_i32, %c0_i32_0 : i32, i32, i32
  }
  func.func @transform_3(%arg0: i32) -> (i32, i32, i32) {
    %c0_i32 = arith.constant 0 : i32
    %c0_i32_0 = arith.constant 0 : i32
    %c0_i32_1 = arith.constant 0 : i32
    return %arg0, %c0_i32, %c0_i32_0 : i32, i32, i32
  }
}

module attributes {stable_mosaic.version = 11 : i64} {
  func.func @kernel(%arg0: i32, %arg1: memref<1x32x632xbf16, #tpu.memory_space<vmem>>, %arg2: memref<1x32x72xbf16, #tpu.memory_space<vmem>>, %arg3: memref<1x632x8xbf16, #tpu.memory_space<vmem>>, %arg4: memref<1x1x8xf32, #tpu.memory_space<vmem>>, %arg5: memref<1x1x8xf32, #tpu.memory_space<vmem>>, %arg6: memref<32x8xf32, #tpu.memory_space<vmem>>) attributes {dimension_semantics = [#tpu.dimension_semantics<arbitrary>], iteration_bounds = array<i64: 5>, scalar_prefetch = 0 : i64, scratch_operands = 0 : i64, tpu.core_type = #tpu.core_type<tc>, window_params = [{transform_indices = @transform_0, window_bounds = array<i64: 1, 32, 632>}, {transform_indices = @transform_1, window_bounds = array<i64: 1, 32, 72>}, {transform_indices = @transform_2, window_bounds = array<i64: 1, 632, 8>}, {transform_indices = @transform_3, window_bounds = array<i64: 1, 1, 8>}, {transform_indices = @transform_4, window_bounds = array<i64: 1, 1, 8>}, {pipeline_mode = #tpu.pipeline_mode<synchronous>, transform_indices = @transform_5, window_bounds = array<i64: 32, 8>}]} {
    %c0_i32 = arith.constant 0 : i32
    %0 = arith.cmpi eq, %arg0, %c0_i32 : i32
    %1 = arith.extui %0 : i1 to i32
    %c0_i32_0 = arith.constant 0 : i32
    %2 = arith.cmpi ne, %1, %c0_i32_0 : i32
    scf.if %2 {
      %cst_19 = arith.constant 0.000000e+00 : f32
      %40 = vector.broadcast %cst_19 : f32 to vector<32x8xf32>
      %c0_20 = arith.constant 0 : index
      %c0_21 = arith.constant 0 : index
      %41 = vector.load %arg6[%c0_20, %c0_21] : memref<32x8xf32, #tpu.memory_space<vmem>>, vector<32x8xf32>
      tpu.vector_store %arg6[%c0_20, %c0_21], %40 {strides = array<i32>} : memref<32x8xf32, #tpu.memory_space<vmem>>, vector<32x8xf32>,
    } else {
    }
    %c0 = arith.constant 0 : index
    %c0_1 = arith.constant 0 : index
    %c0_2 = arith.constant 0 : index
    %3 = vector.load %arg1[%c0, %c0_1, %c0_2] : memref<1x32x632xbf16, #tpu.memory_space<vmem>>, vector<1x32x632xbf16>
    %4 = vector.shape_cast %3 : vector<1x32x632xbf16> to vector<32x632xbf16>
    %c0_3 = arith.constant 0 : index
    %c0_4 = arith.constant 0 : index
    %c0_5 = arith.constant 0 : index
    %5 = vector.load %arg3[%c0_3, %c0_4, %c0_5] : memref<1x632x8xbf16, #tpu.memory_space<vmem>>, vector<1x632x8xbf16>
    %6 = vector.shape_cast %5 : vector<1x632x8xbf16> to vector<632x8xbf16>
    %cst = arith.constant dense<0.000000e+00> : vector<32x8xf32>
    %7 = tpu.matmul %4, %6, %cst {dimension_numbers = #tpu.dot_dimension_numbers<[1], [0], [0], [1], [0, 0, 1, 1], [], []>} : vector<32x632xbf16>, vector<632x8xbf16>, vector<32x8xf32> -> vector<32x8xf32>
    %c0_6 = arith.constant 0 : index
    %c0_7 = arith.constant 0 : index
    %c0_8 = arith.constant 0 : index
    %8 = vector.load %arg2[%c0_6, %c0_7, %c0_8] : memref<1x32x72xbf16, #tpu.memory_space<vmem>>, vector<1x32x72xbf16>
    %9 = vector.shape_cast %8 : vector<1x32x72xbf16> to vector<32x72xbf16>
    %10 = arith.extf %9 : vector<32x72xbf16> to vector<32x72xf32>
    %11 = vector.extract_strided_slice %10 {offsets = [0, 0], sizes = [32, 8], strides = [1, 1]} : vector<32x72xf32> to vector<32x8xf32>
    %12 = vector.extract_strided_slice %10 {offsets = [0, 8], sizes = [32, 8], strides = [1, 1]} : vector<32x72xf32> to vector<32x8xf32>
    %13 = arith.maximumf %11, %12 : vector<32x8xf32>
    %14 = vector.extract_strided_slice %10 {offsets = [0, 16], sizes = [32, 8], strides = [1, 1]} : vector<32x72xf32> to vector<32x8xf32>
    %15 = arith.maximumf %13, %14 : vector<32x8xf32>
    %16 = vector.extract_strided_slice %10 {offsets = [0, 24], sizes = [32, 8], strides = [1, 1]} : vector<32x72xf32> to vector<32x8xf32>
    %17 = arith.maximumf %15, %16 : vector<32x8xf32>
    %18 = vector.extract_strided_slice %10 {offsets = [0, 32], sizes = [32, 8], strides = [1, 1]} : vector<32x72xf32> to vector<32x8xf32>
    %19 = arith.maximumf %17, %18 : vector<32x8xf32>
    %20 = vector.extract_strided_slice %10 {offsets = [0, 40], sizes = [32, 8], strides = [1, 1]} : vector<32x72xf32> to vector<32x8xf32>
    %21 = arith.maximumf %19, %20 : vector<32x8xf32>
    %22 = vector.extract_strided_slice %10 {offsets = [0, 48], sizes = [32, 8], strides = [1, 1]} : vector<32x72xf32> to vector<32x8xf32>
    %23 = arith.maximumf %21, %22 : vector<32x8xf32>
    %24 = vector.extract_strided_slice %10 {offsets = [0, 56], sizes = [32, 8], strides = [1, 1]} : vector<32x72xf32> to vector<32x8xf32>
    %25 = arith.maximumf %23, %24 : vector<32x8xf32>
    %26 = vector.extract_strided_slice %10 {offsets = [0, 64], sizes = [32, 8], strides = [1, 1]} : vector<32x72xf32> to vector<32x8xf32>
    %27 = arith.maximumf %25, %26 : vector<32x8xf32>
    %c0_9 = arith.constant 0 : index
    %c0_10 = arith.constant 0 : index
    %28 = vector.load %arg6[%c0_9, %c0_10] : memref<32x8xf32, #tpu.memory_space<vmem>>, vector<32x8xf32>
    %c0_11 = arith.constant 0 : index
    %c0_12 = arith.constant 0 : index
    %c0_13 = arith.constant 0 : index
    %29 = vector.load %arg4[%c0_11, %c0_12, %c0_13] : memref<1x1x8xf32, #tpu.memory_space<vmem>>, vector<1x1x8xf32>
    %30 = vector.shape_cast %29 : vector<1x1x8xf32> to vector<1x8xf32>
    %31 = vector.broadcast %30 : vector<1x8xf32> to vector<32x8xf32>
    %32 = arith.mulf %27, %31 : vector<32x8xf32>
    %33 = arith.addf %7, %32 : vector<32x8xf32>
    %c0_14 = arith.constant 0 : index
    %c0_15 = arith.constant 0 : index
    %c0_16 = arith.constant 0 : index
    %34 = vector.load %arg5[%c0_14, %c0_15, %c0_16] : memref<1x1x8xf32, #tpu.memory_space<vmem>>, vector<1x1x8xf32>
    %35 = vector.shape_cast %34 : vector<1x1x8xf32> to vector<1x8xf32>
    %36 = vector.broadcast %35 : vector<1x8xf32> to vector<32x8xf32>
    %37 = arith.addf %33, %36 : vector<32x8xf32>
    %38 = arith.addf %28, %37 : vector<32x8xf32>
    %c0_17 = arith.constant 0 : index
    %c0_18 = arith.constant 0 : index
    %39 = vector.load %arg6[%c0_17, %c0_18] : memref<32x8xf32, #tpu.memory_space<vmem>>, vector<32x8xf32>
    tpu.vector_store %arg6[%c0_17, %c0_18], %38 {strides = array<i32>} : memref<32x8xf32, #tpu.memory_space<vmem>>, vector<32x8xf32>,
    return
  }
  func.func @transform_0(%arg0: i32) -> (i32, i32, i32) {
    %c0_i32 = arith.constant 0 : i32
    %c0_i32_0 = arith.constant 0 : i32
    %c0_i32_1 = arith.constant 0 : i32
    return %arg0, %c0_i32, %c0_i32_0 : i32, i32, i32
  }
  func.func @transform_1(%arg0: i32) -> (i32, i32, i32) {
    %c0_i32 = arith.constant 0 : i32
    %c0_i32_0 = arith.constant 0 : i32
    %c0_i32_1 = arith.constant 0 : i32
    return %arg0, %c0_i32, %c0_i32_0 : i32, i32, i32
  }
  func.func @transform_2(%arg0: i32) -> (i32, i32, i32) {
    %c0_i32 = arith.constant 0 : i32
    %c0_i32_0 = arith.constant 0 : i32
    %c0_i32_1 = arith.constant 0 : i32
    return %arg0, %c0_i32, %c0_i32_0 : i32, i32, i32
  }
  func.func @transform_3(%arg0: i32) -> (i32, i32, i32) {
    %c0_i32 = arith.constant 0 : i32
    %c0_i32_0 = arith.constant 0 : i32
    %c0_i32_1 = arith.constant 0 : i32
    return %arg0, %c0_i32, %c0_i32_0 : i32, i32, i32
  }
  func.func @transform_4(%arg0: i32) -> (i32, i32, i32) {
    %c0_i32 = arith.constant 0 : i32
    %c0_i32_0 = arith.constant 0 : i32
    %c0_i32_1 = arith.constant 0 : i32
    return %arg0, %c0_i32, %c0_i32_0 : i32, i32, i32
  }
  func.func @transform_5(%arg0: i32) -> (i32, i32) {
    %c0_i32 = arith.constant 0 : i32
    %c0_i32_0 = arith.constant 0 : i32
    %c0_i32_1 = arith.constant 0 : i32
    return %c0_i32, %c0_i32_0 : i32, i32
  }
}

module attributes {stable_mosaic.version = 11 : i64} {
  func.func @_pool_cls_kernel(%arg0: memref<2x16x32xf32, #tpu.memory_space<vmem>>, %arg1: memref<32x10xbf16, #tpu.memory_space<vmem>>, %arg2: memref<1x10xf32, #tpu.memory_space<vmem>>, %arg3: memref<2x10xf32, #tpu.memory_space<vmem>>) attributes {dimension_semantics = [], scalar_prefetch = 0 : i64, scratch_operands = 0 : i64, tpu.core_type = #tpu.core_type<tc>} {
    %c0 = arith.constant 0 : index
    %c0_0 = arith.constant 0 : index
    %c0_1 = arith.constant 0 : index
    %0 = vector.load %arg0[%c0, %c0_0, %c0_1] : memref<2x16x32xf32, #tpu.memory_space<vmem>>, vector<2x16x32xf32>
    %cst = arith.constant dense<0.000000e+00> : vector<2x32xf32>
    %1 = vector.multi_reduction <add>, %0, %cst [1] : vector<2x16x32xf32> to vector<2x32xf32>
    %cst_2 = arith.constant 1.600000e+01 : f32
    %2 = vector.broadcast %cst_2 : f32 to vector<2x32xf32>
    %3 = arith.divf %1, %2 : vector<2x32xf32>
    %4 = arith.truncf %3 : vector<2x32xf32> to vector<2x32xbf16>
    %c0_3 = arith.constant 0 : index
    %c0_4 = arith.constant 0 : index
    %5 = vector.load %arg1[%c0_3, %c0_4] : memref<32x10xbf16, #tpu.memory_space<vmem>>, vector<32x10xbf16>
    %cst_5 = arith.constant dense<0.000000e+00> : vector<2x10xf32>
    %6 = tpu.matmul %4, %5, %cst_5 {dimension_numbers = #tpu.dot_dimension_numbers<[1], [0], [0], [1], [0, 0, 1, 1], [], []>} : vector<2x32xbf16>, vector<32x10xbf16>, vector<2x10xf32> -> vector<2x10xf32>
    %c0_6 = arith.constant 0 : index
    %c0_7 = arith.constant 0 : index
    %7 = vector.load %arg2[%c0_6, %c0_7] : memref<1x10xf32, #tpu.memory_space<vmem>>, vector<1x10xf32>
    %8 = vector.broadcast %7 : vector<1x10xf32> to vector<2x10xf32>
    %9 = arith.addf %6, %8 : vector<2x10xf32>
    %c0_8 = arith.constant 0 : index
    %c0_9 = arith.constant 0 : index
    %10 = vector.load %arg3[%c0_8, %c0_9] : memref<2x10xf32, #tpu.memory_space<vmem>>, vector<2x10xf32>
    tpu.vector_store %arg3[%c0_8, %c0_9], %9 {strides = array<i32>} : memref<2x10xf32, #tpu.memory_space<vmem>>, vector<2x10xf32>,
    return
  }
}

</mosaic_0001>

<llo_original>
// kernel: _lambda_.11
$region0: #{_lambda_.11}
  #allocation0 [shape = 'u32[]', space=smem, size = 0x4, offset = 0x4, fixed_abs, tag = 'smem constant byte address 0x4 - core index']
  #allocation1 [shape = 'u32[144,128]{1,0:T(1,128)}', space=vmem, size = 0x12000, scoped, tag = 'internal scratch']
  %s0 = inlined_call_operand.vmem [shape: bf16[128,27], index: 0, kind: input, shape index: {}]
  %s1 = inlined_call_operand.vmem [shape: bf16[27,12], index: 1, kind: input, shape index: {}]
  %s2 = inlined_call_operand.vmem [shape: f32[1,12], index: 2, kind: input, shape index: {}]
  %s3 = inlined_call_operand.vmem [shape: f32[128,12], index: 3, kind: output, shape index: {}]
  %s4 = sld [smem:[#allocation0]]
  $region22: #{_lambda_.11} parent=0
    _
  %s6 = ssub.s32 1, %s4
  %s7 = scalar_select 0, %s6, %s4
  // Predicated region
  $region2: #{_lambda_.11} parent=0 // pred_check
    _
  $region3: #{_lambda_.11} parent=0 // pred_check_branch
    %9 = sbr.rel (0) target = $region5
  $region4: #{_lambda_.11} parent=0 // pred_region
    _
  $region5: #{_lambda_.11} parent=0 // pred_fallthru
    _
  // Predicated region
  $region6: #{_lambda_.11} parent=0 // pred_check
    _
  $region7: #{_lambda_.11} parent=0 // pred_check_branch
    %11 = sbr.rel (0) target = $region9
  $region8: #{_lambda_.11} parent=0 // pred_region
    _
  $region9: #{_lambda_.11} parent=0 // pred_fallthru
    _
  // Predicated region
  $region10: #{_lambda_.11} parent=0 // pred_check
    _
  $region11: #{_lambda_.11} parent=0 // pred_check_branch
    %13 = sbr.rel (0) target = $region13
  $region12: #{_lambda_.11} parent=0 // pred_region
    _
  $region13: #{_lambda_.11} parent=0 // pred_fallthru
    _
  %v15 = vld [vmem:[%s0] sm:$0xf]
  %v16 = vld [vmem:[%s0 + $0x4] sm:$0xf]
  %v17 = vld [vmem:[%s0 + $0x8] sm:$0xf]
  %v18 = vld [vmem:[%s0 + $0xc] sm:$0xf]
  %v19 = vld [vmem:[%s0 + $0x10] sm:$0xf]
  %v20 = vld [vmem:[%s0 + $0x14] sm:$0xf]
  %v21 = vld [vmem:[%s0 + $0x18] sm:$0xf]
  %v22 = vld [vmem:[%s0 + $0x1c] sm:$0xf]
  %v23 = vld [vmem:[%s0 + $0x20] sm:$0xf]
  %v24 = vld [vmem:[%s0 + $0x24] sm:$0xf]
  %v25 = vld [vmem:[%s0 + $0x28] sm:$0xf]
  %v26 = vld [vmem:[%s0 + $0x2c] sm:$0xf]
  %v27 = vld [vmem:[%s0 + $0x30] sm:$0xf]
  %v28 = vld [vmem:[%s0 + $0x34] sm:$0xf]
  %v29 = vld [vmem:[%s0 + $0x38] sm:$0xf]
  %v30 = vld [vmem:[%s0 + $0x3c] sm:$0xf]
  %v31 = vld [vmem:[%s1] sm:$0xf]
  %v32 = vld [vmem:[%s1 + $0x4] sm:$0xf]
  %v33 = vld [vmem:[%s1 + $0x8] sm:$0xf]
  %v34 = vld [vmem:[%s1 + $0xc] sm:$0x3]
  %v35 = vld [vmem:[%s2] sm:$0x1]
  %v37 = vlaneseq
  %v38 = vshrl.u32 %v37, 7
  %v39 = vsub.s32 0, %v38
  %v40 = vrot.slane %v35, %v39
  %v58 = vunpack.c.l.b16 %v15
  %v59 = vunpack.c.l.b16 %v16
  %v60 = vunpack.c.l.b16 %v17
  %v61 = vunpack.c.l.b16 %v18
  %v62 = vunpack.c.l.b16 %v19
  %v63 = vunpack.c.l.b16 %v20
  %v64 = vunpack.c.l.b16 %v21
  %v65 = vunpack.c.l.b16 %v22
  %v66 = vunpack.c.l.b16 %v23
  %v67 = vunpack.c.l.b16 %v24
  %v68 = vunpack.c.l.b16 %v25
  %v69 = vunpack.c.l.b16 %v26
  %v70 = vunpack.c.l.b16 %v27
  %v71 = vunpack.c.l.b16 %v28
  %v72 = vunpack.c.l.b16 %v29
  %v73 = vunpack.c.l.b16 %v30
  %v74 = vpack.c.b16 %v59, %v58
  %v75 = vpack.c.b16 %v61, %v60
  %v76 = vpack.c.b16 %v63, %v62
  %v77 = vpack.c.b16 %v65, %v64
  %v78 = vpack.c.b16 %v67, %v66
  %v79 = vpack.c.b16 %v69, %v68
  %v80 = vpack.c.b16 %v71, %v70
  %v81 = vpack.c.b16 %v73, %v72
  %v86 = vunpack.c.l.b16 %v31
  %v87 = vunpack.c.l.b16 %v32
  %v88 = vunpack.c.l.b16 %v33
  %v89 = vunpack.c.l.b16 %v34
  %v90 = vpack.c.b16 %v87, %v86
  %v91 = vpack.c.b16 %v89, %v88
  %vm93 = vcmask 220160
  %v95 = vsel %vm93, %v74, 0
  %v98 = vsel %vm93, %v75, 0
  %v101 = vsel %vm93, %v76, 0
  %v104 = vsel %vm93, %v77, 0
  %v107 = vsel %vm93, %v78, 0
  %v110 = vsel %vm93, %v79, 0
  %v113 = vsel %vm93, %v80, 0
  %v116 = vsel %vm93, %v81, 0
  %vm118 = vcmask 1044480
  %vm119 = vcmask 1045504
  %v120 = vsel %vm118, 4294967295, 65535
  %v121 = vsel %vm119, %v120, 0
  %v123 = vand.u32 %v91, %v121
  %125 = vmatprep.subr.bf16.mxu0 0
  %126 = vmatpush1.bf16.msra.mxu0 0
  %127 = vmatprep.subr.bf16.mxu0 0
  %128 = vmatpush1.bf16.msra.mxu0 0
  %129 = vmatprep.subr.bf16.mxu0 0
  %130 = vmatpush1.bf16.msra.mxu0 0
  %131 = vmatprep.subr.bf16.mxu0 0
  %132 = vmatpush1.bf16.msra.mxu0 0
  %133 = vmatprep.subr.bf16.mxu0 0
  %134 = vmatpush1.bf16.msra.mxu0 0
  %135 = vmatprep.subr.bf16.mxu0 0
  %136 = vmatpush1.bf16.msra.mxu0 0
  %137 = vmatprep.subr.bf16.mxu0 0
  %138 = vmatpush1.bf16.msra.mxu0 %v123
  %139 = vmatprep.subr.bf16.mxu0 0
  %140 = vmatpush1.bf16.msra.mxu0 %v90
  %141 = vmatprep.subr.bf16.mxu0 0
  %142 = vmatpush2.bf16.msra.mxu0 0
  %143 = vmatprep.subr.bf16.mxu0 0
  %144 = vmatpush2.bf16.msra.mxu0 0
  %145 = vmatprep.subr.bf16.mxu0 0
  %146 = vmatpush2.bf16.msra.mxu0 0
  %147 = vmatprep.subr.bf16.mxu0 0
  %148 = vmatpush2.bf16.msra.mxu0 0
  %149 = vmatprep.subr.bf16.mxu0 0
  %150 = vmatpush2.bf16.msra.mxu0 0
  %151 = vmatprep.subr.bf16.mxu0 0
  %152 = vmatpush2.bf16.msra.mxu0 0
  %153 = vmatprep.subr.bf16.mxu0 0
  %154 = vmatpush2.bf16.msra.mxu0 0
  %155 = vmatprep.subr.bf16.mxu0 0
  %156 = vmatpush2.bf16.msra.mxu0 0
  %157 = vmatprep.mubr.bf16.mxu0 0
  %158 = vmatmul.mubr.bf16.gmra.mxu0 %v95
  %v159 = vpop.f32.mrf.mxu0
  %v160 = vadd.f32 %v40, %v159
  %v161 = vpop.f32.mrf.mxu0
  %v162 = vpop.f32.mrf.mxu0
  %v163 = vadd.f32 %v40, %v162
  %v164 = vpop.f32.mrf.mxu0
  %165 = vmatprep.mubr.bf16.mxu0 0
  %166 = vmatmul.mubr.bf16.gmra.mxu0 %v98
  %v167 = vpop.f32.mrf.mxu0
  %v168 = vadd.f32 %v40, %v167
  %v169 = vpop.f32.mrf.mxu0
  %v170 = vpop.f32.mrf.mxu0
  %v171 = vadd.f32 %v40, %v170
  %v172 = vpop.f32.mrf.mxu0
  %173 = vmatprep.mubr.bf16.mxu0 0
  %174 = vmatmul.mubr.bf16.gmra.mxu0 %v101
  %v175 = vpop.f32.mrf.mxu0
  %v176 = vadd.f32 %v40, %v175
  %v177 = vpop.f32.mrf.mxu0
  %v178 = vpop.f32.mrf.mxu0
  %v179 = vadd.f32 %v40, %v178
  %v180 = vpop.f32.mrf.mxu0
  %181 = vmatprep.mubr.bf16.mxu0 0
  %182 = vmatmul.mubr.bf16.gmra.mxu0 %v104
  %v183 = vpop.f32.mrf.mxu0
  %v184 = vadd.f32 %v40, %v183
  %v185 = vpop.f32.mrf.mxu0
  %v186 = vpop.f32.mrf.mxu0
  %v187 = vadd.f32 %v40, %v186
  %v188 = vpop.f32.mrf.mxu0
  %189 = vmatprep.mubr.bf16.mxu0 0
  %190 = vmatmul.mubr.bf16.gmra.mxu0 %v107
  %v191 = vpop.f32.mrf.mxu0
  %v192 = vadd.f32 %v40, %v191
  %v193 = vpop.f32.mrf.mxu0
  %v194 = vpop.f32.mrf.mxu0
  %v195 = vadd.f32 %v40, %v194
  %v196 = vpop.f32.mrf.mxu0
  %197 = vmatprep.mubr.bf16.mxu0 0
  %198 = vmatmul.mubr.bf16.gmra.mxu0 %v110
  %v199 = vpop.f32.mrf.mxu0
  %v200 = vadd.f32 %v40, %v199
  %v201 = vpop.f32.mrf.mxu0
  %v202 = vpop.f32.mrf.mxu0
  %v203 = vadd.f32 %v40, %v202
  %v204 = vpop.f32.mrf.mxu0
  %205 = vmatprep.mubr.bf16.mxu0 0
  %206 = vmatmul.mubr.bf16.gmra.mxu0 %v113
  %v207 = vpop.f32.mrf.mxu0
  %v208 = vadd.f32 %v40, %v207
  %v209 = vpop.f32.mrf.mxu0
  %v210 = vpop.f32.mrf.mxu0
  %v211 = vadd.f32 %v40, %v210
  %v212 = vpop.f32.mrf.mxu0
  %213 = vmatprep.mubr.bf16.mxu0 0
  %214 = vmatmul.mubr.bf16.gmra.mxu0 %v116
  %v215 = vpop.f32.mrf.mxu0
  %v216 = vadd.f32 %v40, %v215
  %v217 = vpop.f32.mrf.mxu0
  %v218 = vpop.f32.mrf.mxu0
  %v219 = vadd.f32 %v40, %v218
  %v220 = vpop.f32.mrf.mxu0
  %221 = vdwg.mxu0
  %vm222 = vcmask 97280
  %223 = vst.msk [vmem:[%s3] sm:$0xff] %vm222, %v160
  %224 = vst.msk [vmem:[%s3 + $0x8] sm:$0xff] %vm222, %v163
  %225 = vst.msk [vmem:[%s3 + $0x10] sm:$0xff] %vm222, %v168
  %226 = vst.msk [vmem:[%s3 + $0x18] sm:$0xff] %vm222, %v171
  %227 = vst.msk [vmem:[%s3 + $0x20] sm:$0xff] %vm222, %v176
  %228 = vst.msk [vmem:[%s3 + $0x28] sm:$0xff] %vm222, %v179
  %229 = vst.msk [vmem:[%s3 + $0x30] sm:$0xff] %vm222, %v184
  %230 = vst.msk [vmem:[%s3 + $0x38] sm:$0xff] %vm222, %v187
  %231 = vst.msk [vmem:[%s3 + $0x40] sm:$0xff] %vm222, %v192
  %232 = vst.msk [vmem:[%s3 + $0x48] sm:$0xff] %vm222, %v195
  %233 = vst.msk [vmem:[%s3 + $0x50] sm:$0xff] %vm222, %v200
  %234 = vst.msk [vmem:[%s3 + $0x58] sm:$0xff] %vm222, %v203
  %235 = vst.msk [vmem:[%s3 + $0x60] sm:$0xff] %vm222, %v208
  %236 = vst.msk [vmem:[%s3 + $0x68] sm:$0xff] %vm222, %v211
  %237 = vst.msk [vmem:[%s3 + $0x70] sm:$0xff] %vm222, %v216
  %238 = vst.msk [vmem:[%s3 + $0x78] sm:$0xff] %vm222, %v219
  // Predicated region
  $region14: #{_lambda_.11} parent=0 // pred_check
    _
  $region15: #{_lambda_.11} parent=0 // pred_check_branch
    %240 = sbr.rel (0) target = $region17
  $region16: #{_lambda_.11} parent=0 // pred_region
    _
  $region17: #{_lambda_.11} parent=0 // pred_fallthru
    _
  // Predicated region
  $region18: #{_lambda_.11} parent=0 // pred_check
    _
  $region19: #{_lambda_.11} parent=0 // pred_check_branch
    %242 = sbr.rel (0) target = $region21
  $region20: #{_lambda_.11} parent=0 // pred_region
    _
  $region21: #{_lambda_.11} parent=0 // pred_fallthru
    _

// kernel: _lambda_.12
$region0: #{_lambda_.12}
  #allocation0 [shape = 'u32[]', space=smem, size = 0x4, offset = 0x4, fixed_abs, tag = 'smem constant byte address 0x4 - core index']
  #allocation1 [shape = 'u32[144,128]{1,0:T(1,128)}', space=vmem, size = 0x12000, scoped, tag = 'internal scratch']
  %s0 = inlined_call_operand.vmem [shape: bf16[128,24], index: 0, kind: input, shape index: {}]
  %s1 = inlined_call_operand.vmem [shape: bf16[24,16], index: 1, kind: input, shape index: {}]
  %s2 = inlined_call_operand.vmem [shape: f32[1,16], index: 2, kind: input, shape index: {}]
  %s3 = inlined_call_operand.vmem [shape: f32[128,16], index: 3, kind: output, shape index: {}]
  %s4 = sld [smem:[#allocation0]]
  $region22: #{_lambda_.12} parent=0
    _
  %s6 = ssub.s32 1, %s4
  %s7 = scalar_select 0, %s6, %s4
  // Predicated region
  $region2: #{_lambda_.12} parent=0 // pred_check
    _
  $region3: #{_lambda_.12} parent=0 // pred_check_branch
    %9 = sbr.rel (0) target = $region5
  $region4: #{_lambda_.12} parent=0 // pred_region
    _
  $region5: #{_lambda_.12} parent=0 // pred_fallthru
    _
  // Predicated region
  $region6: #{_lambda_.12} parent=0 // pred_check
    _
  $region7: #{_lambda_.12} parent=0 // pred_check_branch
    %11 = sbr.rel (0) target = $region9
  $region8: #{_lambda_.12} parent=0 // pred_region
    _
  $region9: #{_lambda_.12} parent=0 // pred_fallthru
    _
  // Predicated region
  $region10: #{_lambda_.12} parent=0 // pred_check
    _
  $region11: #{_lambda_.12} parent=0 // pred_check_branch
    %13 = sbr.rel (0) target = $region13
  $region12: #{_lambda_.12} parent=0 // pred_region
    _
  $region13: #{_lambda_.12} parent=0 // pred_fallthru
    _
  %v15 = vld [vmem:[%s0] sm:$0xf]
  %v16 = vld [vmem:[%s0 + $0x4] sm:$0xf]
  %v17 = vld [vmem:[%s0 + $0x8] sm:$0xf]
  %v18 = vld [vmem:[%s0 + $0xc] sm:$0xf]
  %v19 = vld [vmem:[%s0 + $0x10] sm:$0xf]
  %v20 = vld [vmem:[%s0 + $0x14] sm:$0xf]
  %v21 = vld [vmem:[%s0 + $0x18] sm:$0xf]
  %v22 = vld [vmem:[%s0 + $0x1c] sm:$0xf]
  %v23 = vld [vmem:[%s0 + $0x20] sm:$0xf]
  %v24 = vld [vmem:[%s0 + $0x24] sm:$0xf]
  %v25 = vld [vmem:[%s0 + $0x28] sm:$0xf]
  %v26 = vld [vmem:[%s0 + $0x2c] sm:$0xf]
  %v27 = vld [vmem:[%s0 + $0x30] sm:$0xf]
  %v28 = vld [vmem:[%s0 + $0x34] sm:$0xf]
  %v29 = vld [vmem:[%s0 + $0x38] sm:$0xf]
  %v30 = vld [vmem:[%s0 + $0x3c] sm:$0xf]
  %v31 = vld [vmem:[%s1] sm:$0xf]
  %v32 = vld [vmem:[%s1 + $0x4] sm:$0xf]
  %v33 = vld [vmem:[%s1 + $0x8] sm:$0xf]
  %v34 = vld [vmem:[%s2] sm:$0x1]
  %v36 = vlaneseq
  %v37 = vshrl.u32 %v36, 7
  %v38 = vsub.s32 0, %v37
  %v39 = vrot.slane %v34, %v38
  %v57 = vunpack.c.l.b16 %v15
  %v58 = vunpack.c.l.b16 %v16
  %v59 = vunpack.c.l.b16 %v17
  %v60 = vunpack.c.l.b16 %v18
  %v61 = vunpack.c.l.b16 %v19
  %v62 = vunpack.c.l.b16 %v20
  %v63 = vunpack.c.l.b16 %v21
  %v64 = vunpack.c.l.b16 %v22
  %v65 = vunpack.c.l.b16 %v23
  %v66 = vunpack.c.l.b16 %v24
  %v67 = vunpack.c.l.b16 %v25
  %v68 = vunpack.c.l.b16 %v26
  %v69 = vunpack.c.l.b16 %v27
  %v70 = vunpack.c.l.b16 %v28
  %v71 = vunpack.c.l.b16 %v29
  %v72 = vunpack.c.l.b16 %v30
  %v73 = vpack.c.b16 %v58, %v57
  %v74 = vpack.c.b16 %v60, %v59
  %v75 = vpack.c.b16 %v62, %v61
  %v76 = vpack.c.b16 %v64, %v63
  %v77 = vpack.c.b16 %v66, %v65
  %v78 = vpack.c.b16 %v68, %v67
  %v79 = vpack.c.b16 %v70, %v69
  %v80 = vpack.c.b16 %v72, %v71
  %v84 = vunpack.c.l.b16 %v31
  %v85 = vunpack.c.l.b16 %v32
  %v86 = vunpack.c.l.b16 %v33
  %v87 = vpack.c.b16 %v85, %v84
  %v88 = vpack.c.b16 %v86, %v86
  %vm90 = vcmask 195584
  %v92 = vsel %vm90, %v73, 0
  %v95 = vsel %vm90, %v74, 0
  %v98 = vsel %vm90, %v75, 0
  %v101 = vsel %vm90, %v76, 0
  %v104 = vsel %vm90, %v77, 0
  %v107 = vsel %vm90, %v78, 0
  %v110 = vsel %vm90, %v79, 0
  %v113 = vsel %vm90, %v80, 0
  %vm115 = vcmask 1043456
  %v117 = vsel %vm115, %v88, 0
  %119 = vmatprep.subr.bf16.mxu0 0
  %120 = vmatpush1.bf16.msra.mxu0 0
  %121 = vmatprep.subr.bf16.mxu0 0
  %122 = vmatpush1.bf16.msra.mxu0 0
  %123 = vmatprep.subr.bf16.mxu0 0
  %124 = vmatpush1.bf16.msra.mxu0 0
  %125 = vmatprep.subr.bf16.mxu0 0
  %126 = vmatpush1.bf16.msra.mxu0 0
  %127 = vmatprep.subr.bf16.mxu0 0
  %128 = vmatpush1.bf16.msra.mxu0 0
  %129 = vmatprep.subr.bf16.mxu0 0
  %130 = vmatpush1.bf16.msra.mxu0 0
  %131 = vmatprep.subr.bf16.mxu0 0
  %132 = vmatpush1.bf16.msra.mxu0 %v117
  %133 = vmatprep.subr.bf16.mxu0 0
  %134 = vmatpush1.bf16.msra.mxu0 %v87
  %135 = vmatprep.subr.bf16.mxu0 0
  %136 = vmatpush2.bf16.msra.mxu0 0
  %137 = vmatprep.subr.bf16.mxu0 0
  %138 = vmatpush2.bf16.msra.mxu0 0
  %139 = vmatprep.subr.bf16.mxu0 0
  %140 = vmatpush2.bf16.msra.mxu0 0
  %141 = vmatprep.subr.bf16.mxu0 0
  %142 = vmatpush2.bf16.msra.mxu0 0
  %143 = vmatprep.subr.bf16.mxu0 0
  %144 = vmatpush2.bf16.msra.mxu0 0
  %145 = vmatprep.subr.bf16.mxu0 0
  %146 = vmatpush2.bf16.msra.mxu0 0
  %147 = vmatprep.subr.bf16.mxu0 0
  %148 = vmatpush2.bf16.msra.mxu0 0
  %149 = vmatprep.subr.bf16.mxu0 0
  %150 = vmatpush2.bf16.msra.mxu0 0
  %151 = vmatprep.mubr.bf16.mxu0 0
  %152 = vmatmul.mubr.bf16.gmra.mxu0 %v92
  %v153 = vpop.f32.mrf.mxu0
  %v154 = vadd.f32 %v39, %v153
  %v155 = vpop.f32.mrf.mxu0
  %v156 = vpop.f32.mrf.mxu0
  %v157 = vadd.f32 %v39, %v156
  %v158 = vpop.f32.mrf.mxu0
  %159 = vmatprep.mubr.bf16.mxu0 0
  %160 = vmatmul.mubr.bf16.gmra.mxu0 %v95
  %v161 = vpop.f32.mrf.mxu0
  %v162 = vadd.f32 %v39, %v161
  %v163 = vpop.f32.mrf.mxu0
  %v164 = vpop.f32.mrf.mxu0
  %v165 = vadd.f32 %v39, %v164
  %v166 = vpop.f32.mrf.mxu0
  %167 = vmatprep.mubr.bf16.mxu0 0
  %168 = vmatmul.mubr.bf16.gmra.mxu0 %v98
  %v169 = vpop.f32.mrf.mxu0
  %v170 = vadd.f32 %v39, %v169
  %v171 = vpop.f32.mrf.mxu0
  %v172 = vpop.f32.mrf.mxu0
  %v173 = vadd.f32 %v39, %v172
  %v174 = vpop.f32.mrf.mxu0
  %175 = vmatprep.mubr.bf16.mxu0 0
  %176 = vmatmul.mubr.bf16.gmra.mxu0 %v101
  %v177 = vpop.f32.mrf.mxu0
  %v178 = vadd.f32 %v39, %v177
  %v179 = vpop.f32.mrf.mxu0
  %v180 = vpop.f32.mrf.mxu0
  %v181 = vadd.f32 %v39, %v180
  %v182 = vpop.f32.mrf.mxu0
  %183 = vmatprep.mubr.bf16.mxu0 0
  %184 = vmatmul.mubr.bf16.gmra.mxu0 %v104
  %v185 = vpop.f32.mrf.mxu0
  %v186 = vadd.f32 %v39, %v185
  %v187 = vpop.f32.mrf.mxu0
  %v188 = vpop.f32.mrf.mxu0
  %v189 = vadd.f32 %v39, %v188
  %v190 = vpop.f32.mrf.mxu0
  %191 = vmatprep.mubr.bf16.mxu0 0
  %192 = vmatmul.mubr.bf16.gmra.mxu0 %v107
  %v193 = vpop.f32.mrf.mxu0
  %v194 = vadd.f32 %v39, %v193
  %v195 = vpop.f32.mrf.mxu0
  %v196 = vpop.f32.mrf.mxu0
  %v197 = vadd.f32 %v39, %v196
  %v198 = vpop.f32.mrf.mxu0
  %199 = vmatprep.mubr.bf16.mxu0 0
  %200 = vmatmul.mubr.bf16.gmra.mxu0 %v110
  %v201 = vpop.f32.mrf.mxu0
  %v202 = vadd.f32 %v39, %v201
  %v203 = vpop.f32.mrf.mxu0
  %v204 = vpop.f32.mrf.mxu0
  %v205 = vadd.f32 %v39, %v204
  %v206 = vpop.f32.mrf.mxu0
  %207 = vmatprep.mubr.bf16.mxu0 0
  %208 = vmatmul.mubr.bf16.gmra.mxu0 %v113
  %v209 = vpop.f32.mrf.mxu0
  %v210 = vadd.f32 %v39, %v209
  %v211 = vpop.f32.mrf.mxu0
  %v212 = vpop.f32.mrf.mxu0
  %v213 = vadd.f32 %v39, %v212
  %v214 = vpop.f32.mrf.mxu0
  %215 = vdwg.mxu0
  %vm216 = vcmask 130048
  %217 = vst.msk [vmem:[%s3] sm:$0xff] %vm216, %v154
  %218 = vst.msk [vmem:[%s3 + $0x8] sm:$0xff] %vm216, %v157
  %219 = vst.msk [vmem:[%s3 + $0x10] sm:$0xff] %vm216, %v162
  %220 = vst.msk [vmem:[%s3 + $0x18] sm:$0xff] %vm216, %v165
  %221 = vst.msk [vmem:[%s3 + $0x20] sm:$0xff] %vm216, %v170
  %222 = vst.msk [vmem:[%s3 + $0x28] sm:$0xff] %vm216, %v173
  %223 = vst.msk [vmem:[%s3 + $0x30] sm:$0xff] %vm216, %v178
  %224 = vst.msk [vmem:[%s3 + $0x38] sm:$0xff] %vm216, %v181
  %225 = vst.msk [vmem:[%s3 + $0x40] sm:$0xff] %vm216, %v186
  %226 = vst.msk [vmem:[%s3 + $0x48] sm:$0xff] %vm216, %v189
  %227 = vst.msk [vmem:[%s3 + $0x50] sm:$0xff] %vm216, %v194
  %228 = vst.msk [vmem:[%s3 + $0x58] sm:$0xff] %vm216, %v197
  %229 = vst.msk [vmem:[%s3 + $0x60] sm:$0xff] %vm216, %v202
  %230 = vst.msk [vmem:[%s3 + $0x68] sm:$0xff] %vm216, %v205
  %231 = vst.msk [vmem:[%s3 + $0x70] sm:$0xff] %vm216, %v210
  %232 = vst.msk [vmem:[%s3 + $0x78] sm:$0xff] %vm216, %v213
  // Predicated region
  $region14: #{_lambda_.12} parent=0 // pred_check
    _
  $region15: #{_lambda_.12} parent=0 // pred_check_branch
    %234 = sbr.rel (0) target = $region17
  $region16: #{_lambda_.12} parent=0 // pred_region
    _
  $region17: #{_lambda_.12} parent=0 // pred_fallthru
    _
  // Predicated region
  $region18: #{_lambda_.12} parent=0 // pred_check
    _
  $region19: #{_lambda_.12} parent=0 // pred_check_branch
    %236 = sbr.rel (0) target = $region21
  $region20: #{_lambda_.12} parent=0 // pred_region
    _
  $region21: #{_lambda_.12} parent=0 // pred_fallthru
    _

// kernel: _lambda_.13
$region0: #{_lambda_.13}
  #allocation0 [shape = 'u32[]', space=smem, size = 0x4, offset = 0x4, fixed_abs, tag = 'smem constant byte address 0x4 - core index']
  #allocation1 [shape = 'u32[144,128]{1,0:T(1,128)}', space=vmem, size = 0x12000, scoped, tag = 'internal scratch']
  %s0 = inlined_call_operand.vmem [shape: bf16[2,32,272], index: 0, kind: input, shape index: {}]
  %s1 = inlined_call_operand.vmem [shape: bf16[2,272,16], index: 1, kind: input, shape index: {}]
  %s2 = inlined_call_operand.vmem [shape: f32[2,1,16], index: 2, kind: input, shape index: {}]
  %s3 = inlined_call_operand.vmem [shape: bf16[2,32,16], index: 3, kind: output, shape index: {}]
  %s4 = sld [smem:[#allocation0]]
  $region45: #{_lambda_.13} parent=0
    _
  %s6 = ssub.s32 1, %s4
  %s7 = scalar_select 0, %s6, %s4
  loop: start=0, step=1, limit=4
  $region2: #{_lambda_.13} parent=0 // loop_pre_header
    _
  $region3: #{_lambda_.13} parent=0 // loop_header
    %s9 = sphi 0, %s13
    %p10 = scmp.ge.s32.totalorder %s9, 4
    %s19 = sphi 0, %s21
    %s22 = sphi 0, %s19
    %s23 = sphi 0, %s22
    %s39 = sphi 0, %s23
    %s45 = sphi 0, %s47
    %s48 = sphi 0, %s45
    %s49 = sphi 0, %s48
    %s65 = sphi 0, %s49
    %s71 = sphi 0, %s73
    %s74 = sphi 0, %s71
    %s75 = sphi 0, %s74
    %s91 = sphi 0, %s75
    %s97 = sphi 0, %s99
    %s100 = sphi 0, %s97
    %s101 = sphi 0, %s100
    %s117 = sphi 0, %s101
  $region4: #{_lambda_.13} parent=0 // loop_header_branch
    %12 = sbr.rel (%p10) target = $region8
  $region5: #{_lambda_.13} parent=0 // loop_body
    %s14 = ssub.s32 %s9, 1
    %s15 = ssub.s32 %s9, 2
    %s16 = sadd.s32 %s9, 1
    %s17 = ssub.s32 %s9, %s16
    %p18 = scmp.eq.s32.totalorder %s17, 0
    %s20 = sadd.s32 %s19, 1
    %s21 = scalar_select %p18, %s19, %s20
    %p24 = pneg %p18
    %p25 = scmp.eq.s32.totalorder %s9, 1
    %p26 = por %p24, %p25
    %p27 = scmp.ne.s32.totalorder %s19, %s22
    %p28 = scmp.eq.s32.totalorder %s9, 0
    %p29 = por %p27, %p28
    %p30 = scmp.ne.s32.totalorder %s19, %s22
    %p31 = scmp.eq.s32.totalorder %s14, 1
    %p32 = por %p30, %p31
    %p33 = scmp.ne.s32.totalorder %s22, %s23
    %p34 = scmp.eq.s32.totalorder %s14, 0
    %p35 = por %p33, %p34
    %p36 = scmp.ne.s32.totalorder %s22, %s23
    %p37 = scmp.eq.s32.totalorder %s15, 1
    %p38 = por %p36, %p37
    %p40 = scmp.ne.s32.totalorder %s23, %s39
    %p41 = scmp.eq.s32.totalorder %s15, 0
    %p42 = por %p40, %p41
    %s43 = ssub.s32 %s9, %s16
    %p44 = scmp.eq.s32.totalorder %s43, 0
    %s46 = sadd.s32 %s45, 1
    %s47 = scalar_select %p44, %s45, %s46
    %p50 = pneg %p44
    %p51 = scmp.eq.s32.totalorder %s9, 1
    %p52 = por %p50, %p51
    %p53 = scmp.ne.s32.totalorder %s45, %s48
    %p54 = scmp.eq.s32.totalorder %s9, 0
    %p55 = por %p53, %p54
    %p56 = scmp.ne.s32.totalorder %s45, %s48
    %p57 = scmp.eq.s32.totalorder %s14, 1
    %p58 = por %p56, %p57
    %p59 = scmp.ne.s32.totalorder %s48, %s49
    %p60 = scmp.eq.s32.totalorder %s14, 0
    %p61 = por %p59, %p60
    %p62 = scmp.ne.s32.totalorder %s48, %s49
    %p63 = scmp.eq.s32.totalorder %s15, 1
    %p64 = por %p62, %p63
    %p66 = scmp.ne.s32.totalorder %s49, %s65
    %p67 = scmp.eq.s32.totalorder %s15, 0
    %p68 = por %p66, %p67
    %s69 = ssub.s32 %s9, %s16
    %p70 = scmp.eq.s32.totalorder %s69, 0
    %s72 = sadd.s32 %s71, 1
    %s73 = scalar_select %p70, %s71, %s72
    %p76 = pneg %p70
    %p77 = scmp.eq.s32.totalorder %s9, 1
    %p78 = por %p76, %p77
    %p79 = scmp.ne.s32.totalorder %s71, %s74
    %p80 = scmp.eq.s32.totalorder %s9, 0
    %p81 = por %p79, %p80
    %p82 = scmp.ne.s32.totalorder %s71, %s74
    %p83 = scmp.eq.s32.totalorder %s14, 1
    %p84 = por %p82, %p83
    %p85 = scmp.ne.s32.totalorder %s74, %s75
    %p86 = scmp.eq.s32.totalorder %s14, 0
    %p87 = por %p85, %p86
    %p88 = scmp.ne.s32.totalorder %s74, %s75
    %p89 = scmp.eq.s32.totalorder %s15, 1
    %p90 = por %p88, %p89
    %p92 = scmp.ne.s32.totalorder %s75, %s91
    %p93 = scmp.eq.s32.totalorder %s15, 0
    %p94 = por %p92, %p93
    %s95 = ssub.s32 %s9, %s16
    %p96 = scmp.eq.s32.totalorder %s95, 0
    %s98 = sadd.s32 %s97, 1
    %s99 = scalar_select %p96, %s97, %s98
    %p102 = pneg %p96
    %p103 = scmp.eq.s32.totalorder %s9, 1
    %p104 = por %p102, %p103
    %p105 = scmp.ne.s32.totalorder %s97, %s100
    %p106 = scmp.eq.s32.totalorder %s9, 0
    %p107 = por %p105, %p106
    %p108 = scmp.ne.s32.totalorder %s97, %s100
    %p109 = scmp.eq.s32.totalorder %s14, 1
    %p110 = por %p108, %p109
    %p111 = scmp.ne.s32.totalorder %s100, %s101
    %p112 = scmp.eq.s32.totalorder %s14, 0
    %p113 = por %p111, %p112
    %p114 = scmp.ne.s32.totalorder %s100, %s101
    %p115 = scmp.eq.s32.totalorder %s15, 1
    %p116 = por %p114, %p115
    %p118 = scmp.ne.s32.totalorder %s101, %s117
    %p119 = scmp.eq.s32.totalorder %s15, 0
    %p120 = por %p118, %p119
    %p121 = scmp.le.s32.totalorder 1, %s9
    %p122 = scmp.lt.s32.totalorder %s9, 3
    %p123 = pnand %p121, %p122
    %p124 = pneg %p123
    // Predicated region
    $region9: #{_lambda_.13} parent=5 // pred_check
      _
    $region10: #{_lambda_.13} parent=5 // pred_check_branch
      %126 = sbr.rel (%p123) target = $region12
    $region11: #{_lambda_.13} parent=5 // pred_region
      %s127 = ssub.s32 %s9, 1
    $region12: #{_lambda_.13} parent=5 // pred_fallthru
      _
    %p128 = scmp.lt.s32.totalorder %s9, 2
    // Predicated region
    $region13: #{_lambda_.13} parent=5 // pred_check
      %p129 = pneg %p128
    $region14: #{_lambda_.13} parent=5 // pred_check_branch
      %131 = sbr.rel (%p129) target = $region16
    $region15: #{_lambda_.13} parent=5 // pred_region
      // Predicated region
      $region17: #{_lambda_.13} parent=15 // pred_check
        %p132 = pneg %p29
      $region18: #{_lambda_.13} parent=15 // pred_check_branch
        %134 = sbr.rel (%p132) target = $region20
      $region19: #{_lambda_.13} parent=15 // pred_region
        %p135 = scmp.lt.s32.totalorder %s9, 1
        %s136 = scalar_select %p135, %s9, 1
        %s137 = smul.addr %s136, 12
        %s138 = smul.addr %s137, 4
        %s139 = scalar_lea.vmem %s0, %s138
      $region20: #{_lambda_.13} parent=15 // pred_fallthru
        _
      // Predicated region
      $region21: #{_lambda_.13} parent=15 // pred_check
        %p140 = pneg %p55
      $region22: #{_lambda_.13} parent=15 // pred_check_branch
        %142 = sbr.rel (%p140) target = $region24
      $region23: #{_lambda_.13} parent=15 // pred_region
        %p143 = scmp.lt.s32.totalorder %s9, 1
        %s144 = scalar_select %p143, %s9, 1
        %s145 = smul.addr %s144, 34
        %s146 = smul.addr %s145, 4
        %s147 = scalar_lea.vmem %s1, %s146
      $region24: #{_lambda_.13} parent=15 // pred_fallthru
        _
      // Predicated region
      $region25: #{_lambda_.13} parent=15 // pred_check
        %p148 = pneg %p81
      $region26: #{_lambda_.13} parent=15 // pred_check_branch
        %150 = sbr.rel (%p148) target = $region28
      $region27: #{_lambda_.13} parent=15 // pred_region
        %p151 = scmp.lt.s32.totalorder %s9, 1
        %s152 = scalar_select %p151, %s9, 1
        %s153 = scalar_lea.vmem %s2, %s152
      $region28: #{_lambda_.13} parent=15 // pred_fallthru
        _
    $region16: #{_lambda_.13} parent=5 // pred_fallthru
      _
    %p154 = scmp.le.s32.totalorder 1, %s9
    %p155 = scmp.lt.s32.totalorder %s9, 3
    %p156 = pnand %p154, %p155
    %p157 = pneg %p156
    // Predicated region
    $region29: #{_lambda_.13} parent=5 // pred_check
      _
    $region30: #{_lambda_.13} parent=5 // pred_check_branch
      %159 = sbr.rel (%p156) target = $region32
    $region31: #{_lambda_.13} parent=5 // pred_region
      %s160 = ssub.s32 %s9, 1
      %p161 = scmp.lt.s32.totalorder %s14, 1
      %s162 = scalar_select %p161, %s14, 1
      %s163 = smul.addr %s162, 12
      %s164 = smul.addr %s163, 4
      %s165 = scalar_lea.vmem %s0, %s164
      %p166 = pneg %p35
      %p167 = pneg %p32
      %p168 = scmp.lt.s32.totalorder %s14, 1
      %s169 = scalar_select %p168, %s14, 1
      %s170 = smul.addr %s169, 34
      %s171 = smul.addr %s170, 4
      %s172 = scalar_lea.vmem %s1, %s171
      %p173 = pneg %p61
      %p174 = pneg %p58
      %p175 = scmp.lt.s32.totalorder %s14, 1
      %s176 = scalar_select %p175, %s14, 1
      %s177 = scalar_lea.vmem %s2, %s176
      %p178 = pneg %p87
      %p179 = pneg %p84
      %p180 = pneg %p113
      %p181 = pneg %p110
      %p182 = scmp.lt.s32.totalorder %s14, 1
      %s183 = scalar_select %p182, %s14, 1
      %s184 = smul.addr %s183, 4
      %s185 = smul.addr %s184, 4
      %s186 = scalar_lea.vmem %s3, %s185
      %p187 = scmp.lt.s32.totalorder %s14, 1
      %s188 = scalar_select %p187, %s14, 1
      %s189 = smul.addr %s188, 12
      %s190 = smul.addr %s189, 4
      %s191 = scalar_lea.vmem %s0, %s190
      %p192 = scmp.lt.s32.totalorder %s14, 1
      %s193 = scalar_select %p192, %s14, 1
      %s194 = smul.addr %s193, 34
      %s195 = smul.addr %s194, 4
      %s196 = scalar_lea.vmem %s1, %s195
      %p197 = scmp.lt.s32.totalorder %s14, 1
      %s198 = scalar_select %p197, %s14, 1
      %s199 = scalar_lea.vmem %s2, %s198
      %p200 = scmp.lt.s32.totalorder %s14, 1
      %s201 = scalar_select %p200, %s14, 1
      %s202 = smul.addr %s201, 4
      %s203 = smul.addr %s202, 4
      %s204 = scalar_lea.vmem %s3, %s203
      %v206 = vld [vmem:[%s191] sm:$0xff]
      %v207 = vld [vmem:[%s191 + $0x8] sm:$0xf]
      %v208 = vld [vmem:[%s191 + $0xc] sm:$0xff]
      %v209 = vld [vmem:[%s191 + $0x14] sm:$0xf]
      %v210 = vld [vmem:[%s191 + $0x18] sm:$0xff]
      %v211 = vld [vmem:[%s191 + $0x20] sm:$0xf]
      %v212 = vld [vmem:[%s191 + $0x24] sm:$0xff]
      %v213 = vld [vmem:[%s191 + $0x2c] sm:$0xf]
      %v214 = vld [vmem:[%s196] sm:$0xf]
      %v215 = vld [vmem:[%s196 + $0x4] sm:$0xf]
      %v216 = vld [vmem:[%s196 + $0x8] sm:$0xf]
      %v217 = vld [vmem:[%s196 + $0xc] sm:$0xf]
      %v218 = vld [vmem:[%s196 + $0x10] sm:$0xf]
      %v219 = vld [vmem:[%s196 + $0x14] sm:$0xf]
      %v220 = vld [vmem:[%s196 + $0x18] sm:$0xf]
      %v221 = vld [vmem:[%s196 + $0x1c] sm:$0xf]
      %v222 = vld [vmem:[%s196 + $0x20] sm:$0xf]
      %v223 = vld [vmem:[%s196 + $0x24] sm:$0xf]
      %v224 = vld [vmem:[%s196 + $0x28] sm:$0xf]
      %v225 = vld [vmem:[%s196 + $0x2c] sm:$0xf]
      %v226 = vld [vmem:[%s196 + $0x30] sm:$0xf]
      %v227 = vld [vmem:[%s196 + $0x34] sm:$0xf]
      %v228 = vld [vmem:[%s196 + $0x38] sm:$0xf]
      %v229 = vld [vmem:[%s196 + $0x3c] sm:$0xf]
      %v230 = vld [vmem:[%s196 + $0x40] sm:$0xf]
      %v231 = vld [vmem:[%s196 + $0x44] sm:$0xf]
      %v232 = vld [vmem:[%s196 + $0x48] sm:$0xf]
      %v233 = vld [vmem:[%s196 + $0x4c] sm:$0xf]
      %v234 = vld [vmem:[%s196 + $0x50] sm:$0xf]
      %v235 = vld [vmem:[%s196 + $0x54] sm:$0xf]
      %v236 = vld [vmem:[%s196 + $0x58] sm:$0xf]
      %v237 = vld [vmem:[%s196 + $0x5c] sm:$0xf]
      %v238 = vld [vmem:[%s196 + $0x60] sm:$0xf]
      %v239 = vld [vmem:[%s196 + $0x64] sm:$0xf]
      %v240 = vld [vmem:[%s196 + $0x68] sm:$0xf]
      %v241 = vld [vmem:[%s196 + $0x6c] sm:$0xf]
      %v242 = vld [vmem:[%s196 + $0x70] sm:$0xf]
      %v243 = vld [vmem:[%s196 + $0x74] sm:$0xf]
      %v244 = vld [vmem:[%s196 + $0x78] sm:$0xf]
      %v245 = vld [vmem:[%s196 + $0x7c] sm:$0xf]
      %v246 = vld [vmem:[%s196 + $0x80] sm:$0xf]
      %v247 = vld [vmem:[%s196 + $0x84] sm:$0xf]
      %v248 = vld [vmem:[%s199] sm:$0x1]
      %v250 = vlaneseq
      %v251 = vshrl.u32 %v250, 7
      %v252 = vsub.s32 0, %v251
      %v253 = vrot.slane %v248, %v252
      %v263 = vunpack.c.l.b16 %v206
      %v264 = vunpack.c.h.b16 %v206
      %v265 = vunpack.c.l.b16 %v207
      %v266 = vunpack.c.l.b16 %v208
      %v267 = vunpack.c.h.b16 %v208
      %v268 = vunpack.c.l.b16 %v209
      %v269 = vunpack.c.l.b16 %v210
      %v270 = vunpack.c.h.b16 %v210
      %v271 = vunpack.c.l.b16 %v211
      %v272 = vunpack.c.l.b16 %v212
      %v273 = vunpack.c.h.b16 %v212
      %v274 = vunpack.c.l.b16 %v213
      %v275 = vpack.c.b16 %v266, %v263
      %v276 = vpack.c.b16 %v267, %v264
      %v277 = vpack.c.b16 %v268, %v265
      %v278 = vpack.c.b16 %v272, %v269
      %v279 = vpack.c.b16 %v273, %v270
      %v280 = vpack.c.b16 %v274, %v271
      %v319 = vunpack.c.l.b16 %v214
      %v320 = vunpack.c.l.b16 %v215
      %v321 = vunpack.c.l.b16 %v216
      %v322 = vunpack.c.l.b16 %v217
      %v323 = vunpack.c.l.b16 %v218
      %v324 = vunpack.c.l.b16 %v219
      %v325 = vunpack.c.l.b16 %v220
      %v326 = vunpack.c.l.b16 %v221
      %v327 = vunpack.c.l.b16 %v222
      %v328 = vunpack.c.l.b16 %v223
      %v329 = vunpack.c.l.b16 %v224
      %v330 = vunpack.c.l.b16 %v225
      %v331 = vunpack.c.l.b16 %v226
      %v332 = vunpack.c.l.b16 %v227
      %v333 = vunpack.c.l.b16 %v228
      %v334 = vunpack.c.l.b16 %v229
      %v335 = vunpack.c.l.b16 %v230
      %v336 = vunpack.c.l.b16 %v231
      %v337 = vunpack.c.l.b16 %v232
      %v338 = vunpack.c.l.b16 %v233
      %v339 = vunpack.c.l.b16 %v234
      %v340 = vunpack.c.l.b16 %v235
      %v341 = vunpack.c.l.b16 %v236
      %v342 = vunpack.c.l.b16 %v237
      %v343 = vunpack.c.l.b16 %v238
      %v344 = vunpack.c.l.b16 %v239
      %v345 = vunpack.c.l.b16 %v240
      %v346 = vunpack.c.l.b16 %v241
      %v347 = vunpack.c.l.b16 %v242
      %v348 = vunpack.c.l.b16 %v243
      %v349 = vunpack.c.l.b16 %v244
      %v350 = vunpack.c.l.b16 %v245
      %v351 = vunpack.c.l.b16 %v246
      %v352 = vunpack.c.l.b16 %v247
      %v353 = vpack.c.b16 %v320, %v319
      %v354 = vpack.c.b16 %v322, %v321
      %v355 = vpack.c.b16 %v324, %v323
      %v356 = vpack.c.b16 %v326, %v325
      %v357 = vpack.c.b16 %v328, %v327
      %v358 = vpack.c.b16 %v330, %v329
      %v359 = vpack.c.b16 %v332, %v331
      %v360 = vpack.c.b16 %v334, %v333
      %v361 = vpack.c.b16 %v336, %v335
      %v362 = vpack.c.b16 %v338, %v337
      %v363 = vpack.c.b16 %v340, %v339
      %v364 = vpack.c.b16 %v342, %v341
      %v365 = vpack.c.b16 %v344, %v343
      %v366 = vpack.c.b16 %v346, %v345
      %v367 = vpack.c.b16 %v348, %v347
      %v368 = vpack.c.b16 %v350, %v349
      %v369 = vpack.c.b16 %v352, %v351
      %vm387 = vcmask 130048
      %v389 = vsel %vm387, %v277, 0
      %v392 = vsel %vm387, %v280, 0
      %394 = vmatprep.subr.bf16.mxu0 0
      %395 = vmatpush1.bf16.msra.mxu0 %v360
      %396 = vmatprep.subr.bf16.mxu0 0
      %397 = vmatpush1.bf16.msra.mxu0 %v359
      %398 = vmatprep.subr.bf16.mxu0 0
      %399 = vmatpush1.bf16.msra.mxu0 %v358
      %400 = vmatprep.subr.bf16.mxu0 0
      %401 = vmatpush1.bf16.msra.mxu0 %v357
      %402 = vmatprep.subr.bf16.mxu0 0
      %403 = vmatpush1.bf16.msra.mxu0 %v356
      %404 = vmatprep.subr.bf16.mxu0 0
      %405 = vmatpush1.bf16.msra.mxu0 %v355
      %406 = vmatprep.subr.bf16.mxu0 0
      %407 = vmatpush1.bf16.msra.mxu0 %v354
      %408 = vmatprep.subr.bf16.mxu0 0
      %409 = vmatpush1.bf16.msra.mxu0 %v353
      %410 = vmatprep.subr.bf16.mxu0 0
      %411 = vmatpush2.bf16.msra.mxu0 %v368
      %412 = vmatprep.subr.bf16.mxu0 0
      %413 = vmatpush2.bf16.msra.mxu0 %v367
      %414 = vmatprep.subr.bf16.mxu0 0
      %415 = vmatpush2.bf16.msra.mxu0 %v366
      %416 = vmatprep.subr.bf16.mxu0 0
      %417 = vmatpush2.bf16.msra.mxu0 %v365
      %418 = vmatprep.subr.bf16.mxu0 0
      %419 = vmatpush2.bf16.msra.mxu0 %v364
      %420 = vmatprep.subr.bf16.mxu0 0
      %421 = vmatpush2.bf16.msra.mxu0 %v363
      %422 = vmatprep.subr.bf16.mxu0 0
      %423 = vmatpush2.bf16.msra.mxu0 %v362
      %424 = vmatprep.subr.bf16.mxu0 0
      %425 = vmatpush2.bf16.msra.mxu0 %v361
      %426 = vmatprep.mubr.bf16.mxu0 %v276
      %427 = vmatmul.mubr.bf16.gmra.mxu0 %v275
      %v428 = vpop.f32.mrf.mxu0
      %v429 = vadd.f32 %v253, %v428
      %v430 = vpop.f32.mrf.mxu0
      %v431 = vpop.f32.mrf.mxu0
      %v432 = vadd.f32 %v253, %v431
      %v433 = vpop.f32.mrf.mxu0
      %434 = vmatprep.mubr.bf16.mxu0 %v279
      %435 = vmatmul.mubr.bf16.gmra.mxu0 %v278
      %v436 = vpop.f32.mrf.mxu0
      %v437 = vadd.f32 %v253, %v436
      %v438 = vpop.f32.mrf.mxu0
      %v439 = vpop.f32.mrf.mxu0
      %v440 = vadd.f32 %v253, %v439
      %v441 = vpop.f32.mrf.mxu0
      %442 = vdwg.mxu0
      %443 = vmatprep.subr.bf16.mxu0 0
      %444 = vmatpush1.bf16.msra.mxu0 0
      %445 = vmatprep.subr.bf16.mxu0 0
      %446 = vmatpush1.bf16.msra.mxu0 0
      %447 = vmatprep.subr.bf16.mxu0 0
      %448 = vmatpush1.bf16.msra.mxu0 0
      %449 = vmatprep.subr.bf16.mxu0 0
      %450 = vmatpush1.bf16.msra.mxu0 0
      %451 = vmatprep.subr.bf16.mxu0 0
      %452 = vmatpush1.bf16.msra.mxu0 0
      %453 = vmatprep.subr.bf16.mxu0 0
      %454 = vmatpush1.bf16.msra.mxu0 0
      %455 = vmatprep.subr.bf16.mxu0 0
      %456 = vmatpush1.bf16.msra.mxu0 0
      %457 = vmatprep.subr.bf16.mxu0 0
      %458 = vmatpush1.bf16.msra.mxu0 %v369
      %459 = vmatprep.subr.bf16.mxu0 0
      %460 = vmatpush2.bf16.msra.mxu0 0
      %461 = vmatprep.subr.bf16.mxu0 0
      %462 = vmatpush2.bf16.msra.mxu0 0
      %463 = vmatprep.subr.bf16.mxu0 0
      %464 = vmatpush2.bf16.msra.mxu0 0
      %465 = vmatprep.subr.bf16.mxu0 0
      %466 = vmatpush2.bf16.msra.mxu0 0
      %467 = vmatprep.subr.bf16.mxu0 0
      %468 = vmatpush2.bf16.msra.mxu0 0
      %469 = vmatprep.subr.bf16.mxu0 0
      %470 = vmatpush2.bf16.msra.mxu0 0
      %471 = vmatprep.subr.bf16.mxu0 0
      %472 = vmatpush2.bf16.msra.mxu0 0
      %473 = vmatprep.subr.bf16.mxu0 0
      %474 = vmatpush2.bf16.msra.mxu0 0
      %475 = vmatprep.mubr.bf16.mxu0 0
      %476 = vmatmul.mubr.bf16.gmra.mxu0 %v389
      %v477 = vpop.f32.mrf.mxu0
      %v478 = vadd.f32 %v429, %v477
      %v479 = vpop.f32.mrf.mxu0
      %v480 = vpop.f32.mrf.mxu0
      %v481 = vadd.f32 %v432, %v480
      %v482 = vpop.f32.mrf.mxu0
      %483 = vmatprep.mubr.bf16.mxu0 0
      %484 = vmatmul.mubr.bf16.gmra.mxu0 %v392
      %v485 = vpop.f32.mrf.mxu0
      %v486 = vadd.f32 %v437, %v485
      %v487 = vpop.f32.mrf.mxu0
      %v488 = vpop.f32.mrf.mxu0
      %v489 = vadd.f32 %v440, %v488
      %v490 = vpop.f32.mrf.mxu0
      %491 = vdwg.mxu0
      %v492 = vmax.f32 %v478, 0.0
      %v493 = vmax.f32 %v481, 0.0
      %v494 = vmax.f32 %v486, 0.0
      %v495 = vmax.f32 %v489, 0.0
      %v496 = vpack.c.bf16 %v493, %v492
      %v497 = vpack.c.bf16 %v495, %v494
      %v500 = vunpack.c.l.b16 %v496
      %v501 = vunpack.c.h.b16 %v496
      %v502 = vunpack.c.l.b16 %v497
      %v503 = vunpack.c.h.b16 %v497
      %v504 = vpack.c.b16 %v500, %v500
      %v505 = vpack.c.b16 %v501, %v501
      %v506 = vpack.c.b16 %v502, %v502
      %v507 = vpack.c.b16 %v503, %v503
      %vm512 = vcmask 125952
      %513 = vst.msk [vmem:[%s204] sm:$0xf] %vm512, %v504
      %514 = vst.msk [vmem:[%s204 + $0x4] sm:$0xf] %vm512, %v505
      %515 = vst.msk [vmem:[%s204 + $0x8] sm:$0xf] %vm512, %v506
      %516 = vst.msk [vmem:[%s204 + $0xc] sm:$0xf] %vm512, %v507
      %p517 = scmp.lt.s32.totalorder %s14, 1
      %s518 = scalar_select %p517, %s14, 1
      %s519 = smul.addr %s518, 4
      %s520 = smul.addr %s519, 4
      %s521 = scalar_lea.vmem %s3, %s520
      // Predicated region
      $region33: #{_lambda_.13} parent=31 // pred_check
        %p522 = pneg %p110
      $region34: #{_lambda_.13} parent=31 // pred_check_branch
        %524 = sbr.rel (%p522) target = $region36
      $region35: #{_lambda_.13} parent=31 // pred_region
        _
      $region36: #{_lambda_.13} parent=31 // pred_fallthru
        _
    $region32: #{_lambda_.13} parent=5 // pred_fallthru
      _
    %p525 = scmp.le.s32.totalorder 2, %s9
    // Predicated region
    $region37: #{_lambda_.13} parent=5 // pred_check
      %p526 = pneg %p525
    $region38: #{_lambda_.13} parent=5 // pred_check_branch
      %528 = sbr.rel (%p526) target = $region40
    $region39: #{_lambda_.13} parent=5 // pred_region
      %s529 = ssub.s32 %s9, 2
      // Predicated region
      $region41: #{_lambda_.13} parent=39 // pred_check
        %p530 = pneg %p116
      $region42: #{_lambda_.13} parent=39 // pred_check_branch
        %532 = sbr.rel (%p530) target = $region44
      $region43: #{_lambda_.13} parent=39 // pred_region
        %p533 = scmp.lt.s32.totalorder %s15, 1
        %s534 = scalar_select %p533, %s15, 1
        %s535 = smul.addr %s534, 4
        %s536 = smul.addr %s535, 4
        %s537 = scalar_lea.vmem %s3, %s536
      $region44: #{_lambda_.13} parent=39 // pred_fallthru
        _
    $region40: #{_lambda_.13} parent=5 // pred_fallthru
      _
  $region6: #{_lambda_.13} parent=0 // loop_footer
    %s13 = sadd.s32 1, %s9
  $region7: #{_lambda_.13} parent=0 // loop_footer_branch
    %8 = sbr.rel target = $region3
  $region8: #{_lambda_.13} parent=0 // loop_exit
    _

// kernel: _lambda_.14
$region0: #{_lambda_.14}
  #allocation0 [shape = 'u32[]', space=smem, size = 0x4, offset = 0x4, fixed_abs, tag = 'smem constant byte address 0x4 - core index']
  #allocation1 [shape = 'u32[144,128]{1,0:T(1,128)}', space=vmem, size = 0x12000, scoped, tag = 'internal scratch']
  %s0 = inlined_call_operand.vmem [shape: bf16[2,32,632], index: 0, kind: input, shape index: {}]
  %s1 = inlined_call_operand.vmem [shape: bf16[2,32,72], index: 1, kind: input, shape index: {}]
  %s2 = inlined_call_operand.vmem [shape: bf16[2,632,8], index: 2, kind: input, shape index: {}]
  %s3 = inlined_call_operand.vmem [shape: f32[2,1,8], index: 3, kind: input, shape index: {}]
  %s4 = inlined_call_operand.vmem [shape: f32[2,1,8], index: 4, kind: input, shape index: {}]
  %s5 = inlined_call_operand.vmem [shape: f32[32,8], index: 5, kind: output, shape index: {}]
  %s6 = sld [smem:[#allocation0]]
  $region57: #{_lambda_.14} parent=0
    _
  %s8 = ssub.s32 1, %s6
  %s9 = scalar_select 0, %s8, %s6
  loop: start=0, step=1, limit=4
  $region2: #{_lambda_.14} parent=0 // loop_pre_header
    _
  $region3: #{_lambda_.14} parent=0 // loop_header
    %s11 = sphi 0, %s15
    %p12 = scmp.ge.s32.totalorder %s11, 4
    %s21 = sphi 0, %s23
    %s24 = sphi 0, %s21
    %s25 = sphi 0, %s24
    %s41 = sphi 0, %s25
    %s47 = sphi 0, %s49
    %s50 = sphi 0, %s47
    %s51 = sphi 0, %s50
    %s67 = sphi 0, %s51
    %s73 = sphi 0, %s75
    %s76 = sphi 0, %s73
    %s77 = sphi 0, %s76
    %s93 = sphi 0, %s77
    %s99 = sphi 0, %s101
    %s102 = sphi 0, %s99
    %s103 = sphi 0, %s102
    %s119 = sphi 0, %s103
    %s125 = sphi 0, %s127
    %s128 = sphi 0, %s125
    %s129 = sphi 0, %s128
    %s145 = sphi 0, %s129
    %s149 = sphi 0, %s149
    %s151 = sphi 0, %s149
    %s152 = sphi 0, %s151
    %s166 = sphi 0, %s152
  $region4: #{_lambda_.14} parent=0 // loop_header_branch
    %14 = sbr.rel (%p12) target = $region8
  $region5: #{_lambda_.14} parent=0 // loop_body
    %s16 = ssub.s32 %s11, 1
    %s17 = ssub.s32 %s11, 2
    %s18 = sadd.s32 %s11, 1
    %s19 = ssub.s32 %s11, %s18
    %p20 = scmp.eq.s32.totalorder %s19, 0
    %s22 = sadd.s32 %s21, 1
    %s23 = scalar_select %p20, %s21, %s22
    %p26 = pneg %p20
    %p27 = scmp.eq.s32.totalorder %s11, 1
    %p28 = por %p26, %p27
    %p29 = scmp.ne.s32.totalorder %s21, %s24
    %p30 = scmp.eq.s32.totalorder %s11, 0
    %p31 = por %p29, %p30
    %p32 = scmp.ne.s32.totalorder %s21, %s24
    %p33 = scmp.eq.s32.totalorder %s16, 1
    %p34 = por %p32, %p33
    %p35 = scmp.ne.s32.totalorder %s24, %s25
    %p36 = scmp.eq.s32.totalorder %s16, 0
    %p37 = por %p35, %p36
    %p38 = scmp.ne.s32.totalorder %s24, %s25
    %p39 = scmp.eq.s32.totalorder %s17, 1
    %p40 = por %p38, %p39
    %p42 = scmp.ne.s32.totalorder %s25, %s41
    %p43 = scmp.eq.s32.totalorder %s17, 0
    %p44 = por %p42, %p43
    %s45 = ssub.s32 %s11, %s18
    %p46 = scmp.eq.s32.totalorder %s45, 0
    %s48 = sadd.s32 %s47, 1
    %s49 = scalar_select %p46, %s47, %s48
    %p52 = pneg %p46
    %p53 = scmp.eq.s32.totalorder %s11, 1
    %p54 = por %p52, %p53
    %p55 = scmp.ne.s32.totalorder %s47, %s50
    %p56 = scmp.eq.s32.totalorder %s11, 0
    %p57 = por %p55, %p56
    %p58 = scmp.ne.s32.totalorder %s47, %s50
    %p59 = scmp.eq.s32.totalorder %s16, 1
    %p60 = por %p58, %p59
    %p61 = scmp.ne.s32.totalorder %s50, %s51
    %p62 = scmp.eq.s32.totalorder %s16, 0
    %p63 = por %p61, %p62
    %p64 = scmp.ne.s32.totalorder %s50, %s51
    %p65 = scmp.eq.s32.totalorder %s17, 1
    %p66 = por %p64, %p65
    %p68 = scmp.ne.s32.totalorder %s51, %s67
    %p69 = scmp.eq.s32.totalorder %s17, 0
    %p70 = por %p68, %p69
    %s71 = ssub.s32 %s11, %s18
    %p72 = scmp.eq.s32.totalorder %s71, 0
    %s74 = sadd.s32 %s73, 1
    %s75 = scalar_select %p72, %s73, %s74
    %p78 = pneg %p72
    %p79 = scmp.eq.s32.totalorder %s11, 1
    %p80 = por %p78, %p79
    %p81 = scmp.ne.s32.totalorder %s73, %s76
    %p82 = scmp.eq.s32.totalorder %s11, 0
    %p83 = por %p81, %p82
    %p84 = scmp.ne.s32.totalorder %s73, %s76
    %p85 = scmp.eq.s32.totalorder %s16, 1
    %p86 = por %p84, %p85
    %p87 = scmp.ne.s32.totalorder %s76, %s77
    %p88 = scmp.eq.s32.totalorder %s16, 0
    %p89 = por %p87, %p88
    %p90 = scmp.ne.s32.totalorder %s76, %s77
    %p91 = scmp.eq.s32.totalorder %s17, 1
    %p92 = por %p90, %p91
    %p94 = scmp.ne.s32.totalorder %s77, %s93
    %p95 = scmp.eq.s32.totalorder %s17, 0
    %p96 = por %p94, %p95
    %s97 = ssub.s32 %s11, %s18
    %p98 = scmp.eq.s32.totalorder %s97, 0
    %s100 = sadd.s32 %s99, 1
    %s101 = scalar_select %p98, %s99, %s100
    %p104 = pneg %p98
    %p105 = scmp.eq.s32.totalorder %s11, 1
    %p106 = por %p104, %p105
    %p107 = scmp.ne.s32.totalorder %s99, %s102
    %p108 = scmp.eq.s32.totalorder %s11, 0
    %p109 = por %p107, %p108
    %p110 = scmp.ne.s32.totalorder %s99, %s102
    %p111 = scmp.eq.s32.totalorder %s16, 1
    %p112 = por %p110, %p111
    %p113 = scmp.ne.s32.totalorder %s102, %s103
    %p114 = scmp.eq.s32.totalorder %s16, 0
    %p115 = por %p113, %p114
    %p116 = scmp.ne.s32.totalorder %s102, %s103
    %p117 = scmp.eq.s32.totalorder %s17, 1
    %p118 = por %p116, %p117
    %p120 = scmp.ne.s32.totalorder %s103, %s119
    %p121 = scmp.eq.s32.totalorder %s17, 0
    %p122 = por %p120, %p121
    %s123 = ssub.s32 %s11, %s18
    %p124 = scmp.eq.s32.totalorder %s123, 0
    %s126 = sadd.s32 %s125, 1
    %s127 = scalar_select %p124, %s125, %s126
    %p130 = pneg %p124
    %p131 = scmp.eq.s32.totalorder %s11, 1
    %p132 = por %p130, %p131
    %p133 = scmp.ne.s32.totalorder %s125, %s128
    %p134 = scmp.eq.s32.totalorder %s11, 0
    %p135 = por %p133, %p134
    %p136 = scmp.ne.s32.totalorder %s125, %s128
    %p137 = scmp.eq.s32.totalorder %s16, 1
    %p138 = por %p136, %p137
    %p139 = scmp.ne.s32.totalorder %s128, %s129
    %p140 = scmp.eq.s32.totalorder %s16, 0
    %p141 = por %p139, %p140
    %p142 = scmp.ne.s32.totalorder %s128, %s129
    %p143 = scmp.eq.s32.totalorder %s17, 1
    %p144 = por %p142, %p143
    %p146 = scmp.ne.s32.totalorder %s129, %s145
    %p147 = scmp.eq.s32.totalorder %s17, 0
    %p148 = por %p146, %p147
    %s150 = sadd.s32 %s149, 1
    %p153 = scmp.eq.s32.totalorder %s11, 1
    %p154 = scmp.ne.s32.totalorder %s149, %s151
    %p155 = scmp.eq.s32.totalorder %s11, 0
    %p156 = por %p154, %p155
    %p157 = scmp.ne.s32.totalorder %s149, %s151
    %p158 = scmp.eq.s32.totalorder %s16, 1
    %p159 = por %p157, %p158
    %p160 = scmp.ne.s32.totalorder %s151, %s152
    %p161 = scmp.eq.s32.totalorder %s16, 0
    %p162 = por %p160, %p161
    %p163 = scmp.ne.s32.totalorder %s151, %s152
    %p164 = scmp.eq.s32.totalorder %s17, 1
    %p165 = por %p163, %p164
    %p167 = scmp.ne.s32.totalorder %s152, %s166
    %p168 = scmp.eq.s32.totalorder %s17, 0
    %p169 = por %p167, %p168
    %p170 = scmp.le.s32.totalorder 1, %s11
    %p171 = scmp.lt.s32.totalorder %s11, 3
    %p172 = pnand %p170, %p171
    %p173 = pneg %p172
    // Predicated region
    $region9: #{_lambda_.14} parent=5 // pred_check
      _
    $region10: #{_lambda_.14} parent=5 // pred_check_branch
      %175 = sbr.rel (%p172) target = $region12
    $region11: #{_lambda_.14} parent=5 // pred_region
      %s176 = ssub.s32 %s11, 1
    $region12: #{_lambda_.14} parent=5 // pred_fallthru
      _
    %p177 = scmp.lt.s32.totalorder %s11, 2
    // Predicated region
    $region13: #{_lambda_.14} parent=5 // pred_check
      %p178 = pneg %p177
    $region14: #{_lambda_.14} parent=5 // pred_check_branch
      %180 = sbr.rel (%p178) target = $region16
    $region15: #{_lambda_.14} parent=5 // pred_region
      // Predicated region
      $region17: #{_lambda_.14} parent=15 // pred_check
        %p181 = pneg %p31
      $region18: #{_lambda_.14} parent=15 // pred_check_branch
        %183 = sbr.rel (%p181) target = $region20
      $region19: #{_lambda_.14} parent=15 // pred_region
        %p184 = scmp.lt.s32.totalorder %s11, 1
        %s185 = scalar_select %p184, %s11, 1
        %s186 = smul.addr %s185, 20
        %s187 = smul.addr %s186, 4
        %s188 = scalar_lea.vmem %s0, %s187
      $region20: #{_lambda_.14} parent=15 // pred_fallthru
        _
      // Predicated region
      $region21: #{_lambda_.14} parent=15 // pred_check
        %p189 = pneg %p57
      $region22: #{_lambda_.14} parent=15 // pred_check_branch
        %191 = sbr.rel (%p189) target = $region24
      $region23: #{_lambda_.14} parent=15 // pred_region
        %p192 = scmp.lt.s32.totalorder %s11, 1
        %s193 = scalar_select %p192, %s11, 1
        %s194 = smul.addr %s193, 4
        %s195 = smul.addr %s194, 4
        %s196 = scalar_lea.vmem %s1, %s195
      $region24: #{_lambda_.14} parent=15 // pred_fallthru
        _
      // Predicated region
      $region25: #{_lambda_.14} parent=15 // pred_check
        %p197 = pneg %p83
      $region26: #{_lambda_.14} parent=15 // pred_check_branch
        %199 = sbr.rel (%p197) target = $region28
      $region27: #{_lambda_.14} parent=15 // pred_region
        %p200 = scmp.lt.s32.totalorder %s11, 1
        %s201 = scalar_select %p200, %s11, 1
        %s202 = smul.addr %s201, 79
        %s203 = smul.addr %s202, 4
        %s204 = scalar_lea.vmem %s2, %s203
      $region28: #{_lambda_.14} parent=15 // pred_fallthru
        _
      // Predicated region
      $region29: #{_lambda_.14} parent=15 // pred_check
        %p205 = pneg %p109
      $region30: #{_lambda_.14} parent=15 // pred_check_branch
        %207 = sbr.rel (%p205) target = $region32
      $region31: #{_lambda_.14} parent=15 // pred_region
        %p208 = scmp.lt.s32.totalorder %s11, 1
        %s209 = scalar_select %p208, %s11, 1
        %s210 = scalar_lea.vmem %s3, %s209
      $region32: #{_lambda_.14} parent=15 // pred_fallthru
        _
      // Predicated region
      $region33: #{_lambda_.14} parent=15 // pred_check
        %p211 = pneg %p135
      $region34: #{_lambda_.14} parent=15 // pred_check_branch
        %213 = sbr.rel (%p211) target = $region36
      $region35: #{_lambda_.14} parent=15 // pred_region
        %p214 = scmp.lt.s32.totalorder %s11, 1
        %s215 = scalar_select %p214, %s11, 1
        %s216 = scalar_lea.vmem %s4, %s215
      $region36: #{_lambda_.14} parent=15 // pred_fallthru
        _
    $region16: #{_lambda_.14} parent=5 // pred_fallthru
      _
    %p217 = scmp.le.s32.totalorder 1, %s11
    %p218 = scmp.lt.s32.totalorder %s11, 3
    %p219 = pnand %p217, %p218
    %p220 = pneg %p219
    // Predicated region
    $region37: #{_lambda_.14} parent=5 // pred_check
      _
    $region38: #{_lambda_.14} parent=5 // pred_check_branch
      %222 = sbr.rel (%p219) target = $region40
    $region39: #{_lambda_.14} parent=5 // pred_region
      %s223 = ssub.s32 %s11, 1
      %p224 = scmp.lt.s32.totalorder %s16, 1
      %s225 = scalar_select %p224, %s16, 1
      %s226 = smul.addr %s225, 20
      %s227 = smul.addr %s226, 4
      %s228 = scalar_lea.vmem %s0, %s227
      %p229 = pneg %p37
      %p230 = pneg %p34
      %p231 = scmp.lt.s32.totalorder %s16, 1
      %s232 = scalar_select %p231, %s16, 1
      %s233 = smul.addr %s232, 4
      %s234 = smul.addr %s233, 4
      %s235 = scalar_lea.vmem %s1, %s234
      %p236 = pneg %p63
      %p237 = pneg %p60
      %p238 = scmp.lt.s32.totalorder %s16, 1
      %s239 = scalar_select %p238, %s16, 1
      %s240 = smul.addr %s239, 79
      %s241 = smul.addr %s240, 4
      %s242 = scalar_lea.vmem %s2, %s241
      %p243 = pneg %p89
      %p244 = pneg %p86
      %p245 = scmp.lt.s32.totalorder %s16, 1
      %s246 = scalar_select %p245, %s16, 1
      %s247 = scalar_lea.vmem %s3, %s246
      %p248 = pneg %p115
      %p249 = pneg %p112
      %p250 = scmp.lt.s32.totalorder %s16, 1
      %s251 = scalar_select %p250, %s16, 1
      %s252 = scalar_lea.vmem %s4, %s251
      %p253 = pneg %p141
      %p254 = pneg %p138
      %p255 = pneg %p162
      %p256 = pneg %p159
      %p257 = scmp.lt.s32.totalorder %s16, 1
      %s258 = scalar_select %p257, %s16, 1
      %s259 = smul.addr %s258, 20
      %s260 = smul.addr %s259, 4
      %s261 = scalar_lea.vmem %s0, %s260
      %p262 = scmp.lt.s32.totalorder %s16, 1
      %s263 = scalar_select %p262, %s16, 1
      %s264 = smul.addr %s263, 4
      %s265 = smul.addr %s264, 4
      %s266 = scalar_lea.vmem %s1, %s265
      %p267 = scmp.lt.s32.totalorder %s16, 1
      %s268 = scalar_select %p267, %s16, 1
      %s269 = smul.addr %s268, 79
      %s270 = smul.addr %s269, 4
      %s271 = scalar_lea.vmem %s2, %s270
      %p272 = scmp.lt.s32.totalorder %s16, 1
      %s273 = scalar_select %p272, %s16, 1
      %s274 = scalar_lea.vmem %s3, %s273
      %p275 = scmp.lt.s32.totalorder %s16, 1
      %s276 = scalar_select %p275, %s16, 1
      %s277 = scalar_lea.vmem %s4, %s276
      %p279 = scmp.eq.s32.totalorder %s16, 0
      // Predicated region
      $region41: #{_lambda_.14} parent=39 // pred_check
        %p280 = pneg %p279
      $region42: #{_lambda_.14} parent=39 // pred_check_branch
        %282 = sbr.rel (%p280) target = $region44
      $region43: #{_lambda_.14} parent=39 // pred_region
        %vm283 = vcmask 64512
        %284 = vst.msk [vmem:[%s5] sm:$0xff] %vm283, 0.0
        %285 = vst.msk [vmem:[%s5 + $0x8] sm:$0xff] %vm283, 0.0
        %286 = vst.msk [vmem:[%s5 + $0x10] sm:$0xff] %vm283, 0.0
        %287 = vst.msk [vmem:[%s5 + $0x18] sm:$0xff] %vm283, 0.0
      $region44: #{_lambda_.14} parent=39 // pred_fallthru
        _
      %v288 = vld [vmem:[%s261] sm:$0xff]
      %v289 = vld [vmem:[%s261 + $0x8] sm:$0xff]
      %v290 = vld [vmem:[%s261 + $0x10] sm:$0xf]
      %v291 = vld [vmem:[%s261 + $0x14] sm:$0xff]
      %v292 = vld [vmem:[%s261 + $0x1c] sm:$0xff]
      %v293 = vld [vmem:[%s261 + $0x24] sm:$0xf]
      %v294 = vld [vmem:[%s261 + $0x28] sm:$0xff]
      %v295 = vld [vmem:[%s261 + $0x30] sm:$0xff]
      %v296 = vld [vmem:[%s261 + $0x38] sm:$0xf]
      %v297 = vld [vmem:[%s261 + $0x3c] sm:$0xff]
      %v298 = vld [vmem:[%s261 + $0x44] sm:$0xff]
      %v299 = vld [vmem:[%s261 + $0x4c] sm:$0xf]
      %v300 = vld [vmem:[%s271] sm:$0xf]
      %v301 = vld [vmem:[%s271 + $0x4] sm:$0xf]
      %v302 = vld [vmem:[%s271 + $0x8] sm:$0xf]
      %v303 = vld [vmem:[%s271 + $0xc] sm:$0xf]
      %v304 = vld [vmem:[%s271 + $0x10] sm:$0xf]
      %v305 = vld [vmem:[%s271 + $0x14] sm:$0xf]
      %v306 = vld [vmem:[%s271 + $0x18] sm:$0xf]
      %v307 = vld [vmem:[%s271 + $0x1c] sm:$0xf]
      %v308 = vld [vmem:[%s271 + $0x20] sm:$0xf]
      %v309 = vld [vmem:[%s271 + $0x24] sm:$0xf]
      %v310 = vld [vmem:[%s271 + $0x28] sm:$0xf]
      %v311 = vld [vmem:[%s271 + $0x2c] sm:$0xf]
      %v312 = vld [vmem:[%s271 + $0x30] sm:$0xf]
      %v313 = vld [vmem:[%s271 + $0x34] sm:$0xf]
      %v314 = vld [vmem:[%s271 + $0x38] sm:$0xf]
      %v315 = vld [vmem:[%s271 + $0x3c] sm:$0xf]
      %v316 = vld [vmem:[%s271 + $0x40] sm:$0xf]
      %v317 = vld [vmem:[%s271 + $0x44] sm:$0xf]
      %v318 = vld [vmem:[%s271 + $0x48] sm:$0xf]
      %v319 = vld [vmem:[%s271 + $0x4c] sm:$0xf]
      %v320 = vld [vmem:[%s271 + $0x50] sm:$0xf]
      %v321 = vld [vmem:[%s271 + $0x54] sm:$0xf]
      %v322 = vld [vmem:[%s271 + $0x58] sm:$0xf]
      %v323 = vld [vmem:[%s271 + $0x5c] sm:$0xf]
      %v324 = vld [vmem:[%s271 + $0x60] sm:$0xf]
      %v325 = vld [vmem:[%s271 + $0x64] sm:$0xf]
      %v326 = vld [vmem:[%s271 + $0x68] sm:$0xf]
      %v327 = vld [vmem:[%s271 + $0x6c] sm:$0xf]
      %v328 = vld [vmem:[%s271 + $0x70] sm:$0xf]
      %v329 = vld [vmem:[%s271 + $0x74] sm:$0xf]
      %v330 = vld [vmem:[%s271 + $0x78] sm:$0xf]
      %v331 = vld [vmem:[%s271 + $0x7c] sm:$0xf]
      %v332 = vld [vmem:[%s271 + $0x80] sm:$0xf]
      %v333 = vld [vmem:[%s271 + $0x84] sm:$0xf]
      %v334 = vld [vmem:[%s271 + $0x88] sm:$0xf]
      %v335 = vld [vmem:[%s271 + $0x8c] sm:$0xf]
      %v336 = vld [vmem:[%s271 + $0x90] sm:$0xf]
      %v337 = vld [vmem:[%s271 + $0x94] sm:$0xf]
      %v338 = vld [vmem:[%s271 + $0x98] sm:$0xf]
      %v339 = vld [vmem:[%s271 + $0x9c] sm:$0xf]
      %v340 = vld [vmem:[%s271 + $0xa0] sm:$0xf]
      %v341 = vld [vmem:[%s271 + $0xa4] sm:$0xf]
      %v342 = vld [vmem:[%s271 + $0xa8] sm:$0xf]
      %v343 = vld [vmem:[%s271 + $0xac] sm:$0xf]
      %v344 = vld [vmem:[%s271 + $0xb0] sm:$0xf]
      %v345 = vld [vmem:[%s271 + $0xb4] sm:$0xf]
      %v346 = vld [vmem:[%s271 + $0xb8] sm:$0xf]
      %v347 = vld [vmem:[%s271 + $0xbc] sm:$0xf]
      %v348 = vld [vmem:[%s271 + $0xc0] sm:$0xf]
      %v349 = vld [vmem:[%s271 + $0xc4] sm:$0xf]
      %v350 = vld [vmem:[%s271 + $0xc8] sm:$0xf]
      %v351 = vld [vmem:[%s271 + $0xcc] sm:$0xf]
      %v352 = vld [vmem:[%s271 + $0xd0] sm:$0xf]
      %v353 = vld [vmem:[%s271 + $0xd4] sm:$0xf]
      %v354 = vld [vmem:[%s271 + $0xd8] sm:$0xf]
      %v355 = vld [vmem:[%s271 + $0xdc] sm:$0xf]
      %v356 = vld [vmem:[%s271 + $0xe0] sm:$0xf]
      %v357 = vld [vmem:[%s271 + $0xe4] sm:$0xf]
      %v358 = vld [vmem:[%s271 + $0xe8] sm:$0xf]
      %v359 = vld [vmem:[%s271 + $0xec] sm:$0xf]
      %v360 = vld [vmem:[%s271 + $0xf0] sm:$0xf]
      %v361 = vld [vmem:[%s271 + $0xf4] sm:$0xf]
      %v362 = vld [vmem:[%s271 + $0xf8] sm:$0xf]
      %v363 = vld [vmem:[%s271 + $0xfc] sm:$0xf]
      %v364 = vld [vmem:[%s271 + $0x100] sm:$0xf]
      %v365 = vld [vmem:[%s271 + $0x104] sm:$0xf]
      %v366 = vld [vmem:[%s271 + $0x108] sm:$0xf]
      %v367 = vld [vmem:[%s271 + $0x10c] sm:$0xf]
      %v368 = vld [vmem:[%s271 + $0x110] sm:$0xf]
      %v369 = vld [vmem:[%s271 + $0x114] sm:$0xf]
      %v370 = vld [vmem:[%s271 + $0x118] sm:$0xf]
      %v371 = vld [vmem:[%s271 + $0x11c] sm:$0xf]
      %v372 = vld [vmem:[%s271 + $0x120] sm:$0xf]
      %v373 = vld [vmem:[%s271 + $0x124] sm:$0xf]
      %v374 = vld [vmem:[%s271 + $0x128] sm:$0xf]
      %v375 = vld [vmem:[%s271 + $0x12c] sm:$0xf]
      %v376 = vld [vmem:[%s271 + $0x130] sm:$0xf]
      %v377 = vld [vmem:[%s271 + $0x134] sm:$0xf]
      %v378 = vld [vmem:[%s271 + $0x138] sm:$0xf]
      %v379 = vld [vmem:[%s266] sm:$0xf]
      %v380 = vld [vmem:[%s266 + $0x4] sm:$0xf]
      %v381 = vld [vmem:[%s266 + $0x8] sm:$0xf]
      %v382 = vld [vmem:[%s266 + $0xc] sm:$0xf]
      %v383 = vunpack.c.l.bf16 %v379
      %v384 = vunpack.c.l.bf16 %v380
      %v385 = vunpack.c.l.bf16 %v381
      %v386 = vunpack.c.l.bf16 %v382
      %391 = vrot.lane.b32.xlu0 %v383, 120
      %v392 = vpop.permute.xlu0 %391
      %393 = vrot.lane.b32.xlu0 %v384, 120
      %v394 = vpop.permute.xlu0 %393
      %395 = vrot.lane.b32.xlu0 %v385, 120
      %v396 = vpop.permute.xlu0 %395
      %397 = vrot.lane.b32.xlu0 %v386, 120
      %v398 = vpop.permute.xlu0 %397
      %v403 = vmax.f32 %v383, %v392
      %v404 = vmax.f32 %v384, %v394
      %v405 = vmax.f32 %v385, %v396
      %v406 = vmax.f32 %v386, %v398
      %407 = vrot.lane.b32.xlu0 %v383, 112
      %v408 = vpop.permute.xlu0 %407
      %409 = vrot.lane.b32.xlu0 %v384, 112
      %v410 = vpop.permute.xlu0 %409
      %411 = vrot.lane.b32.xlu0 %v385, 112
      %v412 = vpop.permute.xlu0 %411
      %413 = vrot.lane.b32.xlu0 %v386, 112
      %v414 = vpop.permute.xlu0 %413
      %v419 = vmax.f32 %v403, %v408
      %v420 = vmax.f32 %v404, %v410
      %v421 = vmax.f32 %v405, %v412
      %v422 = vmax.f32 %v406, %v414
      %423 = vrot.lane.b32.xlu0 %v383, 104
      %v424 = vpop.permute.xlu0 %423
      %425 = vrot.lane.b32.xlu0 %v384, 104
      %v426 = vpop.permute.xlu0 %425
      %427 = vrot.lane.b32.xlu0 %v385, 104
      %v428 = vpop.permute.xlu0 %427
      %429 = vrot.lane.b32.xlu0 %v386, 104
      %v430 = vpop.permute.xlu0 %429
      %v435 = vmax.f32 %v419, %v424
      %v436 = vmax.f32 %v420, %v426
      %v437 = vmax.f32 %v421, %v428
      %v438 = vmax.f32 %v422, %v430
      %439 = vrot.lane.b32.xlu0 %v383, 96
      %v440 = vpop.permute.xlu0 %439
      %441 = vrot.lane.b32.xlu0 %v384, 96
      %v442 = vpop.permute.xlu0 %441
      %443 = vrot.lane.b32.xlu0 %v385, 96
      %v444 = vpop.permute.xlu0 %443
      %445 = vrot.lane.b32.xlu0 %v386, 96
      %v446 = vpop.permute.xlu0 %445
      %v451 = vmax.f32 %v435, %v440
      %v452 = vmax.f32 %v436, %v442
      %v453 = vmax.f32 %v437, %v444
      %v454 = vmax.f32 %v438, %v446
      %455 = vrot.lane.b32.xlu0 %v383, 88
      %v456 = vpop.permute.xlu0 %455
      %457 = vrot.lane.b32.xlu0 %v384, 88
      %v458 = vpop.permute.xlu0 %457
      %459 = vrot.lane.b32.xlu0 %v385, 88
      %v460 = vpop.permute.xlu0 %459
      %461 = vrot.lane.b32.xlu0 %v386, 88
      %v462 = vpop.permute.xlu0 %461
      %v467 = vmax.f32 %v451, %v456
      %v468 = vmax.f32 %v452, %v458
      %v469 = vmax.f32 %v453, %v460
      %v470 = vmax.f32 %v454, %v462
      %471 = vrot.lane.b32.xlu0 %v383, 80
      %v472 = vpop.permute.xlu0 %471
      %473 = vrot.lane.b32.xlu0 %v384, 80
      %v474 = vpop.permute.xlu0 %473
      %475 = vrot.lane.b32.xlu0 %v385, 80
      %v476 = vpop.permute.xlu0 %475
      %477 = vrot.lane.b32.xlu0 %v386, 80
      %v478 = vpop.permute.xlu0 %477
      %v483 = vmax.f32 %v467, %v472
      %v484 = vmax.f32 %v468, %v474
      %v485 = vmax.f32 %v469, %v476
      %v486 = vmax.f32 %v470, %v478
      %487 = vrot.lane.b32.xlu0 %v383, 72
      %v488 = vpop.permute.xlu0 %487
      %489 = vrot.lane.b32.xlu0 %v384, 72
      %v490 = vpop.permute.xlu0 %489
      %491 = vrot.lane.b32.xlu0 %v385, 72
      %v492 = vpop.permute.xlu0 %491
      %493 = vrot.lane.b32.xlu0 %v386, 72
      %v494 = vpop.permute.xlu0 %493
      %v499 = vmax.f32 %v483, %v488
      %v500 = vmax.f32 %v484, %v490
      %v501 = vmax.f32 %v485, %v492
      %v502 = vmax.f32 %v486, %v494
      %503 = vrot.lane.b32.xlu0 %v383, 64
      %v504 = vpop.permute.xlu0 %503
      %505 = vrot.lane.b32.xlu0 %v384, 64
      %v506 = vpop.permute.xlu0 %505
      %507 = vrot.lane.b32.xlu0 %v385, 64
      %v508 = vpop.permute.xlu0 %507
      %509 = vrot.lane.b32.xlu0 %v386, 64
      %v510 = vpop.permute.xlu0 %509
      %v515 = vmax.f32 %v499, %v504
      %v516 = vmax.f32 %v500, %v506
      %v517 = vmax.f32 %v501, %v508
      %v518 = vmax.f32 %v502, %v510
      %v519 = vld [vmem:[%s5] sm:$0xff]
      %v520 = vld [vmem:[%s5 + $0x8] sm:$0xff]
      %v521 = vld [vmem:[%s5 + $0x10] sm:$0xff]
      %v522 = vld [vmem:[%s5 + $0x18] sm:$0xff]
      %v523 = vld [vmem:[%s274] sm:$0x1]
      %v525 = vlaneseq
      %v526 = vshrl.u32 %v525, 7
      %v527 = vsub.s32 0, %v526
      %v528 = vrot.slane %v523, %v527
      %v530 = vmul.f32 %v515, %v528
      %v531 = vmul.f32 %v516, %v528
      %v532 = vmul.f32 %v517, %v528
      %v533 = vmul.f32 %v518, %v528
      %v546 = vunpack.c.l.b16 %v288
      %v547 = vunpack.c.h.b16 %v288
      %v548 = vunpack.c.l.b16 %v289
      %v549 = vunpack.c.h.b16 %v289
      %v550 = vunpack.c.l.b16 %v290
      %v551 = vunpack.c.l.b16 %v291
      %v552 = vunpack.c.h.b16 %v291
      %v553 = vunpack.c.l.b16 %v292
      %v554 = vunpack.c.h.b16 %v292
      %v555 = vunpack.c.l.b16 %v293
      %v556 = vunpack.c.l.b16 %v294
      %v557 = vunpack.c.h.b16 %v294
      %v558 = vunpack.c.l.b16 %v295
      %v559 = vunpack.c.h.b16 %v295
      %v560 = vunpack.c.l.b16 %v296
      %v561 = vunpack.c.l.b16 %v297
      %v562 = vunpack.c.h.b16 %v297
      %v563 = vunpack.c.l.b16 %v298
      %v564 = vunpack.c.h.b16 %v298
      %v565 = vunpack.c.l.b16 %v299
      %v566 = vpack.c.b16 %v551, %v546
      %v567 = vpack.c.b16 %v552, %v547
      %v568 = vpack.c.b16 %v553, %v548
      %v569 = vpack.c.b16 %v554, %v549
      %v570 = vpack.c.b16 %v555, %v550
      %v571 = vpack.c.b16 %v561, %v556
      %v572 = vpack.c.b16 %v562, %v557
      %v573 = vpack.c.b16 %v563, %v558
      %v574 = vpack.c.b16 %v564, %v559
      %v575 = vpack.c.b16 %v565, %v560
      %v663 = vunpack.c.l.b16 %v300
      %v664 = vunpack.c.l.b16 %v301
      %v665 = vunpack.c.l.b16 %v302
      %v666 = vunpack.c.l.b16 %v303
      %v667 = vunpack.c.l.b16 %v304
      %v668 = vunpack.c.l.b16 %v305
      %v669 = vunpack.c.l.b16 %v306
      %v670 = vunpack.c.l.b16 %v307
      %v671 = vunpack.c.l.b16 %v308
      %v672 = vunpack.c.l.b16 %v309
      %v673 = vunpack.c.l.b16 %v310
      %v674 = vunpack.c.l.b16 %v311
      %v675 = vunpack.c.l.b16 %v312
      %v676 = vunpack.c.l.b16 %v313
      %v677 = vunpack.c.l.b16 %v314
      %v678 = vunpack.c.l.b16 %v315
      %v679 = vunpack.c.l.b16 %v316
      %v680 = vunpack.c.l.b16 %v317
      %v681 = vunpack.c.l.b16 %v318
      %v682 = vunpack.c.l.b16 %v319
      %v683 = vunpack.c.l.b16 %v320
      %v684 = vunpack.c.l.b16 %v321
      %v685 = vunpack.c.l.b16 %v322
      %v686 = vunpack.c.l.b16 %v323
      %v687 = vunpack.c.l.b16 %v324
      %v688 = vunpack.c.l.b16 %v325
      %v689 = vunpack.c.l.b16 %v326
      %v690 = vunpack.c.l.b16 %v327
      %v691 = vunpack.c.l.b16 %v328
      %v692 = vunpack.c.l.b16 %v329
      %v693 = vunpack.c.l.b16 %v330
      %v694 = vunpack.c.l.b16 %v331
      %v695 = vunpack.c.l.b16 %v332
      %v696 = vunpack.c.l.b16 %v333
      %v697 = vunpack.c.l.b16 %v334
      %v698 = vunpack.c.l.b16 %v335
      %v699 = vunpack.c.l.b16 %v336
      %v700 = vunpack.c.l.b16 %v337
      %v701 = vunpack.c.l.b16 %v338
      %v702 = vunpack.c.l.b16 %v339
      %v703 = vunpack.c.l.b16 %v340
      %v704 = vunpack.c.l.b16 %v341
      %v705 = vunpack.c.l.b16 %v342
      %v706 = vunpack.c.l.b16 %v343
      %v707 = vunpack.c.l.b16 %v344
      %v708 = vunpack.c.l.b16 %v345
      %v709 = vunpack.c.l.b16 %v346
      %v710 = vunpack.c.l.b16 %v347
      %v711 = vunpack.c.l.b16 %v348
      %v712 = vunpack.c.l.b16 %v349
      %v713 = vunpack.c.l.b16 %v350
      %v714 = vunpack.c.l.b16 %v351
      %v715 = vunpack.c.l.b16 %v352
      %v716 = vunpack.c.l.b16 %v353
      %v717 = vunpack.c.l.b16 %v354
      %v718 = vunpack.c.l.b16 %v355
      %v719 = vunpack.c.l.b16 %v356
      %v720 = vunpack.c.l.b16 %v357
      %v721 = vunpack.c.l.b16 %v358
      %v722 = vunpack.c.l.b16 %v359
      %v723 = vunpack.c.l.b16 %v360
      %v724 = vunpack.c.l.b16 %v361
      %v725 = vunpack.c.l.b16 %v362
      %v726 = vunpack.c.l.b16 %v363
      %v727 = vunpack.c.l.b16 %v364
      %v728 = vunpack.c.l.b16 %v365
      %v729 = vunpack.c.l.b16 %v366
      %v730 = vunpack.c.l.b16 %v367
      %v731 = vunpack.c.l.b16 %v368
      %v732 = vunpack.c.l.b16 %v369
      %v733 = vunpack.c.l.b16 %v370
      %v734 = vunpack.c.l.b16 %v371
      %v735 = vunpack.c.l.b16 %v372
      %v736 = vunpack.c.l.b16 %v373
      %v737 = vunpack.c.l.b16 %v374
      %v738 = vunpack.c.l.b16 %v375
      %v739 = vunpack.c.l.b16 %v376
      %v740 = vunpack.c.l.b16 %v377
      %v741 = vunpack.c.l.b16 %v378
      %v742 = vpack.c.b16 %v664, %v663
      %v743 = vpack.c.b16 %v666, %v665
      %v744 = vpack.c.b16 %v668, %v667
      %v745 = vpack.c.b16 %v670, %v669
      %v746 = vpack.c.b16 %v672, %v671
      %v747 = vpack.c.b16 %v674, %v673
      %v748 = vpack.c.b16 %v676, %v675
      %v749 = vpack.c.b16 %v678, %v677
      %v750 = vpack.c.b16 %v680, %v679
      %v751 = vpack.c.b16 %v682, %v681
      %v752 = vpack.c.b16 %v684, %v683
      %v753 = vpack.c.b16 %v686, %v685
      %v754 = vpack.c.b16 %v688, %v687
      %v755 = vpack.c.b16 %v690, %v689
      %v756 = vpack.c.b16 %v692, %v691
      %v757 = vpack.c.b16 %v694, %v693
      %v758 = vpack.c.b16 %v696, %v695
      %v759 = vpack.c.b16 %v698, %v697
      %v760 = vpack.c.b16 %v700, %v699
      %v761 = vpack.c.b16 %v702, %v701
      %v762 = vpack.c.b16 %v704, %v703
      %v763 = vpack.c.b16 %v706, %v705
      %v764 = vpack.c.b16 %v708, %v707
      %v765 = vpack.c.b16 %v710, %v709
      %v766 = vpack.c.b16 %v712, %v711
      %v767 = vpack.c.b16 %v714, %v713
      %v768 = vpack.c.b16 %v716, %v715
      %v769 = vpack.c.b16 %v718, %v717
      %v770 = vpack.c.b16 %v720, %v719
      %v771 = vpack.c.b16 %v722, %v721
      %v772 = vpack.c.b16 %v724, %v723
      %v773 = vpack.c.b16 %v726, %v725
      %v774 = vpack.c.b16 %v728, %v727
      %v775 = vpack.c.b16 %v730, %v729
      %v776 = vpack.c.b16 %v732, %v731
      %v777 = vpack.c.b16 %v734, %v733
      %v778 = vpack.c.b16 %v736, %v735
      %v779 = vpack.c.b16 %v738, %v737
      %v780 = vpack.c.b16 %v740, %v739
      %v781 = vpack.c.b16 %v741, %v741
      %vm821 = vcmask 982016
      %v823 = vsel %vm821, %v570, 0
      %v826 = vsel %vm821, %v575, 0
      %vm828 = vcmask 1043456
      %v830 = vsel %vm828, %v781, 0
      %832 = vmatprep.subr.bf16.mxu0 0
      %833 = vmatpush1.bf16.msra.mxu0 %v749
      %834 = vmatprep.subr.bf16.mxu0 0
      %835 = vmatpush1.bf16.msra.mxu0 %v748
      %836 = vmatprep.subr.bf16.mxu0 0
      %837 = vmatpush1.bf16.msra.mxu0 %v747
      %838 = vmatprep.subr.bf16.mxu0 0
      %839 = vmatpush1.bf16.msra.mxu0 %v746
      %840 = vmatprep.subr.bf16.mxu0 0
      %841 = vmatpush1.bf16.msra.mxu0 %v745
      %842 = vmatprep.subr.bf16.mxu0 0
      %843 = vmatpush1.bf16.msra.mxu0 %v744
      %844 = vmatprep.subr.bf16.mxu0 0
      %845 = vmatpush1.bf16.msra.mxu0 %v743
      %846 = vmatprep.subr.bf16.mxu0 0
      %847 = vmatpush1.bf16.msra.mxu0 %v742
      %848 = vmatprep.subr.bf16.mxu0 0
      %849 = vmatpush2.bf16.msra.mxu0 %v757
      %850 = vmatprep.subr.bf16.mxu0 0
      %851 = vmatpush2.bf16.msra.mxu0 %v756
      %852 = vmatprep.subr.bf16.mxu0 0
      %853 = vmatpush2.bf16.msra.mxu0 %v755
      %854 = vmatprep.subr.bf16.mxu0 0
      %855 = vmatpush2.bf16.msra.mxu0 %v754
      %856 = vmatprep.subr.bf16.mxu0 0
      %857 = vmatpush2.bf16.msra.mxu0 %v753
      %858 = vmatprep.subr.bf16.mxu0 0
      %859 = vmatpush2.bf16.msra.mxu0 %v752
      %860 = vmatprep.subr.bf16.mxu0 0
      %861 = vmatpush2.bf16.msra.mxu0 %v751
      %862 = vmatprep.subr.bf16.mxu0 0
      %863 = vmatpush2.bf16.msra.mxu0 %v750
      %864 = vmatprep.mubr.bf16.mxu0 %v567
      %865 = vmatmul.mubr.bf16.gmra.mxu0 %v566
      %v866 = vpop.f32.mrf.mxu0
      %v867 = vadd.f32 %v530, %v866
      %v868 = vpop.f32.mrf.mxu0
      %v869 = vpop.f32.mrf.mxu0
      %v870 = vadd.f32 %v531, %v869
      %v871 = vpop.f32.mrf.mxu0
      %872 = vmatprep.mubr.bf16.mxu0 %v572
      %873 = vmatmul.mubr.bf16.gmra.mxu0 %v571
      %v874 = vpop.f32.mrf.mxu0
      %v875 = vadd.f32 %v532, %v874
      %v876 = vpop.f32.mrf.mxu0
      %v877 = vpop.f32.mrf.mxu0
      %v878 = vadd.f32 %v533, %v877
      %v879 = vpop.f32.mrf.mxu0
      %880 = vdwg.mxu0
      %881 = vmatprep.subr.bf16.mxu0 0
      %882 = vmatpush1.bf16.msra.mxu0 %v765
      %883 = vmatprep.subr.bf16.mxu0 0
      %884 = vmatpush1.bf16.msra.mxu0 %v764
      %885 = vmatprep.subr.bf16.mxu0 0
      %886 = vmatpush1.bf16.msra.mxu0 %v763
      %887 = vmatprep.subr.bf16.mxu0 0
      %888 = vmatpush1.bf16.msra.mxu0 %v762
      %889 = vmatprep.subr.bf16.mxu0 0
      %890 = vmatpush1.bf16.msra.mxu0 %v761
      %891 = vmatprep.subr.bf16.mxu0 0
      %892 = vmatpush1.bf16.msra.mxu0 %v760
      %893 = vmatprep.subr.bf16.mxu0 0
      %894 = vmatpush1.bf16.msra.mxu0 %v759
      %895 = vmatprep.subr.bf16.mxu0 0
      %896 = vmatpush1.bf16.msra.mxu0 %v758
      %897 = vmatprep.subr.bf16.mxu0 0
      %898 = vmatpush2.bf16.msra.mxu0 %v773
      %899 = vmatprep.subr.bf16.mxu0 0
      %900 = vmatpush2.bf16.msra.mxu0 %v772
      %901 = vmatprep.subr.bf16.mxu0 0
      %902 = vmatpush2.bf16.msra.mxu0 %v771
      %903 = vmatprep.subr.bf16.mxu0 0
      %904 = vmatpush2.bf16.msra.mxu0 %v770
      %905 = vmatprep.subr.bf16.mxu0 0
      %906 = vmatpush2.bf16.msra.mxu0 %v769
      %907 = vmatprep.subr.bf16.mxu0 0
      %908 = vmatpush2.bf16.msra.mxu0 %v768
      %909 = vmatprep.subr.bf16.mxu0 0
      %910 = vmatpush2.bf16.msra.mxu0 %v767
      %911 = vmatprep.subr.bf16.mxu0 0
      %912 = vmatpush2.bf16.msra.mxu0 %v766
      %913 = vmatprep.mubr.bf16.mxu0 %v569
      %914 = vmatmul.mubr.bf16.gmra.mxu0 %v568
      %v915 = vpop.f32.mrf.mxu0
      %v916 = vadd.f32 %v867, %v915
      %v917 = vpop.f32.mrf.mxu0
      %v918 = vpop.f32.mrf.mxu0
      %v919 = vadd.f32 %v870, %v918
      %v920 = vpop.f32.mrf.mxu0
      %921 = vmatprep.mubr.bf16.mxu0 %v574
      %922 = vmatmul.mubr.bf16.gmra.mxu0 %v573
      %v923 = vpop.f32.mrf.mxu0
      %v924 = vadd.f32 %v875, %v923
      %v925 = vpop.f32.mrf.mxu0
      %v926 = vpop.f32.mrf.mxu0
      %v927 = vadd.f32 %v878, %v926
      %v928 = vpop.f32.mrf.mxu0
      %929 = vdwg.mxu0
      %930 = vmatprep.subr.bf16.mxu0 0
      %931 = vmatpush1.bf16.msra.mxu0 %v830
      %932 = vmatprep.subr.bf16.mxu0 0
      %933 = vmatpush1.bf16.msra.mxu0 %v780
      %934 = vmatprep.subr.bf16.mxu0 0
      %935 = vmatpush1.bf16.msra.mxu0 %v779
      %936 = vmatprep.subr.bf16.mxu0 0
      %937 = vmatpush1.bf16.msra.mxu0 %v778
      %938 = vmatprep.subr.bf16.mxu0 0
      %939 = vmatpush1.bf16.msra.mxu0 %v777
      %940 = vmatprep.subr.bf16.mxu0 0
      %941 = vmatpush1.bf16.msra.mxu0 %v776
      %942 = vmatprep.subr.bf16.mxu0 0
      %943 = vmatpush1.bf16.msra.mxu0 %v775
      %944 = vmatprep.subr.bf16.mxu0 0
      %945 = vmatpush1.bf16.msra.mxu0 %v774
      %946 = vmatprep.subr.bf16.mxu0 0
      %947 = vmatpush2.bf16.msra.mxu0 0
      %948 = vmatprep.subr.bf16.mxu0 0
      %949 = vmatpush2.bf16.msra.mxu0 0
      %950 = vmatprep.subr.bf16.mxu0 0
      %951 = vmatpush2.bf16.msra.mxu0 0
      %952 = vmatprep.subr.bf16.mxu0 0
      %953 = vmatpush2.bf16.msra.mxu0 0
      %954 = vmatprep.subr.bf16.mxu0 0
      %955 = vmatpush2.bf16.msra.mxu0 0
      %956 = vmatprep.subr.bf16.mxu0 0
      %957 = vmatpush2.bf16.msra.mxu0 0
      %958 = vmatprep.subr.bf16.mxu0 0
      %959 = vmatpush2.bf16.msra.mxu0 0
      %960 = vmatprep.subr.bf16.mxu0 0
      %961 = vmatpush2.bf16.msra.mxu0 0
      %962 = vmatprep.mubr.bf16.mxu0 0
      %963 = vmatmul.mubr.bf16.gmra.mxu0 %v823
      %v964 = vpop.f32.mrf.mxu0
      %v965 = vadd.f32 %v916, %v964
      %v966 = vpop.f32.mrf.mxu0
      %v967 = vpop.f32.mrf.mxu0
      %v968 = vadd.f32 %v919, %v967
      %v969 = vpop.f32.mrf.mxu0
      %970 = vmatprep.mubr.bf16.mxu0 0
      %971 = vmatmul.mubr.bf16.gmra.mxu0 %v826
      %v972 = vpop.f32.mrf.mxu0
      %v973 = vadd.f32 %v924, %v972
      %v974 = vpop.f32.mrf.mxu0
      %v975 = vpop.f32.mrf.mxu0
      %v976 = vadd.f32 %v927, %v975
      %v977 = vpop.f32.mrf.mxu0
      %978 = vdwg.mxu0
      %v979 = vld [vmem:[%s277] sm:$0x1]
      %v981 = vlaneseq
      %v982 = vshrl.u32 %v981, 7
      %v983 = vsub.s32 0, %v982
      %v984 = vrot.slane %v979, %v983
      %v986 = vadd.f32 %v965, %v984
      %v987 = vadd.f32 %v968, %v984
      %v988 = vadd.f32 %v973, %v984
      %v989 = vadd.f32 %v976, %v984
      %v990 = vadd.f32 %v519, %v986
      %v991 = vadd.f32 %v520, %v987
      %v992 = vadd.f32 %v521, %v988
      %v993 = vadd.f32 %v522, %v989
      %vm994 = vcmask 64512
      %995 = vst.msk [vmem:[%s5] sm:$0xff] %vm994, %v990
      %996 = vst.msk [vmem:[%s5 + $0x8] sm:$0xff] %vm994, %v991
      %997 = vst.msk [vmem:[%s5 + $0x10] sm:$0xff] %vm994, %v992
      %998 = vst.msk [vmem:[%s5 + $0x18] sm:$0xff] %vm994, %v993
      // Predicated region
      $region45: #{_lambda_.14} parent=39 // pred_check
        %p999 = pneg %p159
      $region46: #{_lambda_.14} parent=39 // pred_check_branch
        %1001 = sbr.rel (%p999) target = $region48
      $region47: #{_lambda_.14} parent=39 // pred_region
        _
      $region48: #{_lambda_.14} parent=39 // pred_fallthru
        _
      // Predicated region
      $region49: #{_lambda_.14} parent=39 // pred_check
        %p1002 = pneg %p159
      $region50: #{_lambda_.14} parent=39 // pred_check_branch
        %1004 = sbr.rel (%p1002) target = $region52
      $region51: #{_lambda_.14} parent=39 // pred_region
        _
      $region52: #{_lambda_.14} parent=39 // pred_fallthru
        _
    $region40: #{_lambda_.14} parent=5 // pred_fallthru
      _
    %p1005 = scmp.le.s32.totalorder 2, %s11
    // Predicated region
    $region53: #{_lambda_.14} parent=5 // pred_check
      %p1006 = pneg %p1005
    $region54: #{_lambda_.14} parent=5 // pred_check_branch
      %1008 = sbr.rel (%p1006) target = $region56
    $region55: #{_lambda_.14} parent=5 // pred_region
      %s1009 = ssub.s32 %s11, 2
    $region56: #{_lambda_.14} parent=5 // pred_fallthru
      _
  $region6: #{_lambda_.14} parent=0 // loop_footer
    %s15 = sadd.s32 1, %s11
  $region7: #{_lambda_.14} parent=0 // loop_footer_branch
    %10 = sbr.rel target = $region3
  $region8: #{_lambda_.14} parent=0 // loop_exit
    _

// kernel: _lambda_.15
$region0: #{_lambda_.15}
  #allocation0 [shape = 'u32[]', space=smem, size = 0x4, offset = 0x4, fixed_abs, tag = 'smem constant byte address 0x4 - core index']
  #allocation1 [shape = 'u32[144,128]{1,0:T(1,128)}', space=vmem, size = 0x12000, scoped, tag = 'internal scratch']
  %s0 = inlined_call_operand.vmem [shape: bf16[3,32,272], index: 0, kind: input, shape index: {}]
  %s1 = inlined_call_operand.vmem [shape: bf16[3,272,16], index: 1, kind: input, shape index: {}]
  %s2 = inlined_call_operand.vmem [shape: f32[3,1,16], index: 2, kind: input, shape index: {}]
  %s3 = inlined_call_operand.vmem [shape: bf16[3,32,16], index: 3, kind: output, shape index: {}]
  %s4 = sld [smem:[#allocation0]]
  $region45: #{_lambda_.15} parent=0
    _
  %s6 = ssub.s32 1, %s4
  %s7 = scalar_select 0, %s6, %s4
  loop: start=0, step=1, limit=5
  $region2: #{_lambda_.15} parent=0 // loop_pre_header
    _
  $region3: #{_lambda_.15} parent=0 // loop_header
    %s9 = sphi 0, %s13
    %p10 = scmp.ge.s32.totalorder %s9, 5
    %s19 = sphi 0, %s21
    %s22 = sphi 0, %s19
    %s23 = sphi 0, %s22
    %s39 = sphi 0, %s23
    %s45 = sphi 0, %s47
    %s48 = sphi 0, %s45
    %s49 = sphi 0, %s48
    %s65 = sphi 0, %s49
    %s71 = sphi 0, %s73
    %s74 = sphi 0, %s71
    %s75 = sphi 0, %s74
    %s91 = sphi 0, %s75
    %s97 = sphi 0, %s99
    %s100 = sphi 0, %s97
    %s101 = sphi 0, %s100
    %s117 = sphi 0, %s101
  $region4: #{_lambda_.15} parent=0 // loop_header_branch
    %12 = sbr.rel (%p10) target = $region8
  $region5: #{_lambda_.15} parent=0 // loop_body
    %s14 = ssub.s32 %s9, 1
    %s15 = ssub.s32 %s9, 2
    %s16 = sadd.s32 %s9, 1
    %s17 = ssub.s32 %s9, %s16
    %p18 = scmp.eq.s32.totalorder %s17, 0
    %s20 = sadd.s32 %s19, 1
    %s21 = scalar_select %p18, %s19, %s20
    %p24 = pneg %p18
    %p25 = scmp.eq.s32.totalorder %s9, 2
    %p26 = por %p24, %p25
    %p27 = scmp.ne.s32.totalorder %s19, %s22
    %p28 = scmp.eq.s32.totalorder %s9, 0
    %p29 = por %p27, %p28
    %p30 = scmp.ne.s32.totalorder %s19, %s22
    %p31 = scmp.eq.s32.totalorder %s14, 2
    %p32 = por %p30, %p31
    %p33 = scmp.ne.s32.totalorder %s22, %s23
    %p34 = scmp.eq.s32.totalorder %s14, 0
    %p35 = por %p33, %p34
    %p36 = scmp.ne.s32.totalorder %s22, %s23
    %p37 = scmp.eq.s32.totalorder %s15, 2
    %p38 = por %p36, %p37
    %p40 = scmp.ne.s32.totalorder %s23, %s39
    %p41 = scmp.eq.s32.totalorder %s15, 0
    %p42 = por %p40, %p41
    %s43 = ssub.s32 %s9, %s16
    %p44 = scmp.eq.s32.totalorder %s43, 0
    %s46 = sadd.s32 %s45, 1
    %s47 = scalar_select %p44, %s45, %s46
    %p50 = pneg %p44
    %p51 = scmp.eq.s32.totalorder %s9, 2
    %p52 = por %p50, %p51
    %p53 = scmp.ne.s32.totalorder %s45, %s48
    %p54 = scmp.eq.s32.totalorder %s9, 0
    %p55 = por %p53, %p54
    %p56 = scmp.ne.s32.totalorder %s45, %s48
    %p57 = scmp.eq.s32.totalorder %s14, 2
    %p58 = por %p56, %p57
    %p59 = scmp.ne.s32.totalorder %s48, %s49
    %p60 = scmp.eq.s32.totalorder %s14, 0
    %p61 = por %p59, %p60
    %p62 = scmp.ne.s32.totalorder %s48, %s49
    %p63 = scmp.eq.s32.totalorder %s15, 2
    %p64 = por %p62, %p63
    %p66 = scmp.ne.s32.totalorder %s49, %s65
    %p67 = scmp.eq.s32.totalorder %s15, 0
    %p68 = por %p66, %p67
    %s69 = ssub.s32 %s9, %s16
    %p70 = scmp.eq.s32.totalorder %s69, 0
    %s72 = sadd.s32 %s71, 1
    %s73 = scalar_select %p70, %s71, %s72
    %p76 = pneg %p70
    %p77 = scmp.eq.s32.totalorder %s9, 2
    %p78 = por %p76, %p77
    %p79 = scmp.ne.s32.totalorder %s71, %s74
    %p80 = scmp.eq.s32.totalorder %s9, 0
    %p81 = por %p79, %p80
    %p82 = scmp.ne.s32.totalorder %s71, %s74
    %p83 = scmp.eq.s32.totalorder %s14, 2
    %p84 = por %p82, %p83
    %p85 = scmp.ne.s32.totalorder %s74, %s75
    %p86 = scmp.eq.s32.totalorder %s14, 0
    %p87 = por %p85, %p86
    %p88 = scmp.ne.s32.totalorder %s74, %s75
    %p89 = scmp.eq.s32.totalorder %s15, 2
    %p90 = por %p88, %p89
    %p92 = scmp.ne.s32.totalorder %s75, %s91
    %p93 = scmp.eq.s32.totalorder %s15, 0
    %p94 = por %p92, %p93
    %s95 = ssub.s32 %s9, %s16
    %p96 = scmp.eq.s32.totalorder %s95, 0
    %s98 = sadd.s32 %s97, 1
    %s99 = scalar_select %p96, %s97, %s98
    %p102 = pneg %p96
    %p103 = scmp.eq.s32.totalorder %s9, 2
    %p104 = por %p102, %p103
    %p105 = scmp.ne.s32.totalorder %s97, %s100
    %p106 = scmp.eq.s32.totalorder %s9, 0
    %p107 = por %p105, %p106
    %p108 = scmp.ne.s32.totalorder %s97, %s100
    %p109 = scmp.eq.s32.totalorder %s14, 2
    %p110 = por %p108, %p109
    %p111 = scmp.ne.s32.totalorder %s100, %s101
    %p112 = scmp.eq.s32.totalorder %s14, 0
    %p113 = por %p111, %p112
    %p114 = scmp.ne.s32.totalorder %s100, %s101
    %p115 = scmp.eq.s32.totalorder %s15, 2
    %p116 = por %p114, %p115
    %p118 = scmp.ne.s32.totalorder %s101, %s117
    %p119 = scmp.eq.s32.totalorder %s15, 0
    %p120 = por %p118, %p119
    %p121 = scmp.le.s32.totalorder 1, %s9
    %p122 = scmp.lt.s32.totalorder %s9, 4
    %p123 = pnand %p121, %p122
    %p124 = pneg %p123
    // Predicated region
    $region9: #{_lambda_.15} parent=5 // pred_check
      _
    $region10: #{_lambda_.15} parent=5 // pred_check_branch
      %126 = sbr.rel (%p123) target = $region12
    $region11: #{_lambda_.15} parent=5 // pred_region
      %s127 = ssub.s32 %s9, 1
    $region12: #{_lambda_.15} parent=5 // pred_fallthru
      _
    %p128 = scmp.lt.s32.totalorder %s9, 3
    // Predicated region
    $region13: #{_lambda_.15} parent=5 // pred_check
      %p129 = pneg %p128
    $region14: #{_lambda_.15} parent=5 // pred_check_branch
      %131 = sbr.rel (%p129) target = $region16
    $region15: #{_lambda_.15} parent=5 // pred_region
      // Predicated region
      $region17: #{_lambda_.15} parent=15 // pred_check
        %p132 = pneg %p29
      $region18: #{_lambda_.15} parent=15 // pred_check_branch
        %134 = sbr.rel (%p132) target = $region20
      $region19: #{_lambda_.15} parent=15 // pred_region
        %p135 = scmp.lt.s32.totalorder %s9, 2
        %s136 = scalar_select %p135, %s9, 2
        %s137 = smul.addr %s136, 12
        %s138 = smul.addr %s137, 4
        %s139 = scalar_lea.vmem %s0, %s138
      $region20: #{_lambda_.15} parent=15 // pred_fallthru
        _
      // Predicated region
      $region21: #{_lambda_.15} parent=15 // pred_check
        %p140 = pneg %p55
      $region22: #{_lambda_.15} parent=15 // pred_check_branch
        %142 = sbr.rel (%p140) target = $region24
      $region23: #{_lambda_.15} parent=15 // pred_region
        %p143 = scmp.lt.s32.totalorder %s9, 2
        %s144 = scalar_select %p143, %s9, 2
        %s145 = smul.addr %s144, 34
        %s146 = smul.addr %s145, 4
        %s147 = scalar_lea.vmem %s1, %s146
      $region24: #{_lambda_.15} parent=15 // pred_fallthru
        _
      // Predicated region
      $region25: #{_lambda_.15} parent=15 // pred_check
        %p148 = pneg %p81
      $region26: #{_lambda_.15} parent=15 // pred_check_branch
        %150 = sbr.rel (%p148) target = $region28
      $region27: #{_lambda_.15} parent=15 // pred_region
        %p151 = scmp.lt.s32.totalorder %s9, 2
        %s152 = scalar_select %p151, %s9, 2
        %s153 = scalar_lea.vmem %s2, %s152
      $region28: #{_lambda_.15} parent=15 // pred_fallthru
        _
    $region16: #{_lambda_.15} parent=5 // pred_fallthru
      _
    %p154 = scmp.le.s32.totalorder 1, %s9
    %p155 = scmp.lt.s32.totalorder %s9, 4
    %p156 = pnand %p154, %p155
    %p157 = pneg %p156
    // Predicated region
    $region29: #{_lambda_.15} parent=5 // pred_check
      _
    $region30: #{_lambda_.15} parent=5 // pred_check_branch
      %159 = sbr.rel (%p156) target = $region32
    $region31: #{_lambda_.15} parent=5 // pred_region
      %s160 = ssub.s32 %s9, 1
      %p161 = scmp.lt.s32.totalorder %s14, 2
      %s162 = scalar_select %p161, %s14, 2
      %s163 = smul.addr %s162, 12
      %s164 = smul.addr %s163, 4
      %s165 = scalar_lea.vmem %s0, %s164
      %p166 = pneg %p35
      %p167 = pneg %p32
      %p168 = scmp.lt.s32.totalorder %s14, 2
      %s169 = scalar_select %p168, %s14, 2
      %s170 = smul.addr %s169, 34
      %s171 = smul.addr %s170, 4
      %s172 = scalar_lea.vmem %s1, %s171
      %p173 = pneg %p61
      %p174 = pneg %p58
      %p175 = scmp.lt.s32.totalorder %s14, 2
      %s176 = scalar_select %p175, %s14, 2
      %s177 = scalar_lea.vmem %s2, %s176
      %p178 = pneg %p87
      %p179 = pneg %p84
      %p180 = pneg %p113
      %p181 = pneg %p110
      %p182 = scmp.lt.s32.totalorder %s14, 2
      %s183 = scalar_select %p182, %s14, 2
      %s184 = smul.addr %s183, 4
      %s185 = smul.addr %s184, 4
      %s186 = scalar_lea.vmem %s3, %s185
      %p187 = scmp.lt.s32.totalorder %s14, 2
      %s188 = scalar_select %p187, %s14, 2
      %s189 = smul.addr %s188, 12
      %s190 = smul.addr %s189, 4
      %s191 = scalar_lea.vmem %s0, %s190
      %p192 = scmp.lt.s32.totalorder %s14, 2
      %s193 = scalar_select %p192, %s14, 2
      %s194 = smul.addr %s193, 34
      %s195 = smul.addr %s194, 4
      %s196 = scalar_lea.vmem %s1, %s195
      %p197 = scmp.lt.s32.totalorder %s14, 2
      %s198 = scalar_select %p197, %s14, 2
      %s199 = scalar_lea.vmem %s2, %s198
      %p200 = scmp.lt.s32.totalorder %s14, 2
      %s201 = scalar_select %p200, %s14, 2
      %s202 = smul.addr %s201, 4
      %s203 = smul.addr %s202, 4
      %s204 = scalar_lea.vmem %s3, %s203
      %v206 = vld [vmem:[%s191] sm:$0xff]
      %v207 = vld [vmem:[%s191 + $0x8] sm:$0xf]
      %v208 = vld [vmem:[%s191 + $0xc] sm:$0xff]
      %v209 = vld [vmem:[%s191 + $0x14] sm:$0xf]
      %v210 = vld [vmem:[%s191 + $0x18] sm:$0xff]
      %v211 = vld [vmem:[%s191 + $0x20] sm:$0xf]
      %v212 = vld [vmem:[%s191 + $0x24] sm:$0xff]
      %v213 = vld [vmem:[%s191 + $0x2c] sm:$0xf]
      %v214 = vld [vmem:[%s196] sm:$0xf]
      %v215 = vld [vmem:[%s196 + $0x4] sm:$0xf]
      %v216 = vld [vmem:[%s196 + $0x8] sm:$0xf]
      %v217 = vld [vmem:[%s196 + $0xc] sm:$0xf]
      %v218 = vld [vmem:[%s196 + $0x10] sm:$0xf]
      %v219 = vld [vmem:[%s196 + $0x14] sm:$0xf]
      %v220 = vld [vmem:[%s196 + $0x18] sm:$0xf]
      %v221 = vld [vmem:[%s196 + $0x1c] sm:$0xf]
      %v222 = vld [vmem:[%s196 + $0x20] sm:$0xf]
      %v223 = vld [vmem:[%s196 + $0x24] sm:$0xf]
      %v224 = vld [vmem:[%s196 + $0x28] sm:$0xf]
      %v225 = vld [vmem:[%s196 + $0x2c] sm:$0xf]
      %v226 = vld [vmem:[%s196 + $0x30] sm:$0xf]
      %v227 = vld [vmem:[%s196 + $0x34] sm:$0xf]
      %v228 = vld [vmem:[%s196 + $0x38] sm:$0xf]
      %v229 = vld [vmem:[%s196 + $0x3c] sm:$0xf]
      %v230 = vld [vmem:[%s196 + $0x40] sm:$0xf]
      %v231 = vld [vmem:[%s196 + $0x44] sm:$0xf]
      %v232 = vld [vmem:[%s196 + $0x48] sm:$0xf]
      %v233 = vld [vmem:[%s196 + $0x4c] sm:$0xf]
      %v234 = vld [vmem:[%s196 + $0x50] sm:$0xf]
      %v235 = vld [vmem:[%s196 + $0x54] sm:$0xf]
      %v236 = vld [vmem:[%s196 + $0x58] sm:$0xf]
      %v237 = vld [vmem:[%s196 + $0x5c] sm:$0xf]
      %v238 = vld [vmem:[%s196 + $0x60] sm:$0xf]
      %v239 = vld [vmem:[%s196 + $0x64] sm:$0xf]
      %v240 = vld [vmem:[%s196 + $0x68] sm:$0xf]
      %v241 = vld [vmem:[%s196 + $0x6c] sm:$0xf]
      %v242 = vld [vmem:[%s196 + $0x70] sm:$0xf]
      %v243 = vld [vmem:[%s196 + $0x74] sm:$0xf]
      %v244 = vld [vmem:[%s196 + $0x78] sm:$0xf]
      %v245 = vld [vmem:[%s196 + $0x7c] sm:$0xf]
      %v246 = vld [vmem:[%s196 + $0x80] sm:$0xf]
      %v247 = vld [vmem:[%s196 + $0x84] sm:$0xf]
      %v248 = vld [vmem:[%s199] sm:$0x1]
      %v250 = vlaneseq
      %v251 = vshrl.u32 %v250, 7
      %v252 = vsub.s32 0, %v251
      %v253 = vrot.slane %v248, %v252
      %v263 = vunpack.c.l.b16 %v206
      %v264 = vunpack.c.h.b16 %v206
      %v265 = vunpack.c.l.b16 %v207
      %v266 = vunpack.c.l.b16 %v208
      %v267 = vunpack.c.h.b16 %v208
      %v268 = vunpack.c.l.b16 %v209
      %v269 = vunpack.c.l.b16 %v210
      %v270 = vunpack.c.h.b16 %v210
      %v271 = vunpack.c.l.b16 %v211
      %v272 = vunpack.c.l.b16 %v212
      %v273 = vunpack.c.h.b16 %v212
      %v274 = vunpack.c.l.b16 %v213
      %v275 = vpack.c.b16 %v266, %v263
      %v276 = vpack.c.b16 %v267, %v264
      %v277 = vpack.c.b16 %v268, %v265
      %v278 = vpack.c.b16 %v272, %v269
      %v279 = vpack.c.b16 %v273, %v270
      %v280 = vpack.c.b16 %v274, %v271
      %v319 = vunpack.c.l.b16 %v214
      %v320 = vunpack.c.l.b16 %v215
      %v321 = vunpack.c.l.b16 %v216
      %v322 = vunpack.c.l.b16 %v217
      %v323 = vunpack.c.l.b16 %v218
      %v324 = vunpack.c.l.b16 %v219
      %v325 = vunpack.c.l.b16 %v220
      %v326 = vunpack.c.l.b16 %v221
      %v327 = vunpack.c.l.b16 %v222
      %v328 = vunpack.c.l.b16 %v223
      %v329 = vunpack.c.l.b16 %v224
      %v330 = vunpack.c.l.b16 %v225
      %v331 = vunpack.c.l.b16 %v226
      %v332 = vunpack.c.l.b16 %v227
      %v333 = vunpack.c.l.b16 %v228
      %v334 = vunpack.c.l.b16 %v229
      %v335 = vunpack.c.l.b16 %v230
      %v336 = vunpack.c.l.b16 %v231
      %v337 = vunpack.c.l.b16 %v232
      %v338 = vunpack.c.l.b16 %v233
      %v339 = vunpack.c.l.b16 %v234
      %v340 = vunpack.c.l.b16 %v235
      %v341 = vunpack.c.l.b16 %v236
      %v342 = vunpack.c.l.b16 %v237
      %v343 = vunpack.c.l.b16 %v238
      %v344 = vunpack.c.l.b16 %v239
      %v345 = vunpack.c.l.b16 %v240
      %v346 = vunpack.c.l.b16 %v241
      %v347 = vunpack.c.l.b16 %v242
      %v348 = vunpack.c.l.b16 %v243
      %v349 = vunpack.c.l.b16 %v244
      %v350 = vunpack.c.l.b16 %v245
      %v351 = vunpack.c.l.b16 %v246
      %v352 = vunpack.c.l.b16 %v247
      %v353 = vpack.c.b16 %v320, %v319
      %v354 = vpack.c.b16 %v322, %v321
      %v355 = vpack.c.b16 %v324, %v323
      %v356 = vpack.c.b16 %v326, %v325
      %v357 = vpack.c.b16 %v328, %v327
      %v358 = vpack.c.b16 %v330, %v329
      %v359 = vpack.c.b16 %v332, %v331
      %v360 = vpack.c.b16 %v334, %v333
      %v361 = vpack.c.b16 %v336, %v335
      %v362 = vpack.c.b16 %v338, %v337
      %v363 = vpack.c.b16 %v340, %v339
      %v364 = vpack.c.b16 %v342, %v341
      %v365 = vpack.c.b16 %v344, %v343
      %v366 = vpack.c.b16 %v346, %v345
      %v367 = vpack.c.b16 %v348, %v347
      %v368 = vpack.c.b16 %v350, %v349
      %v369 = vpack.c.b16 %v352, %v351
      %vm387 = vcmask 130048
      %v389 = vsel %vm387, %v277, 0
      %v392 = vsel %vm387, %v280, 0
      %394 = vmatprep.subr.bf16.mxu0 0
      %395 = vmatpush1.bf16.msra.mxu0 %v360
      %396 = vmatprep.subr.bf16.mxu0 0
      %397 = vmatpush1.bf16.msra.mxu0 %v359
      %398 = vmatprep.subr.bf16.mxu0 0
      %399 = vmatpush1.bf16.msra.mxu0 %v358
      %400 = vmatprep.subr.bf16.mxu0 0
      %401 = vmatpush1.bf16.msra.mxu0 %v357
      %402 = vmatprep.subr.bf16.mxu0 0
      %403 = vmatpush1.bf16.msra.mxu0 %v356
      %404 = vmatprep.subr.bf16.mxu0 0
      %405 = vmatpush1.bf16.msra.mxu0 %v355
      %406 = vmatprep.subr.bf16.mxu0 0
      %407 = vmatpush1.bf16.msra.mxu0 %v354
      %408 = vmatprep.subr.bf16.mxu0 0
      %409 = vmatpush1.bf16.msra.mxu0 %v353
      %410 = vmatprep.subr.bf16.mxu0 0
      %411 = vmatpush2.bf16.msra.mxu0 %v368
      %412 = vmatprep.subr.bf16.mxu0 0
      %413 = vmatpush2.bf16.msra.mxu0 %v367
      %414 = vmatprep.subr.bf16.mxu0 0
      %415 = vmatpush2.bf16.msra.mxu0 %v366
      %416 = vmatprep.subr.bf16.mxu0 0
      %417 = vmatpush2.bf16.msra.mxu0 %v365
      %418 = vmatprep.subr.bf16.mxu0 0
      %419 = vmatpush2.bf16.msra.mxu0 %v364
      %420 = vmatprep.subr.bf16.mxu0 0
      %421 = vmatpush2.bf16.msra.mxu0 %v363
      %422 = vmatprep.subr.bf16.mxu0 0
      %423 = vmatpush2.bf16.msra.mxu0 %v362
      %424 = vmatprep.subr.bf16.mxu0 0
      %425 = vmatpush2.bf16.msra.mxu0 %v361
      %426 = vmatprep.mubr.bf16.mxu0 %v276
      %427 = vmatmul.mubr.bf16.gmra.mxu0 %v275
      %v428 = vpop.f32.mrf.mxu0
      %v429 = vadd.f32 %v253, %v428
      %v430 = vpop.f32.mrf.mxu0
      %v431 = vpop.f32.mrf.mxu0
      %v432 = vadd.f32 %v253, %v431
      %v433 = vpop.f32.mrf.mxu0
      %434 = vmatprep.mubr.bf16.mxu0 %v279
      %435 = vmatmul.mubr.bf16.gmra.mxu0 %v278
      %v436 = vpop.f32.mrf.mxu0
      %v437 = vadd.f32 %v253, %v436
      %v438 = vpop.f32.mrf.mxu0
      %v439 = vpop.f32.mrf.mxu0
      %v440 = vadd.f32 %v253, %v439
      %v441 = vpop.f32.mrf.mxu0
      %442 = vdwg.mxu0
      %443 = vmatprep.subr.bf16.mxu0 0
      %444 = vmatpush1.bf16.msra.mxu0 0
      %445 = vmatprep.subr.bf16.mxu0 0
      %446 = vmatpush1.bf16.msra.mxu0 0
      %447 = vmatprep.subr.bf16.mxu0 0
      %448 = vmatpush1.bf16.msra.mxu0 0
      %449 = vmatprep.subr.bf16.mxu0 0
      %450 = vmatpush1.bf16.msra.mxu0 0
      %451 = vmatprep.subr.bf16.mxu0 0
      %452 = vmatpush1.bf16.msra.mxu0 0
      %453 = vmatprep.subr.bf16.mxu0 0
      %454 = vmatpush1.bf16.msra.mxu0 0
      %455 = vmatprep.subr.bf16.mxu0 0
      %456 = vmatpush1.bf16.msra.mxu0 0
      %457 = vmatprep.subr.bf16.mxu0 0
      %458 = vmatpush1.bf16.msra.mxu0 %v369
      %459 = vmatprep.subr.bf16.mxu0 0
      %460 = vmatpush2.bf16.msra.mxu0 0
      %461 = vmatprep.subr.bf16.mxu0 0
      %462 = vmatpush2.bf16.msra.mxu0 0
      %463 = vmatprep.subr.bf16.mxu0 0
      %464 = vmatpush2.bf16.msra.mxu0 0
      %465 = vmatprep.subr.bf16.mxu0 0
      %466 = vmatpush2.bf16.msra.mxu0 0
      %467 = vmatprep.subr.bf16.mxu0 0
      %468 = vmatpush2.bf16.msra.mxu0 0
      %469 = vmatprep.subr.bf16.mxu0 0
      %470 = vmatpush2.bf16.msra.mxu0 0
      %471 = vmatprep.subr.bf16.mxu0 0
      %472 = vmatpush2.bf16.msra.mxu0 0
      %473 = vmatprep.subr.bf16.mxu0 0
      %474 = vmatpush2.bf16.msra.mxu0 0
      %475 = vmatprep.mubr.bf16.mxu0 0
      %476 = vmatmul.mubr.bf16.gmra.mxu0 %v389
      %v477 = vpop.f32.mrf.mxu0
      %v478 = vadd.f32 %v429, %v477
      %v479 = vpop.f32.mrf.mxu0
      %v480 = vpop.f32.mrf.mxu0
      %v481 = vadd.f32 %v432, %v480
      %v482 = vpop.f32.mrf.mxu0
      %483 = vmatprep.mubr.bf16.mxu0 0
      %484 = vmatmul.mubr.bf16.gmra.mxu0 %v392
      %v485 = vpop.f32.mrf.mxu0
      %v486 = vadd.f32 %v437, %v485
      %v487 = vpop.f32.mrf.mxu0
      %v488 = vpop.f32.mrf.mxu0
      %v489 = vadd.f32 %v440, %v488
      %v490 = vpop.f32.mrf.mxu0
      %491 = vdwg.mxu0
      %v492 = vmax.f32 %v478, 0.0
      %v493 = vmax.f32 %v481, 0.0
      %v494 = vmax.f32 %v486, 0.0
      %v495 = vmax.f32 %v489, 0.0
      %v496 = vpack.c.bf16 %v493, %v492
      %v497 = vpack.c.bf16 %v495, %v494
      %v500 = vunpack.c.l.b16 %v496
      %v501 = vunpack.c.h.b16 %v496
      %v502 = vunpack.c.l.b16 %v497
      %v503 = vunpack.c.h.b16 %v497
      %v504 = vpack.c.b16 %v500, %v500
      %v505 = vpack.c.b16 %v501, %v501
      %v506 = vpack.c.b16 %v502, %v502
      %v507 = vpack.c.b16 %v503, %v503
      %vm512 = vcmask 125952
      %513 = vst.msk [vmem:[%s204] sm:$0xf] %vm512, %v504
      %514 = vst.msk [vmem:[%s204 + $0x4] sm:$0xf] %vm512, %v505
      %515 = vst.msk [vmem:[%s204 + $0x8] sm:$0xf] %vm512, %v506
      %516 = vst.msk [vmem:[%s204 + $0xc] sm:$0xf] %vm512, %v507
      %p517 = scmp.lt.s32.totalorder %s14, 2
      %s518 = scalar_select %p517, %s14, 2
      %s519 = smul.addr %s518, 4
      %s520 = smul.addr %s519, 4
      %s521 = scalar_lea.vmem %s3, %s520
      // Predicated region
      $region33: #{_lambda_.15} parent=31 // pred_check
        %p522 = pneg %p110
      $region34: #{_lambda_.15} parent=31 // pred_check_branch
        %524 = sbr.rel (%p522) target = $region36
      $region35: #{_lambda_.15} parent=31 // pred_region
        _
      $region36: #{_lambda_.15} parent=31 // pred_fallthru
        _
    $region32: #{_lambda_.15} parent=5 // pred_fallthru
      _
    %p525 = scmp.le.s32.totalorder 2, %s9
    // Predicated region
    $region37: #{_lambda_.15} parent=5 // pred_check
      %p526 = pneg %p525
    $region38: #{_lambda_.15} parent=5 // pred_check_branch
      %528 = sbr.rel (%p526) target = $region40
    $region39: #{_lambda_.15} parent=5 // pred_region
      %s529 = ssub.s32 %s9, 2
      // Predicated region
      $region41: #{_lambda_.15} parent=39 // pred_check
        %p530 = pneg %p116
      $region42: #{_lambda_.15} parent=39 // pred_check_branch
        %532 = sbr.rel (%p530) target = $region44
      $region43: #{_lambda_.15} parent=39 // pred_region
        %p533 = scmp.lt.s32.totalorder %s15, 2
        %s534 = scalar_select %p533, %s15, 2
        %s535 = smul.addr %s534, 4
        %s536 = smul.addr %s535, 4
        %s537 = scalar_lea.vmem %s3, %s536
      $region44: #{_lambda_.15} parent=39 // pred_fallthru
        _
    $region40: #{_lambda_.15} parent=5 // pred_fallthru
      _
  $region6: #{_lambda_.15} parent=0 // loop_footer
    %s13 = sadd.s32 1, %s9
  $region7: #{_lambda_.15} parent=0 // loop_footer_branch
    %8 = sbr.rel target = $region3
  $region8: #{_lambda_.15} parent=0 // loop_exit
    _

// kernel: _lambda_.16
$region0: #{_lambda_.16}
  #allocation0 [shape = 'u32[]', space=smem, size = 0x4, offset = 0x4, fixed_abs, tag = 'smem constant byte address 0x4 - core index']
  #allocation1 [shape = 'u32[144,128]{1,0:T(1,128)}', space=vmem, size = 0x12000, scoped, tag = 'internal scratch']
  %s0 = inlined_call_operand.vmem [shape: bf16[3,32,632], index: 0, kind: input, shape index: {}]
  %s1 = inlined_call_operand.vmem [shape: bf16[3,32,72], index: 1, kind: input, shape index: {}]
  %s2 = inlined_call_operand.vmem [shape: bf16[3,632,8], index: 2, kind: input, shape index: {}]
  %s3 = inlined_call_operand.vmem [shape: f32[3,1,8], index: 3, kind: input, shape index: {}]
  %s4 = inlined_call_operand.vmem [shape: f32[3,1,8], index: 4, kind: input, shape index: {}]
  %s5 = inlined_call_operand.vmem [shape: f32[32,8], index: 5, kind: output, shape index: {}]
  %s6 = sld [smem:[#allocation0]]
  $region57: #{_lambda_.16} parent=0
    _
  %s8 = ssub.s32 1, %s6
  %s9 = scalar_select 0, %s8, %s6
  loop: start=0, step=1, limit=5
  $region2: #{_lambda_.16} parent=0 // loop_pre_header
    _
  $region3: #{_lambda_.16} parent=0 // loop_header
    %s11 = sphi 0, %s15
    %p12 = scmp.ge.s32.totalorder %s11, 5
    %s21 = sphi 0, %s23
    %s24 = sphi 0, %s21
    %s25 = sphi 0, %s24
    %s41 = sphi 0, %s25
    %s47 = sphi 0, %s49
    %s50 = sphi 0, %s47
    %s51 = sphi 0, %s50
    %s67 = sphi 0, %s51
    %s73 = sphi 0, %s75
    %s76 = sphi 0, %s73
    %s77 = sphi 0, %s76
    %s93 = sphi 0, %s77
    %s99 = sphi 0, %s101
    %s102 = sphi 0, %s99
    %s103 = sphi 0, %s102
    %s119 = sphi 0, %s103
    %s125 = sphi 0, %s127
    %s128 = sphi 0, %s125
    %s129 = sphi 0, %s128
    %s145 = sphi 0, %s129
    %s149 = sphi 0, %s149
    %s151 = sphi 0, %s149
    %s152 = sphi 0, %s151
    %s166 = sphi 0, %s152
  $region4: #{_lambda_.16} parent=0 // loop_header_branch
    %14 = sbr.rel (%p12) target = $region8
  $region5: #{_lambda_.16} parent=0 // loop_body
    %s16 = ssub.s32 %s11, 1
    %s17 = ssub.s32 %s11, 2
    %s18 = sadd.s32 %s11, 1
    %s19 = ssub.s32 %s11, %s18
    %p20 = scmp.eq.s32.totalorder %s19, 0
    %s22 = sadd.s32 %s21, 1
    %s23 = scalar_select %p20, %s21, %s22
    %p26 = pneg %p20
    %p27 = scmp.eq.s32.totalorder %s11, 2
    %p28 = por %p26, %p27
    %p29 = scmp.ne.s32.totalorder %s21, %s24
    %p30 = scmp.eq.s32.totalorder %s11, 0
    %p31 = por %p29, %p30
    %p32 = scmp.ne.s32.totalorder %s21, %s24
    %p33 = scmp.eq.s32.totalorder %s16, 2
    %p34 = por %p32, %p33
    %p35 = scmp.ne.s32.totalorder %s24, %s25
    %p36 = scmp.eq.s32.totalorder %s16, 0
    %p37 = por %p35, %p36
    %p38 = scmp.ne.s32.totalorder %s24, %s25
    %p39 = scmp.eq.s32.totalorder %s17, 2
    %p40 = por %p38, %p39
    %p42 = scmp.ne.s32.totalorder %s25, %s41
    %p43 = scmp.eq.s32.totalorder %s17, 0
    %p44 = por %p42, %p43
    %s45 = ssub.s32 %s11, %s18
    %p46 = scmp.eq.s32.totalorder %s45, 0
    %s48 = sadd.s32 %s47, 1
    %s49 = scalar_select %p46, %s47, %s48
    %p52 = pneg %p46
    %p53 = scmp.eq.s32.totalorder %s11, 2
    %p54 = por %p52, %p53
    %p55 = scmp.ne.s32.totalorder %s47, %s50
    %p56 = scmp.eq.s32.totalorder %s11, 0
    %p57 = por %p55, %p56
    %p58 = scmp.ne.s32.totalorder %s47, %s50
    %p59 = scmp.eq.s32.totalorder %s16, 2
    %p60 = por %p58, %p59
    %p61 = scmp.ne.s32.totalorder %s50, %s51
    %p62 = scmp.eq.s32.totalorder %s16, 0
    %p63 = por %p61, %p62
    %p64 = scmp.ne.s32.totalorder %s50, %s51
    %p65 = scmp.eq.s32.totalorder %s17, 2
    %p66 = por %p64, %p65
    %p68 = scmp.ne.s32.totalorder %s51, %s67
    %p69 = scmp.eq.s32.totalorder %s17, 0
    %p70 = por %p68, %p69
    %s71 = ssub.s32 %s11, %s18
    %p72 = scmp.eq.s32.totalorder %s71, 0
    %s74 = sadd.s32 %s73, 1
    %s75 = scalar_select %p72, %s73, %s74
    %p78 = pneg %p72
    %p79 = scmp.eq.s32.totalorder %s11, 2
    %p80 = por %p78, %p79
    %p81 = scmp.ne.s32.totalorder %s73, %s76
    %p82 = scmp.eq.s32.totalorder %s11, 0
    %p83 = por %p81, %p82
    %p84 = scmp.ne.s32.totalorder %s73, %s76
    %p85 = scmp.eq.s32.totalorder %s16, 2
    %p86 = por %p84, %p85
    %p87 = scmp.ne.s32.totalorder %s76, %s77
    %p88 = scmp.eq.s32.totalorder %s16, 0
    %p89 = por %p87, %p88
    %p90 = scmp.ne.s32.totalorder %s76, %s77
    %p91 = scmp.eq.s32.totalorder %s17, 2
    %p92 = por %p90, %p91
    %p94 = scmp.ne.s32.totalorder %s77, %s93
    %p95 = scmp.eq.s32.totalorder %s17, 0
    %p96 = por %p94, %p95
    %s97 = ssub.s32 %s11, %s18
    %p98 = scmp.eq.s32.totalorder %s97, 0
    %s100 = sadd.s32 %s99, 1
    %s101 = scalar_select %p98, %s99, %s100
    %p104 = pneg %p98
    %p105 = scmp.eq.s32.totalorder %s11, 2
    %p106 = por %p104, %p105
    %p107 = scmp.ne.s32.totalorder %s99, %s102
    %p108 = scmp.eq.s32.totalorder %s11, 0
    %p109 = por %p107, %p108
    %p110 = scmp.ne.s32.totalorder %s99, %s102
    %p111 = scmp.eq.s32.totalorder %s16, 2
    %p112 = por %p110, %p111
    %p113 = scmp.ne.s32.totalorder %s102, %s103
    %p114 = scmp.eq.s32.totalorder %s16, 0
    %p115 = por %p113, %p114
    %p116 = scmp.ne.s32.totalorder %s102, %s103
    %p117 = scmp.eq.s32.totalorder %s17, 2
    %p118 = por %p116, %p117
    %p120 = scmp.ne.s32.totalorder %s103, %s119
    %p121 = scmp.eq.s32.totalorder %s17, 0
    %p122 = por %p120, %p121
    %s123 = ssub.s32 %s11, %s18
    %p124 = scmp.eq.s32.totalorder %s123, 0
    %s126 = sadd.s32 %s125, 1
    %s127 = scalar_select %p124, %s125, %s126
    %p130 = pneg %p124
    %p131 = scmp.eq.s32.totalorder %s11, 2
    %p132 = por %p130, %p131
    %p133 = scmp.ne.s32.totalorder %s125, %s128
    %p134 = scmp.eq.s32.totalorder %s11, 0
    %p135 = por %p133, %p134
    %p136 = scmp.ne.s32.totalorder %s125, %s128
    %p137 = scmp.eq.s32.totalorder %s16, 2
    %p138 = por %p136, %p137
    %p139 = scmp.ne.s32.totalorder %s128, %s129
    %p140 = scmp.eq.s32.totalorder %s16, 0
    %p141 = por %p139, %p140
    %p142 = scmp.ne.s32.totalorder %s128, %s129
    %p143 = scmp.eq.s32.totalorder %s17, 2
    %p144 = por %p142, %p143
    %p146 = scmp.ne.s32.totalorder %s129, %s145
    %p147 = scmp.eq.s32.totalorder %s17, 0
    %p148 = por %p146, %p147
    %s150 = sadd.s32 %s149, 1
    %p153 = scmp.eq.s32.totalorder %s11, 2
    %p154 = scmp.ne.s32.totalorder %s149, %s151
    %p155 = scmp.eq.s32.totalorder %s11, 0
    %p156 = por %p154, %p155
    %p157 = scmp.ne.s32.totalorder %s149, %s151
    %p158 = scmp.eq.s32.totalorder %s16, 2
    %p159 = por %p157, %p158
    %p160 = scmp.ne.s32.totalorder %s151, %s152
    %p161 = scmp.eq.s32.totalorder %s16, 0
    %p162 = por %p160, %p161
    %p163 = scmp.ne.s32.totalorder %s151, %s152
    %p164 = scmp.eq.s32.totalorder %s17, 2
    %p165 = por %p163, %p164
    %p167 = scmp.ne.s32.totalorder %s152, %s166
    %p168 = scmp.eq.s32.totalorder %s17, 0
    %p169 = por %p167, %p168
    %p170 = scmp.le.s32.totalorder 1, %s11
    %p171 = scmp.lt.s32.totalorder %s11, 4
    %p172 = pnand %p170, %p171
    %p173 = pneg %p172
    // Predicated region
    $region9: #{_lambda_.16} parent=5 // pred_check
      _
    $region10: #{_lambda_.16} parent=5 // pred_check_branch
      %175 = sbr.rel (%p172) target = $region12
    $region11: #{_lambda_.16} parent=5 // pred_region
      %s176 = ssub.s32 %s11, 1
    $region12: #{_lambda_.16} parent=5 // pred_fallthru
      _
    %p177 = scmp.lt.s32.totalorder %s11, 3
    // Predicated region
    $region13: #{_lambda_.16} parent=5 // pred_check
      %p178 = pneg %p177
    $region14: #{_lambda_.16} parent=5 // pred_check_branch
      %180 = sbr.rel (%p178) target = $region16
    $region15: #{_lambda_.16} parent=5 // pred_region
      // Predicated region
      $region17: #{_lambda_.16} parent=15 // pred_check
        %p181 = pneg %p31
      $region18: #{_lambda_.16} parent=15 // pred_check_branch
        %183 = sbr.rel (%p181) target = $region20
      $region19: #{_lambda_.16} parent=15 // pred_region
        %p184 = scmp.lt.s32.totalorder %s11, 2
        %s185 = scalar_select %p184, %s11, 2
        %s186 = smul.addr %s185, 20
        %s187 = smul.addr %s186, 4
        %s188 = scalar_lea.vmem %s0, %s187
      $region20: #{_lambda_.16} parent=15 // pred_fallthru
        _
      // Predicated region
      $region21: #{_lambda_.16} parent=15 // pred_check
        %p189 = pneg %p57
      $region22: #{_lambda_.16} parent=15 // pred_check_branch
        %191 = sbr.rel (%p189) target = $region24
      $region23: #{_lambda_.16} parent=15 // pred_region
        %p192 = scmp.lt.s32.totalorder %s11, 2
        %s193 = scalar_select %p192, %s11, 2
        %s194 = smul.addr %s193, 4
        %s195 = smul.addr %s194, 4
        %s196 = scalar_lea.vmem %s1, %s195
      $region24: #{_lambda_.16} parent=15 // pred_fallthru
        _
      // Predicated region
      $region25: #{_lambda_.16} parent=15 // pred_check
        %p197 = pneg %p83
      $region26: #{_lambda_.16} parent=15 // pred_check_branch
        %199 = sbr.rel (%p197) target = $region28
      $region27: #{_lambda_.16} parent=15 // pred_region
        %p200 = scmp.lt.s32.totalorder %s11, 2
        %s201 = scalar_select %p200, %s11, 2
        %s202 = smul.addr %s201, 79
        %s203 = smul.addr %s202, 4
        %s204 = scalar_lea.vmem %s2, %s203
      $region28: #{_lambda_.16} parent=15 // pred_fallthru
        _
      // Predicated region
      $region29: #{_lambda_.16} parent=15 // pred_check
        %p205 = pneg %p109
      $region30: #{_lambda_.16} parent=15 // pred_check_branch
        %207 = sbr.rel (%p205) target = $region32
      $region31: #{_lambda_.16} parent=15 // pred_region
        %p208 = scmp.lt.s32.totalorder %s11, 2
        %s209 = scalar_select %p208, %s11, 2
        %s210 = scalar_lea.vmem %s3, %s209
      $region32: #{_lambda_.16} parent=15 // pred_fallthru
        _
      // Predicated region
      $region33: #{_lambda_.16} parent=15 // pred_check
        %p211 = pneg %p135
      $region34: #{_lambda_.16} parent=15 // pred_check_branch
        %213 = sbr.rel (%p211) target = $region36
      $region35: #{_lambda_.16} parent=15 // pred_region
        %p214 = scmp.lt.s32.totalorder %s11, 2
        %s215 = scalar_select %p214, %s11, 2
        %s216 = scalar_lea.vmem %s4, %s215
      $region36: #{_lambda_.16} parent=15 // pred_fallthru
        _
    $region16: #{_lambda_.16} parent=5 // pred_fallthru
      _
    %p217 = scmp.le.s32.totalorder 1, %s11
    %p218 = scmp.lt.s32.totalorder %s11, 4
    %p219 = pnand %p217, %p218
    %p220 = pneg %p219
    // Predicated region
    $region37: #{_lambda_.16} parent=5 // pred_check
      _
    $region38: #{_lambda_.16} parent=5 // pred_check_branch
      %222 = sbr.rel (%p219) target = $region40
    $region39: #{_lambda_.16} parent=5 // pred_region
      %s223 = ssub.s32 %s11, 1
      %p224 = scmp.lt.s32.totalorder %s16, 2
      %s225 = scalar_select %p224, %s16, 2
      %s226 = smul.addr %s225, 20
      %s227 = smul.addr %s226, 4
      %s228 = scalar_lea.vmem %s0, %s227
      %p229 = pneg %p37
      %p230 = pneg %p34
      %p231 = scmp.lt.s32.totalorder %s16, 2
      %s232 = scalar_select %p231, %s16, 2
      %s233 = smul.addr %s232, 4
      %s234 = smul.addr %s233, 4
      %s235 = scalar_lea.vmem %s1, %s234
      %p236 = pneg %p63
      %p237 = pneg %p60
      %p238 = scmp.lt.s32.totalorder %s16, 2
      %s239 = scalar_select %p238, %s16, 2
      %s240 = smul.addr %s239, 79
      %s241 = smul.addr %s240, 4
      %s242 = scalar_lea.vmem %s2, %s241
      %p243 = pneg %p89
      %p244 = pneg %p86
      %p245 = scmp.lt.s32.totalorder %s16, 2
      %s246 = scalar_select %p245, %s16, 2
      %s247 = scalar_lea.vmem %s3, %s246
      %p248 = pneg %p115
      %p249 = pneg %p112
      %p250 = scmp.lt.s32.totalorder %s16, 2
      %s251 = scalar_select %p250, %s16, 2
      %s252 = scalar_lea.vmem %s4, %s251
      %p253 = pneg %p141
      %p254 = pneg %p138
      %p255 = pneg %p162
      %p256 = pneg %p159
      %p257 = scmp.lt.s32.totalorder %s16, 2
      %s258 = scalar_select %p257, %s16, 2
      %s259 = smul.addr %s258, 20
      %s260 = smul.addr %s259, 4
      %s261 = scalar_lea.vmem %s0, %s260
      %p262 = scmp.lt.s32.totalorder %s16, 2
      %s263 = scalar_select %p262, %s16, 2
      %s264 = smul.addr %s263, 4
      %s265 = smul.addr %s264, 4
      %s266 = scalar_lea.vmem %s1, %s265
      %p267 = scmp.lt.s32.totalorder %s16, 2
      %s268 = scalar_select %p267, %s16, 2
      %s269 = smul.addr %s268, 79
      %s270 = smul.addr %s269, 4
      %s271 = scalar_lea.vmem %s2, %s270
      %p272 = scmp.lt.s32.totalorder %s16, 2
      %s273 = scalar_select %p272, %s16, 2
      %s274 = scalar_lea.vmem %s3, %s273
      %p275 = scmp.lt.s32.totalorder %s16, 2
      %s276 = scalar_select %p275, %s16, 2
      %s277 = scalar_lea.vmem %s4, %s276
      %p279 = scmp.eq.s32.totalorder %s16, 0
      // Predicated region
      $region41: #{_lambda_.16} parent=39 // pred_check
        %p280 = pneg %p279
      $region42: #{_lambda_.16} parent=39 // pred_check_branch
        %282 = sbr.rel (%p280) target = $region44
      $region43: #{_lambda_.16} parent=39 // pred_region
        %vm283 = vcmask 64512
        %284 = vst.msk [vmem:[%s5] sm:$0xff] %vm283, 0.0
        %285 = vst.msk [vmem:[%s5 + $0x8] sm:$0xff] %vm283, 0.0
        %286 = vst.msk [vmem:[%s5 + $0x10] sm:$0xff] %vm283, 0.0
        %287 = vst.msk [vmem:[%s5 + $0x18] sm:$0xff] %vm283, 0.0
      $region44: #{_lambda_.16} parent=39 // pred_fallthru
        _
      %v288 = vld [vmem:[%s261] sm:$0xff]
      %v289 = vld [vmem:[%s261 + $0x8] sm:$0xff]
      %v290 = vld [vmem:[%s261 + $0x10] sm:$0xf]
      %v291 = vld [vmem:[%s261 + $0x14] sm:$0xff]
      %v292 = vld [vmem:[%s261 + $0x1c] sm:$0xff]
      %v293 = vld [vmem:[%s261 + $0x24] sm:$0xf]
      %v294 = vld [vmem:[%s261 + $0x28] sm:$0xff]
      %v295 = vld [vmem:[%s261 + $0x30] sm:$0xff]
      %v296 = vld [vmem:[%s261 + $0x38] sm:$0xf]
      %v297 = vld [vmem:[%s261 + $0x3c] sm:$0xff]
      %v298 = vld [vmem:[%s261 + $0x44] sm:$0xff]
      %v299 = vld [vmem:[%s261 + $0x4c] sm:$0xf]
      %v300 = vld [vmem:[%s271] sm:$0xf]
      %v301 = vld [vmem:[%s271 + $0x4] sm:$0xf]
      %v302 = vld [vmem:[%s271 + $0x8] sm:$0xf]
      %v303 = vld [vmem:[%s271 + $0xc] sm:$0xf]
      %v304 = vld [vmem:[%s271 + $0x10] sm:$0xf]
      %v305 = vld [vmem:[%s271 + $0x14] sm:$0xf]
      %v306 = vld [vmem:[%s271 + $0x18] sm:$0xf]
      %v307 = vld [vmem:[%s271 + $0x1c] sm:$0xf]
      %v308 = vld [vmem:[%s271 + $0x20] sm:$0xf]
      %v309 = vld [vmem:[%s271 + $0x24] sm:$0xf]
      %v310 = vld [vmem:[%s271 + $0x28] sm:$0xf]
      %v311 = vld [vmem:[%s271 + $0x2c] sm:$0xf]
      %v312 = vld [vmem:[%s271 + $0x30] sm:$0xf]
      %v313 = vld [vmem:[%s271 + $0x34] sm:$0xf]
      %v314 = vld [vmem:[%s271 + $0x38] sm:$0xf]
      %v315 = vld [vmem:[%s271 + $0x3c] sm:$0xf]
      %v316 = vld [vmem:[%s271 + $0x40] sm:$0xf]
      %v317 = vld [vmem:[%s271 + $0x44] sm:$0xf]
      %v318 = vld [vmem:[%s271 + $0x48] sm:$0xf]
      %v319 = vld [vmem:[%s271 + $0x4c] sm:$0xf]
      %v320 = vld [vmem:[%s271 + $0x50] sm:$0xf]
      %v321 = vld [vmem:[%s271 + $0x54] sm:$0xf]
      %v322 = vld [vmem:[%s271 + $0x58] sm:$0xf]
      %v323 = vld [vmem:[%s271 + $0x5c] sm:$0xf]
      %v324 = vld [vmem:[%s271 + $0x60] sm:$0xf]
      %v325 = vld [vmem:[%s271 + $0x64] sm:$0xf]
      %v326 = vld [vmem:[%s271 + $0x68] sm:$0xf]
      %v327 = vld [vmem:[%s271 + $0x6c] sm:$0xf]
      %v328 = vld [vmem:[%s271 + $0x70] sm:$0xf]
      %v329 = vld [vmem:[%s271 + $0x74] sm:$0xf]
      %v330 = vld [vmem:[%s271 + $0x78] sm:$0xf]
      %v331 = vld [vmem:[%s271 + $0x7c] sm:$0xf]
      %v332 = vld [vmem:[%s271 + $0x80] sm:$0xf]
      %v333 = vld [vmem:[%s271 + $0x84] sm:$0xf]
      %v334 = vld [vmem:[%s271 + $0x88] sm:$0xf]
      %v335 = vld [vmem:[%s271 + $0x8c] sm:$0xf]
      %v336 = vld [vmem:[%s271 + $0x90] sm:$0xf]
      %v337 = vld [vmem:[%s271 + $0x94] sm:$0xf]
      %v338 = vld [vmem:[%s271 + $0x98] sm:$0xf]
      %v339 = vld [vmem:[%s271 + $0x9c] sm:$0xf]
      %v340 = vld [vmem:[%s271 + $0xa0] sm:$0xf]
      %v341 = vld [vmem:[%s271 + $0xa4] sm:$0xf]
      %v342 = vld [vmem:[%s271 + $0xa8] sm:$0xf]
      %v343 = vld [vmem:[%s271 + $0xac] sm:$0xf]
      %v344 = vld [vmem:[%s271 + $0xb0] sm:$0xf]
      %v345 = vld [vmem:[%s271 + $0xb4] sm:$0xf]
      %v346 = vld [vmem:[%s271 + $0xb8] sm:$0xf]
      %v347 = vld [vmem:[%s271 + $0xbc] sm:$0xf]
      %v348 = vld [vmem:[%s271 + $0xc0] sm:$0xf]
      %v349 = vld [vmem:[%s271 + $0xc4] sm:$0xf]
      %v350 = vld [vmem:[%s271 + $0xc8] sm:$0xf]
      %v351 = vld [vmem:[%s271 + $0xcc] sm:$0xf]
      %v352 = vld [vmem:[%s271 + $0xd0] sm:$0xf]
      %v353 = vld [vmem:[%s271 + $0xd4] sm:$0xf]
      %v354 = vld [vmem:[%s271 + $0xd8] sm:$0xf]
      %v355 = vld [vmem:[%s271 + $0xdc] sm:$0xf]
      %v356 = vld [vmem:[%s271 + $0xe0] sm:$0xf]
      %v357 = vld [vmem:[%s271 + $0xe4] sm:$0xf]
      %v358 = vld [vmem:[%s271 + $0xe8] sm:$0xf]
      %v359 = vld [vmem:[%s271 + $0xec] sm:$0xf]
      %v360 = vld [vmem:[%s271 + $0xf0] sm:$0xf]
      %v361 = vld [vmem:[%s271 + $0xf4] sm:$0xf]
      %v362 = vld [vmem:[%s271 + $0xf8] sm:$0xf]
      %v363 = vld [vmem:[%s271 + $0xfc] sm:$0xf]
      %v364 = vld [vmem:[%s271 + $0x100] sm:$0xf]
      %v365 = vld [vmem:[%s271 + $0x104] sm:$0xf]
      %v366 = vld [vmem:[%s271 + $0x108] sm:$0xf]
      %v367 = vld [vmem:[%s271 + $0x10c] sm:$0xf]
      %v368 = vld [vmem:[%s271 + $0x110] sm:$0xf]
      %v369 = vld [vmem:[%s271 + $0x114] sm:$0xf]
      %v370 = vld [vmem:[%s271 + $0x118] sm:$0xf]
      %v371 = vld [vmem:[%s271 + $0x11c] sm:$0xf]
      %v372 = vld [vmem:[%s271 + $0x120] sm:$0xf]
      %v373 = vld [vmem:[%s271 + $0x124] sm:$0xf]
      %v374 = vld [vmem:[%s271 + $0x128] sm:$0xf]
      %v375 = vld [vmem:[%s271 + $0x12c] sm:$0xf]
      %v376 = vld [vmem:[%s271 + $0x130] sm:$0xf]
      %v377 = vld [vmem:[%s271 + $0x134] sm:$0xf]
      %v378 = vld [vmem:[%s271 + $0x138] sm:$0xf]
      %v379 = vld [vmem:[%s266] sm:$0xf]
      %v380 = vld [vmem:[%s266 + $0x4] sm:$0xf]
      %v381 = vld [vmem:[%s266 + $0x8] sm:$0xf]
      %v382 = vld [vmem:[%s266 + $0xc] sm:$0xf]
      %v383 = vunpack.c.l.bf16 %v379
      %v384 = vunpack.c.l.bf16 %v380
      %v385 = vunpack.c.l.bf16 %v381
      %v386 = vunpack.c.l.bf16 %v382
      %391 = vrot.lane.b32.xlu0 %v383, 120
      %v392 = vpop.permute.xlu0 %391
      %393 = vrot.lane.b32.xlu0 %v384, 120
      %v394 = vpop.permute.xlu0 %393
      %395 = vrot.lane.b32.xlu0 %v385, 120
      %v396 = vpop.permute.xlu0 %395
      %397 = vrot.lane.b32.xlu0 %v386, 120
      %v398 = vpop.permute.xlu0 %397
      %v403 = vmax.f32 %v383, %v392
      %v404 = vmax.f32 %v384, %v394
      %v405 = vmax.f32 %v385, %v396
      %v406 = vmax.f32 %v386, %v398
      %407 = vrot.lane.b32.xlu0 %v383, 112
      %v408 = vpop.permute.xlu0 %407
      %409 = vrot.lane.b32.xlu0 %v384, 112
      %v410 = vpop.permute.xlu0 %409
      %411 = vrot.lane.b32.xlu0 %v385, 112
      %v412 = vpop.permute.xlu0 %411
      %413 = vrot.lane.b32.xlu0 %v386, 112
      %v414 = vpop.permute.xlu0 %413
      %v419 = vmax.f32 %v403, %v408
      %v420 = vmax.f32 %v404, %v410
      %v421 = vmax.f32 %v405, %v412
      %v422 = vmax.f32 %v406, %v414
      %423 = vrot.lane.b32.xlu0 %v383, 104
      %v424 = vpop.permute.xlu0 %423
      %425 = vrot.lane.b32.xlu0 %v384, 104
      %v426 = vpop.permute.xlu0 %425
      %427 = vrot.lane.b32.xlu0 %v385, 104
      %v428 = vpop.permute.xlu0 %427
      %429 = vrot.lane.b32.xlu0 %v386, 104
      %v430 = vpop.permute.xlu0 %429
      %v435 = vmax.f32 %v419, %v424
      %v436 = vmax.f32 %v420, %v426
      %v437 = vmax.f32 %v421, %v428
      %v438 = vmax.f32 %v422, %v430
      %439 = vrot.lane.b32.xlu0 %v383, 96
      %v440 = vpop.permute.xlu0 %439
      %441 = vrot.lane.b32.xlu0 %v384, 96
      %v442 = vpop.permute.xlu0 %441
      %443 = vrot.lane.b32.xlu0 %v385, 96
      %v444 = vpop.permute.xlu0 %443
      %445 = vrot.lane.b32.xlu0 %v386, 96
      %v446 = vpop.permute.xlu0 %445
      %v451 = vmax.f32 %v435, %v440
      %v452 = vmax.f32 %v436, %v442
      %v453 = vmax.f32 %v437, %v444
      %v454 = vmax.f32 %v438, %v446
      %455 = vrot.lane.b32.xlu0 %v383, 88
      %v456 = vpop.permute.xlu0 %455
      %457 = vrot.lane.b32.xlu0 %v384, 88
      %v458 = vpop.permute.xlu0 %457
      %459 = vrot.lane.b32.xlu0 %v385, 88
      %v460 = vpop.permute.xlu0 %459
      %461 = vrot.lane.b32.xlu0 %v386, 88
      %v462 = vpop.permute.xlu0 %461
      %v467 = vmax.f32 %v451, %v456
      %v468 = vmax.f32 %v452, %v458
      %v469 = vmax.f32 %v453, %v460
      %v470 = vmax.f32 %v454, %v462
      %471 = vrot.lane.b32.xlu0 %v383, 80
      %v472 = vpop.permute.xlu0 %471
      %473 = vrot.lane.b32.xlu0 %v384, 80
      %v474 = vpop.permute.xlu0 %473
      %475 = vrot.lane.b32.xlu0 %v385, 80
      %v476 = vpop.permute.xlu0 %475
      %477 = vrot.lane.b32.xlu0 %v386, 80
      %v478 = vpop.permute.xlu0 %477
      %v483 = vmax.f32 %v467, %v472
      %v484 = vmax.f32 %v468, %v474
      %v485 = vmax.f32 %v469, %v476
      %v486 = vmax.f32 %v470, %v478
      %487 = vrot.lane.b32.xlu0 %v383, 72
      %v488 = vpop.permute.xlu0 %487
      %489 = vrot.lane.b32.xlu0 %v384, 72
      %v490 = vpop.permute.xlu0 %489
      %491 = vrot.lane.b32.xlu0 %v385, 72
      %v492 = vpop.permute.xlu0 %491
      %493 = vrot.lane.b32.xlu0 %v386, 72
      %v494 = vpop.permute.xlu0 %493
      %v499 = vmax.f32 %v483, %v488
      %v500 = vmax.f32 %v484, %v490
      %v501 = vmax.f32 %v485, %v492
      %v502 = vmax.f32 %v486, %v494
      %503 = vrot.lane.b32.xlu0 %v383, 64
      %v504 = vpop.permute.xlu0 %503
      %505 = vrot.lane.b32.xlu0 %v384, 64
      %v506 = vpop.permute.xlu0 %505
      %507 = vrot.lane.b32.xlu0 %v385, 64
      %v508 = vpop.permute.xlu0 %507
      %509 = vrot.lane.b32.xlu0 %v386, 64
      %v510 = vpop.permute.xlu0 %509
      %v515 = vmax.f32 %v499, %v504
      %v516 = vmax.f32 %v500, %v506
      %v517 = vmax.f32 %v501, %v508
      %v518 = vmax.f32 %v502, %v510
      %v519 = vld [vmem:[%s5] sm:$0xff]
      %v520 = vld [vmem:[%s5 + $0x8] sm:$0xff]
      %v521 = vld [vmem:[%s5 + $0x10] sm:$0xff]
      %v522 = vld [vmem:[%s5 + $0x18] sm:$0xff]
      %v523 = vld [vmem:[%s274] sm:$0x1]
      %v525 = vlaneseq
      %v526 = vshrl.u32 %v525, 7
      %v527 = vsub.s32 0, %v526
      %v528 = vrot.slane %v523, %v527
      %v530 = vmul.f32 %v515, %v528
      %v531 = vmul.f32 %v516, %v528
      %v532 = vmul.f32 %v517, %v528
      %v533 = vmul.f32 %v518, %v528
      %v546 = vunpack.c.l.b16 %v288
      %v547 = vunpack.c.h.b16 %v288
      %v548 = vunpack.c.l.b16 %v289
      %v549 = vunpack.c.h.b16 %v289
      %v550 = vunpack.c.l.b16 %v290
      %v551 = vunpack.c.l.b16 %v291
      %v552 = vunpack.c.h.b16 %v291
      %v553 = vunpack.c.l.b16 %v292
      %v554 = vunpack.c.h.b16 %v292
      %v555 = vunpack.c.l.b16 %v293
      %v556 = vunpack.c.l.b16 %v294
      %v557 = vunpack.c.h.b16 %v294
      %v558 = vunpack.c.l.b16 %v295
      %v559 = vunpack.c.h.b16 %v295
      %v560 = vunpack.c.l.b16 %v296
      %v561 = vunpack.c.l.b16 %v297
      %v562 = vunpack.c.h.b16 %v297
      %v563 = vunpack.c.l.b16 %v298
      %v564 = vunpack.c.h.b16 %v298
      %v565 = vunpack.c.l.b16 %v299
      %v566 = vpack.c.b16 %v551, %v546
      %v567 = vpack.c.b16 %v552, %v547
      %v568 = vpack.c.b16 %v553, %v548
      %v569 = vpack.c.b16 %v554, %v549
      %v570 = vpack.c.b16 %v555, %v550
      %v571 = vpack.c.b16 %v561, %v556
      %v572 = vpack.c.b16 %v562, %v557
      %v573 = vpack.c.b16 %v563, %v558
      %v574 = vpack.c.b16 %v564, %v559
      %v575 = vpack.c.b16 %v565, %v560
      %v663 = vunpack.c.l.b16 %v300
      %v664 = vunpack.c.l.b16 %v301
      %v665 = vunpack.c.l.b16 %v302
      %v666 = vunpack.c.l.b16 %v303
      %v667 = vunpack.c.l.b16 %v304
      %v668 = vunpack.c.l.b16 %v305
      %v669 = vunpack.c.l.b16 %v306
      %v670 = vunpack.c.l.b16 %v307
      %v671 = vunpack.c.l.b16 %v308
      %v672 = vunpack.c.l.b16 %v309
      %v673 = vunpack.c.l.b16 %v310
      %v674 = vunpack.c.l.b16 %v311
      %v675 = vunpack.c.l.b16 %v312
      %v676 = vunpack.c.l.b16 %v313
      %v677 = vunpack.c.l.b16 %v314
      %v678 = vunpack.c.l.b16 %v315
      %v679 = vunpack.c.l.b16 %v316
      %v680 = vunpack.c.l.b16 %v317
      %v681 = vunpack.c.l.b16 %v318
      %v682 = vunpack.c.l.b16 %v319
      %v683 = vunpack.c.l.b16 %v320
      %v684 = vunpack.c.l.b16 %v321
      %v685 = vunpack.c.l.b16 %v322
      %v686 = vunpack.c.l.b16 %v323
      %v687 = vunpack.c.l.b16 %v324
      %v688 = vunpack.c.l.b16 %v325
      %v689 = vunpack.c.l.b16 %v326
      %v690 = vunpack.c.l.b16 %v327
      %v691 = vunpack.c.l.b16 %v328
      %v692 = vunpack.c.l.b16 %v329
      %v693 = vunpack.c.l.b16 %v330
      %v694 = vunpack.c.l.b16 %v331
      %v695 = vunpack.c.l.b16 %v332
      %v696 = vunpack.c.l.b16 %v333
      %v697 = vunpack.c.l.b16 %v334
      %v698 = vunpack.c.l.b16 %v335
      %v699 = vunpack.c.l.b16 %v336
      %v700 = vunpack.c.l.b16 %v337
      %v701 = vunpack.c.l.b16 %v338
      %v702 = vunpack.c.l.b16 %v339
      %v703 = vunpack.c.l.b16 %v340
      %v704 = vunpack.c.l.b16 %v341
      %v705 = vunpack.c.l.b16 %v342
      %v706 = vunpack.c.l.b16 %v343
      %v707 = vunpack.c.l.b16 %v344
      %v708 = vunpack.c.l.b16 %v345
      %v709 = vunpack.c.l.b16 %v346
      %v710 = vunpack.c.l.b16 %v347
      %v711 = vunpack.c.l.b16 %v348
      %v712 = vunpack.c.l.b16 %v349
      %v713 = vunpack.c.l.b16 %v350
      %v714 = vunpack.c.l.b16 %v351
      %v715 = vunpack.c.l.b16 %v352
      %v716 = vunpack.c.l.b16 %v353
      %v717 = vunpack.c.l.b16 %v354
      %v718 = vunpack.c.l.b16 %v355
      %v719 = vunpack.c.l.b16 %v356
      %v720 = vunpack.c.l.b16 %v357
      %v721 = vunpack.c.l.b16 %v358
      %v722 = vunpack.c.l.b16 %v359
      %v723 = vunpack.c.l.b16 %v360
      %v724 = vunpack.c.l.b16 %v361
      %v725 = vunpack.c.l.b16 %v362
      %v726 = vunpack.c.l.b16 %v363
      %v727 = vunpack.c.l.b16 %v364
      %v728 = vunpack.c.l.b16 %v365
      %v729 = vunpack.c.l.b16 %v366
      %v730 = vunpack.c.l.b16 %v367
      %v731 = vunpack.c.l.b16 %v368
      %v732 = vunpack.c.l.b16 %v369
      %v733 = vunpack.c.l.b16 %v370
      %v734 = vunpack.c.l.b16 %v371
      %v735 = vunpack.c.l.b16 %v372
      %v736 = vunpack.c.l.b16 %v373
      %v737 = vunpack.c.l.b16 %v374
      %v738 = vunpack.c.l.b16 %v375
      %v739 = vunpack.c.l.b16 %v376
      %v740 = vunpack.c.l.b16 %v377
      %v741 = vunpack.c.l.b16 %v378
      %v742 = vpack.c.b16 %v664, %v663
      %v743 = vpack.c.b16 %v666, %v665
      %v744 = vpack.c.b16 %v668, %v667
      %v745 = vpack.c.b16 %v670, %v669
      %v746 = vpack.c.b16 %v672, %v671
      %v747 = vpack.c.b16 %v674, %v673
      %v748 = vpack.c.b16 %v676, %v675
      %v749 = vpack.c.b16 %v678, %v677
      %v750 = vpack.c.b16 %v680, %v679
      %v751 = vpack.c.b16 %v682, %v681
      %v752 = vpack.c.b16 %v684, %v683
      %v753 = vpack.c.b16 %v686, %v685
      %v754 = vpack.c.b16 %v688, %v687
      %v755 = vpack.c.b16 %v690, %v689
      %v756 = vpack.c.b16 %v692, %v691
      %v757 = vpack.c.b16 %v694, %v693
      %v758 = vpack.c.b16 %v696, %v695
      %v759 = vpack.c.b16 %v698, %v697
      %v760 = vpack.c.b16 %v700, %v699
      %v761 = vpack.c.b16 %v702, %v701
      %v762 = vpack.c.b16 %v704, %v703
      %v763 = vpack.c.b16 %v706, %v705
      %v764 = vpack.c.b16 %v708, %v707
      %v765 = vpack.c.b16 %v710, %v709
      %v766 = vpack.c.b16 %v712, %v711
      %v767 = vpack.c.b16 %v714, %v713
      %v768 = vpack.c.b16 %v716, %v715
      %v769 = vpack.c.b16 %v718, %v717
      %v770 = vpack.c.b16 %v720, %v719
      %v771 = vpack.c.b16 %v722, %v721
      %v772 = vpack.c.b16 %v724, %v723
      %v773 = vpack.c.b16 %v726, %v725
      %v774 = vpack.c.b16 %v728, %v727
      %v775 = vpack.c.b16 %v730, %v729
      %v776 = vpack.c.b16 %v732, %v731
      %v777 = vpack.c.b16 %v734, %v733
      %v778 = vpack.c.b16 %v736, %v735
      %v779 = vpack.c.b16 %v738, %v737
      %v780 = vpack.c.b16 %v740, %v739
      %v781 = vpack.c.b16 %v741, %v741
      %vm821 = vcmask 982016
      %v823 = vsel %vm821, %v570, 0
      %v826 = vsel %vm821, %v575, 0
      %vm828 = vcmask 1043456
      %v830 = vsel %vm828, %v781, 0
      %832 = vmatprep.subr.bf16.mxu0 0
      %833 = vmatpush1.bf16.msra.mxu0 %v749
      %834 = vmatprep.subr.bf16.mxu0 0
      %835 = vmatpush1.bf16.msra.mxu0 %v748
      %836 = vmatprep.subr.bf16.mxu0 0
      %837 = vmatpush1.bf16.msra.mxu0 %v747
      %838 = vmatprep.subr.bf16.mxu0 0
      %839 = vmatpush1.bf16.msra.mxu0 %v746
      %840 = vmatprep.subr.bf16.mxu0 0
      %841 = vmatpush1.bf16.msra.mxu0 %v745
      %842 = vmatprep.subr.bf16.mxu0 0
      %843 = vmatpush1.bf16.msra.mxu0 %v744
      %844 = vmatprep.subr.bf16.mxu0 0
      %845 = vmatpush1.bf16.msra.mxu0 %v743
      %846 = vmatprep.subr.bf16.mxu0 0
      %847 = vmatpush1.bf16.msra.mxu0 %v742
      %848 = vmatprep.subr.bf16.mxu0 0
      %849 = vmatpush2.bf16.msra.mxu0 %v757
      %850 = vmatprep.subr.bf16.mxu0 0
      %851 = vmatpush2.bf16.msra.mxu0 %v756
      %852 = vmatprep.subr.bf16.mxu0 0
      %853 = vmatpush2.bf16.msra.mxu0 %v755
      %854 = vmatprep.subr.bf16.mxu0 0
      %855 = vmatpush2.bf16.msra.mxu0 %v754
      %856 = vmatprep.subr.bf16.mxu0 0
      %857 = vmatpush2.bf16.msra.mxu0 %v753
      %858 = vmatprep.subr.bf16.mxu0 0
      %859 = vmatpush2.bf16.msra.mxu0 %v752
      %860 = vmatprep.subr.bf16.mxu0 0
      %861 = vmatpush2.bf16.msra.mxu0 %v751
      %862 = vmatprep.subr.bf16.mxu0 0
      %863 = vmatpush2.bf16.msra.mxu0 %v750
      %864 = vmatprep.mubr.bf16.mxu0 %v567
      %865 = vmatmul.mubr.bf16.gmra.mxu0 %v566
      %v866 = vpop.f32.mrf.mxu0
      %v867 = vadd.f32 %v530, %v866
      %v868 = vpop.f32.mrf.mxu0
      %v869 = vpop.f32.mrf.mxu0
      %v870 = vadd.f32 %v531, %v869
      %v871 = vpop.f32.mrf.mxu0
      %872 = vmatprep.mubr.bf16.mxu0 %v572
      %873 = vmatmul.mubr.bf16.gmra.mxu0 %v571
      %v874 = vpop.f32.mrf.mxu0
      %v875 = vadd.f32 %v532, %v874
      %v876 = vpop.f32.mrf.mxu0
      %v877 = vpop.f32.mrf.mxu0
      %v878 = vadd.f32 %v533, %v877
      %v879 = vpop.f32.mrf.mxu0
      %880 = vdwg.mxu0
      %881 = vmatprep.subr.bf16.mxu0 0
      %882 = vmatpush1.bf16.msra.mxu0 %v765
      %883 = vmatprep.subr.bf16.mxu0 0
      %884 = vmatpush1.bf16.msra.mxu0 %v764
      %885 = vmatprep.subr.bf16.mxu0 0
      %886 = vmatpush1.bf16.msra.mxu0 %v763
      %887 = vmatprep.subr.bf16.mxu0 0
      %888 = vmatpush1.bf16.msra.mxu0 %v762
      %889 = vmatprep.subr.bf16.mxu0 0
      %890 = vmatpush1.bf16.msra.mxu0 %v761
      %891 = vmatprep.subr.bf16.mxu0 0
      %892 = vmatpush1.bf16.msra.mxu0 %v760
      %893 = vmatprep.subr.bf16.mxu0 0
      %894 = vmatpush1.bf16.msra.mxu0 %v759
      %895 = vmatprep.subr.bf16.mxu0 0
      %896 = vmatpush1.bf16.msra.mxu0 %v758
      %897 = vmatprep.subr.bf16.mxu0 0
      %898 = vmatpush2.bf16.msra.mxu0 %v773
      %899 = vmatprep.subr.bf16.mxu0 0
      %900 = vmatpush2.bf16.msra.mxu0 %v772
      %901 = vmatprep.subr.bf16.mxu0 0
      %902 = vmatpush2.bf16.msra.mxu0 %v771
      %903 = vmatprep.subr.bf16.mxu0 0
      %904 = vmatpush2.bf16.msra.mxu0 %v770
      %905 = vmatprep.subr.bf16.mxu0 0
      %906 = vmatpush2.bf16.msra.mxu0 %v769
      %907 = vmatprep.subr.bf16.mxu0 0
      %908 = vmatpush2.bf16.msra.mxu0 %v768
      %909 = vmatprep.subr.bf16.mxu0 0
      %910 = vmatpush2.bf16.msra.mxu0 %v767
      %911 = vmatprep.subr.bf16.mxu0 0
      %912 = vmatpush2.bf16.msra.mxu0 %v766
      %913 = vmatprep.mubr.bf16.mxu0 %v569
      %914 = vmatmul.mubr.bf16.gmra.mxu0 %v568
      %v915 = vpop.f32.mrf.mxu0
      %v916 = vadd.f32 %v867, %v915
      %v917 = vpop.f32.mrf.mxu0
      %v918 = vpop.f32.mrf.mxu0
      %v919 = vadd.f32 %v870, %v918
      %v920 = vpop.f32.mrf.mxu0
      %921 = vmatprep.mubr.bf16.mxu0 %v574
      %922 = vmatmul.mubr.bf16.gmra.mxu0 %v573
      %v923 = vpop.f32.mrf.mxu0
      %v924 = vadd.f32 %v875, %v923
      %v925 = vpop.f32.mrf.mxu0
      %v926 = vpop.f32.mrf.mxu0
      %v927 = vadd.f32 %v878, %v926
      %v928 = vpop.f32.mrf.mxu0
      %929 = vdwg.mxu0
      %930 = vmatprep.subr.bf16.mxu0 0
      %931 = vmatpush1.bf16.msra.mxu0 %v830
      %932 = vmatprep.subr.bf16.mxu0 0
      %933 = vmatpush1.bf16.msra.mxu0 %v780
      %934 = vmatprep.subr.bf16.mxu0 0
      %935 = vmatpush1.bf16.msra.mxu0 %v779
      %936 = vmatprep.subr.bf16.mxu0 0
      %937 = vmatpush1.bf16.msra.mxu0 %v778
      %938 = vmatprep.subr.bf16.mxu0 0
      %939 = vmatpush1.bf16.msra.mxu0 %v777
      %940 = vmatprep.subr.bf16.mxu0 0
      %941 = vmatpush1.bf16.msra.mxu0 %v776
      %942 = vmatprep.subr.bf16.mxu0 0
      %943 = vmatpush1.bf16.msra.mxu0 %v775
      %944 = vmatprep.subr.bf16.mxu0 0
      %945 = vmatpush1.bf16.msra.mxu0 %v774
      %946 = vmatprep.subr.bf16.mxu0 0
      %947 = vmatpush2.bf16.msra.mxu0 0
      %948 = vmatprep.subr.bf16.mxu0 0
      %949 = vmatpush2.bf16.msra.mxu0 0
      %950 = vmatprep.subr.bf16.mxu0 0
      %951 = vmatpush2.bf16.msra.mxu0 0
      %952 = vmatprep.subr.bf16.mxu0 0
      %953 = vmatpush2.bf16.msra.mxu0 0
      %954 = vmatprep.subr.bf16.mxu0 0
      %955 = vmatpush2.bf16.msra.mxu0 0
      %956 = vmatprep.subr.bf16.mxu0 0
      %957 = vmatpush2.bf16.msra.mxu0 0
      %958 = vmatprep.subr.bf16.mxu0 0
      %959 = vmatpush2.bf16.msra.mxu0 0
      %960 = vmatprep.subr.bf16.mxu0 0
      %961 = vmatpush2.bf16.msra.mxu0 0
      %962 = vmatprep.mubr.bf16.mxu0 0
      %963 = vmatmul.mubr.bf16.gmra.mxu0 %v823
      %v964 = vpop.f32.mrf.mxu0
      %v965 = vadd.f32 %v916, %v964
      %v966 = vpop.f32.mrf.mxu0
      %v967 = vpop.f32.mrf.mxu0
      %v968 = vadd.f32 %v919, %v967
      %v969 = vpop.f32.mrf.mxu0
      %970 = vmatprep.mubr.bf16.mxu0 0
      %971 = vmatmul.mubr.bf16.gmra.mxu0 %v826
      %v972 = vpop.f32.mrf.mxu0
      %v973 = vadd.f32 %v924, %v972
      %v974 = vpop.f32.mrf.mxu0
      %v975 = vpop.f32.mrf.mxu0
      %v976 = vadd.f32 %v927, %v975
      %v977 = vpop.f32.mrf.mxu0
      %978 = vdwg.mxu0
      %v979 = vld [vmem:[%s277] sm:$0x1]
      %v981 = vlaneseq
      %v982 = vshrl.u32 %v981, 7
      %v983 = vsub.s32 0, %v982
      %v984 = vrot.slane %v979, %v983
      %v986 = vadd.f32 %v965, %v984
      %v987 = vadd.f32 %v968, %v984
      %v988 = vadd.f32 %v973, %v984
      %v989 = vadd.f32 %v976, %v984
      %v990 = vadd.f32 %v519, %v986
      %v991 = vadd.f32 %v520, %v987
      %v992 = vadd.f32 %v521, %v988
      %v993 = vadd.f32 %v522, %v989
      %vm994 = vcmask 64512
      %995 = vst.msk [vmem:[%s5] sm:$0xff] %vm994, %v990
      %996 = vst.msk [vmem:[%s5 + $0x8] sm:$0xff] %vm994, %v991
      %997 = vst.msk [vmem:[%s5 + $0x10] sm:$0xff] %vm994, %v992
      %998 = vst.msk [vmem:[%s5 + $0x18] sm:$0xff] %vm994, %v993
      // Predicated region
      $region45: #{_lambda_.16} parent=39 // pred_check
        %p999 = pneg %p159
      $region46: #{_lambda_.16} parent=39 // pred_check_branch
        %1001 = sbr.rel (%p999) target = $region48
      $region47: #{_lambda_.16} parent=39 // pred_region
        _
      $region48: #{_lambda_.16} parent=39 // pred_fallthru
        _
      // Predicated region
      $region49: #{_lambda_.16} parent=39 // pred_check
        %p1002 = pneg %p159
      $region50: #{_lambda_.16} parent=39 // pred_check_branch
        %1004 = sbr.rel (%p1002) target = $region52
      $region51: #{_lambda_.16} parent=39 // pred_region
        _
      $region52: #{_lambda_.16} parent=39 // pred_fallthru
        _
    $region40: #{_lambda_.16} parent=5 // pred_fallthru
      _
    %p1005 = scmp.le.s32.totalorder 2, %s11
    // Predicated region
    $region53: #{_lambda_.16} parent=5 // pred_check
      %p1006 = pneg %p1005
    $region54: #{_lambda_.16} parent=5 // pred_check_branch
      %1008 = sbr.rel (%p1006) target = $region56
    $region55: #{_lambda_.16} parent=5 // pred_region
      %s1009 = ssub.s32 %s11, 2
    $region56: #{_lambda_.16} parent=5 // pred_fallthru
      _
  $region6: #{_lambda_.16} parent=0 // loop_footer
    %s15 = sadd.s32 1, %s11
  $region7: #{_lambda_.16} parent=0 // loop_footer_branch
    %10 = sbr.rel target = $region3
  $region8: #{_lambda_.16} parent=0 // loop_exit
    _

// kernel: _lambda_.17
$region0: #{_lambda_.17}
  #allocation0 [shape = 'u32[]', space=smem, size = 0x4, offset = 0x4, fixed_abs, tag = 'smem constant byte address 0x4 - core index']
  #allocation1 [shape = 'u32[144,128]{1,0:T(1,128)}', space=vmem, size = 0x12000, scoped, tag = 'internal scratch']
  %s0 = inlined_call_operand.vmem [shape: bf16[4,32,272], index: 0, kind: input, shape index: {}]
  %s1 = inlined_call_operand.vmem [shape: bf16[4,272,16], index: 1, kind: input, shape index: {}]
  %s2 = inlined_call_operand.vmem [shape: f32[4,1,16], index: 2, kind: input, shape index: {}]
  %s3 = inlined_call_operand.vmem [shape: bf16[4,32,16], index: 3, kind: output, shape index: {}]
  %s4 = sld [smem:[#allocation0]]
  $region45: #{_lambda_.17} parent=0
    _
  %s6 = ssub.s32 1, %s4
  %s7 = scalar_select 0, %s6, %s4
  loop: start=0, step=1, limit=6
  $region2: #{_lambda_.17} parent=0 // loop_pre_header
    _
  $region3: #{_lambda_.17} parent=0 // loop_header
    %s9 = sphi 0, %s13
    %p10 = scmp.ge.s32.totalorder %s9, 6
    %s19 = sphi 0, %s21
    %s22 = sphi 0, %s19
    %s23 = sphi 0, %s22
    %s39 = sphi 0, %s23
    %s45 = sphi 0, %s47
    %s48 = sphi 0, %s45
    %s49 = sphi 0, %s48
    %s65 = sphi 0, %s49
    %s71 = sphi 0, %s73
    %s74 = sphi 0, %s71
    %s75 = sphi 0, %s74
    %s91 = sphi 0, %s75
    %s97 = sphi 0, %s99
    %s100 = sphi 0, %s97
    %s101 = sphi 0, %s100
    %s117 = sphi 0, %s101
  $region4: #{_lambda_.17} parent=0 // loop_header_branch
    %12 = sbr.rel (%p10) target = $region8
  $region5: #{_lambda_.17} parent=0 // loop_body
    %s14 = ssub.s32 %s9, 1
    %s15 = ssub.s32 %s9, 2
    %s16 = sadd.s32 %s9, 1
    %s17 = ssub.s32 %s9, %s16
    %p18 = scmp.eq.s32.totalorder %s17, 0
    %s20 = sadd.s32 %s19, 1
    %s21 = scalar_select %p18, %s19, %s20
    %p24 = pneg %p18
    %p25 = scmp.eq.s32.totalorder %s9, 3
    %p26 = por %p24, %p25
    %p27 = scmp.ne.s32.totalorder %s19, %s22
    %p28 = scmp.eq.s32.totalorder %s9, 0
    %p29 = por %p27, %p28
    %p30 = scmp.ne.s32.totalorder %s19, %s22
    %p31 = scmp.eq.s32.totalorder %s14, 3
    %p32 = por %p30, %p31
    %p33 = scmp.ne.s32.totalorder %s22, %s23
    %p34 = scmp.eq.s32.totalorder %s14, 0
    %p35 = por %p33, %p34
    %p36 = scmp.ne.s32.totalorder %s22, %s23
    %p37 = scmp.eq.s32.totalorder %s15, 3
    %p38 = por %p36, %p37
    %p40 = scmp.ne.s32.totalorder %s23, %s39
    %p41 = scmp.eq.s32.totalorder %s15, 0
    %p42 = por %p40, %p41
    %s43 = ssub.s32 %s9, %s16
    %p44 = scmp.eq.s32.totalorder %s43, 0
    %s46 = sadd.s32 %s45, 1
    %s47 = scalar_select %p44, %s45, %s46
    %p50 = pneg %p44
    %p51 = scmp.eq.s32.totalorder %s9, 3
    %p52 = por %p50, %p51
    %p53 = scmp.ne.s32.totalorder %s45, %s48
    %p54 = scmp.eq.s32.totalorder %s9, 0
    %p55 = por %p53, %p54
    %p56 = scmp.ne.s32.totalorder %s45, %s48
    %p57 = scmp.eq.s32.totalorder %s14, 3
    %p58 = por %p56, %p57
    %p59 = scmp.ne.s32.totalorder %s48, %s49
    %p60 = scmp.eq.s32.totalorder %s14, 0
    %p61 = por %p59, %p60
    %p62 = scmp.ne.s32.totalorder %s48, %s49
    %p63 = scmp.eq.s32.totalorder %s15, 3
    %p64 = por %p62, %p63
    %p66 = scmp.ne.s32.totalorder %s49, %s65
    %p67 = scmp.eq.s32.totalorder %s15, 0
    %p68 = por %p66, %p67
    %s69 = ssub.s32 %s9, %s16
    %p70 = scmp.eq.s32.totalorder %s69, 0
    %s72 = sadd.s32 %s71, 1
    %s73 = scalar_select %p70, %s71, %s72
    %p76 = pneg %p70
    %p77 = scmp.eq.s32.totalorder %s9, 3
    %p78 = por %p76, %p77
    %p79 = scmp.ne.s32.totalorder %s71, %s74
    %p80 = scmp.eq.s32.totalorder %s9, 0
    %p81 = por %p79, %p80
    %p82 = scmp.ne.s32.totalorder %s71, %s74
    %p83 = scmp.eq.s32.totalorder %s14, 3
    %p84 = por %p82, %p83
    %p85 = scmp.ne.s32.totalorder %s74, %s75
    %p86 = scmp.eq.s32.totalorder %s14, 0
    %p87 = por %p85, %p86
    %p88 = scmp.ne.s32.totalorder %s74, %s75
    %p89 = scmp.eq.s32.totalorder %s15, 3
    %p90 = por %p88, %p89
    %p92 = scmp.ne.s32.totalorder %s75, %s91
    %p93 = scmp.eq.s32.totalorder %s15, 0
    %p94 = por %p92, %p93
    %s95 = ssub.s32 %s9, %s16
    %p96 = scmp.eq.s32.totalorder %s95, 0
    %s98 = sadd.s32 %s97, 1
    %s99 = scalar_select %p96, %s97, %s98
    %p102 = pneg %p96
    %p103 = scmp.eq.s32.totalorder %s9, 3
    %p104 = por %p102, %p103
    %p105 = scmp.ne.s32.totalorder %s97, %s100
    %p106 = scmp.eq.s32.totalorder %s9, 0
    %p107 = por %p105, %p106
    %p108 = scmp.ne.s32.totalorder %s97, %s100
    %p109 = scmp.eq.s32.totalorder %s14, 3
    %p110 = por %p108, %p109
    %p111 = scmp.ne.s32.totalorder %s100, %s101
    %p112 = scmp.eq.s32.totalorder %s14, 0
    %p113 = por %p111, %p112
    %p114 = scmp.ne.s32.totalorder %s100, %s101
    %p115 = scmp.eq.s32.totalorder %s15, 3
    %p116 = por %p114, %p115
    %p118 = scmp.ne.s32.totalorder %s101, %s117
    %p119 = scmp.eq.s32.totalorder %s15, 0
    %p120 = por %p118, %p119
    %p121 = scmp.le.s32.totalorder 1, %s9
    %p122 = scmp.lt.s32.totalorder %s9, 5
    %p123 = pnand %p121, %p122
    %p124 = pneg %p123
    // Predicated region
    $region9: #{_lambda_.17} parent=5 // pred_check
      _
    $region10: #{_lambda_.17} parent=5 // pred_check_branch
      %126 = sbr.rel (%p123) target = $region12
    $region11: #{_lambda_.17} parent=5 // pred_region
      %s127 = ssub.s32 %s9, 1
    $region12: #{_lambda_.17} parent=5 // pred_fallthru
      _
    %p128 = scmp.lt.s32.totalorder %s9, 4
    // Predicated region
    $region13: #{_lambda_.17} parent=5 // pred_check
      %p129 = pneg %p128
    $region14: #{_lambda_.17} parent=5 // pred_check_branch
      %131 = sbr.rel (%p129) target = $region16
    $region15: #{_lambda_.17} parent=5 // pred_region
      // Predicated region
      $region17: #{_lambda_.17} parent=15 // pred_check
        %p132 = pneg %p29
      $region18: #{_lambda_.17} parent=15 // pred_check_branch
        %134 = sbr.rel (%p132) target = $region20
      $region19: #{_lambda_.17} parent=15 // pred_region
        %p135 = scmp.lt.s32.totalorder %s9, 3
        %s136 = scalar_select %p135, %s9, 3
        %s137 = smul.addr %s136, 12
        %s138 = smul.addr %s137, 4
        %s139 = scalar_lea.vmem %s0, %s138
      $region20: #{_lambda_.17} parent=15 // pred_fallthru
        _
      // Predicated region
      $region21: #{_lambda_.17} parent=15 // pred_check
        %p140 = pneg %p55
      $region22: #{_lambda_.17} parent=15 // pred_check_branch
        %142 = sbr.rel (%p140) target = $region24
      $region23: #{_lambda_.17} parent=15 // pred_region
        %p143 = scmp.lt.s32.totalorder %s9, 3
        %s144 = scalar_select %p143, %s9, 3
        %s145 = smul.addr %s144, 34
        %s146 = smul.addr %s145, 4
        %s147 = scalar_lea.vmem %s1, %s146
      $region24: #{_lambda_.17} parent=15 // pred_fallthru
        _
      // Predicated region
      $region25: #{_lambda_.17} parent=15 // pred_check
        %p148 = pneg %p81
      $region26: #{_lambda_.17} parent=15 // pred_check_branch
        %150 = sbr.rel (%p148) target = $region28
      $region27: #{_lambda_.17} parent=15 // pred_region
        %p151 = scmp.lt.s32.totalorder %s9, 3
        %s152 = scalar_select %p151, %s9, 3
        %s153 = scalar_lea.vmem %s2, %s152
      $region28: #{_lambda_.17} parent=15 // pred_fallthru
        _
    $region16: #{_lambda_.17} parent=5 // pred_fallthru
      _
    %p154 = scmp.le.s32.totalorder 1, %s9
    %p155 = scmp.lt.s32.totalorder %s9, 5
    %p156 = pnand %p154, %p155
    %p157 = pneg %p156
    // Predicated region
    $region29: #{_lambda_.17} parent=5 // pred_check
      _
    $region30: #{_lambda_.17} parent=5 // pred_check_branch
      %159 = sbr.rel (%p156) target = $region32
    $region31: #{_lambda_.17} parent=5 // pred_region
      %s160 = ssub.s32 %s9, 1
      %p161 = scmp.lt.s32.totalorder %s14, 3
      %s162 = scalar_select %p161, %s14, 3
      %s163 = smul.addr %s162, 12
      %s164 = smul.addr %s163, 4
      %s165 = scalar_lea.vmem %s0, %s164
      %p166 = pneg %p35
      %p167 = pneg %p32
      %p168 = scmp.lt.s32.totalorder %s14, 3
      %s169 = scalar_select %p168, %s14, 3
      %s170 = smul.addr %s169, 34
      %s171 = smul.addr %s170, 4
      %s172 = scalar_lea.vmem %s1, %s171
      %p173 = pneg %p61
      %p174 = pneg %p58
      %p175 = scmp.lt.s32.totalorder %s14, 3
      %s176 = scalar_select %p175, %s14, 3
      %s177 = scalar_lea.vmem %s2, %s176
      %p178 = pneg %p87
      %p179 = pneg %p84
      %p180 = pneg %p113
      %p181 = pneg %p110
      %p182 = scmp.lt.s32.totalorder %s14, 3
      %s183 = scalar_select %p182, %s14, 3
      %s184 = smul.addr %s183, 4
      %s185 = smul.addr %s184, 4
      %s186 = scalar_lea.vmem %s3, %s185
      %p187 = scmp.lt.s32.totalorder %s14, 3
      %s188 = scalar_select %p187, %s14, 3
      %s189 = smul.addr %s188, 12
      %s190 = smul.addr %s189, 4
      %s191 = scalar_lea.vmem %s0, %s190
      %p192 = scmp.lt.s32.totalorder %s14, 3
      %s193 = scalar_select %p192, %s14, 3
      %s194 = smul.addr %s193, 34
      %s195 = smul.addr %s194, 4
      %s196 = scalar_lea.vmem %s1, %s195
      %p197 = scmp.lt.s32.totalorder %s14, 3
      %s198 = scalar_select %p197, %s14, 3
      %s199 = scalar_lea.vmem %s2, %s198
      %p200 = scmp.lt.s32.totalorder %s14, 3
      %s201 = scalar_select %p200, %s14, 3
      %s202 = smul.addr %s201, 4
      %s203 = smul.addr %s202, 4
      %s204 = scalar_lea.vmem %s3, %s203
      %v206 = vld [vmem:[%s191] sm:$0xff]
      %v207 = vld [vmem:[%s191 + $0x8] sm:$0xf]
      %v208 = vld [vmem:[%s191 + $0xc] sm:$0xff]
      %v209 = vld [vmem:[%s191 + $0x14] sm:$0xf]
      %v210 = vld [vmem:[%s191 + $0x18] sm:$0xff]
      %v211 = vld [vmem:[%s191 + $0x20] sm:$0xf]
      %v212 = vld [vmem:[%s191 + $0x24] sm:$0xff]
      %v213 = vld [vmem:[%s191 + $0x2c] sm:$0xf]
      %v214 = vld [vmem:[%s196] sm:$0xf]
      %v215 = vld [vmem:[%s196 + $0x4] sm:$0xf]
      %v216 = vld [vmem:[%s196 + $0x8] sm:$0xf]
      %v217 = vld [vmem:[%s196 + $0xc] sm:$0xf]
      %v218 = vld [vmem:[%s196 + $0x10] sm:$0xf]
      %v219 = vld [vmem:[%s196 + $0x14] sm:$0xf]
      %v220 = vld [vmem:[%s196 + $0x18] sm:$0xf]
      %v221 = vld [vmem:[%s196 + $0x1c] sm:$0xf]
      %v222 = vld [vmem:[%s196 + $0x20] sm:$0xf]
      %v223 = vld [vmem:[%s196 + $0x24] sm:$0xf]
      %v224 = vld [vmem:[%s196 + $0x28] sm:$0xf]
      %v225 = vld [vmem:[%s196 + $0x2c] sm:$0xf]
      %v226 = vld [vmem:[%s196 + $0x30] sm:$0xf]
      %v227 = vld [vmem:[%s196 + $0x34] sm:$0xf]
      %v228 = vld [vmem:[%s196 + $0x38] sm:$0xf]
      %v229 = vld [vmem:[%s196 + $0x3c] sm:$0xf]
      %v230 = vld [vmem:[%s196 + $0x40] sm:$0xf]
      %v231 = vld [vmem:[%s196 + $0x44] sm:$0xf]
      %v232 = vld [vmem:[%s196 + $0x48] sm:$0xf]
      %v233 = vld [vmem:[%s196 + $0x4c] sm:$0xf]
      %v234 = vld [vmem:[%s196 + $0x50] sm:$0xf]
      %v235 = vld [vmem:[%s196 + $0x54] sm:$0xf]
      %v236 = vld [vmem:[%s196 + $0x58] sm:$0xf]
      %v237 = vld [vmem:[%s196 + $0x5c] sm:$0xf]
      %v238 = vld [vmem:[%s196 + $0x60] sm:$0xf]
      %v239 = vld [vmem:[%s196 + $0x64] sm:$0xf]
      %v240 = vld [vmem:[%s196 + $0x68] sm:$0xf]
      %v241 = vld [vmem:[%s196 + $0x6c] sm:$0xf]
      %v242 = vld [vmem:[%s196 + $0x70] sm:$0xf]
      %v243 = vld [vmem:[%s196 + $0x74] sm:$0xf]
      %v244 = vld [vmem:[%s196 + $0x78] sm:$0xf]
      %v245 = vld [vmem:[%s196 + $0x7c] sm:$0xf]
      %v246 = vld [vmem:[%s196 + $0x80] sm:$0xf]
      %v247 = vld [vmem:[%s196 + $0x84] sm:$0xf]
      %v248 = vld [vmem:[%s199] sm:$0x1]
      %v250 = vlaneseq
      %v251 = vshrl.u32 %v250, 7
      %v252 = vsub.s32 0, %v251
      %v253 = vrot.slane %v248, %v252
      %v263 = vunpack.c.l.b16 %v206
      %v264 = vunpack.c.h.b16 %v206
      %v265 = vunpack.c.l.b16 %v207
      %v266 = vunpack.c.l.b16 %v208
      %v267 = vunpack.c.h.b16 %v208
      %v268 = vunpack.c.l.b16 %v209
      %v269 = vunpack.c.l.b16 %v210
      %v270 = vunpack.c.h.b16 %v210
      %v271 = vunpack.c.l.b16 %v211
      %v272 = vunpack.c.l.b16 %v212
      %v273 = vunpack.c.h.b16 %v212
      %v274 = vunpack.c.l.b16 %v213
      %v275 = vpack.c.b16 %v266, %v263
      %v276 = vpack.c.b16 %v267, %v264
      %v277 = vpack.c.b16 %v268, %v265
      %v278 = vpack.c.b16 %v272, %v269
      %v279 = vpack.c.b16 %v273, %v270
      %v280 = vpack.c.b16 %v274, %v271
      %v319 = vunpack.c.l.b16 %v214
      %v320 = vunpack.c.l.b16 %v215
      %v321 = vunpack.c.l.b16 %v216
      %v322 = vunpack.c.l.b16 %v217
      %v323 = vunpack.c.l.b16 %v218
      %v324 = vunpack.c.l.b16 %v219
      %v325 = vunpack.c.l.b16 %v220
      %v326 = vunpack.c.l.b16 %v221
      %v327 = vunpack.c.l.b16 %v222
      %v328 = vunpack.c.l.b16 %v223
      %v329 = vunpack.c.l.b16 %v224
      %v330 = vunpack.c.l.b16 %v225
      %v331 = vunpack.c.l.b16 %v226
      %v332 = vunpack.c.l.b16 %v227
      %v333 = vunpack.c.l.b16 %v228
      %v334 = vunpack.c.l.b16 %v229
      %v335 = vunpack.c.l.b16 %v230
      %v336 = vunpack.c.l.b16 %v231
      %v337 = vunpack.c.l.b16 %v232
      %v338 = vunpack.c.l.b16 %v233
      %v339 = vunpack.c.l.b16 %v234
      %v340 = vunpack.c.l.b16 %v235
      %v341 = vunpack.c.l.b16 %v236
      %v342 = vunpack.c.l.b16 %v237
      %v343 = vunpack.c.l.b16 %v238
      %v344 = vunpack.c.l.b16 %v239
      %v345 = vunpack.c.l.b16 %v240
      %v346 = vunpack.c.l.b16 %v241
      %v347 = vunpack.c.l.b16 %v242
      %v348 = vunpack.c.l.b16 %v243
      %v349 = vunpack.c.l.b16 %v244
      %v350 = vunpack.c.l.b16 %v245
      %v351 = vunpack.c.l.b16 %v246
      %v352 = vunpack.c.l.b16 %v247
      %v353 = vpack.c.b16 %v320, %v319
      %v354 = vpack.c.b16 %v322, %v321
      %v355 = vpack.c.b16 %v324, %v323
      %v356 = vpack.c.b16 %v326, %v325
      %v357 = vpack.c.b16 %v328, %v327
      %v358 = vpack.c.b16 %v330, %v329
      %v359 = vpack.c.b16 %v332, %v331
      %v360 = vpack.c.b16 %v334, %v333
      %v361 = vpack.c.b16 %v336, %v335
      %v362 = vpack.c.b16 %v338, %v337
      %v363 = vpack.c.b16 %v340, %v339
      %v364 = vpack.c.b16 %v342, %v341
      %v365 = vpack.c.b16 %v344, %v343
      %v366 = vpack.c.b16 %v346, %v345
      %v367 = vpack.c.b16 %v348, %v347
      %v368 = vpack.c.b16 %v350, %v349
      %v369 = vpack.c.b16 %v352, %v351
      %vm387 = vcmask 130048
      %v389 = vsel %vm387, %v277, 0
      %v392 = vsel %vm387, %v280, 0
      %394 = vmatprep.subr.bf16.mxu0 0
      %395 = vmatpush1.bf16.msra.mxu0 %v360
      %396 = vmatprep.subr.bf16.mxu0 0
      %397 = vmatpush1.bf16.msra.mxu0 %v359
      %398 = vmatprep.subr.bf16.mxu0 0
      %399 = vmatpush1.bf16.msra.mxu0 %v358
      %400 = vmatprep.subr.bf16.mxu0 0
      %401 = vmatpush1.bf16.msra.mxu0 %v357
      %402 = vmatprep.subr.bf16.mxu0 0
      %403 = vmatpush1.bf16.msra.mxu0 %v356
      %404 = vmatprep.subr.bf16.mxu0 0
      %405 = vmatpush1.bf16.msra.mxu0 %v355
      %406 = vmatprep.subr.bf16.mxu0 0
      %407 = vmatpush1.bf16.msra.mxu0 %v354
      %408 = vmatprep.subr.bf16.mxu0 0
      %409 = vmatpush1.bf16.msra.mxu0 %v353
      %410 = vmatprep.subr.bf16.mxu0 0
      %411 = vmatpush2.bf16.msra.mxu0 %v368
      %412 = vmatprep.subr.bf16.mxu0 0
      %413 = vmatpush2.bf16.msra.mxu0 %v367
      %414 = vmatprep.subr.bf16.mxu0 0
      %415 = vmatpush2.bf16.msra.mxu0 %v366
      %416 = vmatprep.subr.bf16.mxu0 0
      %417 = vmatpush2.bf16.msra.mxu0 %v365
      %418 = vmatprep.subr.bf16.mxu0 0
      %419 = vmatpush2.bf16.msra.mxu0 %v364
      %420 = vmatprep.subr.bf16.mxu0 0
      %421 = vmatpush2.bf16.msra.mxu0 %v363
      %422 = vmatprep.subr.bf16.mxu0 0
      %423 = vmatpush2.bf16.msra.mxu0 %v362
      %424 = vmatprep.subr.bf16.mxu0 0
      %425 = vmatpush2.bf16.msra.mxu0 %v361
      %426 = vmatprep.mubr.bf16.mxu0 %v276
      %427 = vmatmul.mubr.bf16.gmra.mxu0 %v275
      %v428 = vpop.f32.mrf.mxu0
      %v429 = vadd.f32 %v253, %v428
      %v430 = vpop.f32.mrf.mxu0
      %v431 = vpop.f32.mrf.mxu0
      %v432 = vadd.f32 %v253, %v431
      %v433 = vpop.f32.mrf.mxu0
      %434 = vmatprep.mubr.bf16.mxu0 %v279
      %435 = vmatmul.mubr.bf16.gmra.mxu0 %v278
      %v436 = vpop.f32.mrf.mxu0
      %v437 = vadd.f32 %v253, %v436
      %v438 = vpop.f32.mrf.mxu0
      %v439 = vpop.f32.mrf.mxu0
      %v440 = vadd.f32 %v253, %v439
      %v441 = vpop.f32.mrf.mxu0
      %442 = vdwg.mxu0
      %443 = vmatprep.subr.bf16.mxu0 0
      %444 = vmatpush1.bf16.msra.mxu0 0
      %445 = vmatprep.subr.bf16.mxu0 0
      %446 = vmatpush1.bf16.msra.mxu0 0
      %447 = vmatprep.subr.bf16.mxu0 0
      %448 = vmatpush1.bf16.msra.mxu0 0
      %449 = vmatprep.subr.bf16.mxu0 0
      %450 = vmatpush1.bf16.msra.mxu0 0
      %451 = vmatprep.subr.bf16.mxu0 0
      %452 = vmatpush1.bf16.msra.mxu0 0
      %453 = vmatprep.subr.bf16.mxu0 0
      %454 = vmatpush1.bf16.msra.mxu0 0
      %455 = vmatprep.subr.bf16.mxu0 0
      %456 = vmatpush1.bf16.msra.mxu0 0
      %457 = vmatprep.subr.bf16.mxu0 0
      %458 = vmatpush1.bf16.msra.mxu0 %v369
      %459 = vmatprep.subr.bf16.mxu0 0
      %460 = vmatpush2.bf16.msra.mxu0 0
      %461 = vmatprep.subr.bf16.mxu0 0
      %462 = vmatpush2.bf16.msra.mxu0 0
      %463 = vmatprep.subr.bf16.mxu0 0
      %464 = vmatpush2.bf16.msra.mxu0 0
      %465 = vmatprep.subr.bf16.mxu0 0
      %466 = vmatpush2.bf16.msra.mxu0 0
      %467 = vmatprep.subr.bf16.mxu0 0
      %468 = vmatpush2.bf16.msra.mxu0 0
      %469 = vmatprep.subr.bf16.mxu0 0
      %470 = vmatpush2.bf16.msra.mxu0 0
      %471 = vmatprep.subr.bf16.mxu0 0
      %472 = vmatpush2.bf16.msra.mxu0 0
      %473 = vmatprep.subr.bf16.mxu0 0
      %474 = vmatpush2.bf16.msra.mxu0 0
      %475 = vmatprep.mubr.bf16.mxu0 0
      %476 = vmatmul.mubr.bf16.gmra.mxu0 %v389
      %v477 = vpop.f32.mrf.mxu0
      %v478 = vadd.f32 %v429, %v477
      %v479 = vpop.f32.mrf.mxu0
      %v480 = vpop.f32.mrf.mxu0
      %v481 = vadd.f32 %v432, %v480
      %v482 = vpop.f32.mrf.mxu0
      %483 = vmatprep.mubr.bf16.mxu0 0
      %484 = vmatmul.mubr.bf16.gmra.mxu0 %v392
      %v485 = vpop.f32.mrf.mxu0
      %v486 = vadd.f32 %v437, %v485
      %v487 = vpop.f32.mrf.mxu0
      %v488 = vpop.f32.mrf.mxu0
      %v489 = vadd.f32 %v440, %v488
      %v490 = vpop.f32.mrf.mxu0
      %491 = vdwg.mxu0
      %v492 = vmax.f32 %v478, 0.0
      %v493 = vmax.f32 %v481, 0.0
      %v494 = vmax.f32 %v486, 0.0
      %v495 = vmax.f32 %v489, 0.0
      %v496 = vpack.c.bf16 %v493, %v492
      %v497 = vpack.c.bf16 %v495, %v494
      %v500 = vunpack.c.l.b16 %v496
      %v501 = vunpack.c.h.b16 %v496
      %v502 = vunpack.c.l.b16 %v497
      %v503 = vunpack.c.h.b16 %v497
      %v504 = vpack.c.b16 %v500, %v500
      %v505 = vpack.c.b16 %v501, %v501
      %v506 = vpack.c.b16 %v502, %v502
      %v507 = vpack.c.b16 %v503, %v503
      %vm512 = vcmask 125952
      %513 = vst.msk [vmem:[%s204] sm:$0xf] %vm512, %v504
      %514 = vst.msk [vmem:[%s204 + $0x4] sm:$0xf] %vm512, %v505
      %515 = vst.msk [vmem:[%s204 + $0x8] sm:$0xf] %vm512, %v506
      %516 = vst.msk [vmem:[%s204 + $0xc] sm:$0xf] %vm512, %v507
      %p517 = scmp.lt.s32.totalorder %s14, 3
      %s518 = scalar_select %p517, %s14, 3
      %s519 = smul.addr %s518, 4
      %s520 = smul.addr %s519, 4
      %s521 = scalar_lea.vmem %s3, %s520
      // Predicated region
      $region33: #{_lambda_.17} parent=31 // pred_check
        %p522 = pneg %p110
      $region34: #{_lambda_.17} parent=31 // pred_check_branch
        %524 = sbr.rel (%p522) target = $region36
      $region35: #{_lambda_.17} parent=31 // pred_region
        _
      $region36: #{_lambda_.17} parent=31 // pred_fallthru
        _
    $region32: #{_lambda_.17} parent=5 // pred_fallthru
      _
    %p525 = scmp.le.s32.totalorder 2, %s9
    // Predicated region
    $region37: #{_lambda_.17} parent=5 // pred_check
      %p526 = pneg %p525
    $region38: #{_lambda_.17} parent=5 // pred_check_branch
      %528 = sbr.rel (%p526) target = $region40
    $region39: #{_lambda_.17} parent=5 // pred_region
      %s529 = ssub.s32 %s9, 2
      // Predicated region
      $region41: #{_lambda_.17} parent=39 // pred_check
        %p530 = pneg %p116
      $region42: #{_lambda_.17} parent=39 // pred_check_branch
        %532 = sbr.rel (%p530) target = $region44
      $region43: #{_lambda_.17} parent=39 // pred_region
        %p533 = scmp.lt.s32.totalorder %s15, 3
        %s534 = scalar_select %p533, %s15, 3
        %s535 = smul.addr %s534, 4
        %s536 = smul.addr %s535, 4
        %s537 = scalar_lea.vmem %s3, %s536
      $region44: #{_lambda_.17} parent=39 // pred_fallthru
        _
    $region40: #{_lambda_.17} parent=5 // pred_fallthru
      _
  $region6: #{_lambda_.17} parent=0 // loop_footer
    %s13 = sadd.s32 1, %s9
  $region7: #{_lambda_.17} parent=0 // loop_footer_branch
    %8 = sbr.rel target = $region3
  $region8: #{_lambda_.17} parent=0 // loop_exit
    _

// kernel: _lambda_.18
$region0: #{_lambda_.18}
  #allocation0 [shape = 'u32[]', space=smem, size = 0x4, offset = 0x4, fixed_abs, tag = 'smem constant byte address 0x4 - core index']
  #allocation1 [shape = 'u32[144,128]{1,0:T(1,128)}', space=vmem, size = 0x12000, scoped, tag = 'internal scratch']
  %s0 = inlined_call_operand.vmem [shape: bf16[4,32,632], index: 0, kind: input, shape index: {}]
  %s1 = inlined_call_operand.vmem [shape: bf16[4,32,72], index: 1, kind: input, shape index: {}]
  %s2 = inlined_call_operand.vmem [shape: bf16[4,632,8], index: 2, kind: input, shape index: {}]
  %s3 = inlined_call_operand.vmem [shape: f32[4,1,8], index: 3, kind: input, shape index: {}]
  %s4 = inlined_call_operand.vmem [shape: f32[4,1,8], index: 4, kind: input, shape index: {}]
  %s5 = inlined_call_operand.vmem [shape: f32[32,8], index: 5, kind: output, shape index: {}]
  %s6 = sld [smem:[#allocation0]]
  $region57: #{_lambda_.18} parent=0
    _
  %s8 = ssub.s32 1, %s6
  %s9 = scalar_select 0, %s8, %s6
  loop: start=0, step=1, limit=6
  $region2: #{_lambda_.18} parent=0 // loop_pre_header
    _
  $region3: #{_lambda_.18} parent=0 // loop_header
    %s11 = sphi 0, %s15
    %p12 = scmp.ge.s32.totalorder %s11, 6
    %s21 = sphi 0, %s23
    %s24 = sphi 0, %s21
    %s25 = sphi 0, %s24
    %s41 = sphi 0, %s25
    %s47 = sphi 0, %s49
    %s50 = sphi 0, %s47
    %s51 = sphi 0, %s50
    %s67 = sphi 0, %s51
    %s73 = sphi 0, %s75
    %s76 = sphi 0, %s73
    %s77 = sphi 0, %s76
    %s93 = sphi 0, %s77
    %s99 = sphi 0, %s101
    %s102 = sphi 0, %s99
    %s103 = sphi 0, %s102
    %s119 = sphi 0, %s103
    %s125 = sphi 0, %s127
    %s128 = sphi 0, %s125
    %s129 = sphi 0, %s128
    %s145 = sphi 0, %s129
    %s149 = sphi 0, %s149
    %s151 = sphi 0, %s149
    %s152 = sphi 0, %s151
    %s166 = sphi 0, %s152
  $region4: #{_lambda_.18} parent=0 // loop_header_branch
    %14 = sbr.rel (%p12) target = $region8
  $region5: #{_lambda_.18} parent=0 // loop_body
    %s16 = ssub.s32 %s11, 1
    %s17 = ssub.s32 %s11, 2
    %s18 = sadd.s32 %s11, 1
    %s19 = ssub.s32 %s11, %s18
    %p20 = scmp.eq.s32.totalorder %s19, 0
    %s22 = sadd.s32 %s21, 1
    %s23 = scalar_select %p20, %s21, %s22
    %p26 = pneg %p20
    %p27 = scmp.eq.s32.totalorder %s11, 3
    %p28 = por %p26, %p27
    %p29 = scmp.ne.s32.totalorder %s21, %s24
    %p30 = scmp.eq.s32.totalorder %s11, 0
    %p31 = por %p29, %p30
    %p32 = scmp.ne.s32.totalorder %s21, %s24
    %p33 = scmp.eq.s32.totalorder %s16, 3
    %p34 = por %p32, %p33
    %p35 = scmp.ne.s32.totalorder %s24, %s25
    %p36 = scmp.eq.s32.totalorder %s16, 0
    %p37 = por %p35, %p36
    %p38 = scmp.ne.s32.totalorder %s24, %s25
    %p39 = scmp.eq.s32.totalorder %s17, 3
    %p40 = por %p38, %p39
    %p42 = scmp.ne.s32.totalorder %s25, %s41
    %p43 = scmp.eq.s32.totalorder %s17, 0
    %p44 = por %p42, %p43
    %s45 = ssub.s32 %s11, %s18
    %p46 = scmp.eq.s32.totalorder %s45, 0
    %s48 = sadd.s32 %s47, 1
    %s49 = scalar_select %p46, %s47, %s48
    %p52 = pneg %p46
    %p53 = scmp.eq.s32.totalorder %s11, 3
    %p54 = por %p52, %p53
    %p55 = scmp.ne.s32.totalorder %s47, %s50
    %p56 = scmp.eq.s32.totalorder %s11, 0
    %p57 = por %p55, %p56
    %p58 = scmp.ne.s32.totalorder %s47, %s50
    %p59 = scmp.eq.s32.totalorder %s16, 3
    %p60 = por %p58, %p59
    %p61 = scmp.ne.s32.totalorder %s50, %s51
    %p62 = scmp.eq.s32.totalorder %s16, 0
    %p63 = por %p61, %p62
    %p64 = scmp.ne.s32.totalorder %s50, %s51
    %p65 = scmp.eq.s32.totalorder %s17, 3
    %p66 = por %p64, %p65
    %p68 = scmp.ne.s32.totalorder %s51, %s67
    %p69 = scmp.eq.s32.totalorder %s17, 0
    %p70 = por %p68, %p69
    %s71 = ssub.s32 %s11, %s18
    %p72 = scmp.eq.s32.totalorder %s71, 0
    %s74 = sadd.s32 %s73, 1
    %s75 = scalar_select %p72, %s73, %s74
    %p78 = pneg %p72
    %p79 = scmp.eq.s32.totalorder %s11, 3
    %p80 = por %p78, %p79
    %p81 = scmp.ne.s32.totalorder %s73, %s76
    %p82 = scmp.eq.s32.totalorder %s11, 0
    %p83 = por %p81, %p82
    %p84 = scmp.ne.s32.totalorder %s73, %s76
    %p85 = scmp.eq.s32.totalorder %s16, 3
    %p86 = por %p84, %p85
    %p87 = scmp.ne.s32.totalorder %s76, %s77
    %p88 = scmp.eq.s32.totalorder %s16, 0
    %p89 = por %p87, %p88
    %p90 = scmp.ne.s32.totalorder %s76, %s77
    %p91 = scmp.eq.s32.totalorder %s17, 3
    %p92 = por %p90, %p91
    %p94 = scmp.ne.s32.totalorder %s77, %s93
    %p95 = scmp.eq.s32.totalorder %s17, 0
    %p96 = por %p94, %p95
    %s97 = ssub.s32 %s11, %s18
    %p98 = scmp.eq.s32.totalorder %s97, 0
    %s100 = sadd.s32 %s99, 1
    %s101 = scalar_select %p98, %s99, %s100
    %p104 = pneg %p98
    %p105 = scmp.eq.s32.totalorder %s11, 3
    %p106 = por %p104, %p105
    %p107 = scmp.ne.s32.totalorder %s99, %s102
    %p108 = scmp.eq.s32.totalorder %s11, 0
    %p109 = por %p107, %p108
    %p110 = scmp.ne.s32.totalorder %s99, %s102
    %p111 = scmp.eq.s32.totalorder %s16, 3
    %p112 = por %p110, %p111
    %p113 = scmp.ne.s32.totalorder %s102, %s103
    %p114 = scmp.eq.s32.totalorder %s16, 0
    %p115 = por %p113, %p114
    %p116 = scmp.ne.s32.totalorder %s102, %s103
    %p117 = scmp.eq.s32.totalorder %s17, 3
    %p118 = por %p116, %p117
    %p120 = scmp.ne.s32.totalorder %s103, %s119
    %p121 = scmp.eq.s32.totalorder %s17, 0
    %p122 = por %p120, %p121
    %s123 = ssub.s32 %s11, %s18
    %p124 = scmp.eq.s32.totalorder %s123, 0
    %s126 = sadd.s32 %s125, 1
    %s127 = scalar_select %p124, %s125, %s126
    %p130 = pneg %p124
    %p131 = scmp.eq.s32.totalorder %s11, 3
    %p132 = por %p130, %p131
    %p133 = scmp.ne.s32.totalorder %s125, %s128
    %p134 = scmp.eq.s32.totalorder %s11, 0
    %p135 = por %p133, %p134
    %p136 = scmp.ne.s32.totalorder %s125, %s128
    %p137 = scmp.eq.s32.totalorder %s16, 3
    %p138 = por %p136, %p137
    %p139 = scmp.ne.s32.totalorder %s128, %s129
    %p140 = scmp.eq.s32.totalorder %s16, 0
    %p141 = por %p139, %p140
    %p142 = scmp.ne.s32.totalorder %s128, %s129
    %p143 = scmp.eq.s32.totalorder %s17, 3
    %p144 = por %p142, %p143
    %p146 = scmp.ne.s32.totalorder %s129, %s145
    %p147 = scmp.eq.s32.totalorder %s17, 0
    %p148 = por %p146, %p147
    %s150 = sadd.s32 %s149, 1
    %p153 = scmp.eq.s32.totalorder %s11, 3
    %p154 = scmp.ne.s32.totalorder %s149, %s151
    %p155 = scmp.eq.s32.totalorder %s11, 0
    %p156 = por %p154, %p155
    %p157 = scmp.ne.s32.totalorder %s149, %s151
    %p158 = scmp.eq.s32.totalorder %s16, 3
    %p159 = por %p157, %p158
    %p160 = scmp.ne.s32.totalorder %s151, %s152
    %p161 = scmp.eq.s32.totalorder %s16, 0
    %p162 = por %p160, %p161
    %p163 = scmp.ne.s32.totalorder %s151, %s152
    %p164 = scmp.eq.s32.totalorder %s17, 3
    %p165 = por %p163, %p164
    %p167 = scmp.ne.s32.totalorder %s152, %s166
    %p168 = scmp.eq.s32.totalorder %s17, 0
    %p169 = por %p167, %p168
    %p170 = scmp.le.s32.totalorder 1, %s11
    %p171 = scmp.lt.s32.totalorder %s11, 5
    %p172 = pnand %p170, %p171
    %p173 = pneg %p172
    // Predicated region
    $region9: #{_lambda_.18} parent=5 // pred_check
      _
    $region10: #{_lambda_.18} parent=5 // pred_check_branch
      %175 = sbr.rel (%p172) target = $region12
    $region11: #{_lambda_.18} parent=5 // pred_region
      %s176 = ssub.s32 %s11, 1
    $region12: #{_lambda_.18} parent=5 // pred_fallthru
      _
    %p177 = scmp.lt.s32.totalorder %s11, 4
    // Predicated region
    $region13: #{_lambda_.18} parent=5 // pred_check
      %p178 = pneg %p177
    $region14: #{_lambda_.18} parent=5 // pred_check_branch
      %180 = sbr.rel (%p178) target = $region16
    $region15: #{_lambda_.18} parent=5 // pred_region
      // Predicated region
      $region17: #{_lambda_.18} parent=15 // pred_check
        %p181 = pneg %p31
      $region18: #{_lambda_.18} parent=15 // pred_check_branch
        %183 = sbr.rel (%p181) target = $region20
      $region19: #{_lambda_.18} parent=15 // pred_region
        %p184 = scmp.lt.s32.totalorder %s11, 3
        %s185 = scalar_select %p184, %s11, 3
        %s186 = smul.addr %s185, 20
        %s187 = smul.addr %s186, 4
        %s188 = scalar_lea.vmem %s0, %s187
      $region20: #{_lambda_.18} parent=15 // pred_fallthru
        _
      // Predicated region
      $region21: #{_lambda_.18} parent=15 // pred_check
        %p189 = pneg %p57
      $region22: #{_lambda_.18} parent=15 // pred_check_branch
        %191 = sbr.rel (%p189) target = $region24
      $region23: #{_lambda_.18} parent=15 // pred_region
        %p192 = scmp.lt.s32.totalorder %s11, 3
        %s193 = scalar_select %p192, %s11, 3
        %s194 = smul.addr %s193, 4
        %s195 = smul.addr %s194, 4
        %s196 = scalar_lea.vmem %s1, %s195
      $region24: #{_lambda_.18} parent=15 // pred_fallthru
        _
      // Predicated region
      $region25: #{_lambda_.18} parent=15 // pred_check
        %p197 = pneg %p83
      $region26: #{_lambda_.18} parent=15 // pred_check_branch
        %199 = sbr.rel (%p197) target = $region28
      $region27: #{_lambda_.18} parent=15 // pred_region
        %p200 = scmp.lt.s32.totalorder %s11, 3
        %s201 = scalar_select %p200, %s11, 3
        %s202 = smul.addr %s201, 79
        %s203 = smul.addr %s202, 4
        %s204 = scalar_lea.vmem %s2, %s203
      $region28: #{_lambda_.18} parent=15 // pred_fallthru
        _
      // Predicated region
      $region29: #{_lambda_.18} parent=15 // pred_check
        %p205 = pneg %p109
      $region30: #{_lambda_.18} parent=15 // pred_check_branch
        %207 = sbr.rel (%p205) target = $region32
      $region31: #{_lambda_.18} parent=15 // pred_region
        %p208 = scmp.lt.s32.totalorder %s11, 3
        %s209 = scalar_select %p208, %s11, 3
        %s210 = scalar_lea.vmem %s3, %s209
      $region32: #{_lambda_.18} parent=15 // pred_fallthru
        _
      // Predicated region
      $region33: #{_lambda_.18} parent=15 // pred_check
        %p211 = pneg %p135
      $region34: #{_lambda_.18} parent=15 // pred_check_branch
        %213 = sbr.rel (%p211) target = $region36
      $region35: #{_lambda_.18} parent=15 // pred_region
        %p214 = scmp.lt.s32.totalorder %s11, 3
        %s215 = scalar_select %p214, %s11, 3
        %s216 = scalar_lea.vmem %s4, %s215
      $region36: #{_lambda_.18} parent=15 // pred_fallthru
        _
    $region16: #{_lambda_.18} parent=5 // pred_fallthru
      _
    %p217 = scmp.le.s32.totalorder 1, %s11
    %p218 = scmp.lt.s32.totalorder %s11, 5
    %p219 = pnand %p217, %p218
    %p220 = pneg %p219
    // Predicated region
    $region37: #{_lambda_.18} parent=5 // pred_check
      _
    $region38: #{_lambda_.18} parent=5 // pred_check_branch
      %222 = sbr.rel (%p219) target = $region40
    $region39: #{_lambda_.18} parent=5 // pred_region
      %s223 = ssub.s32 %s11, 1
      %p224 = scmp.lt.s32.totalorder %s16, 3
      %s225 = scalar_select %p224, %s16, 3
      %s226 = smul.addr %s225, 20
      %s227 = smul.addr %s226, 4
      %s228 = scalar_lea.vmem %s0, %s227
      %p229 = pneg %p37
      %p230 = pneg %p34
      %p231 = scmp.lt.s32.totalorder %s16, 3
      %s232 = scalar_select %p231, %s16, 3
      %s233 = smul.addr %s232, 4
      %s234 = smul.addr %s233, 4
      %s235 = scalar_lea.vmem %s1, %s234
      %p236 = pneg %p63
      %p237 = pneg %p60
      %p238 = scmp.lt.s32.totalorder %s16, 3
      %s239 = scalar_select %p238, %s16, 3
      %s240 = smul.addr %s239, 79
      %s241 = smul.addr %s240, 4
      %s242 = scalar_lea.vmem %s2, %s241
      %p243 = pneg %p89
      %p244 = pneg %p86
      %p245 = scmp.lt.s32.totalorder %s16, 3
      %s246 = scalar_select %p245, %s16, 3
      %s247 = scalar_lea.vmem %s3, %s246
      %p248 = pneg %p115
      %p249 = pneg %p112
      %p250 = scmp.lt.s32.totalorder %s16, 3
      %s251 = scalar_select %p250, %s16, 3
      %s252 = scalar_lea.vmem %s4, %s251
      %p253 = pneg %p141
      %p254 = pneg %p138
      %p255 = pneg %p162
      %p256 = pneg %p159
      %p257 = scmp.lt.s32.totalorder %s16, 3
      %s258 = scalar_select %p257, %s16, 3
      %s259 = smul.addr %s258, 20
      %s260 = smul.addr %s259, 4
      %s261 = scalar_lea.vmem %s0, %s260
      %p262 = scmp.lt.s32.totalorder %s16, 3
      %s263 = scalar_select %p262, %s16, 3
      %s264 = smul.addr %s263, 4
      %s265 = smul.addr %s264, 4
      %s266 = scalar_lea.vmem %s1, %s265
      %p267 = scmp.lt.s32.totalorder %s16, 3
      %s268 = scalar_select %p267, %s16, 3
      %s269 = smul.addr %s268, 79
      %s270 = smul.addr %s269, 4
      %s271 = scalar_lea.vmem %s2, %s270
      %p272 = scmp.lt.s32.totalorder %s16, 3
      %s273 = scalar_select %p272, %s16, 3
      %s274 = scalar_lea.vmem %s3, %s273
      %p275 = scmp.lt.s32.totalorder %s16, 3
      %s276 = scalar_select %p275, %s16, 3
      %s277 = scalar_lea.vmem %s4, %s276
      %p279 = scmp.eq.s32.totalorder %s16, 0
      // Predicated region
      $region41: #{_lambda_.18} parent=39 // pred_check
        %p280 = pneg %p279
      $region42: #{_lambda_.18} parent=39 // pred_check_branch
        %282 = sbr.rel (%p280) target = $region44
      $region43: #{_lambda_.18} parent=39 // pred_region
        %vm283 = vcmask 64512
        %284 = vst.msk [vmem:[%s5] sm:$0xff] %vm283, 0.0
        %285 = vst.msk [vmem:[%s5 + $0x8] sm:$0xff] %vm283, 0.0
        %286 = vst.msk [vmem:[%s5 + $0x10] sm:$0xff] %vm283, 0.0
        %287 = vst.msk [vmem:[%s5 + $0x18] sm:$0xff] %vm283, 0.0
      $region44: #{_lambda_.18} parent=39 // pred_fallthru
        _
      %v288 = vld [vmem:[%s261] sm:$0xff]
      %v289 = vld [vmem:[%s261 + $0x8] sm:$0xff]
      %v290 = vld [vmem:[%s261 + $0x10] sm:$0xf]
      %v291 = vld [vmem:[%s261 + $0x14] sm:$0xff]
      %v292 = vld [vmem:[%s261 + $0x1c] sm:$0xff]
      %v293 = vld [vmem:[%s261 + $0x24] sm:$0xf]
      %v294 = vld [vmem:[%s261 + $0x28] sm:$0xff]
      %v295 = vld [vmem:[%s261 + $0x30] sm:$0xff]
      %v296 = vld [vmem:[%s261 + $0x38] sm:$0xf]
      %v297 = vld [vmem:[%s261 + $0x3c] sm:$0xff]
      %v298 = vld [vmem:[%s261 + $0x44] sm:$0xff]
      %v299 = vld [vmem:[%s261 + $0x4c] sm:$0xf]
      %v300 = vld [vmem:[%s271] sm:$0xf]
      %v301 = vld [vmem:[%s271 + $0x4] sm:$0xf]
      %v302 = vld [vmem:[%s271 + $0x8] sm:$0xf]
      %v303 = vld [vmem:[%s271 + $0xc] sm:$0xf]
      %v304 = vld [vmem:[%s271 + $0x10] sm:$0xf]
      %v305 = vld [vmem:[%s271 + $0x14] sm:$0xf]
      %v306 = vld [vmem:[%s271 + $0x18] sm:$0xf]
      %v307 = vld [vmem:[%s271 + $0x1c] sm:$0xf]
      %v308 = vld [vmem:[%s271 + $0x20] sm:$0xf]
      %v309 = vld [vmem:[%s271 + $0x24] sm:$0xf]
      %v310 = vld [vmem:[%s271 + $0x28] sm:$0xf]
      %v311 = vld [vmem:[%s271 + $0x2c] sm:$0xf]
      %v312 = vld [vmem:[%s271 + $0x30] sm:$0xf]
      %v313 = vld [vmem:[%s271 + $0x34] sm:$0xf]
      %v314 = vld [vmem:[%s271 + $0x38] sm:$0xf]
      %v315 = vld [vmem:[%s271 + $0x3c] sm:$0xf]
      %v316 = vld [vmem:[%s271 + $0x40] sm:$0xf]
      %v317 = vld [vmem:[%s271 + $0x44] sm:$0xf]
      %v318 = vld [vmem:[%s271 + $0x48] sm:$0xf]
      %v319 = vld [vmem:[%s271 + $0x4c] sm:$0xf]
      %v320 = vld [vmem:[%s271 + $0x50] sm:$0xf]
      %v321 = vld [vmem:[%s271 + $0x54] sm:$0xf]
      %v322 = vld [vmem:[%s271 + $0x58] sm:$0xf]
      %v323 = vld [vmem:[%s271 + $0x5c] sm:$0xf]
      %v324 = vld [vmem:[%s271 + $0x60] sm:$0xf]
      %v325 = vld [vmem:[%s271 + $0x64] sm:$0xf]
      %v326 = vld [vmem:[%s271 + $0x68] sm:$0xf]
      %v327 = vld [vmem:[%s271 + $0x6c] sm:$0xf]
      %v328 = vld [vmem:[%s271 + $0x70] sm:$0xf]
      %v329 = vld [vmem:[%s271 + $0x74] sm:$0xf]
      %v330 = vld [vmem:[%s271 + $0x78] sm:$0xf]
      %v331 = vld [vmem:[%s271 + $0x7c] sm:$0xf]
      %v332 = vld [vmem:[%s271 + $0x80] sm:$0xf]
      %v333 = vld [vmem:[%s271 + $0x84] sm:$0xf]
      %v334 = vld [vmem:[%s271 + $0x88] sm:$0xf]
      %v335 = vld [vmem:[%s271 + $0x8c] sm:$0xf]
      %v336 = vld [vmem:[%s271 + $0x90] sm:$0xf]
      %v337 = vld [vmem:[%s271 + $0x94] sm:$0xf]
      %v338 = vld [vmem:[%s271 + $0x98] sm:$0xf]
      %v339 = vld [vmem:[%s271 + $0x9c] sm:$0xf]
      %v340 = vld [vmem:[%s271 + $0xa0] sm:$0xf]
      %v341 = vld [vmem:[%s271 + $0xa4] sm:$0xf]
      %v342 = vld [vmem:[%s271 + $0xa8] sm:$0xf]
      %v343 = vld [vmem:[%s271 + $0xac] sm:$0xf]
      %v344 = vld [vmem:[%s271 + $0xb0] sm:$0xf]
      %v345 = vld [vmem:[%s271 + $0xb4] sm:$0xf]
      %v346 = vld [vmem:[%s271 + $0xb8] sm:$0xf]
      %v347 = vld [vmem:[%s271 + $0xbc] sm:$0xf]
      %v348 = vld [vmem:[%s271 + $0xc0] sm:$0xf]
      %v349 = vld [vmem:[%s271 + $0xc4] sm:$0xf]
      %v350 = vld [vmem:[%s271 + $0xc8] sm:$0xf]
      %v351 = vld [vmem:[%s271 + $0xcc] sm:$0xf]
      %v352 = vld [vmem:[%s271 + $0xd0] sm:$0xf]
      %v353 = vld [vmem:[%s271 + $0xd4] sm:$0xf]
      %v354 = vld [vmem:[%s271 + $0xd8] sm:$0xf]
      %v355 = vld [vmem:[%s271 + $0xdc] sm:$0xf]
      %v356 = vld [vmem:[%s271 + $0xe0] sm:$0xf]
      %v357 = vld [vmem:[%s271 + $0xe4] sm:$0xf]
      %v358 = vld [vmem:[%s271 + $0xe8] sm:$0xf]
      %v359 = vld [vmem:[%s271 + $0xec] sm:$0xf]
      %v360 = vld [vmem:[%s271 + $0xf0] sm:$0xf]
      %v361 = vld [vmem:[%s271 + $0xf4] sm:$0xf]
      %v362 = vld [vmem:[%s271 + $0xf8] sm:$0xf]
      %v363 = vld [vmem:[%s271 + $0xfc] sm:$0xf]
      %v364 = vld [vmem:[%s271 + $0x100] sm:$0xf]
      %v365 = vld [vmem:[%s271 + $0x104] sm:$0xf]
      %v366 = vld [vmem:[%s271 + $0x108] sm:$0xf]
      %v367 = vld [vmem:[%s271 + $0x10c] sm:$0xf]
      %v368 = vld [vmem:[%s271 + $0x110] sm:$0xf]
      %v369 = vld [vmem:[%s271 + $0x114] sm:$0xf]
      %v370 = vld [vmem:[%s271 + $0x118] sm:$0xf]
      %v371 = vld [vmem:[%s271 + $0x11c] sm:$0xf]
      %v372 = vld [vmem:[%s271 + $0x120] sm:$0xf]
      %v373 = vld [vmem:[%s271 + $0x124] sm:$0xf]
      %v374 = vld [vmem:[%s271 + $0x128] sm:$0xf]
      %v375 = vld [vmem:[%s271 + $0x12c] sm:$0xf]
      %v376 = vld [vmem:[%s271 + $0x130] sm:$0xf]
      %v377 = vld [vmem:[%s271 + $0x134] sm:$0xf]
      %v378 = vld [vmem:[%s271 + $0x138] sm:$0xf]
      %v379 = vld [vmem:[%s266] sm:$0xf]
      %v380 = vld [vmem:[%s266 + $0x4] sm:$0xf]
      %v381 = vld [vmem:[%s266 + $0x8] sm:$0xf]
      %v382 = vld [vmem:[%s266 + $0xc] sm:$0xf]
      %v383 = vunpack.c.l.bf16 %v379
      %v384 = vunpack.c.l.bf16 %v380
      %v385 = vunpack.c.l.bf16 %v381
      %v386 = vunpack.c.l.bf16 %v382
      %391 = vrot.lane.b32.xlu0 %v383, 120
      %v392 = vpop.permute.xlu0 %391
      %393 = vrot.lane.b32.xlu0 %v384, 120
      %v394 = vpop.permute.xlu0 %393
      %395 = vrot.lane.b32.xlu0 %v385, 120
      %v396 = vpop.permute.xlu0 %395
      %397 = vrot.lane.b32.xlu0 %v386, 120
      %v398 = vpop.permute.xlu0 %397
      %v403 = vmax.f32 %v383, %v392
      %v404 = vmax.f32 %v384, %v394
      %v405 = vmax.f32 %v385, %v396
      %v406 = vmax.f32 %v386, %v398
      %407 = vrot.lane.b32.xlu0 %v383, 112
      %v408 = vpop.permute.xlu0 %407
      %409 = vrot.lane.b32.xlu0 %v384, 112
      %v410 = vpop.permute.xlu0 %409
      %411 = vrot.lane.b32.xlu0 %v385, 112
      %v412 = vpop.permute.xlu0 %411
      %413 = vrot.lane.b32.xlu0 %v386, 112
      %v414 = vpop.permute.xlu0 %413
      %v419 = vmax.f32 %v403, %v408
      %v420 = vmax.f32 %v404, %v410
      %v421 = vmax.f32 %v405, %v412
      %v422 = vmax.f32 %v406, %v414
      %423 = vrot.lane.b32.xlu0 %v383, 104
      %v424 = vpop.permute.xlu0 %423
      %425 = vrot.lane.b32.xlu0 %v384, 104
      %v426 = vpop.permute.xlu0 %425
      %427 = vrot.lane.b32.xlu0 %v385, 104
      %v428 = vpop.permute.xlu0 %427
      %429 = vrot.lane.b32.xlu0 %v386, 104
      %v430 = vpop.permute.xlu0 %429
      %v435 = vmax.f32 %v419, %v424
      %v436 = vmax.f32 %v420, %v426
      %v437 = vmax.f32 %v421, %v428
      %v438 = vmax.f32 %v422, %v430
      %439 = vrot.lane.b32.xlu0 %v383, 96
      %v440 = vpop.permute.xlu0 %439
      %441 = vrot.lane.b32.xlu0 %v384, 96
      %v442 = vpop.permute.xlu0 %441
      %443 = vrot.lane.b32.xlu0 %v385, 96
      %v444 = vpop.permute.xlu0 %443
      %445 = vrot.lane.b32.xlu0 %v386, 96
      %v446 = vpop.permute.xlu0 %445
      %v451 = vmax.f32 %v435, %v440
      %v452 = vmax.f32 %v436, %v442
      %v453 = vmax.f32 %v437, %v444
      %v454 = vmax.f32 %v438, %v446
      %455 = vrot.lane.b32.xlu0 %v383, 88
      %v456 = vpop.permute.xlu0 %455
      %457 = vrot.lane.b32.xlu0 %v384, 88
      %v458 = vpop.permute.xlu0 %457
      %459 = vrot.lane.b32.xlu0 %v385, 88
      %v460 = vpop.permute.xlu0 %459
      %461 = vrot.lane.b32.xlu0 %v386, 88
      %v462 = vpop.permute.xlu0 %461
      %v467 = vmax.f32 %v451, %v456
      %v468 = vmax.f32 %v452, %v458
      %v469 = vmax.f32 %v453, %v460
      %v470 = vmax.f32 %v454, %v462
      %471 = vrot.lane.b32.xlu0 %v383, 80
      %v472 = vpop.permute.xlu0 %471
      %473 = vrot.lane.b32.xlu0 %v384, 80
      %v474 = vpop.permute.xlu0 %473
      %475 = vrot.lane.b32.xlu0 %v385, 80
      %v476 = vpop.permute.xlu0 %475
      %477 = vrot.lane.b32.xlu0 %v386, 80
      %v478 = vpop.permute.xlu0 %477
      %v483 = vmax.f32 %v467, %v472
      %v484 = vmax.f32 %v468, %v474
      %v485 = vmax.f32 %v469, %v476
      %v486 = vmax.f32 %v470, %v478
      %487 = vrot.lane.b32.xlu0 %v383, 72
      %v488 = vpop.permute.xlu0 %487
      %489 = vrot.lane.b32.xlu0 %v384, 72
      %v490 = vpop.permute.xlu0 %489
      %491 = vrot.lane.b32.xlu0 %v385, 72
      %v492 = vpop.permute.xlu0 %491
      %493 = vrot.lane.b32.xlu0 %v386, 72
      %v494 = vpop.permute.xlu0 %493
      %v499 = vmax.f32 %v483, %v488
      %v500 = vmax.f32 %v484, %v490
      %v501 = vmax.f32 %v485, %v492
      %v502 = vmax.f32 %v486, %v494
      %503 = vrot.lane.b32.xlu0 %v383, 64
      %v504 = vpop.permute.xlu0 %503
      %505 = vrot.lane.b32.xlu0 %v384, 64
      %v506 = vpop.permute.xlu0 %505
      %507 = vrot.lane.b32.xlu0 %v385, 64
      %v508 = vpop.permute.xlu0 %507
      %509 = vrot.lane.b32.xlu0 %v386, 64
      %v510 = vpop.permute.xlu0 %509
      %v515 = vmax.f32 %v499, %v504
      %v516 = vmax.f32 %v500, %v506
      %v517 = vmax.f32 %v501, %v508
      %v518 = vmax.f32 %v502, %v510
      %v519 = vld [vmem:[%s5] sm:$0xff]
      %v520 = vld [vmem:[%s5 + $0x8] sm:$0xff]
      %v521 = vld [vmem:[%s5 + $0x10] sm:$0xff]
      %v522 = vld [vmem:[%s5 + $0x18] sm:$0xff]
      %v523 = vld [vmem:[%s274] sm:$0x1]
      %v525 = vlaneseq
      %v526 = vshrl.u32 %v525, 7
      %v527 = vsub.s32 0, %v526
      %v528 = vrot.slane %v523, %v527
      %v530 = vmul.f32 %v515, %v528
      %v531 = vmul.f32 %v516, %v528
      %v532 = vmul.f32 %v517, %v528
      %v533 = vmul.f32 %v518, %v528
      %v546 = vunpack.c.l.b16 %v288
      %v547 = vunpack.c.h.b16 %v288
      %v548 = vunpack.c.l.b16 %v289
      %v549 = vunpack.c.h.b16 %v289
      %v550 = vunpack.c.l.b16 %v290
      %v551 = vunpack.c.l.b16 %v291
      %v552 = vunpack.c.h.b16 %v291
      %v553 = vunpack.c.l.b16 %v292
      %v554 = vunpack.c.h.b16 %v292
      %v555 = vunpack.c.l.b16 %v293
      %v556 = vunpack.c.l.b16 %v294
      %v557 = vunpack.c.h.b16 %v294
      %v558 = vunpack.c.l.b16 %v295
      %v559 = vunpack.c.h.b16 %v295
      %v560 = vunpack.c.l.b16 %v296
      %v561 = vunpack.c.l.b16 %v297
      %v562 = vunpack.c.h.b16 %v297
      %v563 = vunpack.c.l.b16 %v298
      %v564 = vunpack.c.h.b16 %v298
      %v565 = vunpack.c.l.b16 %v299
      %v566 = vpack.c.b16 %v551, %v546
      %v567 = vpack.c.b16 %v552, %v547
      %v568 = vpack.c.b16 %v553, %v548
      %v569 = vpack.c.b16 %v554, %v549
      %v570 = vpack.c.b16 %v555, %v550
      %v571 = vpack.c.b16 %v561, %v556
      %v572 = vpack.c.b16 %v562, %v557
      %v573 = vpack.c.b16 %v563, %v558
      %v574 = vpack.c.b16 %v564, %v559
      %v575 = vpack.c.b16 %v565, %v560
      %v663 = vunpack.c.l.b16 %v300
      %v664 = vunpack.c.l.b16 %v301
      %v665 = vunpack.c.l.b16 %v302
      %v666 = vunpack.c.l.b16 %v303
      %v667 = vunpack.c.l.b16 %v304
      %v668 = vunpack.c.l.b16 %v305
      %v669 = vunpack.c.l.b16 %v306
      %v670 = vunpack.c.l.b16 %v307
      %v671 = vunpack.c.l.b16 %v308
      %v672 = vunpack.c.l.b16 %v309
      %v673 = vunpack.c.l.b16 %v310
      %v674 = vunpack.c.l.b16 %v311
      %v675 = vunpack.c.l.b16 %v312
      %v676 = vunpack.c.l.b16 %v313
      %v677 = vunpack.c.l.b16 %v314
      %v678 = vunpack.c.l.b16 %v315
      %v679 = vunpack.c.l.b16 %v316
      %v680 = vunpack.c.l.b16 %v317
      %v681 = vunpack.c.l.b16 %v318
      %v682 = vunpack.c.l.b16 %v319
      %v683 = vunpack.c.l.b16 %v320
      %v684 = vunpack.c.l.b16 %v321
      %v685 = vunpack.c.l.b16 %v322
      %v686 = vunpack.c.l.b16 %v323
      %v687 = vunpack.c.l.b16 %v324
      %v688 = vunpack.c.l.b16 %v325
      %v689 = vunpack.c.l.b16 %v326
      %v690 = vunpack.c.l.b16 %v327
      %v691 = vunpack.c.l.b16 %v328
      %v692 = vunpack.c.l.b16 %v329
      %v693 = vunpack.c.l.b16 %v330
      %v694 = vunpack.c.l.b16 %v331
      %v695 = vunpack.c.l.b16 %v332
      %v696 = vunpack.c.l.b16 %v333
      %v697 = vunpack.c.l.b16 %v334
      %v698 = vunpack.c.l.b16 %v335
      %v699 = vunpack.c.l.b16 %v336
      %v700 = vunpack.c.l.b16 %v337
      %v701 = vunpack.c.l.b16 %v338
      %v702 = vunpack.c.l.b16 %v339
      %v703 = vunpack.c.l.b16 %v340
      %v704 = vunpack.c.l.b16 %v341
      %v705 = vunpack.c.l.b16 %v342
      %v706 = vunpack.c.l.b16 %v343
      %v707 = vunpack.c.l.b16 %v344
      %v708 = vunpack.c.l.b16 %v345
      %v709 = vunpack.c.l.b16 %v346
      %v710 = vunpack.c.l.b16 %v347
      %v711 = vunpack.c.l.b16 %v348
      %v712 = vunpack.c.l.b16 %v349
      %v713 = vunpack.c.l.b16 %v350
      %v714 = vunpack.c.l.b16 %v351
      %v715 = vunpack.c.l.b16 %v352
      %v716 = vunpack.c.l.b16 %v353
      %v717 = vunpack.c.l.b16 %v354
      %v718 = vunpack.c.l.b16 %v355
      %v719 = vunpack.c.l.b16 %v356
      %v720 = vunpack.c.l.b16 %v357
      %v721 = vunpack.c.l.b16 %v358
      %v722 = vunpack.c.l.b16 %v359
      %v723 = vunpack.c.l.b16 %v360
      %v724 = vunpack.c.l.b16 %v361
      %v725 = vunpack.c.l.b16 %v362
      %v726 = vunpack.c.l.b16 %v363
      %v727 = vunpack.c.l.b16 %v364
      %v728 = vunpack.c.l.b16 %v365
      %v729 = vunpack.c.l.b16 %v366
      %v730 = vunpack.c.l.b16 %v367
      %v731 = vunpack.c.l.b16 %v368
      %v732 = vunpack.c.l.b16 %v369
      %v733 = vunpack.c.l.b16 %v370
      %v734 = vunpack.c.l.b16 %v371
      %v735 = vunpack.c.l.b16 %v372
      %v736 = vunpack.c.l.b16 %v373
      %v737 = vunpack.c.l.b16 %v374
      %v738 = vunpack.c.l.b16 %v375
      %v739 = vunpack.c.l.b16 %v376
      %v740 = vunpack.c.l.b16 %v377
      %v741 = vunpack.c.l.b16 %v378
      %v742 = vpack.c.b16 %v664, %v663
      %v743 = vpack.c.b16 %v666, %v665
      %v744 = vpack.c.b16 %v668, %v667
      %v745 = vpack.c.b16 %v670, %v669
      %v746 = vpack.c.b16 %v672, %v671
      %v747 = vpack.c.b16 %v674, %v673
      %v748 = vpack.c.b16 %v676, %v675
      %v749 = vpack.c.b16 %v678, %v677
      %v750 = vpack.c.b16 %v680, %v679
      %v751 = vpack.c.b16 %v682, %v681
      %v752 = vpack.c.b16 %v684, %v683
      %v753 = vpack.c.b16 %v686, %v685
      %v754 = vpack.c.b16 %v688, %v687
      %v755 = vpack.c.b16 %v690, %v689
      %v756 = vpack.c.b16 %v692, %v691
      %v757 = vpack.c.b16 %v694, %v693
      %v758 = vpack.c.b16 %v696, %v695
      %v759 = vpack.c.b16 %v698, %v697
      %v760 = vpack.c.b16 %v700, %v699
      %v761 = vpack.c.b16 %v702, %v701
      %v762 = vpack.c.b16 %v704, %v703
      %v763 = vpack.c.b16 %v706, %v705
      %v764 = vpack.c.b16 %v708, %v707
      %v765 = vpack.c.b16 %v710, %v709
      %v766 = vpack.c.b16 %v712, %v711
      %v767 = vpack.c.b16 %v714, %v713
      %v768 = vpack.c.b16 %v716, %v715
      %v769 = vpack.c.b16 %v718, %v717
      %v770 = vpack.c.b16 %v720, %v719
      %v771 = vpack.c.b16 %v722, %v721
      %v772 = vpack.c.b16 %v724, %v723
      %v773 = vpack.c.b16 %v726, %v725
      %v774 = vpack.c.b16 %v728, %v727
      %v775 = vpack.c.b16 %v730, %v729
      %v776 = vpack.c.b16 %v732, %v731
      %v777 = vpack.c.b16 %v734, %v733
      %v778 = vpack.c.b16 %v736, %v735
      %v779 = vpack.c.b16 %v738, %v737
      %v780 = vpack.c.b16 %v740, %v739
      %v781 = vpack.c.b16 %v741, %v741
      %vm821 = vcmask 982016
      %v823 = vsel %vm821, %v570, 0
      %v826 = vsel %vm821, %v575, 0
      %vm828 = vcmask 1043456
      %v830 = vsel %vm828, %v781, 0
      %832 = vmatprep.subr.bf16.mxu0 0
      %833 = vmatpush1.bf16.msra.mxu0 %v749
      %834 = vmatprep.subr.bf16.mxu0 0
      %835 = vmatpush1.bf16.msra.mxu0 %v748
      %836 = vmatprep.subr.bf16.mxu0 0
      %837 = vmatpush1.bf16.msra.mxu0 %v747
      %838 = vmatprep.subr.bf16.mxu0 0
      %839 = vmatpush1.bf16.msra.mxu0 %v746
      %840 = vmatprep.subr.bf16.mxu0 0
      %841 = vmatpush1.bf16.msra.mxu0 %v745
      %842 = vmatprep.subr.bf16.mxu0 0
      %843 = vmatpush1.bf16.msra.mxu0 %v744
      %844 = vmatprep.subr.bf16.mxu0 0
      %845 = vmatpush1.bf16.msra.mxu0 %v743
      %846 = vmatprep.subr.bf16.mxu0 0
      %847 = vmatpush1.bf16.msra.mxu0 %v742
      %848 = vmatprep.subr.bf16.mxu0 0
      %849 = vmatpush2.bf16.msra.mxu0 %v757
      %850 = vmatprep.subr.bf16.mxu0 0
      %851 = vmatpush2.bf16.msra.mxu0 %v756
      %852 = vmatprep.subr.bf16.mxu0 0
      %853 = vmatpush2.bf16.msra.mxu0 %v755
      %854 = vmatprep.subr.bf16.mxu0 0
      %855 = vmatpush2.bf16.msra.mxu0 %v754
      %856 = vmatprep.subr.bf16.mxu0 0
      %857 = vmatpush2.bf16.msra.mxu0 %v753
      %858 = vmatprep.subr.bf16.mxu0 0
      %859 = vmatpush2.bf16.msra.mxu0 %v752
      %860 = vmatprep.subr.bf16.mxu0 0
      %861 = vmatpush2.bf16.msra.mxu0 %v751
      %862 = vmatprep.subr.bf16.mxu0 0
      %863 = vmatpush2.bf16.msra.mxu0 %v750
      %864 = vmatprep.mubr.bf16.mxu0 %v567
      %865 = vmatmul.mubr.bf16.gmra.mxu0 %v566
      %v866 = vpop.f32.mrf.mxu0
      %v867 = vadd.f32 %v530, %v866
      %v868 = vpop.f32.mrf.mxu0
      %v869 = vpop.f32.mrf.mxu0
      %v870 = vadd.f32 %v531, %v869
      %v871 = vpop.f32.mrf.mxu0
      %872 = vmatprep.mubr.bf16.mxu0 %v572
      %873 = vmatmul.mubr.bf16.gmra.mxu0 %v571
      %v874 = vpop.f32.mrf.mxu0
      %v875 = vadd.f32 %v532, %v874
      %v876 = vpop.f32.mrf.mxu0
      %v877 = vpop.f32.mrf.mxu0
      %v878 = vadd.f32 %v533, %v877
      %v879 = vpop.f32.mrf.mxu0
      %880 = vdwg.mxu0
      %881 = vmatprep.subr.bf16.mxu0 0
      %882 = vmatpush1.bf16.msra.mxu0 %v765
      %883 = vmatprep.subr.bf16.mxu0 0
      %884 = vmatpush1.bf16.msra.mxu0 %v764
      %885 = vmatprep.subr.bf16.mxu0 0
      %886 = vmatpush1.bf16.msra.mxu0 %v763
      %887 = vmatprep.subr.bf16.mxu0 0
      %888 = vmatpush1.bf16.msra.mxu0 %v762
      %889 = vmatprep.subr.bf16.mxu0 0
      %890 = vmatpush1.bf16.msra.mxu0 %v761
      %891 = vmatprep.subr.bf16.mxu0 0
      %892 = vmatpush1.bf16.msra.mxu0 %v760
      %893 = vmatprep.subr.bf16.mxu0 0
      %894 = vmatpush1.bf16.msra.mxu0 %v759
      %895 = vmatprep.subr.bf16.mxu0 0
      %896 = vmatpush1.bf16.msra.mxu0 %v758
      %897 = vmatprep.subr.bf16.mxu0 0
      %898 = vmatpush2.bf16.msra.mxu0 %v773
      %899 = vmatprep.subr.bf16.mxu0 0
      %900 = vmatpush2.bf16.msra.mxu0 %v772
      %901 = vmatprep.subr.bf16.mxu0 0
      %902 = vmatpush2.bf16.msra.mxu0 %v771
      %903 = vmatprep.subr.bf16.mxu0 0
      %904 = vmatpush2.bf16.msra.mxu0 %v770
      %905 = vmatprep.subr.bf16.mxu0 0
      %906 = vmatpush2.bf16.msra.mxu0 %v769
      %907 = vmatprep.subr.bf16.mxu0 0
      %908 = vmatpush2.bf16.msra.mxu0 %v768
      %909 = vmatprep.subr.bf16.mxu0 0
      %910 = vmatpush2.bf16.msra.mxu0 %v767
      %911 = vmatprep.subr.bf16.mxu0 0
      %912 = vmatpush2.bf16.msra.mxu0 %v766
      %913 = vmatprep.mubr.bf16.mxu0 %v569
      %914 = vmatmul.mubr.bf16.gmra.mxu0 %v568
      %v915 = vpop.f32.mrf.mxu0
      %v916 = vadd.f32 %v867, %v915
      %v917 = vpop.f32.mrf.mxu0
      %v918 = vpop.f32.mrf.mxu0
      %v919 = vadd.f32 %v870, %v918
      %v920 = vpop.f32.mrf.mxu0
      %921 = vmatprep.mubr.bf16.mxu0 %v574
      %922 = vmatmul.mubr.bf16.gmra.mxu0 %v573
      %v923 = vpop.f32.mrf.mxu0
      %v924 = vadd.f32 %v875, %v923
      %v925 = vpop.f32.mrf.mxu0
      %v926 = vpop.f32.mrf.mxu0
      %v927 = vadd.f32 %v878, %v926
      %v928 = vpop.f32.mrf.mxu0
      %929 = vdwg.mxu0
      %930 = vmatprep.subr.bf16.mxu0 0
      %931 = vmatpush1.bf16.msra.mxu0 %v830
      %932 = vmatprep.subr.bf16.mxu0 0
      %933 = vmatpush1.bf16.msra.mxu0 %v780
      %934 = vmatprep.subr.bf16.mxu0 0
      %935 = vmatpush1.bf16.msra.mxu0 %v779
      %936 = vmatprep.subr.bf16.mxu0 0
      %937 = vmatpush1.bf16.msra.mxu0 %v778
      %938 = vmatprep.subr.bf16.mxu0 0
      %939 = vmatpush1.bf16.msra.mxu0 %v777
      %940 = vmatprep.subr.bf16.mxu0 0
      %941 = vmatpush1.bf16.msra.mxu0 %v776
      %942 = vmatprep.subr.bf16.mxu0 0
      %943 = vmatpush1.bf16.msra.mxu0 %v775
      %944 = vmatprep.subr.bf16.mxu0 0
      %945 = vmatpush1.bf16.msra.mxu0 %v774
      %946 = vmatprep.subr.bf16.mxu0 0
      %947 = vmatpush2.bf16.msra.mxu0 0
      %948 = vmatprep.subr.bf16.mxu0 0
      %949 = vmatpush2.bf16.msra.mxu0 0
      %950 = vmatprep.subr.bf16.mxu0 0
      %951 = vmatpush2.bf16.msra.mxu0 0
      %952 = vmatprep.subr.bf16.mxu0 0
      %953 = vmatpush2.bf16.msra.mxu0 0
      %954 = vmatprep.subr.bf16.mxu0 0
      %955 = vmatpush2.bf16.msra.mxu0 0
      %956 = vmatprep.subr.bf16.mxu0 0
      %957 = vmatpush2.bf16.msra.mxu0 0
      %958 = vmatprep.subr.bf16.mxu0 0
      %959 = vmatpush2.bf16.msra.mxu0 0
      %960 = vmatprep.subr.bf16.mxu0 0
      %961 = vmatpush2.bf16.msra.mxu0 0
      %962 = vmatprep.mubr.bf16.mxu0 0
      %963 = vmatmul.mubr.bf16.gmra.mxu0 %v823
      %v964 = vpop.f32.mrf.mxu0
      %v965 = vadd.f32 %v916, %v964
      %v966 = vpop.f32.mrf.mxu0
      %v967 = vpop.f32.mrf.mxu0
      %v968 = vadd.f32 %v919, %v967
      %v969 = vpop.f32.mrf.mxu0
      %970 = vmatprep.mubr.bf16.mxu0 0
      %971 = vmatmul.mubr.bf16.gmra.mxu0 %v826
      %v972 = vpop.f32.mrf.mxu0
      %v973 = vadd.f32 %v924, %v972
      %v974 = vpop.f32.mrf.mxu0
      %v975 = vpop.f32.mrf.mxu0
      %v976 = vadd.f32 %v927, %v975
      %v977 = vpop.f32.mrf.mxu0
      %978 = vdwg.mxu0
      %v979 = vld [vmem:[%s277] sm:$0x1]
      %v981 = vlaneseq
      %v982 = vshrl.u32 %v981, 7
      %v983 = vsub.s32 0, %v982
      %v984 = vrot.slane %v979, %v983
      %v986 = vadd.f32 %v965, %v984
      %v987 = vadd.f32 %v968, %v984
      %v988 = vadd.f32 %v973, %v984
      %v989 = vadd.f32 %v976, %v984
      %v990 = vadd.f32 %v519, %v986
      %v991 = vadd.f32 %v520, %v987
      %v992 = vadd.f32 %v521, %v988
      %v993 = vadd.f32 %v522, %v989
      %vm994 = vcmask 64512
      %995 = vst.msk [vmem:[%s5] sm:$0xff] %vm994, %v990
      %996 = vst.msk [vmem:[%s5 + $0x8] sm:$0xff] %vm994, %v991
      %997 = vst.msk [vmem:[%s5 + $0x10] sm:$0xff] %vm994, %v992
      %998 = vst.msk [vmem:[%s5 + $0x18] sm:$0xff] %vm994, %v993
      // Predicated region
      $region45: #{_lambda_.18} parent=39 // pred_check
        %p999 = pneg %p159
      $region46: #{_lambda_.18} parent=39 // pred_check_branch
        %1001 = sbr.rel (%p999) target = $region48
      $region47: #{_lambda_.18} parent=39 // pred_region
        _
      $region48: #{_lambda_.18} parent=39 // pred_fallthru
        _
      // Predicated region
      $region49: #{_lambda_.18} parent=39 // pred_check
        %p1002 = pneg %p159
      $region50: #{_lambda_.18} parent=39 // pred_check_branch
        %1004 = sbr.rel (%p1002) target = $region52
      $region51: #{_lambda_.18} parent=39 // pred_region
        _
      $region52: #{_lambda_.18} parent=39 // pred_fallthru
        _
    $region40: #{_lambda_.18} parent=5 // pred_fallthru
      _
    %p1005 = scmp.le.s32.totalorder 2, %s11
    // Predicated region
    $region53: #{_lambda_.18} parent=5 // pred_check
      %p1006 = pneg %p1005
    $region54: #{_lambda_.18} parent=5 // pred_check_branch
      %1008 = sbr.rel (%p1006) target = $region56
    $region55: #{_lambda_.18} parent=5 // pred_region
      %s1009 = ssub.s32 %s11, 2
    $region56: #{_lambda_.18} parent=5 // pred_fallthru
      _
  $region6: #{_lambda_.18} parent=0 // loop_footer
    %s15 = sadd.s32 1, %s11
  $region7: #{_lambda_.18} parent=0 // loop_footer_branch
    %10 = sbr.rel target = $region3
  $region8: #{_lambda_.18} parent=0 // loop_exit
    _

// kernel: _lambda_.19
$region0: #{_lambda_.19}
  #allocation0 [shape = 'u32[]', space=smem, size = 0x4, offset = 0x4, fixed_abs, tag = 'smem constant byte address 0x4 - core index']
  #allocation1 [shape = 'u32[144,128]{1,0:T(1,128)}', space=vmem, size = 0x12000, scoped, tag = 'internal scratch']
  %s0 = inlined_call_operand.vmem [shape: bf16[5,32,272], index: 0, kind: input, shape index: {}]
  %s1 = inlined_call_operand.vmem [shape: bf16[5,272,16], index: 1, kind: input, shape index: {}]
  %s2 = inlined_call_operand.vmem [shape: f32[5,1,16], index: 2, kind: input, shape index: {}]
  %s3 = inlined_call_operand.vmem [shape: bf16[5,32,16], index: 3, kind: output, shape index: {}]
  %s4 = sld [smem:[#allocation0]]
  $region45: #{_lambda_.19} parent=0
    _
  %s6 = ssub.s32 1, %s4
  %s7 = scalar_select 0, %s6, %s4
  loop: start=0, step=1, limit=7
  $region2: #{_lambda_.19} parent=0 // loop_pre_header
    _
  $region3: #{_lambda_.19} parent=0 // loop_header
    %s9 = sphi 0, %s13
    %p10 = scmp.ge.s32.totalorder %s9, 7
    %s19 = sphi 0, %s21
    %s22 = sphi 0, %s19
    %s23 = sphi 0, %s22
    %s39 = sphi 0, %s23
    %s45 = sphi 0, %s47
    %s48 = sphi 0, %s45
    %s49 = sphi 0, %s48
    %s65 = sphi 0, %s49
    %s71 = sphi 0, %s73
    %s74 = sphi 0, %s71
    %s75 = sphi 0, %s74
    %s91 = sphi 0, %s75
    %s97 = sphi 0, %s99
    %s100 = sphi 0, %s97
    %s101 = sphi 0, %s100
    %s117 = sphi 0, %s101
  $region4: #{_lambda_.19} parent=0 // loop_header_branch
    %12 = sbr.rel (%p10) target = $region8
  $region5: #{_lambda_.19} parent=0 // loop_body
    %s14 = ssub.s32 %s9, 1
    %s15 = ssub.s32 %s9, 2
    %s16 = sadd.s32 %s9, 1
    %s17 = ssub.s32 %s9, %s16
    %p18 = scmp.eq.s32.totalorder %s17, 0
    %s20 = sadd.s32 %s19, 1
    %s21 = scalar_select %p18, %s19, %s20
    %p24 = pneg %p18
    %p25 = scmp.eq.s32.totalorder %s9, 4
    %p26 = por %p24, %p25
    %p27 = scmp.ne.s32.totalorder %s19, %s22
    %p28 = scmp.eq.s32.totalorder %s9, 0
    %p29 = por %p27, %p28
    %p30 = scmp.ne.s32.totalorder %s19, %s22
    %p31 = scmp.eq.s32.totalorder %s14, 4
    %p32 = por %p30, %p31
    %p33 = scmp.ne.s32.totalorder %s22, %s23
    %p34 = scmp.eq.s32.totalorder %s14, 0
    %p35 = por %p33, %p34
    %p36 = scmp.ne.s32.totalorder %s22, %s23
    %p37 = scmp.eq.s32.totalorder %s15, 4
    %p38 = por %p36, %p37
    %p40 = scmp.ne.s32.totalorder %s23, %s39
    %p41 = scmp.eq.s32.totalorder %s15, 0
    %p42 = por %p40, %p41
    %s43 = ssub.s32 %s9, %s16
    %p44 = scmp.eq.s32.totalorder %s43, 0
    %s46 = sadd.s32 %s45, 1
    %s47 = scalar_select %p44, %s45, %s46
    %p50 = pneg %p44
    %p51 = scmp.eq.s32.totalorder %s9, 4
    %p52 = por %p50, %p51
    %p53 = scmp.ne.s32.totalorder %s45, %s48
    %p54 = scmp.eq.s32.totalorder %s9, 0
    %p55 = por %p53, %p54
    %p56 = scmp.ne.s32.totalorder %s45, %s48
    %p57 = scmp.eq.s32.totalorder %s14, 4
    %p58 = por %p56, %p57
    %p59 = scmp.ne.s32.totalorder %s48, %s49
    %p60 = scmp.eq.s32.totalorder %s14, 0
    %p61 = por %p59, %p60
    %p62 = scmp.ne.s32.totalorder %s48, %s49
    %p63 = scmp.eq.s32.totalorder %s15, 4
    %p64 = por %p62, %p63
    %p66 = scmp.ne.s32.totalorder %s49, %s65
    %p67 = scmp.eq.s32.totalorder %s15, 0
    %p68 = por %p66, %p67
    %s69 = ssub.s32 %s9, %s16
    %p70 = scmp.eq.s32.totalorder %s69, 0
    %s72 = sadd.s32 %s71, 1
    %s73 = scalar_select %p70, %s71, %s72
    %p76 = pneg %p70
    %p77 = scmp.eq.s32.totalorder %s9, 4
    %p78 = por %p76, %p77
    %p79 = scmp.ne.s32.totalorder %s71, %s74
    %p80 = scmp.eq.s32.totalorder %s9, 0
    %p81 = por %p79, %p80
    %p82 = scmp.ne.s32.totalorder %s71, %s74
    %p83 = scmp.eq.s32.totalorder %s14, 4
    %p84 = por %p82, %p83
    %p85 = scmp.ne.s32.totalorder %s74, %s75
    %p86 = scmp.eq.s32.totalorder %s14, 0
    %p87 = por %p85, %p86
    %p88 = scmp.ne.s32.totalorder %s74, %s75
    %p89 = scmp.eq.s32.totalorder %s15, 4
    %p90 = por %p88, %p89
    %p92 = scmp.ne.s32.totalorder %s75, %s91
    %p93 = scmp.eq.s32.totalorder %s15, 0
    %p94 = por %p92, %p93
    %s95 = ssub.s32 %s9, %s16
    %p96 = scmp.eq.s32.totalorder %s95, 0
    %s98 = sadd.s32 %s97, 1
    %s99 = scalar_select %p96, %s97, %s98
    %p102 = pneg %p96
    %p103 = scmp.eq.s32.totalorder %s9, 4
    %p104 = por %p102, %p103
    %p105 = scmp.ne.s32.totalorder %s97, %s100
    %p106 = scmp.eq.s32.totalorder %s9, 0
    %p107 = por %p105, %p106
    %p108 = scmp.ne.s32.totalorder %s97, %s100
    %p109 = scmp.eq.s32.totalorder %s14, 4
    %p110 = por %p108, %p109
    %p111 = scmp.ne.s32.totalorder %s100, %s101
    %p112 = scmp.eq.s32.totalorder %s14, 0
    %p113 = por %p111, %p112
    %p114 = scmp.ne.s32.totalorder %s100, %s101
    %p115 = scmp.eq.s32.totalorder %s15, 4
    %p116 = por %p114, %p115
    %p118 = scmp.ne.s32.totalorder %s101, %s117
    %p119 = scmp.eq.s32.totalorder %s15, 0
    %p120 = por %p118, %p119
    %p121 = scmp.le.s32.totalorder 1, %s9
    %p122 = scmp.lt.s32.totalorder %s9, 6
    %p123 = pnand %p121, %p122
    %p124 = pneg %p123
    // Predicated region
    $region9: #{_lambda_.19} parent=5 // pred_check
      _
    $region10: #{_lambda_.19} parent=5 // pred_check_branch
      %126 = sbr.rel (%p123) target = $region12
    $region11: #{_lambda_.19} parent=5 // pred_region
      %s127 = ssub.s32 %s9, 1
    $region12: #{_lambda_.19} parent=5 // pred_fallthru
      _
    %p128 = scmp.lt.s32.totalorder %s9, 5
    // Predicated region
    $region13: #{_lambda_.19} parent=5 // pred_check
      %p129 = pneg %p128
    $region14: #{_lambda_.19} parent=5 // pred_check_branch
      %131 = sbr.rel (%p129) target = $region16
    $region15: #{_lambda_.19} parent=5 // pred_region
      // Predicated region
      $region17: #{_lambda_.19} parent=15 // pred_check
        %p132 = pneg %p29
      $region18: #{_lambda_.19} parent=15 // pred_check_branch
        %134 = sbr.rel (%p132) target = $region20
      $region19: #{_lambda_.19} parent=15 // pred_region
        %p135 = scmp.lt.s32.totalorder %s9, 4
        %s136 = scalar_select %p135, %s9, 4
        %s137 = smul.addr %s136, 12
        %s138 = smul.addr %s137, 4
        %s139 = scalar_lea.vmem %s0, %s138
      $region20: #{_lambda_.19} parent=15 // pred_fallthru
        _
      // Predicated region
      $region21: #{_lambda_.19} parent=15 // pred_check
        %p140 = pneg %p55
      $region22: #{_lambda_.19} parent=15 // pred_check_branch
        %142 = sbr.rel (%p140) target = $region24
      $region23: #{_lambda_.19} parent=15 // pred_region
        %p143 = scmp.lt.s32.totalorder %s9, 4
        %s144 = scalar_select %p143, %s9, 4
        %s145 = smul.addr %s144, 34
        %s146 = smul.addr %s145, 4
        %s147 = scalar_lea.vmem %s1, %s146
      $region24: #{_lambda_.19} parent=15 // pred_fallthru
        _
      // Predicated region
      $region25: #{_lambda_.19} parent=15 // pred_check
        %p148 = pneg %p81
      $region26: #{_lambda_.19} parent=15 // pred_check_branch
        %150 = sbr.rel (%p148) target = $region28
      $region27: #{_lambda_.19} parent=15 // pred_region
        %p151 = scmp.lt.s32.totalorder %s9, 4
        %s152 = scalar_select %p151, %s9, 4
        %s153 = scalar_lea.vmem %s2, %s152
      $region28: #{_lambda_.19} parent=15 // pred_fallthru
        _
    $region16: #{_lambda_.19} parent=5 // pred_fallthru
      _
    %p154 = scmp.le.s32.totalorder 1, %s9
    %p155 = scmp.lt.s32.totalorder %s9, 6
    %p156 = pnand %p154, %p155
    %p157 = pneg %p156
    // Predicated region
    $region29: #{_lambda_.19} parent=5 // pred_check
      _
    $region30: #{_lambda_.19} parent=5 // pred_check_branch
      %159 = sbr.rel (%p156) target = $region32
    $region31: #{_lambda_.19} parent=5 // pred_region
      %s160 = ssub.s32 %s9, 1
      %p161 = scmp.lt.s32.totalorder %s14, 4
      %s162 = scalar_select %p161, %s14, 4
      %s163 = smul.addr %s162, 12
      %s164 = smul.addr %s163, 4
      %s165 = scalar_lea.vmem %s0, %s164
      %p166 = pneg %p35
      %p167 = pneg %p32
      %p168 = scmp.lt.s32.totalorder %s14, 4
      %s169 = scalar_select %p168, %s14, 4
      %s170 = smul.addr %s169, 34
      %s171 = smul.addr %s170, 4
      %s172 = scalar_lea.vmem %s1, %s171
      %p173 = pneg %p61
      %p174 = pneg %p58
      %p175 = scmp.lt.s32.totalorder %s14, 4
      %s176 = scalar_select %p175, %s14, 4
      %s177 = scalar_lea.vmem %s2, %s176
      %p178 = pneg %p87
      %p179 = pneg %p84
      %p180 = pneg %p113
      %p181 = pneg %p110
      %p182 = scmp.lt.s32.totalorder %s14, 4
      %s183 = scalar_select %p182, %s14, 4
      %s184 = smul.addr %s183, 4
      %s185 = smul.addr %s184, 4
      %s186 = scalar_lea.vmem %s3, %s185
      %p187 = scmp.lt.s32.totalorder %s14, 4
      %s188 = scalar_select %p187, %s14, 4
      %s189 = smul.addr %s188, 12
      %s190 = smul.addr %s189, 4
      %s191 = scalar_lea.vmem %s0, %s190
      %p192 = scmp.lt.s32.totalorder %s14, 4
      %s193 = scalar_select %p192, %s14, 4
      %s194 = smul.addr %s193, 34
      %s195 = smul.addr %s194, 4
      %s196 = scalar_lea.vmem %s1, %s195
      %p197 = scmp.lt.s32.totalorder %s14, 4
      %s198 = scalar_select %p197, %s14, 4
      %s199 = scalar_lea.vmem %s2, %s198
      %p200 = scmp.lt.s32.totalorder %s14, 4
      %s201 = scalar_select %p200, %s14, 4
      %s202 = smul.addr %s201, 4
      %s203 = smul.addr %s202, 4
      %s204 = scalar_lea.vmem %s3, %s203
      %v206 = vld [vmem:[%s191] sm:$0xff]
      %v207 = vld [vmem:[%s191 + $0x8] sm:$0xf]
      %v208 = vld [vmem:[%s191 + $0xc] sm:$0xff]
      %v209 = vld [vmem:[%s191 + $0x14] sm:$0xf]
      %v210 = vld [vmem:[%s191 + $0x18] sm:$0xff]
      %v211 = vld [vmem:[%s191 + $0x20] sm:$0xf]
      %v212 = vld [vmem:[%s191 + $0x24] sm:$0xff]
      %v213 = vld [vmem:[%s191 + $0x2c] sm:$0xf]
      %v214 = vld [vmem:[%s196] sm:$0xf]
      %v215 = vld [vmem:[%s196 + $0x4] sm:$0xf]
      %v216 = vld [vmem:[%s196 + $0x8] sm:$0xf]
      %v217 = vld [vmem:[%s196 + $0xc] sm:$0xf]
      %v218 = vld [vmem:[%s196 + $0x10] sm:$0xf]
      %v219 = vld [vmem:[%s196 + $0x14] sm:$0xf]
      %v220 = vld [vmem:[%s196 + $0x18] sm:$0xf]
      %v221 = vld [vmem:[%s196 + $0x1c] sm:$0xf]
      %v222 = vld [vmem:[%s196 + $0x20] sm:$0xf]
      %v223 = vld [vmem:[%s196 + $0x24] sm:$0xf]
      %v224 = vld [vmem:[%s196 + $0x28] sm:$0xf]
      %v225 = vld [vmem:[%s196 + $0x2c] sm:$0xf]
      %v226 = vld [vmem:[%s196 + $0x30] sm:$0xf]
      %v227 = vld [vmem:[%s196 + $0x34] sm:$0xf]
      %v228 = vld [vmem:[%s196 + $0x38] sm:$0xf]
      %v229 = vld [vmem:[%s196 + $0x3c] sm:$0xf]
      %v230 = vld [vmem:[%s196 + $0x40] sm:$0xf]
      %v231 = vld [vmem:[%s196 + $0x44] sm:$0xf]
      %v232 = vld [vmem:[%s196 + $0x48] sm:$0xf]
      %v233 = vld [vmem:[%s196 + $0x4c] sm:$0xf]
      %v234 = vld [vmem:[%s196 + $0x50] sm:$0xf]
      %v235 = vld [vmem:[%s196 + $0x54] sm:$0xf]
      %v236 = vld [vmem:[%s196 + $0x58] sm:$0xf]
      %v237 = vld [vmem:[%s196 + $0x5c] sm:$0xf]
      %v238 = vld [vmem:[%s196 + $0x60] sm:$0xf]
      %v239 = vld [vmem:[%s196 + $0x64] sm:$0xf]
      %v240 = vld [vmem:[%s196 + $0x68] sm:$0xf]
      %v241 = vld [vmem:[%s196 + $0x6c] sm:$0xf]
      %v242 = vld [vmem:[%s196 + $0x70] sm:$0xf]
      %v243 = vld [vmem:[%s196 + $0x74] sm:$0xf]
      %v244 = vld [vmem:[%s196 + $0x78] sm:$0xf]
      %v245 = vld [vmem:[%s196 + $0x7c] sm:$0xf]
      %v246 = vld [vmem:[%s196 + $0x80] sm:$0xf]
      %v247 = vld [vmem:[%s196 + $0x84] sm:$0xf]
      %v248 = vld [vmem:[%s199] sm:$0x1]
      %v250 = vlaneseq
      %v251 = vshrl.u32 %v250, 7
      %v252 = vsub.s32 0, %v251
      %v253 = vrot.slane %v248, %v252
      %v263 = vunpack.c.l.b16 %v206
      %v264 = vunpack.c.h.b16 %v206
      %v265 = vunpack.c.l.b16 %v207
      %v266 = vunpack.c.l.b16 %v208
      %v267 = vunpack.c.h.b16 %v208
      %v268 = vunpack.c.l.b16 %v209
      %v269 = vunpack.c.l.b16 %v210
      %v270 = vunpack.c.h.b16 %v210
      %v271 = vunpack.c.l.b16 %v211
      %v272 = vunpack.c.l.b16 %v212
      %v273 = vunpack.c.h.b16 %v212
      %v274 = vunpack.c.l.b16 %v213
      %v275 = vpack.c.b16 %v266, %v263
      %v276 = vpack.c.b16 %v267, %v264
      %v277 = vpack.c.b16 %v268, %v265
      %v278 = vpack.c.b16 %v272, %v269
      %v279 = vpack.c.b16 %v273, %v270
      %v280 = vpack.c.b16 %v274, %v271
      %v319 = vunpack.c.l.b16 %v214
      %v320 = vunpack.c.l.b16 %v215
      %v321 = vunpack.c.l.b16 %v216
      %v322 = vunpack.c.l.b16 %v217
      %v323 = vunpack.c.l.b16 %v218
      %v324 = vunpack.c.l.b16 %v219
      %v325 = vunpack.c.l.b16 %v220
      %v326 = vunpack.c.l.b16 %v221
      %v327 = vunpack.c.l.b16 %v222
      %v328 = vunpack.c.l.b16 %v223
      %v329 = vunpack.c.l.b16 %v224
      %v330 = vunpack.c.l.b16 %v225
      %v331 = vunpack.c.l.b16 %v226
      %v332 = vunpack.c.l.b16 %v227
      %v333 = vunpack.c.l.b16 %v228
      %v334 = vunpack.c.l.b16 %v229
      %v335 = vunpack.c.l.b16 %v230
      %v336 = vunpack.c.l.b16 %v231
      %v337 = vunpack.c.l.b16 %v232
      %v338 = vunpack.c.l.b16 %v233
      %v339 = vunpack.c.l.b16 %v234
      %v340 = vunpack.c.l.b16 %v235
      %v341 = vunpack.c.l.b16 %v236
      %v342 = vunpack.c.l.b16 %v237
      %v343 = vunpack.c.l.b16 %v238
      %v344 = vunpack.c.l.b16 %v239
      %v345 = vunpack.c.l.b16 %v240
      %v346 = vunpack.c.l.b16 %v241
      %v347 = vunpack.c.l.b16 %v242
      %v348 = vunpack.c.l.b16 %v243
      %v349 = vunpack.c.l.b16 %v244
      %v350 = vunpack.c.l.b16 %v245
      %v351 = vunpack.c.l.b16 %v246
      %v352 = vunpack.c.l.b16 %v247
      %v353 = vpack.c.b16 %v320, %v319
      %v354 = vpack.c.b16 %v322, %v321
      %v355 = vpack.c.b16 %v324, %v323
      %v356 = vpack.c.b16 %v326, %v325
      %v357 = vpack.c.b16 %v328, %v327
      %v358 = vpack.c.b16 %v330, %v329
      %v359 = vpack.c.b16 %v332, %v331
      %v360 = vpack.c.b16 %v334, %v333
      %v361 = vpack.c.b16 %v336, %v335
      %v362 = vpack.c.b16 %v338, %v337
      %v363 = vpack.c.b16 %v340, %v339
      %v364 = vpack.c.b16 %v342, %v341
      %v365 = vpack.c.b16 %v344, %v343
      %v366 = vpack.c.b16 %v346, %v345
      %v367 = vpack.c.b16 %v348, %v347
      %v368 = vpack.c.b16 %v350, %v349
      %v369 = vpack.c.b16 %v352, %v351
      %vm387 = vcmask 130048
      %v389 = vsel %vm387, %v277, 0
      %v392 = vsel %vm387, %v280, 0
      %394 = vmatprep.subr.bf16.mxu0 0
      %395 = vmatpush1.bf16.msra.mxu0 %v360
      %396 = vmatprep.subr.bf16.mxu0 0
      %397 = vmatpush1.bf16.msra.mxu0 %v359
      %398 = vmatprep.subr.bf16.mxu0 0
      %399 = vmatpush1.bf16.msra.mxu0 %v358
      %400 = vmatprep.subr.bf16.mxu0 0
      %401 = vmatpush1.bf16.msra.mxu0 %v357
      %402 = vmatprep.subr.bf16.mxu0 0
      %403 = vmatpush1.bf16.msra.mxu0 %v356
      %404 = vmatprep.subr.bf16.mxu0 0
      %405 = vmatpush1.bf16.msra.mxu0 %v355
      %406 = vmatprep.subr.bf16.mxu0 0
      %407 = vmatpush1.bf16.msra.mxu0 %v354
      %408 = vmatprep.subr.bf16.mxu0 0
      %409 = vmatpush1.bf16.msra.mxu0 %v353
      %410 = vmatprep.subr.bf16.mxu0 0
      %411 = vmatpush2.bf16.msra.mxu0 %v368
      %412 = vmatprep.subr.bf16.mxu0 0
      %413 = vmatpush2.bf16.msra.mxu0 %v367
      %414 = vmatprep.subr.bf16.mxu0 0
      %415 = vmatpush2.bf16.msra.mxu0 %v366
      %416 = vmatprep.subr.bf16.mxu0 0
      %417 = vmatpush2.bf16.msra.mxu0 %v365
      %418 = vmatprep.subr.bf16.mxu0 0
      %419 = vmatpush2.bf16.msra.mxu0 %v364
      %420 = vmatprep.subr.bf16.mxu0 0
      %421 = vmatpush2.bf16.msra.mxu0 %v363
      %422 = vmatprep.subr.bf16.mxu0 0
      %423 = vmatpush2.bf16.msra.mxu0 %v362
      %424 = vmatprep.subr.bf16.mxu0 0
      %425 = vmatpush2.bf16.msra.mxu0 %v361
      %426 = vmatprep.mubr.bf16.mxu0 %v276
      %427 = vmatmul.mubr.bf16.gmra.mxu0 %v275
      %v428 = vpop.f32.mrf.mxu0
      %v429 = vadd.f32 %v253, %v428
      %v430 = vpop.f32.mrf.mxu0
      %v431 = vpop.f32.mrf.mxu0
      %v432 = vadd.f32 %v253, %v431
      %v433 = vpop.f32.mrf.mxu0
      %434 = vmatprep.mubr.bf16.mxu0 %v279
      %435 = vmatmul.mubr.bf16.gmra.mxu0 %v278
      %v436 = vpop.f32.mrf.mxu0
      %v437 = vadd.f32 %v253, %v436
      %v438 = vpop.f32.mrf.mxu0
      %v439 = vpop.f32.mrf.mxu0
      %v440 = vadd.f32 %v253, %v439
      %v441 = vpop.f32.mrf.mxu0
      %442 = vdwg.mxu0
      %443 = vmatprep.subr.bf16.mxu0 0
      %444 = vmatpush1.bf16.msra.mxu0 0
      %445 = vmatprep.subr.bf16.mxu0 0
      %446 = vmatpush1.bf16.msra.mxu0 0
      %447 = vmatprep.subr.bf16.mxu0 0
      %448 = vmatpush1.bf16.msra.mxu0 0
      %449 = vmatprep.subr.bf16.mxu0 0
      %450 = vmatpush1.bf16.msra.mxu0 0
      %451 = vmatprep.subr.bf16.mxu0 0
      %452 = vmatpush1.bf16.msra.mxu0 0
      %453 = vmatprep.subr.bf16.mxu0 0
      %454 = vmatpush1.bf16.msra.mxu0 0
      %455 = vmatprep.subr.bf16.mxu0 0
      %456 = vmatpush1.bf16.msra.mxu0 0
      %457 = vmatprep.subr.bf16.mxu0 0
      %458 = vmatpush1.bf16.msra.mxu0 %v369
      %459 = vmatprep.subr.bf16.mxu0 0
      %460 = vmatpush2.bf16.msra.mxu0 0
      %461 = vmatprep.subr.bf16.mxu0 0
      %462 = vmatpush2.bf16.msra.mxu0 0
      %463 = vmatprep.subr.bf16.mxu0 0
      %464 = vmatpush2.bf16.msra.mxu0 0
      %465 = vmatprep.subr.bf16.mxu0 0
      %466 = vmatpush2.bf16.msra.mxu0 0
      %467 = vmatprep.subr.bf16.mxu0 0
      %468 = vmatpush2.bf16.msra.mxu0 0
      %469 = vmatprep.subr.bf16.mxu0 0
      %470 = vmatpush2.bf16.msra.mxu0 0
      %471 = vmatprep.subr.bf16.mxu0 0
      %472 = vmatpush2.bf16.msra.mxu0 0
      %473 = vmatprep.subr.bf16.mxu0 0
      %474 = vmatpush2.bf16.msra.mxu0 0
      %475 = vmatprep.mubr.bf16.mxu0 0
      %476 = vmatmul.mubr.bf16.gmra.mxu0 %v389
      %v477 = vpop.f32.mrf.mxu0
      %v478 = vadd.f32 %v429, %v477
      %v479 = vpop.f32.mrf.mxu0
      %v480 = vpop.f32.mrf.mxu0
      %v481 = vadd.f32 %v432, %v480
      %v482 = vpop.f32.mrf.mxu0
      %483 = vmatprep.mubr.bf16.mxu0 0
      %484 = vmatmul.mubr.bf16.gmra.mxu0 %v392
      %v485 = vpop.f32.mrf.mxu0
      %v486 = vadd.f32 %v437, %v485
      %v487 = vpop.f32.mrf.mxu0
      %v488 = vpop.f32.mrf.mxu0
      %v489 = vadd.f32 %v440, %v488
      %v490 = vpop.f32.mrf.mxu0
      %491 = vdwg.mxu0
      %v492 = vmax.f32 %v478, 0.0
      %v493 = vmax.f32 %v481, 0.0
      %v494 = vmax.f32 %v486, 0.0
      %v495 = vmax.f32 %v489, 0.0
      %v496 = vpack.c.bf16 %v493, %v492
      %v497 = vpack.c.bf16 %v495, %v494
      %v500 = vunpack.c.l.b16 %v496
      %v501 = vunpack.c.h.b16 %v496
      %v502 = vunpack.c.l.b16 %v497
      %v503 = vunpack.c.h.b16 %v497
      %v504 = vpack.c.b16 %v500, %v500
      %v505 = vpack.c.b16 %v501, %v501
      %v506 = vpack.c.b16 %v502, %v502
      %v507 = vpack.c.b16 %v503, %v503
      %vm512 = vcmask 125952
      %513 = vst.msk [vmem:[%s204] sm:$0xf] %vm512, %v504
      %514 = vst.msk [vmem:[%s204 + $0x4] sm:$0xf] %vm512, %v505
      %515 = vst.msk [vmem:[%s204 + $0x8] sm:$0xf] %vm512, %v506
      %516 = vst.msk [vmem:[%s204 + $0xc] sm:$0xf] %vm512, %v507
      %p517 = scmp.lt.s32.totalorder %s14, 4
      %s518 = scalar_select %p517, %s14, 4
      %s519 = smul.addr %s518, 4
      %s520 = smul.addr %s519, 4
      %s521 = scalar_lea.vmem %s3, %s520
      // Predicated region
      $region33: #{_lambda_.19} parent=31 // pred_check
        %p522 = pneg %p110
      $region34: #{_lambda_.19} parent=31 // pred_check_branch
        %524 = sbr.rel (%p522) target = $region36
      $region35: #{_lambda_.19} parent=31 // pred_region
        _
      $region36: #{_lambda_.19} parent=31 // pred_fallthru
        _
    $region32: #{_lambda_.19} parent=5 // pred_fallthru
      _
    %p525 = scmp.le.s32.totalorder 2, %s9
    // Predicated region
    $region37: #{_lambda_.19} parent=5 // pred_check
      %p526 = pneg %p525
    $region38: #{_lambda_.19} parent=5 // pred_check_branch
      %528 = sbr.rel (%p526) target = $region40
    $region39: #{_lambda_.19} parent=5 // pred_region
      %s529 = ssub.s32 %s9, 2
      // Predicated region
      $region41: #{_lambda_.19} parent=39 // pred_check
        %p530 = pneg %p116
      $region42: #{_lambda_.19} parent=39 // pred_check_branch
        %532 = sbr.rel (%p530) target = $region44
      $region43: #{_lambda_.19} parent=39 // pred_region
        %p533 = scmp.lt.s32.totalorder %s15, 4
        %s534 = scalar_select %p533, %s15, 4
        %s535 = smul.addr %s534, 4
        %s536 = smul.addr %s535, 4
        %s537 = scalar_lea.vmem %s3, %s536
      $region44: #{_lambda_.19} parent=39 // pred_fallthru
        _
    $region40: #{_lambda_.19} parent=5 // pred_fallthru
      _
  $region6: #{_lambda_.19} parent=0 // loop_footer
    %s13 = sadd.s32 1, %s9
  $region7: #{_lambda_.19} parent=0 // loop_footer_branch
    %8 = sbr.rel target = $region3
  $region8: #{_lambda_.19} parent=0 // loop_exit
    _

// kernel: _lambda_.20
$region0: #{_lambda_.20}
  #allocation0 [shape = 'u32[]', space=smem, size = 0x4, offset = 0x4, fixed_abs, tag = 'smem constant byte address 0x4 - core index']
  #allocation1 [shape = 'u32[144,128]{1,0:T(1,128)}', space=vmem, size = 0x12000, scoped, tag = 'internal scratch']
  %s0 = inlined_call_operand.vmem [shape: bf16[5,32,632], index: 0, kind: input, shape index: {}]
  %s1 = inlined_call_operand.vmem [shape: bf16[5,32,72], index: 1, kind: input, shape index: {}]
  %s2 = inlined_call_operand.vmem [shape: bf16[5,632,8], index: 2, kind: input, shape index: {}]
  %s3 = inlined_call_operand.vmem [shape: f32[5,1,8], index: 3, kind: input, shape index: {}]
  %s4 = inlined_call_operand.vmem [shape: f32[5,1,8], index: 4, kind: input, shape index: {}]
  %s5 = inlined_call_operand.vmem [shape: f32[32,8], index: 5, kind: output, shape index: {}]
  %s6 = sld [smem:[#allocation0]]
  $region57: #{_lambda_.20} parent=0
    _
  %s8 = ssub.s32 1, %s6
  %s9 = scalar_select 0, %s8, %s6
  loop: start=0, step=1, limit=7
  $region2: #{_lambda_.20} parent=0 // loop_pre_header
    _
  $region3: #{_lambda_.20} parent=0 // loop_header
    %s11 = sphi 0, %s15
    %p12 = scmp.ge.s32.totalorder %s11, 7
    %s21 = sphi 0, %s23
    %s24 = sphi 0, %s21
    %s25 = sphi 0, %s24
    %s41 = sphi 0, %s25
    %s47 = sphi 0, %s49
    %s50 = sphi 0, %s47
    %s51 = sphi 0, %s50
    %s67 = sphi 0, %s51
    %s73 = sphi 0, %s75
    %s76 = sphi 0, %s73
    %s77 = sphi 0, %s76
    %s93 = sphi 0, %s77
    %s99 = sphi 0, %s101
    %s102 = sphi 0, %s99
    %s103 = sphi 0, %s102
    %s119 = sphi 0, %s103
    %s125 = sphi 0, %s127
    %s128 = sphi 0, %s125
    %s129 = sphi 0, %s128
    %s145 = sphi 0, %s129
    %s149 = sphi 0, %s149
    %s151 = sphi 0, %s149
    %s152 = sphi 0, %s151
    %s166 = sphi 0, %s152
  $region4: #{_lambda_.20} parent=0 // loop_header_branch
    %14 = sbr.rel (%p12) target = $region8
  $region5: #{_lambda_.20} parent=0 // loop_body
    %s16 = ssub.s32 %s11, 1
    %s17 = ssub.s32 %s11, 2
    %s18 = sadd.s32 %s11, 1
    %s19 = ssub.s32 %s11, %s18
    %p20 = scmp.eq.s32.totalorder %s19, 0
    %s22 = sadd.s32 %s21, 1
    %s23 = scalar_select %p20, %s21, %s22
    %p26 = pneg %p20
    %p27 = scmp.eq.s32.totalorder %s11, 4
    %p28 = por %p26, %p27
    %p29 = scmp.ne.s32.totalorder %s21, %s24
    %p30 = scmp.eq.s32.totalorder %s11, 0
    %p31 = por %p29, %p30
    %p32 = scmp.ne.s32.totalorder %s21, %s24
    %p33 = scmp.eq.s32.totalorder %s16, 4
    %p34 = por %p32, %p33
    %p35 = scmp.ne.s32.totalorder %s24, %s25
    %p36 = scmp.eq.s32.totalorder %s16, 0
    %p37 = por %p35, %p36
    %p38 = scmp.ne.s32.totalorder %s24, %s25
    %p39 = scmp.eq.s32.totalorder %s17, 4
    %p40 = por %p38, %p39
    %p42 = scmp.ne.s32.totalorder %s25, %s41
    %p43 = scmp.eq.s32.totalorder %s17, 0
    %p44 = por %p42, %p43
    %s45 = ssub.s32 %s11, %s18
    %p46 = scmp.eq.s32.totalorder %s45, 0
    %s48 = sadd.s32 %s47, 1
    %s49 = scalar_select %p46, %s47, %s48
    %p52 = pneg %p46
    %p53 = scmp.eq.s32.totalorder %s11, 4
    %p54 = por %p52, %p53
    %p55 = scmp.ne.s32.totalorder %s47, %s50
    %p56 = scmp.eq.s32.totalorder %s11, 0
    %p57 = por %p55, %p56
    %p58 = scmp.ne.s32.totalorder %s47, %s50
    %p59 = scmp.eq.s32.totalorder %s16, 4
    %p60 = por %p58, %p59
    %p61 = scmp.ne.s32.totalorder %s50, %s51
    %p62 = scmp.eq.s32.totalorder %s16, 0
    %p63 = por %p61, %p62
    %p64 = scmp.ne.s32.totalorder %s50, %s51
    %p65 = scmp.eq.s32.totalorder %s17, 4
    %p66 = por %p64, %p65
    %p68 = scmp.ne.s32.totalorder %s51, %s67
    %p69 = scmp.eq.s32.totalorder %s17, 0
    %p70 = por %p68, %p69
    %s71 = ssub.s32 %s11, %s18
    %p72 = scmp.eq.s32.totalorder %s71, 0
    %s74 = sadd.s32 %s73, 1
    %s75 = scalar_select %p72, %s73, %s74
    %p78 = pneg %p72
    %p79 = scmp.eq.s32.totalorder %s11, 4
    %p80 = por %p78, %p79
    %p81 = scmp.ne.s32.totalorder %s73, %s76
    %p82 = scmp.eq.s32.totalorder %s11, 0
    %p83 = por %p81, %p82
    %p84 = scmp.ne.s32.totalorder %s73, %s76
    %p85 = scmp.eq.s32.totalorder %s16, 4
    %p86 = por %p84, %p85
    %p87 = scmp.ne.s32.totalorder %s76, %s77
    %p88 = scmp.eq.s32.totalorder %s16, 0
    %p89 = por %p87, %p88
    %p90 = scmp.ne.s32.totalorder %s76, %s77
    %p91 = scmp.eq.s32.totalorder %s17, 4
    %p92 = por %p90, %p91
    %p94 = scmp.ne.s32.totalorder %s77, %s93
    %p95 = scmp.eq.s32.totalorder %s17, 0
    %p96 = por %p94, %p95
    %s97 = ssub.s32 %s11, %s18
    %p98 = scmp.eq.s32.totalorder %s97, 0
    %s100 = sadd.s32 %s99, 1
    %s101 = scalar_select %p98, %s99, %s100
    %p104 = pneg %p98
    %p105 = scmp.eq.s32.totalorder %s11, 4
    %p106 = por %p104, %p105
    %p107 = scmp.ne.s32.totalorder %s99, %s102
    %p108 = scmp.eq.s32.totalorder %s11, 0
    %p109 = por %p107, %p108
    %p110 = scmp.ne.s32.totalorder %s99, %s102
    %p111 = scmp.eq.s32.totalorder %s16, 4
    %p112 = por %p110, %p111
    %p113 = scmp.ne.s32.totalorder %s102, %s103
    %p114 = scmp.eq.s32.totalorder %s16, 0
    %p115 = por %p113, %p114
    %p116 = scmp.ne.s32.totalorder %s102, %s103
    %p117 = scmp.eq.s32.totalorder %s17, 4
    %p118 = por %p116, %p117
    %p120 = scmp.ne.s32.totalorder %s103, %s119
    %p121 = scmp.eq.s32.totalorder %s17, 0
    %p122 = por %p120, %p121
    %s123 = ssub.s32 %s11, %s18
    %p124 = scmp.eq.s32.totalorder %s123, 0
    %s126 = sadd.s32 %s125, 1
    %s127 = scalar_select %p124, %s125, %s126
    %p130 = pneg %p124
    %p131 = scmp.eq.s32.totalorder %s11, 4
    %p132 = por %p130, %p131
    %p133 = scmp.ne.s32.totalorder %s125, %s128
    %p134 = scmp.eq.s32.totalorder %s11, 0
    %p135 = por %p133, %p134
    %p136 = scmp.ne.s32.totalorder %s125, %s128
    %p137 = scmp.eq.s32.totalorder %s16, 4
    %p138 = por %p136, %p137
    %p139 = scmp.ne.s32.totalorder %s128, %s129
    %p140 = scmp.eq.s32.totalorder %s16, 0
    %p141 = por %p139, %p140
    %p142 = scmp.ne.s32.totalorder %s128, %s129
    %p143 = scmp.eq.s32.totalorder %s17, 4
    %p144 = por %p142, %p143
    %p146 = scmp.ne.s32.totalorder %s129, %s145
    %p147 = scmp.eq.s32.totalorder %s17, 0
    %p148 = por %p146, %p147
    %s150 = sadd.s32 %s149, 1
    %p153 = scmp.eq.s32.totalorder %s11, 4
    %p154 = scmp.ne.s32.totalorder %s149, %s151
    %p155 = scmp.eq.s32.totalorder %s11, 0
    %p156 = por %p154, %p155
    %p157 = scmp.ne.s32.totalorder %s149, %s151
    %p158 = scmp.eq.s32.totalorder %s16, 4
    %p159 = por %p157, %p158
    %p160 = scmp.ne.s32.totalorder %s151, %s152
    %p161 = scmp.eq.s32.totalorder %s16, 0
    %p162 = por %p160, %p161
    %p163 = scmp.ne.s32.totalorder %s151, %s152
    %p164 = scmp.eq.s32.totalorder %s17, 4
    %p165 = por %p163, %p164
    %p167 = scmp.ne.s32.totalorder %s152, %s166
    %p168 = scmp.eq.s32.totalorder %s17, 0
    %p169 = por %p167, %p168
    %p170 = scmp.le.s32.totalorder 1, %s11
    %p171 = scmp.lt.s32.totalorder %s11, 6
    %p172 = pnand %p170, %p171
    %p173 = pneg %p172
    // Predicated region
    $region9: #{_lambda_.20} parent=5 // pred_check
      _
    $region10: #{_lambda_.20} parent=5 // pred_check_branch
      %175 = sbr.rel (%p172) target = $region12
    $region11: #{_lambda_.20} parent=5 // pred_region
      %s176 = ssub.s32 %s11, 1
    $region12: #{_lambda_.20} parent=5 // pred_fallthru
      _
    %p177 = scmp.lt.s32.totalorder %s11, 5
    // Predicated region
    $region13: #{_lambda_.20} parent=5 // pred_check
      %p178 = pneg %p177
    $region14: #{_lambda_.20} parent=5 // pred_check_branch
      %180 = sbr.rel (%p178) target = $region16
    $region15: #{_lambda_.20} parent=5 // pred_region
      // Predicated region
      $region17: #{_lambda_.20} parent=15 // pred_check
        %p181 = pneg %p31
      $region18: #{_lambda_.20} parent=15 // pred_check_branch
        %183 = sbr.rel (%p181) target = $region20
      $region19: #{_lambda_.20} parent=15 // pred_region
        %p184 = scmp.lt.s32.totalorder %s11, 4
        %s185 = scalar_select %p184, %s11, 4
        %s186 = smul.addr %s185, 20
        %s187 = smul.addr %s186, 4
        %s188 = scalar_lea.vmem %s0, %s187
      $region20: #{_lambda_.20} parent=15 // pred_fallthru
        _
      // Predicated region
      $region21: #{_lambda_.20} parent=15 // pred_check
        %p189 = pneg %p57
      $region22: #{_lambda_.20} parent=15 // pred_check_branch
        %191 = sbr.rel (%p189) target = $region24
      $region23: #{_lambda_.20} parent=15 // pred_region
        %p192 = scmp.lt.s32.totalorder %s11, 4
        %s193 = scalar_select %p192, %s11, 4
        %s194 = smul.addr %s193, 4
        %s195 = smul.addr %s194, 4
        %s196 = scalar_lea.vmem %s1, %s195
      $region24: #{_lambda_.20} parent=15 // pred_fallthru
        _
      // Predicated region
      $region25: #{_lambda_.20} parent=15 // pred_check
        %p197 = pneg %p83
      $region26: #{_lambda_.20} parent=15 // pred_check_branch
        %199 = sbr.rel (%p197) target = $region28
      $region27: #{_lambda_.20} parent=15 // pred_region
        %p200 = scmp.lt.s32.totalorder %s11, 4
        %s201 = scalar_select %p200, %s11, 4
        %s202 = smul.addr %s201, 79
        %s203 = smul.addr %s202, 4
        %s204 = scalar_lea.vmem %s2, %s203
      $region28: #{_lambda_.20} parent=15 // pred_fallthru
        _
      // Predicated region
      $region29: #{_lambda_.20} parent=15 // pred_check
        %p205 = pneg %p109
      $region30: #{_lambda_.20} parent=15 // pred_check_branch
        %207 = sbr.rel (%p205) target = $region32
      $region31: #{_lambda_.20} parent=15 // pred_region
        %p208 = scmp.lt.s32.totalorder %s11, 4
        %s209 = scalar_select %p208, %s11, 4
        %s210 = scalar_lea.vmem %s3, %s209
      $region32: #{_lambda_.20} parent=15 // pred_fallthru
        _
      // Predicated region
      $region33: #{_lambda_.20} parent=15 // pred_check
        %p211 = pneg %p135
      $region34: #{_lambda_.20} parent=15 // pred_check_branch
        %213 = sbr.rel (%p211) target = $region36
      $region35: #{_lambda_.20} parent=15 // pred_region
        %p214 = scmp.lt.s32.totalorder %s11, 4
        %s215 = scalar_select %p214, %s11, 4
        %s216 = scalar_lea.vmem %s4, %s215
      $region36: #{_lambda_.20} parent=15 // pred_fallthru
        _
    $region16: #{_lambda_.20} parent=5 // pred_fallthru
      _
    %p217 = scmp.le.s32.totalorder 1, %s11
    %p218 = scmp.lt.s32.totalorder %s11, 6
    %p219 = pnand %p217, %p218
    %p220 = pneg %p219
    // Predicated region
    $region37: #{_lambda_.20} parent=5 // pred_check
      _
    $region38: #{_lambda_.20} parent=5 // pred_check_branch
      %222 = sbr.rel (%p219) target = $region40
    $region39: #{_lambda_.20} parent=5 // pred_region
      %s223 = ssub.s32 %s11, 1
      %p224 = scmp.lt.s32.totalorder %s16, 4
      %s225 = scalar_select %p224, %s16, 4
      %s226 = smul.addr %s225, 20
      %s227 = smul.addr %s226, 4
      %s228 = scalar_lea.vmem %s0, %s227
      %p229 = pneg %p37
      %p230 = pneg %p34
      %p231 = scmp.lt.s32.totalorder %s16, 4
      %s232 = scalar_select %p231, %s16, 4
      %s233 = smul.addr %s232, 4
      %s234 = smul.addr %s233, 4
      %s235 = scalar_lea.vmem %s1, %s234
      %p236 = pneg %p63
      %p237 = pneg %p60
      %p238 = scmp.lt.s32.totalorder %s16, 4
      %s239 = scalar_select %p238, %s16, 4
      %s240 = smul.addr %s239, 79
      %s241 = smul.addr %s240, 4
      %s242 = scalar_lea.vmem %s2, %s241
      %p243 = pneg %p89
      %p244 = pneg %p86
      %p245 = scmp.lt.s32.totalorder %s16, 4
      %s246 = scalar_select %p245, %s16, 4
      %s247 = scalar_lea.vmem %s3, %s246
      %p248 = pneg %p115
      %p249 = pneg %p112
      %p250 = scmp.lt.s32.totalorder %s16, 4
      %s251 = scalar_select %p250, %s16, 4
      %s252 = scalar_lea.vmem %s4, %s251
      %p253 = pneg %p141
      %p254 = pneg %p138
      %p255 = pneg %p162
      %p256 = pneg %p159
      %p257 = scmp.lt.s32.totalorder %s16, 4
      %s258 = scalar_select %p257, %s16, 4
      %s259 = smul.addr %s258, 20
      %s260 = smul.addr %s259, 4
      %s261 = scalar_lea.vmem %s0, %s260
      %p262 = scmp.lt.s32.totalorder %s16, 4
      %s263 = scalar_select %p262, %s16, 4
      %s264 = smul.addr %s263, 4
      %s265 = smul.addr %s264, 4
      %s266 = scalar_lea.vmem %s1, %s265
      %p267 = scmp.lt.s32.totalorder %s16, 4
      %s268 = scalar_select %p267, %s16, 4
      %s269 = smul.addr %s268, 79
      %s270 = smul.addr %s269, 4
      %s271 = scalar_lea.vmem %s2, %s270
      %p272 = scmp.lt.s32.totalorder %s16, 4
      %s273 = scalar_select %p272, %s16, 4
      %s274 = scalar_lea.vmem %s3, %s273
      %p275 = scmp.lt.s32.totalorder %s16, 4
      %s276 = scalar_select %p275, %s16, 4
      %s277 = scalar_lea.vmem %s4, %s276
      %p279 = scmp.eq.s32.totalorder %s16, 0
      // Predicated region
      $region41: #{_lambda_.20} parent=39 // pred_check
        %p280 = pneg %p279
      $region42: #{_lambda_.20} parent=39 // pred_check_branch
        %282 = sbr.rel (%p280) target = $region44
      $region43: #{_lambda_.20} parent=39 // pred_region
        %vm283 = vcmask 64512
        %284 = vst.msk [vmem:[%s5] sm:$0xff] %vm283, 0.0
        %285 = vst.msk [vmem:[%s5 + $0x8] sm:$0xff] %vm283, 0.0
        %286 = vst.msk [vmem:[%s5 + $0x10] sm:$0xff] %vm283, 0.0
        %287 = vst.msk [vmem:[%s5 + $0x18] sm:$0xff] %vm283, 0.0
      $region44: #{_lambda_.20} parent=39 // pred_fallthru
        _
      %v288 = vld [vmem:[%s261] sm:$0xff]
      %v289 = vld [vmem:[%s261 + $0x8] sm:$0xff]
      %v290 = vld [vmem:[%s261 + $0x10] sm:$0xf]
      %v291 = vld [vmem:[%s261 + $0x14] sm:$0xff]
      %v292 = vld [vmem:[%s261 + $0x1c] sm:$0xff]
      %v293 = vld [vmem:[%s261 + $0x24] sm:$0xf]
      %v294 = vld [vmem:[%s261 + $0x28] sm:$0xff]
      %v295 = vld [vmem:[%s261 + $0x30] sm:$0xff]
      %v296 = vld [vmem:[%s261 + $0x38] sm:$0xf]
      %v297 = vld [vmem:[%s261 + $0x3c] sm:$0xff]
      %v298 = vld [vmem:[%s261 + $0x44] sm:$0xff]
      %v299 = vld [vmem:[%s261 + $0x4c] sm:$0xf]
      %v300 = vld [vmem:[%s271] sm:$0xf]
      %v301 = vld [vmem:[%s271 + $0x4] sm:$0xf]
      %v302 = vld [vmem:[%s271 + $0x8] sm:$0xf]
      %v303 = vld [vmem:[%s271 + $0xc] sm:$0xf]
      %v304 = vld [vmem:[%s271 + $0x10] sm:$0xf]
      %v305 = vld [vmem:[%s271 + $0x14] sm:$0xf]
      %v306 = vld [vmem:[%s271 + $0x18] sm:$0xf]
      %v307 = vld [vmem:[%s271 + $0x1c] sm:$0xf]
      %v308 = vld [vmem:[%s271 + $0x20] sm:$0xf]
      %v309 = vld [vmem:[%s271 + $0x24] sm:$0xf]
      %v310 = vld [vmem:[%s271 + $0x28] sm:$0xf]
      %v311 = vld [vmem:[%s271 + $0x2c] sm:$0xf]
      %v312 = vld [vmem:[%s271 + $0x30] sm:$0xf]
      %v313 = vld [vmem:[%s271 + $0x34] sm:$0xf]
      %v314 = vld [vmem:[%s271 + $0x38] sm:$0xf]
      %v315 = vld [vmem:[%s271 + $0x3c] sm:$0xf]
      %v316 = vld [vmem:[%s271 + $0x40] sm:$0xf]
      %v317 = vld [vmem:[%s271 + $0x44] sm:$0xf]
      %v318 = vld [vmem:[%s271 + $0x48] sm:$0xf]
      %v319 = vld [vmem:[%s271 + $0x4c] sm:$0xf]
      %v320 = vld [vmem:[%s271 + $0x50] sm:$0xf]
      %v321 = vld [vmem:[%s271 + $0x54] sm:$0xf]
      %v322 = vld [vmem:[%s271 + $0x58] sm:$0xf]
      %v323 = vld [vmem:[%s271 + $0x5c] sm:$0xf]
      %v324 = vld [vmem:[%s271 + $0x60] sm:$0xf]
      %v325 = vld [vmem:[%s271 + $0x64] sm:$0xf]
      %v326 = vld [vmem:[%s271 + $0x68] sm:$0xf]
      %v327 = vld [vmem:[%s271 + $0x6c] sm:$0xf]
      %v328 = vld [vmem:[%s271 + $0x70] sm:$0xf]
      %v329 = vld [vmem:[%s271 + $0x74] sm:$0xf]
      %v330 = vld [vmem:[%s271 + $0x78] sm:$0xf]
      %v331 = vld [vmem:[%s271 + $0x7c] sm:$0xf]
      %v332 = vld [vmem:[%s271 + $0x80] sm:$0xf]
      %v333 = vld [vmem:[%s271 + $0x84] sm:$0xf]
      %v334 = vld [vmem:[%s271 + $0x88] sm:$0xf]
      %v335 = vld [vmem:[%s271 + $0x8c] sm:$0xf]
      %v336 = vld [vmem:[%s271 + $0x90] sm:$0xf]
      %v337 = vld [vmem:[%s271 + $0x94] sm:$0xf]
      %v338 = vld [vmem:[%s271 + $0x98] sm:$0xf]
      %v339 = vld [vmem:[%s271 + $0x9c] sm:$0xf]
      %v340 = vld [vmem:[%s271 + $0xa0] sm:$0xf]
      %v341 = vld [vmem:[%s271 + $0xa4] sm:$0xf]
      %v342 = vld [vmem:[%s271 + $0xa8] sm:$0xf]
      %v343 = vld [vmem:[%s271 + $0xac] sm:$0xf]
      %v344 = vld [vmem:[%s271 + $0xb0] sm:$0xf]
      %v345 = vld [vmem:[%s271 + $0xb4] sm:$0xf]
      %v346 = vld [vmem:[%s271 + $0xb8] sm:$0xf]
      %v347 = vld [vmem:[%s271 + $0xbc] sm:$0xf]
      %v348 = vld [vmem:[%s271 + $0xc0] sm:$0xf]
      %v349 = vld [vmem:[%s271 + $0xc4] sm:$0xf]
      %v350 = vld [vmem:[%s271 + $0xc8] sm:$0xf]
      %v351 = vld [vmem:[%s271 + $0xcc] sm:$0xf]
      %v352 = vld [vmem:[%s271 + $0xd0] sm:$0xf]
      %v353 = vld [vmem:[%s271 + $0xd4] sm:$0xf]
      %v354 = vld [vmem:[%s271 + $0xd8] sm:$0xf]
      %v355 = vld [vmem:[%s271 + $0xdc] sm:$0xf]
      %v356 = vld [vmem:[%s271 + $0xe0] sm:$0xf]
      %v357 = vld [vmem:[%s271 + $0xe4] sm:$0xf]
      %v358 = vld [vmem:[%s271 + $0xe8] sm:$0xf]
      %v359 = vld [vmem:[%s271 + $0xec] sm:$0xf]
      %v360 = vld [vmem:[%s271 + $0xf0] sm:$0xf]
      %v361 = vld [vmem:[%s271 + $0xf4] sm:$0xf]
      %v362 = vld [vmem:[%s271 + $0xf8] sm:$0xf]
      %v363 = vld [vmem:[%s271 + $0xfc] sm:$0xf]
      %v364 = vld [vmem:[%s271 + $0x100] sm:$0xf]
      %v365 = vld [vmem:[%s271 + $0x104] sm:$0xf]
      %v366 = vld [vmem:[%s271 + $0x108] sm:$0xf]
      %v367 = vld [vmem:[%s271 + $0x10c] sm:$0xf]
      %v368 = vld [vmem:[%s271 + $0x110] sm:$0xf]
      %v369 = vld [vmem:[%s271 + $0x114] sm:$0xf]
      %v370 = vld [vmem:[%s271 + $0x118] sm:$0xf]
      %v371 = vld [vmem:[%s271 + $0x11c] sm:$0xf]
      %v372 = vld [vmem:[%s271 + $0x120] sm:$0xf]
      %v373 = vld [vmem:[%s271 + $0x124] sm:$0xf]
      %v374 = vld [vmem:[%s271 + $0x128] sm:$0xf]
      %v375 = vld [vmem:[%s271 + $0x12c] sm:$0xf]
      %v376 = vld [vmem:[%s271 + $0x130] sm:$0xf]
      %v377 = vld [vmem:[%s271 + $0x134] sm:$0xf]
      %v378 = vld [vmem:[%s271 + $0x138] sm:$0xf]
      %v379 = vld [vmem:[%s266] sm:$0xf]
      %v380 = vld [vmem:[%s266 + $0x4] sm:$0xf]
      %v381 = vld [vmem:[%s266 + $0x8] sm:$0xf]
      %v382 = vld [vmem:[%s266 + $0xc] sm:$0xf]
      %v383 = vunpack.c.l.bf16 %v379
      %v384 = vunpack.c.l.bf16 %v380
      %v385 = vunpack.c.l.bf16 %v381
      %v386 = vunpack.c.l.bf16 %v382
      %391 = vrot.lane.b32.xlu0 %v383, 120
      %v392 = vpop.permute.xlu0 %391
      %393 = vrot.lane.b32.xlu0 %v384, 120
      %v394 = vpop.permute.xlu0 %393
      %395 = vrot.lane.b32.xlu0 %v385, 120
      %v396 = vpop.permute.xlu0 %395
      %397 = vrot.lane.b32.xlu0 %v386, 120
      %v398 = vpop.permute.xlu0 %397
      %v403 = vmax.f32 %v383, %v392
      %v404 = vmax.f32 %v384, %v394
      %v405 = vmax.f32 %v385, %v396
      %v406 = vmax.f32 %v386, %v398
      %407 = vrot.lane.b32.xlu0 %v383, 112
      %v408 = vpop.permute.xlu0 %407
      %409 = vrot.lane.b32.xlu0 %v384, 112
      %v410 = vpop.permute.xlu0 %409
      %411 = vrot.lane.b32.xlu0 %v385, 112
      %v412 = vpop.permute.xlu0 %411
      %413 = vrot.lane.b32.xlu0 %v386, 112
      %v414 = vpop.permute.xlu0 %413
      %v419 = vmax.f32 %v403, %v408
      %v420 = vmax.f32 %v404, %v410
      %v421 = vmax.f32 %v405, %v412
      %v422 = vmax.f32 %v406, %v414
      %423 = vrot.lane.b32.xlu0 %v383, 104
      %v424 = vpop.permute.xlu0 %423
      %425 = vrot.lane.b32.xlu0 %v384, 104
      %v426 = vpop.permute.xlu0 %425
      %427 = vrot.lane.b32.xlu0 %v385, 104
      %v428 = vpop.permute.xlu0 %427
      %429 = vrot.lane.b32.xlu0 %v386, 104
      %v430 = vpop.permute.xlu0 %429
      %v435 = vmax.f32 %v419, %v424
      %v436 = vmax.f32 %v420, %v426
      %v437 = vmax.f32 %v421, %v428
      %v438 = vmax.f32 %v422, %v430
      %439 = vrot.lane.b32.xlu0 %v383, 96
      %v440 = vpop.permute.xlu0 %439
      %441 = vrot.lane.b32.xlu0 %v384, 96
      %v442 = vpop.permute.xlu0 %441
      %443 = vrot.lane.b32.xlu0 %v385, 96
      %v444 = vpop.permute.xlu0 %443
      %445 = vrot.lane.b32.xlu0 %v386, 96
      %v446 = vpop.permute.xlu0 %445
      %v451 = vmax.f32 %v435, %v440
      %v452 = vmax.f32 %v436, %v442
      %v453 = vmax.f32 %v437, %v444
      %v454 = vmax.f32 %v438, %v446
      %455 = vrot.lane.b32.xlu0 %v383, 88
      %v456 = vpop.permute.xlu0 %455
      %457 = vrot.lane.b32.xlu0 %v384, 88
      %v458 = vpop.permute.xlu0 %457
      %459 = vrot.lane.b32.xlu0 %v385, 88
      %v460 = vpop.permute.xlu0 %459
      %461 = vrot.lane.b32.xlu0 %v386, 88
      %v462 = vpop.permute.xlu0 %461
      %v467 = vmax.f32 %v451, %v456
      %v468 = vmax.f32 %v452, %v458
      %v469 = vmax.f32 %v453, %v460
      %v470 = vmax.f32 %v454, %v462
      %471 = vrot.lane.b32.xlu0 %v383, 80
      %v472 = vpop.permute.xlu0 %471
      %473 = vrot.lane.b32.xlu0 %v384, 80
      %v474 = vpop.permute.xlu0 %473
      %475 = vrot.lane.b32.xlu0 %v385, 80
      %v476 = vpop.permute.xlu0 %475
      %477 = vrot.lane.b32.xlu0 %v386, 80
      %v478 = vpop.permute.xlu0 %477
      %v483 = vmax.f32 %v467, %v472
      %v484 = vmax.f32 %v468, %v474
      %v485 = vmax.f32 %v469, %v476
      %v486 = vmax.f32 %v470, %v478
      %487 = vrot.lane.b32.xlu0 %v383, 72
      %v488 = vpop.permute.xlu0 %487
      %489 = vrot.lane.b32.xlu0 %v384, 72
      %v490 = vpop.permute.xlu0 %489
      %491 = vrot.lane.b32.xlu0 %v385, 72
      %v492 = vpop.permute.xlu0 %491
      %493 = vrot.lane.b32.xlu0 %v386, 72
      %v494 = vpop.permute.xlu0 %493
      %v499 = vmax.f32 %v483, %v488
      %v500 = vmax.f32 %v484, %v490
      %v501 = vmax.f32 %v485, %v492
      %v502 = vmax.f32 %v486, %v494
      %503 = vrot.lane.b32.xlu0 %v383, 64
      %v504 = vpop.permute.xlu0 %503
      %505 = vrot.lane.b32.xlu0 %v384, 64
      %v506 = vpop.permute.xlu0 %505
      %507 = vrot.lane.b32.xlu0 %v385, 64
      %v508 = vpop.permute.xlu0 %507
      %509 = vrot.lane.b32.xlu0 %v386, 64
      %v510 = vpop.permute.xlu0 %509
      %v515 = vmax.f32 %v499, %v504
      %v516 = vmax.f32 %v500, %v506
      %v517 = vmax.f32 %v501, %v508
      %v518 = vmax.f32 %v502, %v510
      %v519 = vld [vmem:[%s5] sm:$0xff]
      %v520 = vld [vmem:[%s5 + $0x8] sm:$0xff]
      %v521 = vld [vmem:[%s5 + $0x10] sm:$0xff]
      %v522 = vld [vmem:[%s5 + $0x18] sm:$0xff]
      %v523 = vld [vmem:[%s274] sm:$0x1]
      %v525 = vlaneseq
      %v526 = vshrl.u32 %v525, 7
      %v527 = vsub.s32 0, %v526
      %v528 = vrot.slane %v523, %v527
      %v530 = vmul.f32 %v515, %v528
      %v531 = vmul.f32 %v516, %v528
      %v532 = vmul.f32 %v517, %v528
      %v533 = vmul.f32 %v518, %v528
      %v546 = vunpack.c.l.b16 %v288
      %v547 = vunpack.c.h.b16 %v288
      %v548 = vunpack.c.l.b16 %v289
      %v549 = vunpack.c.h.b16 %v289
      %v550 = vunpack.c.l.b16 %v290
      %v551 = vunpack.c.l.b16 %v291
      %v552 = vunpack.c.h.b16 %v291
      %v553 = vunpack.c.l.b16 %v292
      %v554 = vunpack.c.h.b16 %v292
      %v555 = vunpack.c.l.b16 %v293
      %v556 = vunpack.c.l.b16 %v294
      %v557 = vunpack.c.h.b16 %v294
      %v558 = vunpack.c.l.b16 %v295
      %v559 = vunpack.c.h.b16 %v295
      %v560 = vunpack.c.l.b16 %v296
      %v561 = vunpack.c.l.b16 %v297
      %v562 = vunpack.c.h.b16 %v297
      %v563 = vunpack.c.l.b16 %v298
      %v564 = vunpack.c.h.b16 %v298
      %v565 = vunpack.c.l.b16 %v299
      %v566 = vpack.c.b16 %v551, %v546
      %v567 = vpack.c.b16 %v552, %v547
      %v568 = vpack.c.b16 %v553, %v548
      %v569 = vpack.c.b16 %v554, %v549
      %v570 = vpack.c.b16 %v555, %v550
      %v571 = vpack.c.b16 %v561, %v556
      %v572 = vpack.c.b16 %v562, %v557
      %v573 = vpack.c.b16 %v563, %v558
      %v574 = vpack.c.b16 %v564, %v559
      %v575 = vpack.c.b16 %v565, %v560
      %v663 = vunpack.c.l.b16 %v300
      %v664 = vunpack.c.l.b16 %v301
      %v665 = vunpack.c.l.b16 %v302
      %v666 = vunpack.c.l.b16 %v303
      %v667 = vunpack.c.l.b16 %v304
      %v668 = vunpack.c.l.b16 %v305
      %v669 = vunpack.c.l.b16 %v306
      %v670 = vunpack.c.l.b16 %v307
      %v671 = vunpack.c.l.b16 %v308
      %v672 = vunpack.c.l.b16 %v309
      %v673 = vunpack.c.l.b16 %v310
      %v674 = vunpack.c.l.b16 %v311
      %v675 = vunpack.c.l.b16 %v312
      %v676 = vunpack.c.l.b16 %v313
      %v677 = vunpack.c.l.b16 %v314
      %v678 = vunpack.c.l.b16 %v315
      %v679 = vunpack.c.l.b16 %v316
      %v680 = vunpack.c.l.b16 %v317
      %v681 = vunpack.c.l.b16 %v318
      %v682 = vunpack.c.l.b16 %v319
      %v683 = vunpack.c.l.b16 %v320
      %v684 = vunpack.c.l.b16 %v321
      %v685 = vunpack.c.l.b16 %v322
      %v686 = vunpack.c.l.b16 %v323
      %v687 = vunpack.c.l.b16 %v324
      %v688 = vunpack.c.l.b16 %v325
      %v689 = vunpack.c.l.b16 %v326
      %v690 = vunpack.c.l.b16 %v327
      %v691 = vunpack.c.l.b16 %v328
      %v692 = vunpack.c.l.b16 %v329
      %v693 = vunpack.c.l.b16 %v330
      %v694 = vunpack.c.l.b16 %v331
      %v695 = vunpack.c.l.b16 %v332
      %v696 = vunpack.c.l.b16 %v333
      %v697 = vunpack.c.l.b16 %v334
      %v698 = vunpack.c.l.b16 %v335
      %v699 = vunpack.c.l.b16 %v336
      %v700 = vunpack.c.l.b16 %v337
      %v701 = vunpack.c.l.b16 %v338
      %v702 = vunpack.c.l.b16 %v339
      %v703 = vunpack.c.l.b16 %v340
      %v704 = vunpack.c.l.b16 %v341
      %v705 = vunpack.c.l.b16 %v342
      %v706 = vunpack.c.l.b16 %v343
      %v707 = vunpack.c.l.b16 %v344
      %v708 = vunpack.c.l.b16 %v345
      %v709 = vunpack.c.l.b16 %v346
      %v710 = vunpack.c.l.b16 %v347
      %v711 = vunpack.c.l.b16 %v348
      %v712 = vunpack.c.l.b16 %v349
      %v713 = vunpack.c.l.b16 %v350
      %v714 = vunpack.c.l.b16 %v351
      %v715 = vunpack.c.l.b16 %v352
      %v716 = vunpack.c.l.b16 %v353
      %v717 = vunpack.c.l.b16 %v354
      %v718 = vunpack.c.l.b16 %v355
      %v719 = vunpack.c.l.b16 %v356
      %v720 = vunpack.c.l.b16 %v357
      %v721 = vunpack.c.l.b16 %v358
      %v722 = vunpack.c.l.b16 %v359
      %v723 = vunpack.c.l.b16 %v360
      %v724 = vunpack.c.l.b16 %v361
      %v725 = vunpack.c.l.b16 %v362
      %v726 = vunpack.c.l.b16 %v363
      %v727 = vunpack.c.l.b16 %v364
      %v728 = vunpack.c.l.b16 %v365
      %v729 = vunpack.c.l.b16 %v366
      %v730 = vunpack.c.l.b16 %v367
      %v731 = vunpack.c.l.b16 %v368
      %v732 = vunpack.c.l.b16 %v369
      %v733 = vunpack.c.l.b16 %v370
      %v734 = vunpack.c.l.b16 %v371
      %v735 = vunpack.c.l.b16 %v372
      %v736 = vunpack.c.l.b16 %v373
      %v737 = vunpack.c.l.b16 %v374
      %v738 = vunpack.c.l.b16 %v375
      %v739 = vunpack.c.l.b16 %v376
      %v740 = vunpack.c.l.b16 %v377
      %v741 = vunpack.c.l.b16 %v378
      %v742 = vpack.c.b16 %v664, %v663
      %v743 = vpack.c.b16 %v666, %v665
      %v744 = vpack.c.b16 %v668, %v667
      %v745 = vpack.c.b16 %v670, %v669
      %v746 = vpack.c.b16 %v672, %v671
      %v747 = vpack.c.b16 %v674, %v673
      %v748 = vpack.c.b16 %v676, %v675
      %v749 = vpack.c.b16 %v678, %v677
      %v750 = vpack.c.b16 %v680, %v679
      %v751 = vpack.c.b16 %v682, %v681
      %v752 = vpack.c.b16 %v684, %v683
      %v753 = vpack.c.b16 %v686, %v685
      %v754 = vpack.c.b16 %v688, %v687
      %v755 = vpack.c.b16 %v690, %v689
      %v756 = vpack.c.b16 %v692, %v691
      %v757 = vpack.c.b16 %v694, %v693
      %v758 = vpack.c.b16 %v696, %v695
      %v759 = vpack.c.b16 %v698, %v697
      %v760 = vpack.c.b16 %v700, %v699
      %v761 = vpack.c.b16 %v702, %v701
      %v762 = vpack.c.b16 %v704, %v703
      %v763 = vpack.c.b16 %v706, %v705
      %v764 = vpack.c.b16 %v708, %v707
      %v765 = vpack.c.b16 %v710, %v709
      %v766 = vpack.c.b16 %v712, %v711
      %v767 = vpack.c.b16 %v714, %v713
      %v768 = vpack.c.b16 %v716, %v715
      %v769 = vpack.c.b16 %v718, %v717
      %v770 = vpack.c.b16 %v720, %v719
      %v771 = vpack.c.b16 %v722, %v721
      %v772 = vpack.c.b16 %v724, %v723
      %v773 = vpack.c.b16 %v726, %v725
      %v774 = vpack.c.b16 %v728, %v727
      %v775 = vpack.c.b16 %v730, %v729
      %v776 = vpack.c.b16 %v732, %v731
      %v777 = vpack.c.b16 %v734, %v733
      %v778 = vpack.c.b16 %v736, %v735
      %v779 = vpack.c.b16 %v738, %v737
      %v780 = vpack.c.b16 %v740, %v739
      %v781 = vpack.c.b16 %v741, %v741
      %vm821 = vcmask 982016
      %v823 = vsel %vm821, %v570, 0
      %v826 = vsel %vm821, %v575, 0
      %vm828 = vcmask 1043456
      %v830 = vsel %vm828, %v781, 0
      %832 = vmatprep.subr.bf16.mxu0 0
      %833 = vmatpush1.bf16.msra.mxu0 %v749
      %834 = vmatprep.subr.bf16.mxu0 0
      %835 = vmatpush1.bf16.msra.mxu0 %v748
      %836 = vmatprep.subr.bf16.mxu0 0
      %837 = vmatpush1.bf16.msra.mxu0 %v747
      %838 = vmatprep.subr.bf16.mxu0 0
      %839 = vmatpush1.bf16.msra.mxu0 %v746
      %840 = vmatprep.subr.bf16.mxu0 0
      %841 = vmatpush1.bf16.msra.mxu0 %v745
      %842 = vmatprep.subr.bf16.mxu0 0
      %843 = vmatpush1.bf16.msra.mxu0 %v744
      %844 = vmatprep.subr.bf16.mxu0 0
      %845 = vmatpush1.bf16.msra.mxu0 %v743
      %846 = vmatprep.subr.bf16.mxu0 0
      %847 = vmatpush1.bf16.msra.mxu0 %v742
      %848 = vmatprep.subr.bf16.mxu0 0
      %849 = vmatpush2.bf16.msra.mxu0 %v757
      %850 = vmatprep.subr.bf16.mxu0 0
      %851 = vmatpush2.bf16.msra.mxu0 %v756
      %852 = vmatprep.subr.bf16.mxu0 0
      %853 = vmatpush2.bf16.msra.mxu0 %v755
      %854 = vmatprep.subr.bf16.mxu0 0
      %855 = vmatpush2.bf16.msra.mxu0 %v754
      %856 = vmatprep.subr.bf16.mxu0 0
      %857 = vmatpush2.bf16.msra.mxu0 %v753
      %858 = vmatprep.subr.bf16.mxu0 0
      %859 = vmatpush2.bf16.msra.mxu0 %v752
      %860 = vmatprep.subr.bf16.mxu0 0
      %861 = vmatpush2.bf16.msra.mxu0 %v751
      %862 = vmatprep.subr.bf16.mxu0 0
      %863 = vmatpush2.bf16.msra.mxu0 %v750
      %864 = vmatprep.mubr.bf16.mxu0 %v567
      %865 = vmatmul.mubr.bf16.gmra.mxu0 %v566
      %v866 = vpop.f32.mrf.mxu0
      %v867 = vadd.f32 %v530, %v866
      %v868 = vpop.f32.mrf.mxu0
      %v869 = vpop.f32.mrf.mxu0
      %v870 = vadd.f32 %v531, %v869
      %v871 = vpop.f32.mrf.mxu0
      %872 = vmatprep.mubr.bf16.mxu0 %v572
      %873 = vmatmul.mubr.bf16.gmra.mxu0 %v571
      %v874 = vpop.f32.mrf.mxu0
      %v875 = vadd.f32 %v532, %v874
      %v876 = vpop.f32.mrf.mxu0
      %v877 = vpop.f32.mrf.mxu0
      %v878 = vadd.f32 %v533, %v877
      %v879 = vpop.f32.mrf.mxu0
      %880 = vdwg.mxu0
      %881 = vmatprep.subr.bf16.mxu0 0
      %882 = vmatpush1.bf16.msra.mxu0 %v765
      %883 = vmatprep.subr.bf16.mxu0 0
      %884 = vmatpush1.bf16.msra.mxu0 %v764
      %885 = vmatprep.subr.bf16.mxu0 0
      %886 = vmatpush1.bf16.msra.mxu0 %v763
      %887 = vmatprep.subr.bf16.mxu0 0
      %888 = vmatpush1.bf16.msra.mxu0 %v762
      %889 = vmatprep.subr.bf16.mxu0 0
      %890 = vmatpush1.bf16.msra.mxu0 %v761
      %891 = vmatprep.subr.bf16.mxu0 0
      %892 = vmatpush1.bf16.msra.mxu0 %v760
      %893 = vmatprep.subr.bf16.mxu0 0
      %894 = vmatpush1.bf16.msra.mxu0 %v759
      %895 = vmatprep.subr.bf16.mxu0 0
      %896 = vmatpush1.bf16.msra.mxu0 %v758
      %897 = vmatprep.subr.bf16.mxu0 0
      %898 = vmatpush2.bf16.msra.mxu0 %v773
      %899 = vmatprep.subr.bf16.mxu0 0
      %900 = vmatpush2.bf16.msra.mxu0 %v772
      %901 = vmatprep.subr.bf16.mxu0 0
      %902 = vmatpush2.bf16.msra.mxu0 %v771
      %903 = vmatprep.subr.bf16.mxu0 0
      %904 = vmatpush2.bf16.msra.mxu0 %v770
      %905 = vmatprep.subr.bf16.mxu0 0
      %906 = vmatpush2.bf16.msra.mxu0 %v769
      %907 = vmatprep.subr.bf16.mxu0 0
      %908 = vmatpush2.bf16.msra.mxu0 %v768
      %909 = vmatprep.subr.bf16.mxu0 0
      %910 = vmatpush2.bf16.msra.mxu0 %v767
      %911 = vmatprep.subr.bf16.mxu0 0
      %912 = vmatpush2.bf16.msra.mxu0 %v766
      %913 = vmatprep.mubr.bf16.mxu0 %v569
      %914 = vmatmul.mubr.bf16.gmra.mxu0 %v568
      %v915 = vpop.f32.mrf.mxu0
      %v916 = vadd.f32 %v867, %v915
      %v917 = vpop.f32.mrf.mxu0
      %v918 = vpop.f32.mrf.mxu0
      %v919 = vadd.f32 %v870, %v918
      %v920 = vpop.f32.mrf.mxu0
      %921 = vmatprep.mubr.bf16.mxu0 %v574
      %922 = vmatmul.mubr.bf16.gmra.mxu0 %v573
      %v923 = vpop.f32.mrf.mxu0
      %v924 = vadd.f32 %v875, %v923
      %v925 = vpop.f32.mrf.mxu0
      %v926 = vpop.f32.mrf.mxu0
      %v927 = vadd.f32 %v878, %v926
      %v928 = vpop.f32.mrf.mxu0
      %929 = vdwg.mxu0
      %930 = vmatprep.subr.bf16.mxu0 0
      %931 = vmatpush1.bf16.msra.mxu0 %v830
      %932 = vmatprep.subr.bf16.mxu0 0
      %933 = vmatpush1.bf16.msra.mxu0 %v780
      %934 = vmatprep.subr.bf16.mxu0 0
      %935 = vmatpush1.bf16.msra.mxu0 %v779
      %936 = vmatprep.subr.bf16.mxu0 0
      %937 = vmatpush1.bf16.msra.mxu0 %v778
      %938 = vmatprep.subr.bf16.mxu0 0
      %939 = vmatpush1.bf16.msra.mxu0 %v777
      %940 = vmatprep.subr.bf16.mxu0 0
      %941 = vmatpush1.bf16.msra.mxu0 %v776
      %942 = vmatprep.subr.bf16.mxu0 0
      %943 = vmatpush1.bf16.msra.mxu0 %v775
      %944 = vmatprep.subr.bf16.mxu0 0
      %945 = vmatpush1.bf16.msra.mxu0 %v774
      %946 = vmatprep.subr.bf16.mxu0 0
      %947 = vmatpush2.bf16.msra.mxu0 0
      %948 = vmatprep.subr.bf16.mxu0 0
      %949 = vmatpush2.bf16.msra.mxu0 0
      %950 = vmatprep.subr.bf16.mxu0 0
      %951 = vmatpush2.bf16.msra.mxu0 0
      %952 = vmatprep.subr.bf16.mxu0 0
      %953 = vmatpush2.bf16.msra.mxu0 0
      %954 = vmatprep.subr.bf16.mxu0 0
      %955 = vmatpush2.bf16.msra.mxu0 0
      %956 = vmatprep.subr.bf16.mxu0 0
      %957 = vmatpush2.bf16.msra.mxu0 0
      %958 = vmatprep.subr.bf16.mxu0 0
      %959 = vmatpush2.bf16.msra.mxu0 0
      %960 = vmatprep.subr.bf16.mxu0 0
      %961 = vmatpush2.bf16.msra.mxu0 0
      %962 = vmatprep.mubr.bf16.mxu0 0
      %963 = vmatmul.mubr.bf16.gmra.mxu0 %v823
      %v964 = vpop.f32.mrf.mxu0
      %v965 = vadd.f32 %v916, %v964
      %v966 = vpop.f32.mrf.mxu0
      %v967 = vpop.f32.mrf.mxu0
      %v968 = vadd.f32 %v919, %v967
      %v969 = vpop.f32.mrf.mxu0
      %970 = vmatprep.mubr.bf16.mxu0 0
      %971 = vmatmul.mubr.bf16.gmra.mxu0 %v826
      %v972 = vpop.f32.mrf.mxu0
      %v973 = vadd.f32 %v924, %v972
      %v974 = vpop.f32.mrf.mxu0
      %v975 = vpop.f32.mrf.mxu0
      %v976 = vadd.f32 %v927, %v975
      %v977 = vpop.f32.mrf.mxu0
      %978 = vdwg.mxu0
      %v979 = vld [vmem:[%s277] sm:$0x1]
      %v981 = vlaneseq
      %v982 = vshrl.u32 %v981, 7
      %v983 = vsub.s32 0, %v982
      %v984 = vrot.slane %v979, %v983
      %v986 = vadd.f32 %v965, %v984
      %v987 = vadd.f32 %v968, %v984
      %v988 = vadd.f32 %v973, %v984
      %v989 = vadd.f32 %v976, %v984
      %v990 = vadd.f32 %v519, %v986
      %v991 = vadd.f32 %v520, %v987
      %v992 = vadd.f32 %v521, %v988
      %v993 = vadd.f32 %v522, %v989
      %vm994 = vcmask 64512
      %995 = vst.msk [vmem:[%s5] sm:$0xff] %vm994, %v990
      %996 = vst.msk [vmem:[%s5 + $0x8] sm:$0xff] %vm994, %v991
      %997 = vst.msk [vmem:[%s5 + $0x10] sm:$0xff] %vm994, %v992
      %998 = vst.msk [vmem:[%s5 + $0x18] sm:$0xff] %vm994, %v993
      // Predicated region
      $region45: #{_lambda_.20} parent=39 // pred_check
        %p999 = pneg %p159
      $region46: #{_lambda_.20} parent=39 // pred_check_branch
        %1001 = sbr.rel (%p999) target = $region48
      $region47: #{_lambda_.20} parent=39 // pred_region
        _
      $region48: #{_lambda_.20} parent=39 // pred_fallthru
        _
      // Predicated region
      $region49: #{_lambda_.20} parent=39 // pred_check
        %p1002 = pneg %p159
      $region50: #{_lambda_.20} parent=39 // pred_check_branch
        %1004 = sbr.rel (%p1002) target = $region52
      $region51: #{_lambda_.20} parent=39 // pred_region
        _
      $region52: #{_lambda_.20} parent=39 // pred_fallthru
        _
    $region40: #{_lambda_.20} parent=5 // pred_fallthru
      _
    %p1005 = scmp.le.s32.totalorder 2, %s11
    // Predicated region
    $region53: #{_lambda_.20} parent=5 // pred_check
      %p1006 = pneg %p1005
    $region54: #{_lambda_.20} parent=5 // pred_check_branch
      %1008 = sbr.rel (%p1006) target = $region56
    $region55: #{_lambda_.20} parent=5 // pred_region
      %s1009 = ssub.s32 %s11, 2
    $region56: #{_lambda_.20} parent=5 // pred_fallthru
      _
  $region6: #{_lambda_.20} parent=0 // loop_footer
    %s15 = sadd.s32 1, %s11
  $region7: #{_lambda_.20} parent=0 // loop_footer_branch
    %10 = sbr.rel target = $region3
  $region8: #{_lambda_.20} parent=0 // loop_exit
    _

// kernel: _lambda_.21
$region0: #{_lambda_.21}
  #allocation0 [shape = 'u32[]', space=smem, size = 0x4, offset = 0x4, fixed_abs, tag = 'smem constant byte address 0x4 - core index']
  #allocation1 [shape = 'u32[144,128]{1,0:T(1,128)}', space=vmem, size = 0x12000, scoped, tag = 'internal scratch']
  %s0 = inlined_call_operand.vmem [shape: f32[2,16,32], index: 0, kind: input, shape index: {}]
  %s1 = inlined_call_operand.vmem [shape: bf16[32,10], index: 1, kind: input, shape index: {}]
  %s2 = inlined_call_operand.vmem [shape: f32[1,10], index: 2, kind: input, shape index: {}]
  %s3 = inlined_call_operand.hbm [shape: f32[2,10], index: 3, kind: output, shape index: {}]
  %s4 = sld [smem:[#allocation0]]
  $region22: #{_lambda_.21} parent=0
    _
  %s6 = ssub.s32 1, %s4
  %s7 = scalar_select 0, %s6, %s4
  $region1: #{_lambda_.21} parent=0
    #allocation2 [shape = 'u8[1024]{0}', space=vmem, size = 0x400, scoped, tag = 'output window, operand 0, single buffered']
    #allocation3 [shape = 's32[1]{0}', space=sflag, size = 0x4, scoped, tag = 'scoped memory for _lambda_.21']
    %8 = vsyncpa [#allocation3], 0
    // Predicated region
    $region2: #{_lambda_.21} parent=1 // pred_check
      _
    $region3: #{_lambda_.21} parent=1 // pred_check_branch
      %10 = sbr.rel (0) target = $region5
    $region4: #{_lambda_.21} parent=1 // pred_region
      _
    $region5: #{_lambda_.21} parent=1 // pred_fallthru
      _
    // Predicated region
    $region6: #{_lambda_.21} parent=1 // pred_check
      _
    $region7: #{_lambda_.21} parent=1 // pred_check_branch
      %12 = sbr.rel (0) target = $region9
    $region8: #{_lambda_.21} parent=1 // pred_region
      _
    $region9: #{_lambda_.21} parent=1 // pred_fallthru
      _
    // Predicated region
    $region10: #{_lambda_.21} parent=1 // pred_check
      _
    $region11: #{_lambda_.21} parent=1 // pred_check_branch
      %14 = sbr.rel (0) target = $region13
    $region12: #{_lambda_.21} parent=1 // pred_region
      _
    $region13: #{_lambda_.21} parent=1 // pred_fallthru
      _
    %v16 = vld [vmem:[%s0] sm:$0xff]
    %v17 = vld [vmem:[%s0 + $0x8] sm:$0xff]
    %v18 = vld [vmem:[%s0 + $0x10] sm:$0xff]
    %v19 = vld [vmem:[%s0 + $0x18] sm:$0xff]
    %vm20 = vcmask 261120
    %v21 = vsel %vm20, %v16, 0.0
    %v22 = vsel %vm20, %v17, 0.0
    %v23 = vadd.f32 %v21, %v22
    %v24 = vrot.slane %v23, 4
    %v25 = vadd.f32 %v23, %v24
    %v26 = vrot.slane %v25, 2
    %v27 = vadd.f32 %v25, %v26
    %v28 = vrot.slane %v27, 1
    %v29 = vadd.f32 %v27, %v28
    %v30 = vsel %vm20, %v18, 0.0
    %v31 = vsel %vm20, %v19, 0.0
    %v32 = vadd.f32 %v30, %v31
    %v33 = vrot.slane %v32, 4
    %v34 = vadd.f32 %v32, %v33
    %v35 = vrot.slane %v34, 2
    %v36 = vadd.f32 %v34, %v35
    %v37 = vrot.slane %v36, 1
    %v38 = vadd.f32 %v36, %v37
    %v39 = vrcp.pop 16.0
    %v40 = vmul.f32 %v29, %v39
    %v41 = vmul.f32 %v38, %v39
    %v42 = vpack.c.bf16 %v40, %v40
    %v43 = vpack.c.bf16 %v41, %v41
    %v44 = vld [vmem:[%s1] sm:$0xf]
    %v45 = vld [vmem:[%s1 + $0x4] sm:$0xf]
    %v46 = vld [vmem:[%s1 + $0x8] sm:$0xf]
    %v47 = vld [vmem:[%s1 + $0xc] sm:$0xf]
    %v48 = vld [vmem:[%s2] sm:$0x1]
    %v50 = vlaneseq
    %v51 = vshrl.u32 %v50, 7
    %v52 = vsub.s32 0, %v51
    %v53 = vrot.slane %v48, %v52
    %v57 = vunpack.c.l.b16 %v42
    %v58 = vunpack.c.l.b16 %v43
    %vm59 = vcmask 1041409
    %v60 = vsel %vm59, %v58, %v57
    %v61 = vpack.c.b16 %v60, %v60
    %v66 = vunpack.c.l.b16 %v44
    %v67 = vunpack.c.l.b16 %v45
    %v68 = vunpack.c.l.b16 %v46
    %v69 = vunpack.c.l.b16 %v47
    %v70 = vpack.c.b16 %v67, %v66
    %v71 = vpack.c.b16 %v69, %v68
    %v75 = vsel %vm20, %v61, 0
    %77 = vmatprep.subr.bf16.mxu0 0
    %78 = vmatpush1.bf16.msra.mxu0 0
    %79 = vmatprep.subr.bf16.mxu0 0
    %80 = vmatpush1.bf16.msra.mxu0 0
    %81 = vmatprep.subr.bf16.mxu0 0
    %82 = vmatpush1.bf16.msra.mxu0 0
    %83 = vmatprep.subr.bf16.mxu0 0
    %84 = vmatpush1.bf16.msra.mxu0 0
    %85 = vmatprep.subr.bf16.mxu0 0
    %86 = vmatpush1.bf16.msra.mxu0 0
    %87 = vmatprep.subr.bf16.mxu0 0
    %88 = vmatpush1.bf16.msra.mxu0 0
    %89 = vmatprep.subr.bf16.mxu0 0
    %90 = vmatpush1.bf16.msra.mxu0 %v71
    %91 = vmatprep.subr.bf16.mxu0 0
    %92 = vmatpush1.bf16.msra.mxu0 %v70
    %93 = vmatprep.subr.bf16.mxu0 0
    %94 = vmatpush2.bf16.msra.mxu0 0
    %95 = vmatprep.subr.bf16.mxu0 0
    %96 = vmatpush2.bf16.msra.mxu0 0
    %97 = vmatprep.subr.bf16.mxu0 0
    %98 = vmatpush2.bf16.msra.mxu0 0
    %99 = vmatprep.subr.bf16.mxu0 0
    %100 = vmatpush2.bf16.msra.mxu0 0
    %101 = vmatprep.subr.bf16.mxu0 0
    %102 = vmatpush2.bf16.msra.mxu0 0
    %103 = vmatprep.subr.bf16.mxu0 0
    %104 = vmatpush2.bf16.msra.mxu0 0
    %105 = vmatprep.subr.bf16.mxu0 0
    %106 = vmatpush2.bf16.msra.mxu0 0
    %107 = vmatprep.subr.bf16.mxu0 0
    %108 = vmatpush2.bf16.msra.mxu0 0
    %109 = vmatprep.mubr.bf16.mxu0 0
    %110 = vmatmul.mubr.bf16.gmra.mxu0 %v75
    %v111 = vpop.f32.mrf.mxu0
    %v112 = vadd.f32 %v53, %v111
    %v113 = vpop.f32.mrf.mxu0
    %v114 = vpop.f32.mrf.mxu0
    %v115 = vpop.f32.mrf.mxu0
    %116 = vdwg.mxu0
    %vm117 = vcmask 74752
    %118 = vst.msk [vmem:[#allocation2] sm:$0x3] %vm117, %v112
    // Predicated region
    $region14: #{_lambda_.21} parent=1 // pred_check
      _
    $region15: #{_lambda_.21} parent=1 // pred_check_branch
      %120 = sbr.rel (0) target = $region17
    $region16: #{_lambda_.21} parent=1 // pred_region
      %s122 = ssub.s32 32, 32
      %123 = vsyncadd [#allocation3], %s122
      %s125 = sshll.u32 [#allocation2], 4
      %s126 = int_to_ptr.vmem [resolvable:$true] %s125
      %128 = dma.vmem_to_hbm [thread:$0]  %s126, 32, %s3, [#allocation3]
    $region17: #{_lambda_.21} parent=1 // pred_fallthru
      _
    // Predicated region
    $region18: #{_lambda_.21} parent=1 // pred_check
      _
    $region19: #{_lambda_.21} parent=1 // pred_check_branch
      %130 = sbr.rel (0) target = $region21
    $region20: #{_lambda_.21} parent=1 // pred_region
      %131 = dma.done [#allocation3], 32
    $region21: #{_lambda_.21} parent=1 // pred_fallthru
      _
    %132 = vsyncpa [#allocation3], 1

</llo_original>
